<compile_context>
chip_gen: v5e
topology: v5e:2x2
jax: 0.10.0
libtpu: 0.0.40
codegen_flags: <defaults>
</compile_context>

<pallas_src>
import functools

import jax
import jax.numpy as jnp
from jax.experimental import pallas as pl
from jax.experimental.pallas import tpu as pltpu

# ---------------- module config (matches __init__ arguments) ----------------
BLOCK_EXPANSION = 8
NUM_BLOCKS = 2
MAX_FEATURES = 32
MOTION_NUM_KP = 5
STILL_NUM_KP = 2
NUM_CHANNELS = 1          # create_deformed_source_image's .view() requires num_channels == 1
KP_VARIANCE = 0.01
SCALE_FACTOR = 1.0        # scale_factor == 1 -> no AntiAliasInterpolation3d downsampling

_CONV_VMEM_LIMIT = 64 * 1024 * 1024   # raise scoped VMEM above the 16/32 MiB defaults


def _round_up(x, m):
    return (x + m - 1) // m * m


# ============================ Pallas kernels ============================

def _conv3x3_kernel(x_ref, w_ref, b_ref, o_ref, *, wp, spout, relu):
    """Fused im2col 3x3x3 conv for one output depth plane.

    x_ref : (Dp, Cin_pad, SpW) bf16 - zero-padded volume, one wide-padded plane per depth
            (SpW >= SpOut + 2*(Wp+1), plane data starts at lane Wp+1).
    w_ref : (Cout, 27*Cin_pad) bf16 ; b_ref : (Cout, 1) f32 ; o_ref : (Cout, SpOut).
    The 27 taps are static lane slices of the 3 relevant planes, stacked along sublanes
    (aligned, Cin_pad multiple of 16) and contracted in ONE MXU dot (K = 27*Cin_pad).
    """
    d = pl.program_id(1)
    taps = []
    for kd in range(3):
        plane = x_ref[d + kd]                       # (Cin_pad, SpW), dynamic index on axis 0
        for kh in range(3):
            for kw in range(3):
                off = kh * wp + kw                  # static lane offset
                taps.append(plane[:, off:off + spout])
    patches = jnp.concatenate(taps, axis=0)         # (27*Cin_pad, SpOut) bf16
    acc = jnp.dot(w_ref[...], patches, preferred_element_type=jnp.float32)
    acc = acc + b_ref[...]                           # (Cout, SpOut) + (Cout, 1)
    if relu:
        acc = jnp.maximum(acc, 0.0)
    o_ref[...] = acc.astype(o_ref.dtype)             # lane-dense, written exactly once


def conv3d(x, w, b, relu, out_dtype=jnp.bfloat16):
    """Conv3d kernel 3x3x3, padding 1, stride 1 on (bs, D, Cin, H, W) channel-middle layout.

    Returns (bs, D, Cout, H, W).  One padded bf16 slab per batch item is DMA'd to VMEM once
    (block index only changes with the batch axis); the per-plane grid axis feeds both cores.
    """
    bs, D, Cin, H, W = x.shape
    Cout = w.shape[0]
    cin_pad = w.shape[1] // 27
    Dp, Hp, Wp = D + 2, H + 2, W + 2
    Sp = Hp * Wp
    SpOut = _round_up(Sp, 128)                        # lane-dense output width per plane
    lead = Wp + 1                                     # zeros before each plane (halo guard)
    SpW = _round_up(SpOut + 2 * lead, 128)

    xp = jnp.pad(x.astype(jnp.bfloat16),
                 ((0, 0), (1, 1), (0, cin_pad - Cin), (1, 1), (1, 1)))   # (bs,Dp,Cin_pad,Hp,Wp)
    xw = jnp.pad(xp.reshape(bs, Dp, cin_pad, Sp),
                 ((0, 0), (0, 0), (0, 0), (lead, SpW - Sp - lead)))      # (bs,Dp,Cin_pad,SpW)

    out = pl.pallas_call(
        functools.partial(_conv3x3_kernel, wp=Wp, spout=SpOut, relu=relu),
        out_shape=jax.ShapeDtypeStruct((bs, D, Cout, SpOut), out_dtype),
        grid=(bs, D),
        in_specs=[
            pl.BlockSpec((None, Dp, cin_pad, SpW), lambda bb, dd: (bb, 0, 0, 0)),
            pl.BlockSpec((Cout, 27 * cin_pad), lambda bb, dd: (0, 0)),
            pl.BlockSpec((Cout, 1), lambda bb, dd: (0, 0)),
        ],
        out_specs=pl.BlockSpec((None, None, Cout, SpOut), lambda bb, dd: (bb, dd, 0, 0)),
        compiler_params=pltpu.CompilerParams(
            dimension_semantics=("parallel", "parallel"),
            vmem_limit_bytes=_CONV_VMEM_LIMIT),
    )(xw, w, b.reshape(Cout, 1))

    # crop lane padding + the per-plane (h, w) halo ring (valid centers sit at (h+1, w+1))
    out = out[:, :, :, :Sp].reshape(bs, D, Cout, Hp, Wp)[:, :, :, 1:-1, 1:-1]
    return out


def _heatmap_kernel(kpd_ref, kps_ref, g_ref, heat_ref, ssum_ref, *, num_kp, kp_var):
    # kpd_ref / kps_ref: flat (bs*K*3,) f32 scalars in SMEM
    # g_ref: (3, HWr) rows = (x, y, z) for this depth plane; heat_ref: (K+1, HWr); ssum: (1, HWr)
    b = pl.program_id(0)
    scale = -0.5 / kp_var
    gx = g_ref[0:1, :]
    gy = g_ref[1:2, :]
    gz = g_ref[2:3, :]
    base = b * (num_kp * 3)
    heat_ref[0:1, :] = jnp.zeros_like(gx)                 # zeros channel
    ssum = jnp.zeros_like(gx)
    for k in range(num_kp):
        dxd = gx - kpd_ref[base + 3 * k + 0]
        dyd = gy - kpd_ref[base + 3 * k + 1]
        dzd = gz - kpd_ref[base + 3 * k + 2]
        gd = jnp.exp(scale * (dxd * dxd + dyd * dyd + dzd * dzd))   # gaussian_driving_k
        dxs = gx - kps_ref[base + 3 * k + 0]
        dys = gy - kps_ref[base + 3 * k + 1]
        dzs = gz - kps_ref[base + 3 * k + 2]
        gs = jnp.exp(scale * (dxs * dxs + dys * dys + dzs * dzs))   # gaussian_source_k
        heat_ref[k + 1:k + 2, :] = gd - gs
        ssum = ssum + gs
    ssum_ref[...] = ssum


def heatmap_representation(gplane, kp_d_flat, kp_s_flat, bs, num_kp, kp_var):
    D, _, HWr = gplane.shape
    return pl.pallas_call(
        functools.partial(_heatmap_kernel, num_kp=num_kp, kp_var=kp_var),
        out_shape=(
            jax.ShapeDtypeStruct((bs, D, num_kp + 1, HWr), jnp.float32),
            jax.ShapeDtypeStruct((bs, D, 1, HWr), jnp.float32),
        ),
        grid=(bs, D),
        in_specs=[
            pl.BlockSpec(memory_space=pltpu.MemorySpace.SMEM),
            pl.BlockSpec(memory_space=pltpu.MemorySpace.SMEM),
            pl.BlockSpec((None, 3, HWr), lambda bb, dd: (dd, 0, 0)),
        ],
        out_specs=(
            pl.BlockSpec((None, None, num_kp + 1, HWr), lambda bb, dd: (bb, dd, 0, 0)),
            pl.BlockSpec((None, None, 1, HWr), lambda bb, dd: (bb, dd, 0, 0)),
        ),
        compiler_params=pltpu.CompilerParams(dimension_semantics=("parallel", "parallel")),
    )(kp_d_flat, kp_s_flat, gplane)


def _mask_deform_kernel(kpd_ref, kps_ref, g_ref, logit_ref, mask_ref, deform_ref, *, num_kp):
    # Softmax over the K+1 channels + deformation = sum_k mask_k * T_{s<-d,k}(z); the sparse
    # motions are rebuilt from the coordinate-grid plane + keypoint SMEM scalars (never DMA'd).
    b = pl.program_id(0)
    base = b * (num_kp * 3)
    rows = [logit_ref[k:k + 1, :] for k in range(num_kp + 1)]    # each (1, HWr) f32
    mx = rows[0]
    for k in range(1, num_kp + 1):
        mx = jnp.maximum(mx, rows[k])
    es = [jnp.exp(r - mx) for r in rows]
    tot = es[0]
    for k in range(1, num_kp + 1):
        tot = tot + es[k]
    inv = 1.0 / tot
    ms = [e * inv for e in es]
    for k in range(num_kp + 1):
        mask_ref[k:k + 1, :] = ms[k]
    for c in range(3):
        gc = g_ref[c:c + 1, :]
        acc = ms[0] * gc                                          # identity-grid term
        for k in range(num_kp):
            shift = kps_ref[base + 3 * k + c] - kpd_ref[base + 3 * k + c]
            acc = acc + ms[k + 1] * (gc + shift)
        deform_ref[c:c + 1, :] = acc


def mask_and_deformation(mask_logits, gplane, kp_d_flat, kp_s_flat, num_kp):
    bs, D, Kp1, HWr = mask_logits.shape
    return pl.pallas_call(
        functools.partial(_mask_deform_kernel, num_kp=num_kp),
        out_shape=(
            jax.ShapeDtypeStruct((bs, D, Kp1, HWr), jnp.float32),
            jax.ShapeDtypeStruct((bs, D, 3, HWr), jnp.float32),
        ),
        grid=(bs, D),
        in_specs=[
            pl.BlockSpec(memory_space=pltpu.MemorySpace.SMEM),
            pl.BlockSpec(memory_space=pltpu.MemorySpace.SMEM),
            pl.BlockSpec((None, 3, HWr), lambda bb, dd: (dd, 0, 0)),
            pl.BlockSpec((None, None, Kp1, HWr), lambda bb, dd: (bb, dd, 0, 0)),
        ],
        out_specs=(
            pl.BlockSpec((None, None, Kp1, HWr), lambda bb, dd: (bb, dd, 0, 0)),
            pl.BlockSpec((None, None, 3, HWr), lambda bb, dd: (bb, dd, 0, 0)),
        ),
        compiler_params=pltpu.CompilerParams(dimension_semantics=("parallel", "parallel")),
    )(kp_d_flat, kp_s_flat, gplane, mask_logits)


# ============================ JAX glue ============================

def make_coordinate_grid(d, h, w):
    # (d, h, w, 3), last dim = (x, y, z) in [-1, 1]; x <-> w axis, y <-> h, z <-> d
    z = 2.0 * (jnp.arange(d, dtype=jnp.float32) / (d - 1)) - 1.0
    y = 2.0 * (jnp.arange(h, dtype=jnp.float32) / (h - 1)) - 1.0
    x = 2.0 * (jnp.arange(w, dtype=jnp.float32) / (w - 1)) - 1.0
    zz = jnp.broadcast_to(z[:, None, None], (d, h, w))
    yy = jnp.broadcast_to(y[None, :, None], (d, h, w))
    xx = jnp.broadcast_to(x[None, None, :], (d, h, w))
    return jnp.stack([xx, yy, zz], axis=-1)


def grid_sample_3d(vol, coords):
    """F.grid_sample equivalent: trilinear, padding_mode='zeros', align_corners=False.
    vol: (N, D, H, W) single channel; coords: (N, M, 3) with (x, y, z); returns (N, M).
    Gathers from the single flattened volume (no K+1 broadcast copies of the source)."""
    N, D, H, W = vol.shape
    x, y, z = coords[..., 0], coords[..., 1], coords[..., 2]
    ix = ((x + 1.0) * W - 1.0) * 0.5
    iy = ((y + 1.0) * H - 1.0) * 0.5
    iz = ((z + 1.0) * D - 1.0) * 0.5
    ix0, iy0, iz0 = jnp.floor(ix), jnp.floor(iy), jnp.floor(iz)
    fx, fy, fz = ix - ix0, iy - iy0, iz - iz0
    flat = vol.reshape(N, D * H * W)
    out = jnp.zeros_like(x)
    for dz_ in (0, 1):
        for dy_ in (0, 1):
            for dx_ in (0, 1):
                cx, cy, cz = ix0 + dx_, iy0 + dy_, iz0 + dz_
                wgt = ((fx if dx_ else 1.0 - fx) * (fy if dy_ else 1.0 - fy)
                       * (fz if dz_ else 1.0 - fz))
                valid = ((cx >= 0) & (cx <= W - 1) & (cy >= 0) & (cy <= H - 1)
                         & (cz >= 0) & (cz <= D - 1))
                xi = jnp.clip(cx, 0, W - 1).astype(jnp.int32)
                yi = jnp.clip(cy, 0, H - 1).astype(jnp.int32)
                zi = jnp.clip(cz, 0, D - 1).astype(jnp.int32)
                idx = (zi * H + yi) * W + xi
                vals = jnp.take_along_axis(flat, idx, axis=1)
                out = out + wgt * jnp.where(valid, vals, 0.0)
    return out


def avg_pool3d_2(x):
    # x: (bs, D, C, H, W)
    bs, D, C, H, W = x.shape
    return x.reshape(bs, D // 2, 2, C, H // 2, 2, W // 2, 2).mean(axis=(2, 5, 7))


def upsample_nearest_2(x):
    # x: (bs, D, C, H, W)
    x = jnp.repeat(x, 2, axis=1)
    x = jnp.repeat(x, 2, axis=3)
    x = jnp.repeat(x, 2, axis=4)
    return x


# ============================ parameters ============================

def init_params(key):
    in_chal = (MOTION_NUM_KP + 1) * (NUM_CHANNELS + 1)
    out_chal = MOTION_NUM_KP + 1
    enc_out = [min(MAX_FEATURES, BLOCK_EXPANSION * (2 ** (i + 1))) for i in range(NUM_BLOCKS)]

    def conv_param(k, cin, cout):
        cin_pad = _round_up(cin, 16)
        kw_, kb_ = jax.random.split(k)
        w = jax.random.normal(kw_, (3, 3, 3, cin, cout), jnp.float32) / jnp.sqrt(27.0 * cin)
        w = jnp.pad(w, ((0, 0), (0, 0), (0, 0), (0, cin_pad - cin), (0, 0)))
        # stored pre-flattened (Cout, 27*Cin_pad) bf16 for the fused, K-folded conv kernel
        w = w.reshape(27 * cin_pad, cout).T.astype(jnp.bfloat16)
        b = 0.01 * jax.random.normal(kb_, (cout,), jnp.float32)
        return w, b

    keys = jax.random.split(key, 2 * NUM_BLOCKS + 2)
    params = {}
    ki = 0
    cin = in_chal
    for i in range(NUM_BLOCKS):                       # encoder
        params[f'enc{i}_w'], params[f'enc{i}_b'] = conv_param(keys[ki], cin, enc_out[i])
        cin = enc_out[i]
        ki += 1
    for i in reversed(range(NUM_BLOCKS)):             # decoder
        dec_in = (1 if i == NUM_BLOCKS - 1 else 2) * min(MAX_FEATURES, BLOCK_EXPANSION * 2 ** (i + 1))
        dec_out = min(MAX_FEATURES, BLOCK_EXPANSION * 2 ** i)
        params[f'dec{i}_w'], params[f'dec{i}_b'] = conv_param(keys[ki], dec_in, dec_out)
        ki += 1
    params['hg_final_w'], params['hg_final_b'] = conv_param(keys[ki], BLOCK_EXPANSION + in_chal, out_chal)
    ki += 1
    params['mask_w'], params['mask_b'] = conv_param(keys[ki], out_chal, out_chal)
    return params


def hourglass_forward(params, x):
    # TODO(synk): Hourglass_D definition not provided; FOMM-style encoder/decoder stand-in.
    # x: (bs, D, C, H, W) bf16
    skips = [x]
    out = x
    for i in range(NUM_BLOCKS):
        out = conv3d(out, params[f'enc{i}_w'], params[f'enc{i}_b'], relu=True)
        out = avg_pool3d_2(out)
        skips.append(out)
    out = skips.pop()
    for i in reversed(range(NUM_BLOCKS)):
        out = upsample_nearest_2(out)
        out = conv3d(out, params[f'dec{i}_w'], params[f'dec{i}_b'], relu=True)
        out = jnp.concatenate([out, skips.pop()], axis=2)
    return conv3d(out, params['hg_final_w'], params['hg_final_b'], relu=False)


# ============================ forward ============================

def dense_motion_forward(params, source_image, kp_driving_value, kp_source_value):
    """source_image: (bs, 1, d, h, w) NCDHW; kp values: (bs, still+motion, 3) (x,y,z)."""
    bs, _, d, h, w = source_image.shape
    K = MOTION_NUM_KP
    HW = h * w
    HWr = _round_up(HW, 128)

    kp_d = kp_driving_value[:, STILL_NUM_KP:, :].astype(jnp.float32)     # (bs, K, 3)
    kp_s = kp_source_value[:, STILL_NUM_KP:, :].astype(jnp.float32)
    kp_d_flat = kp_d.reshape(bs * K * 3)                                 # SMEM scalars
    kp_s_flat = kp_s.reshape(bs * K * 3)

    grid = make_coordinate_grid(d, h, w)                                 # (d, h, w, 3)
    gplane = jnp.pad(jnp.transpose(grid.reshape(d, HW, 3), (0, 2, 1)),
                     ((0, 0), (0, 0), (0, HWr - HW)))                    # (d, 3, HWr)

    # heatmap representation (Pallas): zeros channel + (gauss_drv - gauss_src), source sum
    heat, ssum = heatmap_representation(gplane, kp_d_flat, kp_s_flat, bs, K, KP_VARIANCE)
    heat = heat[..., :HW].reshape(bs, d, K + 1, h, w)
    source_heatmap = ssum[..., :HW].reshape(bs, d, 1, h, w)

    # sparse motions T_{s<-d}(z) (only needed for the grid_sample gather)
    id_g = grid[None, :, None]                                           # (1, d, 1, h, w, 3)
    shift = (kp_s - kp_d)[:, None, :, None, None, :]                     # (bs, 1, K, 1, 1, 3)
    sparse_motion = jnp.concatenate(
        [jnp.broadcast_to(id_g, (bs, d, 1, h, w, 3)), id_g + shift], axis=2)  # (bs,d,K+1,h,w,3)

    # deformed source image (grid_sample gather kept in plain JAX; single source volume)
    vol = source_image[:, 0]                                             # (bs, d, h, w)
    deformed = grid_sample_3d(vol, sparse_motion.reshape(bs, -1, 3)).reshape(bs, d, K + 1, h, w)

    # hourglass + mask conv (all conv compute in the fused, K-folded Pallas conv kernel)
    hg_in = jnp.concatenate([heat, deformed], axis=2).astype(jnp.bfloat16)   # (bs,d,2(K+1),h,w)
    prediction = hourglass_forward(params, hg_in)                            # (bs,d,K+1,h,w) bf16
    mask_logits = conv3d(prediction, params['mask_w'], params['mask_b'],
                         relu=False, out_dtype=jnp.float32)                   # (bs,d,K+1,h,w)

    # softmax over channel dim + deformation reduction (Pallas, sparse motion rebuilt in-kernel)
    logits_flat = jnp.pad(mask_logits.reshape(bs, d, K + 1, HW),
                          ((0, 0), (0, 0), (0, 0), (0, HWr - HW)))
    mask, deform = mask_and_deformation(logits_flat, gplane, kp_d_flat, kp_s_flat, K)
    mask = mask[..., :HW].reshape(bs, d, K + 1, h, w)
    deform = deform[..., :HW].reshape(bs, d, 3, h, w)

    return {
        'sparse_deformed': jnp.transpose(deformed, (0, 2, 1, 3, 4)),          # (bs, K+1, d, h, w)
        'source_heatmap': jnp.transpose(source_heatmap, (0, 2, 1, 3, 4)),     # (bs, 1, d, h, w)
        'mask': jnp.transpose(mask, (0, 2, 1, 3, 4)),                         # (bs, K+1, d, h, w)
        'deformation': jnp.transpose(deform, (0, 1, 3, 4, 2)),                # (bs, d, h, w, 3)
    }


if __name__ == "__main__":
    key = jax.random.PRNGKey(0)
    k1, k2, k3, kp_key = jax.random.split(key, 4)
    bs, d, h, w = 2, 8, 8, 8
    total_kp = STILL_NUM_KP + MOTION_NUM_KP
    source_image = jax.random.normal(k1, (bs, NUM_CHANNELS, d, h, w), jnp.float32)
    kp_driving = jax.random.uniform(k2, (bs, total_kp, 3), jnp.float32, -0.8, 0.8)
    kp_source = jax.random.uniform(k3, (bs, total_kp, 3), jnp.float32, -0.8, 0.8)
    params = init_params(kp_key)

    fwd = jax.jit(dense_motion_forward)
    out = jax.block_until_ready(fwd(params, source_image, kp_driving, kp_source))

    assert out['sparse_deformed'].shape == (bs, MOTION_NUM_KP + 1, d, h, w)
    assert out['source_heatmap'].shape == (bs, 1, d, h, w)
    assert out['mask'].shape == (bs, MOTION_NUM_KP + 1, d, h, w)
    assert out['deformation'].shape == (bs, d, h, w, 3)
    for v in out.values():
        assert bool(jnp.all(jnp.isfinite(v.astype(jnp.float32))))
    print("KERNEL_OK")
</pallas_src>

<mosaic_0001>
module attributes {stable_mosaic.version = 11 : i64} {
  func.func @_heatmap_kernel(%arg0: i32, %arg1: i32, %arg2: memref<30xf32, #tpu.memory_space<smem>>, %arg3: memref<30xf32, #tpu.memory_space<smem>>, %arg4: memref<1x3x128xf32, #tpu.memory_space<vmem>>, %arg5: memref<1x1x6x128xf32, #tpu.memory_space<vmem>>, %arg6: memref<1x1x1x128xf32, #tpu.memory_space<vmem>>) attributes {dimension_semantics = [#tpu.dimension_semantics<parallel>, #tpu.dimension_semantics<parallel>], iteration_bounds = array<i64: 2, 8>, scalar_prefetch = 0 : i64, scratch_operands = 0 : i64, tpu.core_type = #tpu.core_type<tc>, window_params = [{transform_indices = @transform_0, window_bounds = array<i64: 30>}, {transform_indices = @transform_1, window_bounds = array<i64: 30>}, {transform_indices = @transform_2, window_bounds = array<i64: 1, 3, 128>}, {transform_indices = @transform_3, window_bounds = array<i64: 1, 1, 6, 128>}, {transform_indices = @transform_4, window_bounds = array<i64: 1, 1, 1, 128>}]} {
    %c0 = arith.constant 0 : index
    %c0_0 = arith.constant 0 : index
    %c0_1 = arith.constant 0 : index
    %0 = vector.load %arg4[%c0, %c0_0, %c0_1] : memref<1x3x128xf32, #tpu.memory_space<vmem>>, vector<1x1x128xf32>
    %1 = vector.shape_cast %0 : vector<1x1x128xf32> to vector<1x128xf32>
    %c0_2 = arith.constant 0 : index
    %c1 = arith.constant 1 : index
    %c0_3 = arith.constant 0 : index
    %2 = vector.load %arg4[%c0_2, %c1, %c0_3] : memref<1x3x128xf32, #tpu.memory_space<vmem>>, vector<1x1x128xf32>
    %3 = vector.shape_cast %2 : vector<1x1x128xf32> to vector<1x128xf32>
    %c0_4 = arith.constant 0 : index
    %c2 = arith.constant 2 : index
    %c0_5 = arith.constant 0 : index
    %4 = vector.load %arg4[%c0_4, %c2, %c0_5] : memref<1x3x128xf32, #tpu.memory_space<vmem>>, vector<1x1x128xf32>
    %5 = vector.shape_cast %4 : vector<1x1x128xf32> to vector<1x128xf32>
    %c15_i32 = arith.constant 15 : i32
    %6 = arith.muli %arg0, %c15_i32 : i32
    %cst = arith.constant 0.000000e+00 : f32
    %7 = vector.broadcast %cst : f32 to vector<1x128xf32>
    %c0_6 = arith.constant 0 : index
    %c0_7 = arith.constant 0 : index
    %c0_8 = arith.constant 0 : index
    %c0_9 = arith.constant 0 : index
    %8 = vector.load %arg5[%c0_6, %c0_7, %c0_8, %c0_9] : memref<1x1x6x128xf32, #tpu.memory_space<vmem>>, vector<1x1x1x128xf32>
    %9 = vector.shape_cast %8 : vector<1x1x1x128xf32> to vector<1x128xf32>
    %10 = vector.shape_cast %7 : vector<1x128xf32> to vector<1x1x1x128xf32>
    tpu.vector_store %arg5[%c0_6, %c0_7, %c0_8, %c0_9], %10 {strides = array<i32>} : memref<1x1x6x128xf32, #tpu.memory_space<vmem>>, vector<1x1x1x128xf32>,
    %cst_10 = arith.constant 0.000000e+00 : f32
    %11 = vector.broadcast %cst_10 : f32 to vector<1x128xf32>
    %c0_i32 = arith.constant 0 : i32
    %12 = arith.addi %6, %c0_i32 : i32
    %c0_i32_11 = arith.constant 0 : i32
    %13 = arith.addi %12, %c0_i32_11 : i32
    %14 = arith.index_cast %13 : i32 to index
    %15 = memref.load %arg2[%14] : memref<30xf32, #tpu.memory_space<smem>>
    %16 = vector.broadcast %15 : f32 to vector<1x128xf32>
    %17 = arith.subf %1, %16 : vector<1x128xf32>
    %c0_i32_12 = arith.constant 0 : i32
    %18 = arith.addi %6, %c0_i32_12 : i32
    %c1_i32 = arith.constant 1 : i32
    %19 = arith.addi %18, %c1_i32 : i32
    %20 = arith.index_cast %19 : i32 to index
    %21 = memref.load %arg2[%20] : memref<30xf32, #tpu.memory_space<smem>>
    %22 = vector.broadcast %21 : f32 to vector<1x128xf32>
    %23 = arith.subf %3, %22 : vector<1x128xf32>
    %c0_i32_13 = arith.constant 0 : i32
    %24 = arith.addi %6, %c0_i32_13 : i32
    %c2_i32 = arith.constant 2 : i32
    %25 = arith.addi %24, %c2_i32 : i32
    %26 = arith.index_cast %25 : i32 to index
    %27 = memref.load %arg2[%26] : memref<30xf32, #tpu.memory_space<smem>>
    %28 = vector.broadcast %27 : f32 to vector<1x128xf32>
    %29 = arith.subf %5, %28 : vector<1x128xf32>
    %30 = arith.mulf %17, %17 : vector<1x128xf32>
    %31 = arith.mulf %23, %23 : vector<1x128xf32>
    %32 = arith.addf %30, %31 : vector<1x128xf32>
    %33 = arith.mulf %29, %29 : vector<1x128xf32>
    %34 = arith.addf %32, %33 : vector<1x128xf32>
    %cst_14 = arith.constant -5.000000e+01 : f32
    %35 = vector.broadcast %cst_14 : f32 to vector<1x128xf32>
    %36 = arith.mulf %35, %34 : vector<1x128xf32>
    %37 = math.exp %36 : vector<1x128xf32>
    %c0_i32_15 = arith.constant 0 : i32
    %38 = arith.addi %6, %c0_i32_15 : i32
    %c0_i32_16 = arith.constant 0 : i32
    %39 = arith.addi %38, %c0_i32_16 : i32
    %40 = arith.index_cast %39 : i32 to index
    %41 = memref.load %arg3[%40] : memref<30xf32, #tpu.memory_space<smem>>
    %42 = vector.broadcast %41 : f32 to vector<1x128xf32>
    %43 = arith.subf %1, %42 : vector<1x128xf32>
    %c0_i32_17 = arith.constant 0 : i32
    %44 = arith.addi %6, %c0_i32_17 : i32
    %c1_i32_18 = arith.constant 1 : i32
    %45 = arith.addi %44, %c1_i32_18 : i32
    %46 = arith.index_cast %45 : i32 to index
    %47 = memref.load %arg3[%46] : memref<30xf32, #tpu.memory_space<smem>>
    %48 = vector.broadcast %47 : f32 to vector<1x128xf32>
    %49 = arith.subf %3, %48 : vector<1x128xf32>
    %c0_i32_19 = arith.constant 0 : i32
    %50 = arith.addi %6, %c0_i32_19 : i32
    %c2_i32_20 = arith.constant 2 : i32
    %51 = arith.addi %50, %c2_i32_20 : i32
    %52 = arith.index_cast %51 : i32 to index
    %53 = memref.load %arg3[%52] : memref<30xf32, #tpu.memory_space<smem>>
    %54 = vector.broadcast %53 : f32 to vector<1x128xf32>
    %55 = arith.subf %5, %54 : vector<1x128xf32>
    %56 = arith.mulf %43, %43 : vector<1x128xf32>
    %57 = arith.mulf %49, %49 : vector<1x128xf32>
    %58 = arith.addf %56, %57 : vector<1x128xf32>
    %59 = arith.mulf %55, %55 : vector<1x128xf32>
    %60 = arith.addf %58, %59 : vector<1x128xf32>
    %cst_21 = arith.constant -5.000000e+01 : f32
    %61 = vector.broadcast %cst_21 : f32 to vector<1x128xf32>
    %62 = arith.mulf %61, %60 : vector<1x128xf32>
    %63 = math.exp %62 : vector<1x128xf32>
    %64 = arith.subf %37, %63 : vector<1x128xf32>
    %c0_22 = arith.constant 0 : index
    %c0_23 = arith.constant 0 : index
    %c1_24 = arith.constant 1 : index
    %c0_25 = arith.constant 0 : index
    %65 = vector.load %arg5[%c0_22, %c0_23, %c1_24, %c0_25] : memref<1x1x6x128xf32, #tpu.memory_space<vmem>>, vector<1x1x1x128xf32>
    %66 = vector.shape_cast %65 : vector<1x1x1x128xf32> to vector<1x128xf32>
    %67 = vector.shape_cast %64 : vector<1x128xf32> to vector<1x1x1x128xf32>
    tpu.vector_store %arg5[%c0_22, %c0_23, %c1_24, %c0_25], %67 {strides = array<i32>} : memref<1x1x6x128xf32, #tpu.memory_space<vmem>>, vector<1x1x1x128xf32>,
    %68 = arith.addf %11, %63 : vector<1x128xf32>
    %c3_i32 = arith.constant 3 : i32
    %69 = arith.addi %6, %c3_i32 : i32
    %c0_i32_26 = arith.constant 0 : i32
    %70 = arith.addi %69, %c0_i32_26 : i32
    %71 = arith.index_cast %70 : i32 to index
    %72 = memref.load %arg2[%71] : memref<30xf32, #tpu.memory_space<smem>>
    %73 = vector.broadcast %72 : f32 to vector<1x128xf32>
    %74 = arith.subf %1, %73 : vector<1x128xf32>
    %c3_i32_27 = arith.constant 3 : i32
    %75 = arith.addi %6, %c3_i32_27 : i32
    %c1_i32_28 = arith.constant 1 : i32
    %76 = arith.addi %75, %c1_i32_28 : i32
    %77 = arith.index_cast %76 : i32 to index
    %78 = memref.load %arg2[%77] : memref<30xf32, #tpu.memory_space<smem>>
    %79 = vector.broadcast %78 : f32 to vector<1x128xf32>
    %80 = arith.subf %3, %79 : vector<1x128xf32>
    %c3_i32_29 = arith.constant 3 : i32
    %81 = arith.addi %6, %c3_i32_29 : i32
    %c2_i32_30 = arith.constant 2 : i32
    %82 = arith.addi %81, %c2_i32_30 : i32
    %83 = arith.index_cast %82 : i32 to index
    %84 = memref.load %arg2[%83] : memref<30xf32, #tpu.memory_space<smem>>
    %85 = vector.broadcast %84 : f32 to vector<1x128xf32>
    %86 = arith.subf %5, %85 : vector<1x128xf32>
    %87 = arith.mulf %74, %74 : vector<1x128xf32>
    %88 = arith.mulf %80, %80 : vector<1x128xf32>
    %89 = arith.addf %87, %88 : vector<1x128xf32>
    %90 = arith.mulf %86, %86 : vector<1x128xf32>
    %91 = arith.addf %89, %90 : vector<1x128xf32>
    %cst_31 = arith.constant -5.000000e+01 : f32
    %92 = vector.broadcast %cst_31 : f32 to vector<1x128xf32>
    %93 = arith.mulf %92, %91 : vector<1x128xf32>
    %94 = math.exp %93 : vector<1x128xf32>
    %c3_i32_32 = arith.constant 3 : i32
    %95 = arith.addi %6, %c3_i32_32 : i32
    %c0_i32_33 = arith.constant 0 : i32
    %96 = arith.addi %95, %c0_i32_33 : i32
    %97 = arith.index_cast %96 : i32 to index
    %98 = memref.load %arg3[%97] : memref<30xf32, #tpu.memory_space<smem>>
    %99 = vector.broadcast %98 : f32 to vector<1x128xf32>
    %100 = arith.subf %1, %99 : vector<1x128xf32>
    %c3_i32_34 = arith.constant 3 : i32
    %101 = arith.addi %6, %c3_i32_34 : i32
    %c1_i32_35 = arith.constant 1 : i32
    %102 = arith.addi %101, %c1_i32_35 : i32
    %103 = arith.index_cast %102 : i32 to index
    %104 = memref.load %arg3[%103] : memref<30xf32, #tpu.memory_space<smem>>
    %105 = vector.broadcast %104 : f32 to vector<1x128xf32>
    %106 = arith.subf %3, %105 : vector<1x128xf32>
    %c3_i32_36 = arith.constant 3 : i32
    %107 = arith.addi %6, %c3_i32_36 : i32
    %c2_i32_37 = arith.constant 2 : i32
    %108 = arith.addi %107, %c2_i32_37 : i32
    %109 = arith.index_cast %108 : i32 to index
    %110 = memref.load %arg3[%109] : memref<30xf32, #tpu.memory_space<smem>>
    %111 = vector.broadcast %110 : f32 to vector<1x128xf32>
    %112 = arith.subf %5, %111 : vector<1x128xf32>
    %113 = arith.mulf %100, %100 : vector<1x128xf32>
    %114 = arith.mulf %106, %106 : vector<1x128xf32>
    %115 = arith.addf %113, %114 : vector<1x128xf32>
    %116 = arith.mulf %112, %112 : vector<1x128xf32>
    %117 = arith.addf %115, %116 : vector<1x128xf32>
    %cst_38 = arith.constant -5.000000e+01 : f32
    %118 = vector.broadcast %cst_38 : f32 to vector<1x128xf32>
    %119 = arith.mulf %118, %117 : vector<1x128xf32>
    %120 = math.exp %119 : vector<1x128xf32>
    %121 = arith.subf %94, %120 : vector<1x128xf32>
    %c0_39 = arith.constant 0 : index
    %c0_40 = arith.constant 0 : index
    %c2_41 = arith.constant 2 : index
    %c0_42 = arith.constant 0 : index
    %122 = vector.load %arg5[%c0_39, %c0_40, %c2_41, %c0_42] : memref<1x1x6x128xf32, #tpu.memory_space<vmem>>, vector<1x1x1x128xf32>
    %123 = vector.shape_cast %122 : vector<1x1x1x128xf32> to vector<1x128xf32>
    %124 = vector.shape_cast %121 : vector<1x128xf32> to vector<1x1x1x128xf32>
    tpu.vector_store %arg5[%c0_39, %c0_40, %c2_41, %c0_42], %124 {strides = array<i32>} : memref<1x1x6x128xf32, #tpu.memory_space<vmem>>, vector<1x1x1x128xf32>,
    %125 = arith.addf %68, %120 : vector<1x128xf32>
    %c6_i32 = arith.constant 6 : i32
    %126 = arith.addi %6, %c6_i32 : i32
    %c0_i32_43 = arith.constant 0 : i32
    %127 = arith.addi %126, %c0_i32_43 : i32
    %128 = arith.index_cast %127 : i32 to index
    %129 = memref.load %arg2[%128] : memref<30xf32, #tpu.memory_space<smem>>
    %130 = vector.broadcast %129 : f32 to vector<1x128xf32>
    %131 = arith.subf %1, %130 : vector<1x128xf32>
    %c6_i32_44 = arith.constant 6 : i32
    %132 = arith.addi %6, %c6_i32_44 : i32
    %c1_i32_45 = arith.constant 1 : i32
    %133 = arith.addi %132, %c1_i32_45 : i32
    %134 = arith.index_cast %133 : i32 to index
    %135 = memref.load %arg2[%134] : memref<30xf32, #tpu.memory_space<smem>>
    %136 = vector.broadcast %135 : f32 to vector<1x128xf32>
    %137 = arith.subf %3, %136 : vector<1x128xf32>
    %c6_i32_46 = arith.constant 6 : i32
    %138 = arith.addi %6, %c6_i32_46 : i32
    %c2_i32_47 = arith.constant 2 : i32
    %139 = arith.addi %138, %c2_i32_47 : i32
    %140 = arith.index_cast %139 : i32 to index
    %141 = memref.load %arg2[%140] : memref<30xf32, #tpu.memory_space<smem>>
    %142 = vector.broadcast %141 : f32 to vector<1x128xf32>
    %143 = arith.subf %5, %142 : vector<1x128xf32>
    %144 = arith.mulf %131, %131 : vector<1x128xf32>
    %145 = arith.mulf %137, %137 : vector<1x128xf32>
    %146 = arith.addf %144, %145 : vector<1x128xf32>
    %147 = arith.mulf %143, %143 : vector<1x128xf32>
    %148 = arith.addf %146, %147 : vector<1x128xf32>
    %cst_48 = arith.constant -5.000000e+01 : f32
    %149 = vector.broadcast %cst_48 : f32 to vector<1x128xf32>
    %150 = arith.mulf %149, %148 : vector<1x128xf32>
    %151 = math.exp %150 : vector<1x128xf32>
    %c6_i32_49 = arith.constant 6 : i32
    %152 = arith.addi %6, %c6_i32_49 : i32
    %c0_i32_50 = arith.constant 0 : i32
    %153 = arith.addi %152, %c0_i32_50 : i32
    %154 = arith.index_cast %153 : i32 to index
    %155 = memref.load %arg3[%154] : memref<30xf32, #tpu.memory_space<smem>>
    %156 = vector.broadcast %155 : f32 to vector<1x128xf32>
    %157 = arith.subf %1, %156 : vector<1x128xf32>
    %c6_i32_51 = arith.constant 6 : i32
    %158 = arith.addi %6, %c6_i32_51 : i32
    %c1_i32_52 = arith.constant 1 : i32
    %159 = arith.addi %158, %c1_i32_52 : i32
    %160 = arith.index_cast %159 : i32 to index
    %161 = memref.load %arg3[%160] : memref<30xf32, #tpu.memory_space<smem>>
    %162 = vector.broadcast %161 : f32 to vector<1x128xf32>
    %163 = arith.subf %3, %162 : vector<1x128xf32>
    %c6_i32_53 = arith.constant 6 : i32
    %164 = arith.addi %6, %c6_i32_53 : i32
    %c2_i32_54 = arith.constant 2 : i32
    %165 = arith.addi %164, %c2_i32_54 : i32
    %166 = arith.index_cast %165 : i32 to index
    %167 = memref.load %arg3[%166] : memref<30xf32, #tpu.memory_space<smem>>
    %168 = vector.broadcast %167 : f32 to vector<1x128xf32>
    %169 = arith.subf %5, %168 : vector<1x128xf32>
    %170 = arith.mulf %157, %157 : vector<1x128xf32>
    %171 = arith.mulf %163, %163 : vector<1x128xf32>
    %172 = arith.addf %170, %171 : vector<1x128xf32>
    %173 = arith.mulf %169, %169 : vector<1x128xf32>
    %174 = arith.addf %172, %173 : vector<1x128xf32>
    %cst_55 = arith.constant -5.000000e+01 : f32
    %175 = vector.broadcast %cst_55 : f32 to vector<1x128xf32>
    %176 = arith.mulf %175, %174 : vector<1x128xf32>
    %177 = math.exp %176 : vector<1x128xf32>
    %178 = arith.subf %151, %177 : vector<1x128xf32>
    %c0_56 = arith.constant 0 : index
    %c0_57 = arith.constant 0 : index
    %c3 = arith.constant 3 : index
    %c0_58 = arith.constant 0 : index
    %179 = vector.load %arg5[%c0_56, %c0_57, %c3, %c0_58] : memref<1x1x6x128xf32, #tpu.memory_space<vmem>>, vector<1x1x1x128xf32>
    %180 = vector.shape_cast %179 : vector<1x1x1x128xf32> to vector<1x128xf32>
    %181 = vector.shape_cast %178 : vector<1x128xf32> to vector<1x1x1x128xf32>
    tpu.vector_store %arg5[%c0_56, %c0_57, %c3, %c0_58], %181 {strides = array<i32>} : memref<1x1x6x128xf32, #tpu.memory_space<vmem>>, vector<1x1x1x128xf32>,
    %182 = arith.addf %125, %177 : vector<1x128xf32>
    %c9_i32 = arith.constant 9 : i32
    %183 = arith.addi %6, %c9_i32 : i32
    %c0_i32_59 = arith.constant 0 : i32
    %184 = arith.addi %183, %c0_i32_59 : i32
    %185 = arith.index_cast %184 : i32 to index
    %186 = memref.load %arg2[%185] : memref<30xf32, #tpu.memory_space<smem>>
    %187 = vector.broadcast %186 : f32 to vector<1x128xf32>
    %188 = arith.subf %1, %187 : vector<1x128xf32>
    %c9_i32_60 = arith.constant 9 : i32
    %189 = arith.addi %6, %c9_i32_60 : i32
    %c1_i32_61 = arith.constant 1 : i32
    %190 = arith.addi %189, %c1_i32_61 : i32
    %191 = arith.index_cast %190 : i32 to index
    %192 = memref.load %arg2[%191] : memref<30xf32, #tpu.memory_space<smem>>
    %193 = vector.broadcast %192 : f32 to vector<1x128xf32>
    %194 = arith.subf %3, %193 : vector<1x128xf32>
    %c9_i32_62 = arith.constant 9 : i32
    %195 = arith.addi %6, %c9_i32_62 : i32
    %c2_i32_63 = arith.constant 2 : i32
    %196 = arith.addi %195, %c2_i32_63 : i32
    %197 = arith.index_cast %196 : i32 to index
    %198 = memref.load %arg2[%197] : memref<30xf32, #tpu.memory_space<smem>>
    %199 = vector.broadcast %198 : f32 to vector<1x128xf32>
    %200 = arith.subf %5, %199 : vector<1x128xf32>
    %201 = arith.mulf %188, %188 : vector<1x128xf32>
    %202 = arith.mulf %194, %194 : vector<1x128xf32>
    %203 = arith.addf %201, %202 : vector<1x128xf32>
    %204 = arith.mulf %200, %200 : vector<1x128xf32>
    %205 = arith.addf %203, %204 : vector<1x128xf32>
    %cst_64 = arith.constant -5.000000e+01 : f32
    %206 = vector.broadcast %cst_64 : f32 to vector<1x128xf32>
    %207 = arith.mulf %206, %205 : vector<1x128xf32>
    %208 = math.exp %207 : vector<1x128xf32>
    %c9_i32_65 = arith.constant 9 : i32
    %209 = arith.addi %6, %c9_i32_65 : i32
    %c0_i32_66 = arith.constant 0 : i32
    %210 = arith.addi %209, %c0_i32_66 : i32
    %211 = arith.index_cast %210 : i32 to index
    %212 = memref.load %arg3[%211] : memref<30xf32, #tpu.memory_space<smem>>
    %213 = vector.broadcast %212 : f32 to vector<1x128xf32>
    %214 = arith.subf %1, %213 : vector<1x128xf32>
    %c9_i32_67 = arith.constant 9 : i32
    %215 = arith.addi %6, %c9_i32_67 : i32
    %c1_i32_68 = arith.constant 1 : i32
    %216 = arith.addi %215, %c1_i32_68 : i32
    %217 = arith.index_cast %216 : i32 to index
    %218 = memref.load %arg3[%217] : memref<30xf32, #tpu.memory_space<smem>>
    %219 = vector.broadcast %218 : f32 to vector<1x128xf32>
    %220 = arith.subf %3, %219 : vector<1x128xf32>
    %c9_i32_69 = arith.constant 9 : i32
    %221 = arith.addi %6, %c9_i32_69 : i32
    %c2_i32_70 = arith.constant 2 : i32
    %222 = arith.addi %221, %c2_i32_70 : i32
    %223 = arith.index_cast %222 : i32 to index
    %224 = memref.load %arg3[%223] : memref<30xf32, #tpu.memory_space<smem>>
    %225 = vector.broadcast %224 : f32 to vector<1x128xf32>
    %226 = arith.subf %5, %225 : vector<1x128xf32>
    %227 = arith.mulf %214, %214 : vector<1x128xf32>
    %228 = arith.mulf %220, %220 : vector<1x128xf32>
    %229 = arith.addf %227, %228 : vector<1x128xf32>
    %230 = arith.mulf %226, %226 : vector<1x128xf32>
    %231 = arith.addf %229, %230 : vector<1x128xf32>
    %cst_71 = arith.constant -5.000000e+01 : f32
    %232 = vector.broadcast %cst_71 : f32 to vector<1x128xf32>
    %233 = arith.mulf %232, %231 : vector<1x128xf32>
    %234 = math.exp %233 : vector<1x128xf32>
    %235 = arith.subf %208, %234 : vector<1x128xf32>
    %c0_72 = arith.constant 0 : index
    %c0_73 = arith.constant 0 : index
    %c4 = arith.constant 4 : index
    %c0_74 = arith.constant 0 : index
    %236 = vector.load %arg5[%c0_72, %c0_73, %c4, %c0_74] : memref<1x1x6x128xf32, #tpu.memory_space<vmem>>, vector<1x1x1x128xf32>
    %237 = vector.shape_cast %236 : vector<1x1x1x128xf32> to vector<1x128xf32>
    %238 = vector.shape_cast %235 : vector<1x128xf32> to vector<1x1x1x128xf32>
    tpu.vector_store %arg5[%c0_72, %c0_73, %c4, %c0_74], %238 {strides = array<i32>} : memref<1x1x6x128xf32, #tpu.memory_space<vmem>>, vector<1x1x1x128xf32>,
    %239 = arith.addf %182, %234 : vector<1x128xf32>
    %c12_i32 = arith.constant 12 : i32
    %240 = arith.addi %6, %c12_i32 : i32
    %c0_i32_75 = arith.constant 0 : i32
    %241 = arith.addi %240, %c0_i32_75 : i32
    %242 = arith.index_cast %241 : i32 to index
    %243 = memref.load %arg2[%242] : memref<30xf32, #tpu.memory_space<smem>>
    %244 = vector.broadcast %243 : f32 to vector<1x128xf32>
    %245 = arith.subf %1, %244 : vector<1x128xf32>
    %c12_i32_76 = arith.constant 12 : i32
    %246 = arith.addi %6, %c12_i32_76 : i32
    %c1_i32_77 = arith.constant 1 : i32
    %247 = arith.addi %246, %c1_i32_77 : i32
    %248 = arith.index_cast %247 : i32 to index
    %249 = memref.load %arg2[%248] : memref<30xf32, #tpu.memory_space<smem>>
    %250 = vector.broadcast %249 : f32 to vector<1x128xf32>
    %251 = arith.subf %3, %250 : vector<1x128xf32>
    %c12_i32_78 = arith.constant 12 : i32
    %252 = arith.addi %6, %c12_i32_78 : i32
    %c2_i32_79 = arith.constant 2 : i32
    %253 = arith.addi %252, %c2_i32_79 : i32
    %254 = arith.index_cast %253 : i32 to index
    %255 = memref.load %arg2[%254] : memref<30xf32, #tpu.memory_space<smem>>
    %256 = vector.broadcast %255 : f32 to vector<1x128xf32>
    %257 = arith.subf %5, %256 : vector<1x128xf32>
    %258 = arith.mulf %245, %245 : vector<1x128xf32>
    %259 = arith.mulf %251, %251 : vector<1x128xf32>
    %260 = arith.addf %258, %259 : vector<1x128xf32>
    %261 = arith.mulf %257, %257 : vector<1x128xf32>
    %262 = arith.addf %260, %261 : vector<1x128xf32>
    %cst_80 = arith.constant -5.000000e+01 : f32
    %263 = vector.broadcast %cst_80 : f32 to vector<1x128xf32>
    %264 = arith.mulf %263, %262 : vector<1x128xf32>
    %265 = math.exp %264 : vector<1x128xf32>
    %c12_i32_81 = arith.constant 12 : i32
    %266 = arith.addi %6, %c12_i32_81 : i32
    %c0_i32_82 = arith.constant 0 : i32
    %267 = arith.addi %266, %c0_i32_82 : i32
    %268 = arith.index_cast %267 : i32 to index
    %269 = memref.load %arg3[%268] : memref<30xf32, #tpu.memory_space<smem>>
    %270 = vector.broadcast %269 : f32 to vector<1x128xf32>
    %271 = arith.subf %1, %270 : vector<1x128xf32>
    %c12_i32_83 = arith.constant 12 : i32
    %272 = arith.addi %6, %c12_i32_83 : i32
    %c1_i32_84 = arith.constant 1 : i32
    %273 = arith.addi %272, %c1_i32_84 : i32
    %274 = arith.index_cast %273 : i32 to index
    %275 = memref.load %arg3[%274] : memref<30xf32, #tpu.memory_space<smem>>
    %276 = vector.broadcast %275 : f32 to vector<1x128xf32>
    %277 = arith.subf %3, %276 : vector<1x128xf32>
    %c12_i32_85 = arith.constant 12 : i32
    %278 = arith.addi %6, %c12_i32_85 : i32
    %c2_i32_86 = arith.constant 2 : i32
    %279 = arith.addi %278, %c2_i32_86 : i32
    %280 = arith.index_cast %279 : i32 to index
    %281 = memref.load %arg3[%280] : memref<30xf32, #tpu.memory_space<smem>>
    %282 = vector.broadcast %281 : f32 to vector<1x128xf32>
    %283 = arith.subf %5, %282 : vector<1x128xf32>
    %284 = arith.mulf %271, %271 : vector<1x128xf32>
    %285 = arith.mulf %277, %277 : vector<1x128xf32>
    %286 = arith.addf %284, %285 : vector<1x128xf32>
    %287 = arith.mulf %283, %283 : vector<1x128xf32>
    %288 = arith.addf %286, %287 : vector<1x128xf32>
    %cst_87 = arith.constant -5.000000e+01 : f32
    %289 = vector.broadcast %cst_87 : f32 to vector<1x128xf32>
    %290 = arith.mulf %289, %288 : vector<1x128xf32>
    %291 = math.exp %290 : vector<1x128xf32>
    %292 = arith.subf %265, %291 : vector<1x128xf32>
    %c0_88 = arith.constant 0 : index
    %c0_89 = arith.constant 0 : index
    %c5 = arith.constant 5 : index
    %c0_90 = arith.constant 0 : index
    %293 = vector.load %arg5[%c0_88, %c0_89, %c5, %c0_90] : memref<1x1x6x128xf32, #tpu.memory_space<vmem>>, vector<1x1x1x128xf32>
    %294 = vector.shape_cast %293 : vector<1x1x1x128xf32> to vector<1x128xf32>
    %295 = vector.shape_cast %292 : vector<1x128xf32> to vector<1x1x1x128xf32>
    tpu.vector_store %arg5[%c0_88, %c0_89, %c5, %c0_90], %295 {strides = array<i32>} : memref<1x1x6x128xf32, #tpu.memory_space<vmem>>, vector<1x1x1x128xf32>,
    %296 = arith.addf %239, %291 : vector<1x128xf32>
    %c0_91 = arith.constant 0 : index
    %c0_92 = arith.constant 0 : index
    %c0_93 = arith.constant 0 : index
    %c0_94 = arith.constant 0 : index
    %297 = vector.load %arg6[%c0_91, %c0_92, %c0_93, %c0_94] : memref<1x1x1x128xf32, #tpu.memory_space<vmem>>, vector<1x1x1x128xf32>
    %298 = vector.shape_cast %297 : vector<1x1x1x128xf32> to vector<1x128xf32>
    %299 = vector.shape_cast %296 : vector<1x128xf32> to vector<1x1x1x128xf32>
    tpu.vector_store %arg6[%c0_91, %c0_92, %c0_93, %c0_94], %299 {strides = array<i32>} : memref<1x1x1x128xf32, #tpu.memory_space<vmem>>, vector<1x1x1x128xf32>,
    return
  }
  func.func @transform_0(%arg0: i32, %arg1: i32) -> i32 {
    %c0_i32 = arith.constant 0 : i32
    %c0_i32_0 = arith.constant 0 : i32
    return %c0_i32 : i32
  }
  func.func @transform_1(%arg0: i32, %arg1: i32) -> i32 {
    %c0_i32 = arith.constant 0 : i32
    %c0_i32_0 = arith.constant 0 : i32
    return %c0_i32 : i32
  }
  func.func @transform_2(%arg0: i32, %arg1: i32) -> (i32, i32, i32) {
    %c0_i32 = arith.constant 0 : i32
    %c0_i32_0 = arith.constant 0 : i32
    %c0_i32_1 = arith.constant 0 : i32
    return %arg1, %c0_i32, %c0_i32_0 : i32, i32, i32
  }
  func.func @transform_3(%arg0: i32, %arg1: i32) -> (i32, i32, i32, i32) {
    %c0_i32 = arith.constant 0 : i32
    %c0_i32_0 = arith.constant 0 : i32
    %c0_i32_1 = arith.constant 0 : i32
    return %arg0, %arg1, %c0_i32, %c0_i32_0 : i32, i32, i32, i32
  }
  func.func @transform_4(%arg0: i32, %arg1: i32) -> (i32, i32, i32, i32) {
    %c0_i32 = arith.constant 0 : i32
    %c0_i32_0 = arith.constant 0 : i32
    %c0_i32_1 = arith.constant 0 : i32
    return %arg0, %arg1, %c0_i32, %c0_i32_0 : i32, i32, i32, i32
  }
}

module attributes {stable_mosaic.version = 11 : i64} {
  func.func @_conv3x3_kernel(%arg0: i32, %arg1: i32, %arg2: memref<1x10x16x256xbf16, #tpu.memory_space<vmem>>, %arg3: memref<16x432xbf16, #tpu.memory_space<vmem>>, %arg4: memref<16x1xf32, #tpu.memory_space<vmem>>, %arg5: memref<1x1x16x128xbf16, #tpu.memory_space<vmem>>) attributes {dimension_semantics = [#tpu.dimension_semantics<parallel>, #tpu.dimension_semantics<parallel>], iteration_bounds = array<i64: 2, 8>, scalar_prefetch = 0 : i64, scratch_operands = 0 : i64, tpu.core_type = #tpu.core_type<tc>, window_params = [{transform_indices = @transform_0, window_bounds = array<i64: 1, 10, 16, 256>}, {pipeline_mode = #tpu.pipeline_mode<synchronous>, transform_indices = @transform_1, window_bounds = array<i64: 16, 432>}, {pipeline_mode = #tpu.pipeline_mode<synchronous>, transform_indices = @transform_2, window_bounds = array<i64: 16, 1>}, {transform_indices = @transform_3, window_bounds = array<i64: 1, 1, 16, 128>}]} {
    %c0_i32 = arith.constant 0 : i32
    %0 = arith.addi %arg1, %c0_i32 : i32
    %c0 = arith.constant 0 : index
    %1 = arith.index_cast %0 : i32 to index
    %c0_0 = arith.constant 0 : index
    %c0_1 = arith.constant 0 : index
    %2 = vector.load %arg2[%c0, %1, %c0_0, %c0_1] : memref<1x10x16x256xbf16, #tpu.memory_space<vmem>>, vector<1x1x16x256xbf16>
    %3 = vector.shape_cast %2 : vector<1x1x16x256xbf16> to vector<16x256xbf16>
    %4 = vector.extract_strided_slice %3 {offsets = [0, 0], sizes = [16, 128], strides = [1, 1]} : vector<16x256xbf16> to vector<16x128xbf16>
    %5 = vector.extract_strided_slice %3 {offsets = [0, 1], sizes = [16, 128], strides = [1, 1]} : vector<16x256xbf16> to vector<16x128xbf16>
    %6 = vector.extract_strided_slice %3 {offsets = [0, 2], sizes = [16, 128], strides = [1, 1]} : vector<16x256xbf16> to vector<16x128xbf16>
    %7 = vector.extract_strided_slice %3 {offsets = [0, 10], sizes = [16, 128], strides = [1, 1]} : vector<16x256xbf16> to vector<16x128xbf16>
    %8 = vector.extract_strided_slice %3 {offsets = [0, 11], sizes = [16, 128], strides = [1, 1]} : vector<16x256xbf16> to vector<16x128xbf16>
    %9 = vector.extract_strided_slice %3 {offsets = [0, 12], sizes = [16, 128], strides = [1, 1]} : vector<16x256xbf16> to vector<16x128xbf16>
    %10 = vector.extract_strided_slice %3 {offsets = [0, 20], sizes = [16, 128], strides = [1, 1]} : vector<16x256xbf16> to vector<16x128xbf16>
    %11 = vector.extract_strided_slice %3 {offsets = [0, 21], sizes = [16, 128], strides = [1, 1]} : vector<16x256xbf16> to vector<16x128xbf16>
    %12 = vector.extract_strided_slice %3 {offsets = [0, 22], sizes = [16, 128], strides = [1, 1]} : vector<16x256xbf16> to vector<16x128xbf16>
    %c1_i32 = arith.constant 1 : i32
    %13 = arith.addi %arg1, %c1_i32 : i32
    %c0_2 = arith.constant 0 : index
    %14 = arith.index_cast %13 : i32 to index
    %c0_3 = arith.constant 0 : index
    %c0_4 = arith.constant 0 : index
    %15 = vector.load %arg2[%c0_2, %14, %c0_3, %c0_4] : memref<1x10x16x256xbf16, #tpu.memory_space<vmem>>, vector<1x1x16x256xbf16>
    %16 = vector.shape_cast %15 : vector<1x1x16x256xbf16> to vector<16x256xbf16>
    %17 = vector.extract_strided_slice %16 {offsets = [0, 0], sizes = [16, 128], strides = [1, 1]} : vector<16x256xbf16> to vector<16x128xbf16>
    %18 = vector.extract_strided_slice %16 {offsets = [0, 1], sizes = [16, 128], strides = [1, 1]} : vector<16x256xbf16> to vector<16x128xbf16>
    %19 = vector.extract_strided_slice %16 {offsets = [0, 2], sizes = [16, 128], strides = [1, 1]} : vector<16x256xbf16> to vector<16x128xbf16>
    %20 = vector.extract_strided_slice %16 {offsets = [0, 10], sizes = [16, 128], strides = [1, 1]} : vector<16x256xbf16> to vector<16x128xbf16>
    %21 = vector.extract_strided_slice %16 {offsets = [0, 11], sizes = [16, 128], strides = [1, 1]} : vector<16x256xbf16> to vector<16x128xbf16>
    %22 = vector.extract_strided_slice %16 {offsets = [0, 12], sizes = [16, 128], strides = [1, 1]} : vector<16x256xbf16> to vector<16x128xbf16>
    %23 = vector.extract_strided_slice %16 {offsets = [0, 20], sizes = [16, 128], strides = [1, 1]} : vector<16x256xbf16> to vector<16x128xbf16>
    %24 = vector.extract_strided_slice %16 {offsets = [0, 21], sizes = [16, 128], strides = [1, 1]} : vector<16x256xbf16> to vector<16x128xbf16>
    %25 = vector.extract_strided_slice %16 {offsets = [0, 22], sizes = [16, 128], strides = [1, 1]} : vector<16x256xbf16> to vector<16x128xbf16>
    %c2_i32 = arith.constant 2 : i32
    %26 = arith.addi %arg1, %c2_i32 : i32
    %c0_5 = arith.constant 0 : index
    %27 = arith.index_cast %26 : i32 to index
    %c0_6 = arith.constant 0 : index
    %c0_7 = arith.constant 0 : index
    %28 = vector.load %arg2[%c0_5, %27, %c0_6, %c0_7] : memref<1x10x16x256xbf16, #tpu.memory_space<vmem>>, vector<1x1x16x256xbf16>
    %29 = vector.shape_cast %28 : vector<1x1x16x256xbf16> to vector<16x256xbf16>
    %30 = vector.extract_strided_slice %29 {offsets = [0, 0], sizes = [16, 128], strides = [1, 1]} : vector<16x256xbf16> to vector<16x128xbf16>
    %31 = vector.extract_strided_slice %29 {offsets = [0, 1], sizes = [16, 128], strides = [1, 1]} : vector<16x256xbf16> to vector<16x128xbf16>
    %32 = vector.extract_strided_slice %29 {offsets = [0, 2], sizes = [16, 128], strides = [1, 1]} : vector<16x256xbf16> to vector<16x128xbf16>
    %33 = vector.extract_strided_slice %29 {offsets = [0, 10], sizes = [16, 128], strides = [1, 1]} : vector<16x256xbf16> to vector<16x128xbf16>
    %34 = vector.extract_strided_slice %29 {offsets = [0, 11], sizes = [16, 128], strides = [1, 1]} : vector<16x256xbf16> to vector<16x128xbf16>
    %35 = vector.extract_strided_slice %29 {offsets = [0, 12], sizes = [16, 128], strides = [1, 1]} : vector<16x256xbf16> to vector<16x128xbf16>
    %36 = vector.extract_strided_slice %29 {offsets = [0, 20], sizes = [16, 128], strides = [1, 1]} : vector<16x256xbf16> to vector<16x128xbf16>
    %37 = vector.extract_strided_slice %29 {offsets = [0, 21], sizes = [16, 128], strides = [1, 1]} : vector<16x256xbf16> to vector<16x128xbf16>
    %38 = vector.extract_strided_slice %29 {offsets = [0, 22], sizes = [16, 128], strides = [1, 1]} : vector<16x256xbf16> to vector<16x128xbf16>
    %39 = tpu.concatenate %4, %5, %6, %7, %8, %9, %10, %11, %12, %17, %18, %19, %20, %21, %22, %23 in 0 : vector<16x128xbf16>, vector<16x128xbf16>, vector<16x128xbf16>, vector<16x128xbf16>, vector<16x128xbf16>, vector<16x128xbf16>, vector<16x128xbf16>, vector<16x128xbf16>, vector<16x128xbf16>, vector<16x128xbf16>, vector<16x128xbf16>, vector<16x128xbf16>, vector<16x128xbf16>, vector<16x128xbf16>, vector<16x128xbf16>, vector<16x128xbf16> -> vector<256x128xbf16>
    %40 = tpu.concatenate %24, %25, %30, %31, %32, %33, %34, %35, %36, %37, %38 in 0 : vector<16x128xbf16>, vector<16x128xbf16>, vector<16x128xbf16>, vector<16x128xbf16>, vector<16x128xbf16>, vector<16x128xbf16>, vector<16x128xbf16>, vector<16x128xbf16>, vector<16x128xbf16>, vector<16x128xbf16>, vector<16x128xbf16> -> vector<176x128xbf16>
    %41 = tpu.concatenate %39, %40 in 0 : vector<256x128xbf16>, vector<176x128xbf16> -> vector<432x128xbf16>
    %c0_8 = arith.constant 0 : index
    %c0_9 = arith.constant 0 : index
    %42 = vector.load %arg3[%c0_8, %c0_9] : memref<16x432xbf16, #tpu.memory_space<vmem>>, vector<16x432xbf16>
    %cst = arith.constant dense<0.000000e+00> : vector<16x128xf32>
    %43 = tpu.matmul %42, %41, %cst {dimension_numbers = #tpu.dot_dimension_numbers<[1], [0], [0], [1], [0, 0, 1, 1], [], []>} : vector<16x432xbf16>, vector<432x128xbf16>, vector<16x128xf32> -> vector<16x128xf32>
    %c0_10 = arith.constant 0 : index
    %c0_11 = arith.constant 0 : index
    %44 = vector.load %arg4[%c0_10, %c0_11] : memref<16x1xf32, #tpu.memory_space<vmem>>, vector<16x1xf32>
    %45 = vector.broadcast %44 : vector<16x1xf32> to vector<16x128xf32>
    %46 = arith.addf %43, %45 : vector<16x128xf32>
    %cst_12 = arith.constant 0.000000e+00 : f32
    %47 = vector.broadcast %cst_12 : f32 to vector<16x128xf32>
    %48 = arith.maximumf %46, %47 : vector<16x128xf32>
    %49 = arith.truncf %48 : vector<16x128xf32> to vector<16x128xbf16>
    %c0_13 = arith.constant 0 : index
    %c0_14 = arith.constant 0 : index
    %c0_15 = arith.constant 0 : index
    %c0_16 = arith.constant 0 : index
    %50 = vector.load %arg5[%c0_13, %c0_14, %c0_15, %c0_16] : memref<1x1x16x128xbf16, #tpu.memory_space<vmem>>, vector<1x1x16x128xbf16>
    %51 = vector.shape_cast %50 : vector<1x1x16x128xbf16> to vector<16x128xbf16>
    %52 = vector.shape_cast %49 : vector<16x128xbf16> to vector<1x1x16x128xbf16>
    tpu.vector_store %arg5[%c0_13, %c0_14, %c0_15, %c0_16], %52 {strides = array<i32>} : memref<1x1x16x128xbf16, #tpu.memory_space<vmem>>, vector<1x1x16x128xbf16>,
    return
  }
  func.func @transform_0(%arg0: i32, %arg1: i32) -> (i32, i32, i32, i32) {
    %c0_i32 = arith.constant 0 : i32
    %c0_i32_0 = arith.constant 0 : i32
    %c0_i32_1 = arith.constant 0 : i32
    %c0_i32_2 = arith.constant 0 : i32
    return %arg0, %c0_i32, %c0_i32_0, %c0_i32_1 : i32, i32, i32, i32
  }
  func.func @transform_1(%arg0: i32, %arg1: i32) -> (i32, i32) {
    %c0_i32 = arith.constant 0 : i32
    %c0_i32_0 = arith.constant 0 : i32
    %c0_i32_1 = arith.constant 0 : i32
    return %c0_i32, %c0_i32_0 : i32, i32
  }
  func.func @transform_2(%arg0: i32, %arg1: i32) -> (i32, i32) {
    %c0_i32 = arith.constant 0 : i32
    %c0_i32_0 = arith.constant 0 : i32
    %c0_i32_1 = arith.constant 0 : i32
    return %c0_i32, %c0_i32_0 : i32, i32
  }
  func.func @transform_3(%arg0: i32, %arg1: i32) -> (i32, i32, i32, i32) {
    %c0_i32 = arith.constant 0 : i32
    %c0_i32_0 = arith.constant 0 : i32
    %c0_i32_1 = arith.constant 0 : i32
    return %arg0, %arg1, %c0_i32, %c0_i32_0 : i32, i32, i32, i32
  }
}

module attributes {stable_mosaic.version = 11 : i64} {
  func.func @_conv3x3_kernel(%arg0: i32, %arg1: i32, %arg2: memref<1x6x16x256xbf16, #tpu.memory_space<vmem>>, %arg3: memref<32x432xbf16, #tpu.memory_space<vmem>>, %arg4: memref<32x1xf32, #tpu.memory_space<vmem>>, %arg5: memref<1x1x32x128xbf16, #tpu.memory_space<vmem>>) attributes {dimension_semantics = [#tpu.dimension_semantics<parallel>, #tpu.dimension_semantics<parallel>], iteration_bounds = array<i64: 2, 4>, scalar_prefetch = 0 : i64, scratch_operands = 0 : i64, tpu.core_type = #tpu.core_type<tc>, window_params = [{transform_indices = @transform_0, window_bounds = array<i64: 1, 6, 16, 256>}, {pipeline_mode = #tpu.pipeline_mode<synchronous>, transform_indices = @transform_1, window_bounds = array<i64: 32, 432>}, {pipeline_mode = #tpu.pipeline_mode<synchronous>, transform_indices = @transform_2, window_bounds = array<i64: 32, 1>}, {transform_indices = @transform_3, window_bounds = array<i64: 1, 1, 32, 128>}]} {
    %c0_i32 = arith.constant 0 : i32
    %0 = arith.addi %arg1, %c0_i32 : i32
    %c0 = arith.constant 0 : index
    %1 = arith.index_cast %0 : i32 to index
    %c0_0 = arith.constant 0 : index
    %c0_1 = arith.constant 0 : index
    %2 = vector.load %arg2[%c0, %1, %c0_0, %c0_1] : memref<1x6x16x256xbf16, #tpu.memory_space<vmem>>, vector<1x1x16x256xbf16>
    %3 = vector.shape_cast %2 : vector<1x1x16x256xbf16> to vector<16x256xbf16>
    %4 = vector.extract_strided_slice %3 {offsets = [0, 0], sizes = [16, 128], strides = [1, 1]} : vector<16x256xbf16> to vector<16x128xbf16>
    %5 = vector.extract_strided_slice %3 {offsets = [0, 1], sizes = [16, 128], strides = [1, 1]} : vector<16x256xbf16> to vector<16x128xbf16>
    %6 = vector.extract_strided_slice %3 {offsets = [0, 2], sizes = [16, 128], strides = [1, 1]} : vector<16x256xbf16> to vector<16x128xbf16>
    %7 = vector.extract_strided_slice %3 {offsets = [0, 6], sizes = [16, 128], strides = [1, 1]} : vector<16x256xbf16> to vector<16x128xbf16>
    %8 = vector.extract_strided_slice %3 {offsets = [0, 7], sizes = [16, 128], strides = [1, 1]} : vector<16x256xbf16> to vector<16x128xbf16>
    %9 = vector.extract_strided_slice %3 {offsets = [0, 8], sizes = [16, 128], strides = [1, 1]} : vector<16x256xbf16> to vector<16x128xbf16>
    %10 = vector.extract_strided_slice %3 {offsets = [0, 12], sizes = [16, 128], strides = [1, 1]} : vector<16x256xbf16> to vector<16x128xbf16>
    %11 = vector.extract_strided_slice %3 {offsets = [0, 13], sizes = [16, 128], strides = [1, 1]} : vector<16x256xbf16> to vector<16x128xbf16>
    %12 = vector.extract_strided_slice %3 {offsets = [0, 14], sizes = [16, 128], strides = [1, 1]} : vector<16x256xbf16> to vector<16x128xbf16>
    %c1_i32 = arith.constant 1 : i32
    %13 = arith.addi %arg1, %c1_i32 : i32
    %c0_2 = arith.constant 0 : index
    %14 = arith.index_cast %13 : i32 to index
    %c0_3 = arith.constant 0 : index
    %c0_4 = arith.constant 0 : index
    %15 = vector.load %arg2[%c0_2, %14, %c0_3, %c0_4] : memref<1x6x16x256xbf16, #tpu.memory_space<vmem>>, vector<1x1x16x256xbf16>
    %16 = vector.shape_cast %15 : vector<1x1x16x256xbf16> to vector<16x256xbf16>
    %17 = vector.extract_strided_slice %16 {offsets = [0, 0], sizes = [16, 128], strides = [1, 1]} : vector<16x256xbf16> to vector<16x128xbf16>
    %18 = vector.extract_strided_slice %16 {offsets = [0, 1], sizes = [16, 128], strides = [1, 1]} : vector<16x256xbf16> to vector<16x128xbf16>
    %19 = vector.extract_strided_slice %16 {offsets = [0, 2], sizes = [16, 128], strides = [1, 1]} : vector<16x256xbf16> to vector<16x128xbf16>
    %20 = vector.extract_strided_slice %16 {offsets = [0, 6], sizes = [16, 128], strides = [1, 1]} : vector<16x256xbf16> to vector<16x128xbf16>
    %21 = vector.extract_strided_slice %16 {offsets = [0, 7], sizes = [16, 128], strides = [1, 1]} : vector<16x256xbf16> to vector<16x128xbf16>
    %22 = vector.extract_strided_slice %16 {offsets = [0, 8], sizes = [16, 128], strides = [1, 1]} : vector<16x256xbf16> to vector<16x128xbf16>
    %23 = vector.extract_strided_slice %16 {offsets = [0, 12], sizes = [16, 128], strides = [1, 1]} : vector<16x256xbf16> to vector<16x128xbf16>
    %24 = vector.extract_strided_slice %16 {offsets = [0, 13], sizes = [16, 128], strides = [1, 1]} : vector<16x256xbf16> to vector<16x128xbf16>
    %25 = vector.extract_strided_slice %16 {offsets = [0, 14], sizes = [16, 128], strides = [1, 1]} : vector<16x256xbf16> to vector<16x128xbf16>
    %c2_i32 = arith.constant 2 : i32
    %26 = arith.addi %arg1, %c2_i32 : i32
    %c0_5 = arith.constant 0 : index
    %27 = arith.index_cast %26 : i32 to index
    %c0_6 = arith.constant 0 : index
    %c0_7 = arith.constant 0 : index
    %28 = vector.load %arg2[%c0_5, %27, %c0_6, %c0_7] : memref<1x6x16x256xbf16, #tpu.memory_space<vmem>>, vector<1x1x16x256xbf16>
    %29 = vector.shape_cast %28 : vector<1x1x16x256xbf16> to vector<16x256xbf16>
    %30 = vector.extract_strided_slice %29 {offsets = [0, 0], sizes = [16, 128], strides = [1, 1]} : vector<16x256xbf16> to vector<16x128xbf16>
    %31 = vector.extract_strided_slice %29 {offsets = [0, 1], sizes = [16, 128], strides = [1, 1]} : vector<16x256xbf16> to vector<16x128xbf16>
    %32 = vector.extract_strided_slice %29 {offsets = [0, 2], sizes = [16, 128], strides = [1, 1]} : vector<16x256xbf16> to vector<16x128xbf16>
    %33 = vector.extract_strided_slice %29 {offsets = [0, 6], sizes = [16, 128], strides = [1, 1]} : vector<16x256xbf16> to vector<16x128xbf16>
    %34 = vector.extract_strided_slice %29 {offsets = [0, 7], sizes = [16, 128], strides = [1, 1]} : vector<16x256xbf16> to vector<16x128xbf16>
    %35 = vector.extract_strided_slice %29 {offsets = [0, 8], sizes = [16, 128], strides = [1, 1]} : vector<16x256xbf16> to vector<16x128xbf16>
    %36 = vector.extract_strided_slice %29 {offsets = [0, 12], sizes = [16, 128], strides = [1, 1]} : vector<16x256xbf16> to vector<16x128xbf16>
    %37 = vector.extract_strided_slice %29 {offsets = [0, 13], sizes = [16, 128], strides = [1, 1]} : vector<16x256xbf16> to vector<16x128xbf16>
    %38 = vector.extract_strided_slice %29 {offsets = [0, 14], sizes = [16, 128], strides = [1, 1]} : vector<16x256xbf16> to vector<16x128xbf16>
    %39 = tpu.concatenate %4, %5, %6, %7, %8, %9, %10, %11, %12, %17, %18, %19, %20, %21, %22, %23 in 0 : vector<16x128xbf16>, vector<16x128xbf16>, vector<16x128xbf16>, vector<16x128xbf16>, vector<16x128xbf16>, vector<16x128xbf16>, vector<16x128xbf16>, vector<16x128xbf16>, vector<16x128xbf16>, vector<16x128xbf16>, vector<16x128xbf16>, vector<16x128xbf16>, vector<16x128xbf16>, vector<16x128xbf16>, vector<16x128xbf16>, vector<16x128xbf16> -> vector<256x128xbf16>
    %40 = tpu.concatenate %24, %25, %30, %31, %32, %33, %34, %35, %36, %37, %38 in 0 : vector<16x128xbf16>, vector<16x128xbf16>, vector<16x128xbf16>, vector<16x128xbf16>, vector<16x128xbf16>, vector<16x128xbf16>, vector<16x128xbf16>, vector<16x128xbf16>, vector<16x128xbf16>, vector<16x128xbf16>, vector<16x128xbf16> -> vector<176x128xbf16>
    %41 = tpu.concatenate %39, %40 in 0 : vector<256x128xbf16>, vector<176x128xbf16> -> vector<432x128xbf16>
    %c0_8 = arith.constant 0 : index
    %c0_9 = arith.constant 0 : index
    %42 = vector.load %arg3[%c0_8, %c0_9] : memref<32x432xbf16, #tpu.memory_space<vmem>>, vector<32x432xbf16>
    %cst = arith.constant dense<0.000000e+00> : vector<32x128xf32>
    %43 = tpu.matmul %42, %41, %cst {dimension_numbers = #tpu.dot_dimension_numbers<[1], [0], [0], [1], [0, 0, 1, 1], [], []>} : vector<32x432xbf16>, vector<432x128xbf16>, vector<32x128xf32> -> vector<32x128xf32>
    %c0_10 = arith.constant 0 : index
    %c0_11 = arith.constant 0 : index
    %44 = vector.load %arg4[%c0_10, %c0_11] : memref<32x1xf32, #tpu.memory_space<vmem>>, vector<32x1xf32>
    %45 = vector.broadcast %44 : vector<32x1xf32> to vector<32x128xf32>
    %46 = arith.addf %43, %45 : vector<32x128xf32>
    %cst_12 = arith.constant 0.000000e+00 : f32
    %47 = vector.broadcast %cst_12 : f32 to vector<32x128xf32>
    %48 = arith.maximumf %46, %47 : vector<32x128xf32>
    %49 = arith.truncf %48 : vector<32x128xf32> to vector<32x128xbf16>
    %c0_13 = arith.constant 0 : index
    %c0_14 = arith.constant 0 : index
    %c0_15 = arith.constant 0 : index
    %c0_16 = arith.constant 0 : index
    %50 = vector.load %arg5[%c0_13, %c0_14, %c0_15, %c0_16] : memref<1x1x32x128xbf16, #tpu.memory_space<vmem>>, vector<1x1x32x128xbf16>
    %51 = vector.shape_cast %50 : vector<1x1x32x128xbf16> to vector<32x128xbf16>
    %52 = vector.shape_cast %49 : vector<32x128xbf16> to vector<1x1x32x128xbf16>
    tpu.vector_store %arg5[%c0_13, %c0_14, %c0_15, %c0_16], %52 {strides = array<i32>} : memref<1x1x32x128xbf16, #tpu.memory_space<vmem>>, vector<1x1x32x128xbf16>,
    return
  }
  func.func @transform_0(%arg0: i32, %arg1: i32) -> (i32, i32, i32, i32) {
    %c0_i32 = arith.constant 0 : i32
    %c0_i32_0 = arith.constant 0 : i32
    %c0_i32_1 = arith.constant 0 : i32
    %c0_i32_2 = arith.constant 0 : i32
    return %arg0, %c0_i32, %c0_i32_0, %c0_i32_1 : i32, i32, i32, i32
  }
  func.func @transform_1(%arg0: i32, %arg1: i32) -> (i32, i32) {
    %c0_i32 = arith.constant 0 : i32
    %c0_i32_0 = arith.constant 0 : i32
    %c0_i32_1 = arith.constant 0 : i32
    return %c0_i32, %c0_i32_0 : i32, i32
  }
  func.func @transform_2(%arg0: i32, %arg1: i32) -> (i32, i32) {
    %c0_i32 = arith.constant 0 : i32
    %c0_i32_0 = arith.constant 0 : i32
    %c0_i32_1 = arith.constant 0 : i32
    return %c0_i32, %c0_i32_0 : i32, i32
  }
  func.func @transform_3(%arg0: i32, %arg1: i32) -> (i32, i32, i32, i32) {
    %c0_i32 = arith.constant 0 : i32
    %c0_i32_0 = arith.constant 0 : i32
    %c0_i32_1 = arith.constant 0 : i32
    return %arg0, %arg1, %c0_i32, %c0_i32_0 : i32, i32, i32, i32
  }
}

module attributes {stable_mosaic.version = 11 : i64} {
  func.func @_conv3x3_kernel(%arg0: i32, %arg1: i32, %arg2: memref<1x6x32x256xbf16, #tpu.memory_space<vmem>>, %arg3: memref<16x864xbf16, #tpu.memory_space<vmem>>, %arg4: memref<16x1xf32, #tpu.memory_space<vmem>>, %arg5: memref<1x1x16x128xbf16, #tpu.memory_space<vmem>>) attributes {dimension_semantics = [#tpu.dimension_semantics<parallel>, #tpu.dimension_semantics<parallel>], iteration_bounds = array<i64: 2, 4>, scalar_prefetch = 0 : i64, scratch_operands = 0 : i64, tpu.core_type = #tpu.core_type<tc>, window_params = [{transform_indices = @transform_0, window_bounds = array<i64: 1, 6, 32, 256>}, {pipeline_mode = #tpu.pipeline_mode<synchronous>, transform_indices = @transform_1, window_bounds = array<i64: 16, 864>}, {pipeline_mode = #tpu.pipeline_mode<synchronous>, transform_indices = @transform_2, window_bounds = array<i64: 16, 1>}, {transform_indices = @transform_3, window_bounds = array<i64: 1, 1, 16, 128>}]} {
    %c0_i32 = arith.constant 0 : i32
    %0 = arith.addi %arg1, %c0_i32 : i32
    %c0 = arith.constant 0 : index
    %1 = arith.index_cast %0 : i32 to index
    %c0_0 = arith.constant 0 : index
    %c0_1 = arith.constant 0 : index
    %2 = vector.load %arg2[%c0, %1, %c0_0, %c0_1] : memref<1x6x32x256xbf16, #tpu.memory_space<vmem>>, vector<1x1x32x256xbf16>
    %3 = vector.shape_cast %2 : vector<1x1x32x256xbf16> to vector<32x256xbf16>
    %4 = vector.extract_strided_slice %3 {offsets = [0, 0], sizes = [32, 128], strides = [1, 1]} : vector<32x256xbf16> to vector<32x128xbf16>
    %5 = vector.extract_strided_slice %3 {offsets = [0, 1], sizes = [32, 128], strides = [1, 1]} : vector<32x256xbf16> to vector<32x128xbf16>
    %6 = vector.extract_strided_slice %3 {offsets = [0, 2], sizes = [32, 128], strides = [1, 1]} : vector<32x256xbf16> to vector<32x128xbf16>
    %7 = vector.extract_strided_slice %3 {offsets = [0, 6], sizes = [32, 128], strides = [1, 1]} : vector<32x256xbf16> to vector<32x128xbf16>
    %8 = vector.extract_strided_slice %3 {offsets = [0, 7], sizes = [32, 128], strides = [1, 1]} : vector<32x256xbf16> to vector<32x128xbf16>
    %9 = vector.extract_strided_slice %3 {offsets = [0, 8], sizes = [32, 128], strides = [1, 1]} : vector<32x256xbf16> to vector<32x128xbf16>
    %10 = vector.extract_strided_slice %3 {offsets = [0, 12], sizes = [32, 128], strides = [1, 1]} : vector<32x256xbf16> to vector<32x128xbf16>
    %11 = vector.extract_strided_slice %3 {offsets = [0, 13], sizes = [32, 128], strides = [1, 1]} : vector<32x256xbf16> to vector<32x128xbf16>
    %12 = vector.extract_strided_slice %3 {offsets = [0, 14], sizes = [32, 128], strides = [1, 1]} : vector<32x256xbf16> to vector<32x128xbf16>
    %c1_i32 = arith.constant 1 : i32
    %13 = arith.addi %arg1, %c1_i32 : i32
    %c0_2 = arith.constant 0 : index
    %14 = arith.index_cast %13 : i32 to index
    %c0_3 = arith.constant 0 : index
    %c0_4 = arith.constant 0 : index
    %15 = vector.load %arg2[%c0_2, %14, %c0_3, %c0_4] : memref<1x6x32x256xbf16, #tpu.memory_space<vmem>>, vector<1x1x32x256xbf16>
    %16 = vector.shape_cast %15 : vector<1x1x32x256xbf16> to vector<32x256xbf16>
    %17 = vector.extract_strided_slice %16 {offsets = [0, 0], sizes = [32, 128], strides = [1, 1]} : vector<32x256xbf16> to vector<32x128xbf16>
    %18 = vector.extract_strided_slice %16 {offsets = [0, 1], sizes = [32, 128], strides = [1, 1]} : vector<32x256xbf16> to vector<32x128xbf16>
    %19 = vector.extract_strided_slice %16 {offsets = [0, 2], sizes = [32, 128], strides = [1, 1]} : vector<32x256xbf16> to vector<32x128xbf16>
    %20 = vector.extract_strided_slice %16 {offsets = [0, 6], sizes = [32, 128], strides = [1, 1]} : vector<32x256xbf16> to vector<32x128xbf16>
    %21 = vector.extract_strided_slice %16 {offsets = [0, 7], sizes = [32, 128], strides = [1, 1]} : vector<32x256xbf16> to vector<32x128xbf16>
    %22 = vector.extract_strided_slice %16 {offsets = [0, 8], sizes = [32, 128], strides = [1, 1]} : vector<32x256xbf16> to vector<32x128xbf16>
    %23 = vector.extract_strided_slice %16 {offsets = [0, 12], sizes = [32, 128], strides = [1, 1]} : vector<32x256xbf16> to vector<32x128xbf16>
    %24 = vector.extract_strided_slice %16 {offsets = [0, 13], sizes = [32, 128], strides = [1, 1]} : vector<32x256xbf16> to vector<32x128xbf16>
    %25 = vector.extract_strided_slice %16 {offsets = [0, 14], sizes = [32, 128], strides = [1, 1]} : vector<32x256xbf16> to vector<32x128xbf16>
    %c2_i32 = arith.constant 2 : i32
    %26 = arith.addi %arg1, %c2_i32 : i32
    %c0_5 = arith.constant 0 : index
    %27 = arith.index_cast %26 : i32 to index
    %c0_6 = arith.constant 0 : index
    %c0_7 = arith.constant 0 : index
    %28 = vector.load %arg2[%c0_5, %27, %c0_6, %c0_7] : memref<1x6x32x256xbf16, #tpu.memory_space<vmem>>, vector<1x1x32x256xbf16>
    %29 = vector.shape_cast %28 : vector<1x1x32x256xbf16> to vector<32x256xbf16>
    %30 = vector.extract_strided_slice %29 {offsets = [0, 0], sizes = [32, 128], strides = [1, 1]} : vector<32x256xbf16> to vector<32x128xbf16>
    %31 = vector.extract_strided_slice %29 {offsets = [0, 1], sizes = [32, 128], strides = [1, 1]} : vector<32x256xbf16> to vector<32x128xbf16>
    %32 = vector.extract_strided_slice %29 {offsets = [0, 2], sizes = [32, 128], strides = [1, 1]} : vector<32x256xbf16> to vector<32x128xbf16>
    %33 = vector.extract_strided_slice %29 {offsets = [0, 6], sizes = [32, 128], strides = [1, 1]} : vector<32x256xbf16> to vector<32x128xbf16>
    %34 = vector.extract_strided_slice %29 {offsets = [0, 7], sizes = [32, 128], strides = [1, 1]} : vector<32x256xbf16> to vector<32x128xbf16>
    %35 = vector.extract_strided_slice %29 {offsets = [0, 8], sizes = [32, 128], strides = [1, 1]} : vector<32x256xbf16> to vector<32x128xbf16>
    %36 = vector.extract_strided_slice %29 {offsets = [0, 12], sizes = [32, 128], strides = [1, 1]} : vector<32x256xbf16> to vector<32x128xbf16>
    %37 = vector.extract_strided_slice %29 {offsets = [0, 13], sizes = [32, 128], strides = [1, 1]} : vector<32x256xbf16> to vector<32x128xbf16>
    %38 = vector.extract_strided_slice %29 {offsets = [0, 14], sizes = [32, 128], strides = [1, 1]} : vector<32x256xbf16> to vector<32x128xbf16>
    %39 = tpu.concatenate %4, %5, %6, %7, %8, %9, %10, %11, %12, %17, %18, %19, %20, %21, %22, %23 in 0 : vector<32x128xbf16>, vector<32x128xbf16>, vector<32x128xbf16>, vector<32x128xbf16>, vector<32x128xbf16>, vector<32x128xbf16>, vector<32x128xbf16>, vector<32x128xbf16>, vector<32x128xbf16>, vector<32x128xbf16>, vector<32x128xbf16>, vector<32x128xbf16>, vector<32x128xbf16>, vector<32x128xbf16>, vector<32x128xbf16>, vector<32x128xbf16> -> vector<512x128xbf16>
    %40 = tpu.concatenate %24, %25, %30, %31, %32, %33, %34, %35, %36, %37, %38 in 0 : vector<32x128xbf16>, vector<32x128xbf16>, vector<32x128xbf16>, vector<32x128xbf16>, vector<32x128xbf16>, vector<32x128xbf16>, vector<32x128xbf16>, vector<32x128xbf16>, vector<32x128xbf16>, vector<32x128xbf16>, vector<32x128xbf16> -> vector<352x128xbf16>
    %41 = tpu.concatenate %39, %40 in 0 : vector<512x128xbf16>, vector<352x128xbf16> -> vector<864x128xbf16>
    %c0_8 = arith.constant 0 : index
    %c0_9 = arith.constant 0 : index
    %42 = vector.load %arg3[%c0_8, %c0_9] : memref<16x864xbf16, #tpu.memory_space<vmem>>, vector<16x864xbf16>
    %cst = arith.constant dense<0.000000e+00> : vector<16x128xf32>
    %43 = tpu.matmul %42, %41, %cst {dimension_numbers = #tpu.dot_dimension_numbers<[1], [0], [0], [1], [0, 0, 1, 1], [], []>} : vector<16x864xbf16>, vector<864x128xbf16>, vector<16x128xf32> -> vector<16x128xf32>
    %c0_10 = arith.constant 0 : index
    %c0_11 = arith.constant 0 : index
    %44 = vector.load %arg4[%c0_10, %c0_11] : memref<16x1xf32, #tpu.memory_space<vmem>>, vector<16x1xf32>
    %45 = vector.broadcast %44 : vector<16x1xf32> to vector<16x128xf32>
    %46 = arith.addf %43, %45 : vector<16x128xf32>
    %cst_12 = arith.constant 0.000000e+00 : f32
    %47 = vector.broadcast %cst_12 : f32 to vector<16x128xf32>
    %48 = arith.maximumf %46, %47 : vector<16x128xf32>
    %49 = arith.truncf %48 : vector<16x128xf32> to vector<16x128xbf16>
    %c0_13 = arith.constant 0 : index
    %c0_14 = arith.constant 0 : index
    %c0_15 = arith.constant 0 : index
    %c0_16 = arith.constant 0 : index
    %50 = vector.load %arg5[%c0_13, %c0_14, %c0_15, %c0_16] : memref<1x1x16x128xbf16, #tpu.memory_space<vmem>>, vector<1x1x16x128xbf16>
    %51 = vector.shape_cast %50 : vector<1x1x16x128xbf16> to vector<16x128xbf16>
    %52 = vector.shape_cast %49 : vector<16x128xbf16> to vector<1x1x16x128xbf16>
    tpu.vector_store %arg5[%c0_13, %c0_14, %c0_15, %c0_16], %52 {strides = array<i32>} : memref<1x1x16x128xbf16, #tpu.memory_space<vmem>>, vector<1x1x16x128xbf16>,
    return
  }
  func.func @transform_0(%arg0: i32, %arg1: i32) -> (i32, i32, i32, i32) {
    %c0_i32 = arith.constant 0 : i32
    %c0_i32_0 = arith.constant 0 : i32
    %c0_i32_1 = arith.constant 0 : i32
    %c0_i32_2 = arith.constant 0 : i32
    return %arg0, %c0_i32, %c0_i32_0, %c0_i32_1 : i32, i32, i32, i32
  }
  func.func @transform_1(%arg0: i32, %arg1: i32) -> (i32, i32) {
    %c0_i32 = arith.constant 0 : i32
    %c0_i32_0 = arith.constant 0 : i32
    %c0_i32_1 = arith.constant 0 : i32
    return %c0_i32, %c0_i32_0 : i32, i32
  }
  func.func @transform_2(%arg0: i32, %arg1: i32) -> (i32, i32) {
    %c0_i32 = arith.constant 0 : i32
    %c0_i32_0 = arith.constant 0 : i32
    %c0_i32_1 = arith.constant 0 : i32
    return %c0_i32, %c0_i32_0 : i32, i32
  }
  func.func @transform_3(%arg0: i32, %arg1: i32) -> (i32, i32, i32, i32) {
    %c0_i32 = arith.constant 0 : i32
    %c0_i32_0 = arith.constant 0 : i32
    %c0_i32_1 = arith.constant 0 : i32
    return %arg0, %arg1, %c0_i32, %c0_i32_0 : i32, i32, i32, i32
  }
}

module attributes {stable_mosaic.version = 11 : i64} {
  func.func @_conv3x3_kernel(%arg0: i32, %arg1: i32, %arg2: memref<1x10x32x256xbf16, #tpu.memory_space<vmem>>, %arg3: memref<8x864xbf16, #tpu.memory_space<vmem>>, %arg4: memref<8x1xf32, #tpu.memory_space<vmem>>, %arg5: memref<1x1x8x128xbf16, #tpu.memory_space<vmem>>) attributes {dimension_semantics = [#tpu.dimension_semantics<parallel>, #tpu.dimension_semantics<parallel>], iteration_bounds = array<i64: 2, 8>, scalar_prefetch = 0 : i64, scratch_operands = 0 : i64, tpu.core_type = #tpu.core_type<tc>, window_params = [{transform_indices = @transform_0, window_bounds = array<i64: 1, 10, 32, 256>}, {pipeline_mode = #tpu.pipeline_mode<synchronous>, transform_indices = @transform_1, window_bounds = array<i64: 8, 864>}, {pipeline_mode = #tpu.pipeline_mode<synchronous>, transform_indices = @transform_2, window_bounds = array<i64: 8, 1>}, {transform_indices = @transform_3, window_bounds = array<i64: 1, 1, 8, 128>}]} {
    %c0_i32 = arith.constant 0 : i32
    %0 = arith.addi %arg1, %c0_i32 : i32
    %c0 = arith.constant 0 : index
    %1 = arith.index_cast %0 : i32 to index
    %c0_0 = arith.constant 0 : index
    %c0_1 = arith.constant 0 : index
    %2 = vector.load %arg2[%c0, %1, %c0_0, %c0_1] : memref<1x10x32x256xbf16, #tpu.memory_space<vmem>>, vector<1x1x32x256xbf16>
    %3 = vector.shape_cast %2 : vector<1x1x32x256xbf16> to vector<32x256xbf16>
    %4 = vector.extract_strided_slice %3 {offsets = [0, 0], sizes = [32, 128], strides = [1, 1]} : vector<32x256xbf16> to vector<32x128xbf16>
    %5 = vector.extract_strided_slice %3 {offsets = [0, 1], sizes = [32, 128], strides = [1, 1]} : vector<32x256xbf16> to vector<32x128xbf16>
    %6 = vector.extract_strided_slice %3 {offsets = [0, 2], sizes = [32, 128], strides = [1, 1]} : vector<32x256xbf16> to vector<32x128xbf16>
    %7 = vector.extract_strided_slice %3 {offsets = [0, 10], sizes = [32, 128], strides = [1, 1]} : vector<32x256xbf16> to vector<32x128xbf16>
    %8 = vector.extract_strided_slice %3 {offsets = [0, 11], sizes = [32, 128], strides = [1, 1]} : vector<32x256xbf16> to vector<32x128xbf16>
    %9 = vector.extract_strided_slice %3 {offsets = [0, 12], sizes = [32, 128], strides = [1, 1]} : vector<32x256xbf16> to vector<32x128xbf16>
    %10 = vector.extract_strided_slice %3 {offsets = [0, 20], sizes = [32, 128], strides = [1, 1]} : vector<32x256xbf16> to vector<32x128xbf16>
    %11 = vector.extract_strided_slice %3 {offsets = [0, 21], sizes = [32, 128], strides = [1, 1]} : vector<32x256xbf16> to vector<32x128xbf16>
    %12 = vector.extract_strided_slice %3 {offsets = [0, 22], sizes = [32, 128], strides = [1, 1]} : vector<32x256xbf16> to vector<32x128xbf16>
    %c1_i32 = arith.constant 1 : i32
    %13 = arith.addi %arg1, %c1_i32 : i32
    %c0_2 = arith.constant 0 : index
    %14 = arith.index_cast %13 : i32 to index
    %c0_3 = arith.constant 0 : index
    %c0_4 = arith.constant 0 : index
    %15 = vector.load %arg2[%c0_2, %14, %c0_3, %c0_4] : memref<1x10x32x256xbf16, #tpu.memory_space<vmem>>, vector<1x1x32x256xbf16>
    %16 = vector.shape_cast %15 : vector<1x1x32x256xbf16> to vector<32x256xbf16>
    %17 = vector.extract_strided_slice %16 {offsets = [0, 0], sizes = [32, 128], strides = [1, 1]} : vector<32x256xbf16> to vector<32x128xbf16>
    %18 = vector.extract_strided_slice %16 {offsets = [0, 1], sizes = [32, 128], strides = [1, 1]} : vector<32x256xbf16> to vector<32x128xbf16>
    %19 = vector.extract_strided_slice %16 {offsets = [0, 2], sizes = [32, 128], strides = [1, 1]} : vector<32x256xbf16> to vector<32x128xbf16>
    %20 = vector.extract_strided_slice %16 {offsets = [0, 10], sizes = [32, 128], strides = [1, 1]} : vector<32x256xbf16> to vector<32x128xbf16>
    %21 = vector.extract_strided_slice %16 {offsets = [0, 11], sizes = [32, 128], strides = [1, 1]} : vector<32x256xbf16> to vector<32x128xbf16>
    %22 = vector.extract_strided_slice %16 {offsets = [0, 12], sizes = [32, 128], strides = [1, 1]} : vector<32x256xbf16> to vector<32x128xbf16>
    %23 = vector.extract_strided_slice %16 {offsets = [0, 20], sizes = [32, 128], strides = [1, 1]} : vector<32x256xbf16> to vector<32x128xbf16>
    %24 = vector.extract_strided_slice %16 {offsets = [0, 21], sizes = [32, 128], strides = [1, 1]} : vector<32x256xbf16> to vector<32x128xbf16>
    %25 = vector.extract_strided_slice %16 {offsets = [0, 22], sizes = [32, 128], strides = [1, 1]} : vector<32x256xbf16> to vector<32x128xbf16>
    %c2_i32 = arith.constant 2 : i32
    %26 = arith.addi %arg1, %c2_i32 : i32
    %c0_5 = arith.constant 0 : index
    %27 = arith.index_cast %26 : i32 to index
    %c0_6 = arith.constant 0 : index
    %c0_7 = arith.constant 0 : index
    %28 = vector.load %arg2[%c0_5, %27, %c0_6, %c0_7] : memref<1x10x32x256xbf16, #tpu.memory_space<vmem>>, vector<1x1x32x256xbf16>
    %29 = vector.shape_cast %28 : vector<1x1x32x256xbf16> to vector<32x256xbf16>
    %30 = vector.extract_strided_slice %29 {offsets = [0, 0], sizes = [32, 128], strides = [1, 1]} : vector<32x256xbf16> to vector<32x128xbf16>
    %31 = vector.extract_strided_slice %29 {offsets = [0, 1], sizes = [32, 128], strides = [1, 1]} : vector<32x256xbf16> to vector<32x128xbf16>
    %32 = vector.extract_strided_slice %29 {offsets = [0, 2], sizes = [32, 128], strides = [1, 1]} : vector<32x256xbf16> to vector<32x128xbf16>
    %33 = vector.extract_strided_slice %29 {offsets = [0, 10], sizes = [32, 128], strides = [1, 1]} : vector<32x256xbf16> to vector<32x128xbf16>
    %34 = vector.extract_strided_slice %29 {offsets = [0, 11], sizes = [32, 128], strides = [1, 1]} : vector<32x256xbf16> to vector<32x128xbf16>
    %35 = vector.extract_strided_slice %29 {offsets = [0, 12], sizes = [32, 128], strides = [1, 1]} : vector<32x256xbf16> to vector<32x128xbf16>
    %36 = vector.extract_strided_slice %29 {offsets = [0, 20], sizes = [32, 128], strides = [1, 1]} : vector<32x256xbf16> to vector<32x128xbf16>
    %37 = vector.extract_strided_slice %29 {offsets = [0, 21], sizes = [32, 128], strides = [1, 1]} : vector<32x256xbf16> to vector<32x128xbf16>
    %38 = vector.extract_strided_slice %29 {offsets = [0, 22], sizes = [32, 128], strides = [1, 1]} : vector<32x256xbf16> to vector<32x128xbf16>
    %39 = tpu.concatenate %4, %5, %6, %7, %8, %9, %10, %11, %12, %17, %18, %19, %20, %21, %22, %23 in 0 : vector<32x128xbf16>, vector<32x128xbf16>, vector<32x128xbf16>, vector<32x128xbf16>, vector<32x128xbf16>, vector<32x128xbf16>, vector<32x128xbf16>, vector<32x128xbf16>, vector<32x128xbf16>, vector<32x128xbf16>, vector<32x128xbf16>, vector<32x128xbf16>, vector<32x128xbf16>, vector<32x128xbf16>, vector<32x128xbf16>, vector<32x128xbf16> -> vector<512x128xbf16>
    %40 = tpu.concatenate %24, %25, %30, %31, %32, %33, %34, %35, %36, %37, %38 in 0 : vector<32x128xbf16>, vector<32x128xbf16>, vector<32x128xbf16>, vector<32x128xbf16>, vector<32x128xbf16>, vector<32x128xbf16>, vector<32x128xbf16>, vector<32x128xbf16>, vector<32x128xbf16>, vector<32x128xbf16>, vector<32x128xbf16> -> vector<352x128xbf16>
    %41 = tpu.concatenate %39, %40 in 0 : vector<512x128xbf16>, vector<352x128xbf16> -> vector<864x128xbf16>
    %c0_8 = arith.constant 0 : index
    %c0_9 = arith.constant 0 : index
    %42 = vector.load %arg3[%c0_8, %c0_9] : memref<8x864xbf16, #tpu.memory_space<vmem>>, vector<8x864xbf16>
    %cst = arith.constant dense<0.000000e+00> : vector<8x128xf32>
    %43 = tpu.matmul %42, %41, %cst {dimension_numbers = #tpu.dot_dimension_numbers<[1], [0], [0], [1], [0, 0, 1, 1], [], []>} : vector<8x864xbf16>, vector<864x128xbf16>, vector<8x128xf32> -> vector<8x128xf32>
    %c0_10 = arith.constant 0 : index
    %c0_11 = arith.constant 0 : index
    %44 = vector.load %arg4[%c0_10, %c0_11] : memref<8x1xf32, #tpu.memory_space<vmem>>, vector<8x1xf32>
    %45 = vector.broadcast %44 : vector<8x1xf32> to vector<8x128xf32>
    %46 = arith.addf %43, %45 : vector<8x128xf32>
    %cst_12 = arith.constant 0.000000e+00 : f32
    %47 = vector.broadcast %cst_12 : f32 to vector<8x128xf32>
    %48 = arith.maximumf %46, %47 : vector<8x128xf32>
    %49 = arith.truncf %48 : vector<8x128xf32> to vector<8x128xbf16>
    %c0_13 = arith.constant 0 : index
    %c0_14 = arith.constant 0 : index
    %c0_15 = arith.constant 0 : index
    %c0_16 = arith.constant 0 : index
    %50 = vector.load %arg5[%c0_13, %c0_14, %c0_15, %c0_16] : memref<1x1x8x128xbf16, #tpu.memory_space<vmem>>, vector<1x1x8x128xbf16>
    %51 = vector.shape_cast %50 : vector<1x1x8x128xbf16> to vector<8x128xbf16>
    %52 = vector.shape_cast %49 : vector<8x128xbf16> to vector<1x1x8x128xbf16>
    tpu.vector_store %arg5[%c0_13, %c0_14, %c0_15, %c0_16], %52 {strides = array<i32>} : memref<1x1x8x128xbf16, #tpu.memory_space<vmem>>, vector<1x1x8x128xbf16>,
    return
  }
  func.func @transform_0(%arg0: i32, %arg1: i32) -> (i32, i32, i32, i32) {
    %c0_i32 = arith.constant 0 : i32
    %c0_i32_0 = arith.constant 0 : i32
    %c0_i32_1 = arith.constant 0 : i32
    %c0_i32_2 = arith.constant 0 : i32
    return %arg0, %c0_i32, %c0_i32_0, %c0_i32_1 : i32, i32, i32, i32
  }
  func.func @transform_1(%arg0: i32, %arg1: i32) -> (i32, i32) {
    %c0_i32 = arith.constant 0 : i32
    %c0_i32_0 = arith.constant 0 : i32
    %c0_i32_1 = arith.constant 0 : i32
    return %c0_i32, %c0_i32_0 : i32, i32
  }
  func.func @transform_2(%arg0: i32, %arg1: i32) -> (i32, i32) {
    %c0_i32 = arith.constant 0 : i32
    %c0_i32_0 = arith.constant 0 : i32
    %c0_i32_1 = arith.constant 0 : i32
    return %c0_i32, %c0_i32_0 : i32, i32
  }
  func.func @transform_3(%arg0: i32, %arg1: i32) -> (i32, i32, i32, i32) {
    %c0_i32 = arith.constant 0 : i32
    %c0_i32_0 = arith.constant 0 : i32
    %c0_i32_1 = arith.constant 0 : i32
    return %arg0, %arg1, %c0_i32, %c0_i32_0 : i32, i32, i32, i32
  }
}

module attributes {stable_mosaic.version = 11 : i64} {
  func.func @_conv3x3_kernel(%arg0: i32, %arg1: i32, %arg2: memref<1x10x32x256xbf16, #tpu.memory_space<vmem>>, %arg3: memref<6x864xbf16, #tpu.memory_space<vmem>>, %arg4: memref<6x1xf32, #tpu.memory_space<vmem>>, %arg5: memref<1x1x6x128xbf16, #tpu.memory_space<vmem>>) attributes {dimension_semantics = [#tpu.dimension_semantics<parallel>, #tpu.dimension_semantics<parallel>], iteration_bounds = array<i64: 2, 8>, scalar_prefetch = 0 : i64, scratch_operands = 0 : i64, tpu.core_type = #tpu.core_type<tc>, window_params = [{transform_indices = @transform_0, window_bounds = array<i64: 1, 10, 32, 256>}, {pipeline_mode = #tpu.pipeline_mode<synchronous>, transform_indices = @transform_1, window_bounds = array<i64: 6, 864>}, {pipeline_mode = #tpu.pipeline_mode<synchronous>, transform_indices = @transform_2, window_bounds = array<i64: 6, 1>}, {transform_indices = @transform_3, window_bounds = array<i64: 1, 1, 6, 128>}]} {
    %c0_i32 = arith.constant 0 : i32
    %0 = arith.addi %arg1, %c0_i32 : i32
    %c0 = arith.constant 0 : index
    %1 = arith.index_cast %0 : i32 to index
    %c0_0 = arith.constant 0 : index
    %c0_1 = arith.constant 0 : index
    %2 = vector.load %arg2[%c0, %1, %c0_0, %c0_1] : memref<1x10x32x256xbf16, #tpu.memory_space<vmem>>, vector<1x1x32x256xbf16>
    %3 = vector.shape_cast %2 : vector<1x1x32x256xbf16> to vector<32x256xbf16>
    %4 = vector.extract_strided_slice %3 {offsets = [0, 0], sizes = [32, 128], strides = [1, 1]} : vector<32x256xbf16> to vector<32x128xbf16>
    %5 = vector.extract_strided_slice %3 {offsets = [0, 1], sizes = [32, 128], strides = [1, 1]} : vector<32x256xbf16> to vector<32x128xbf16>
    %6 = vector.extract_strided_slice %3 {offsets = [0, 2], sizes = [32, 128], strides = [1, 1]} : vector<32x256xbf16> to vector<32x128xbf16>
    %7 = vector.extract_strided_slice %3 {offsets = [0, 10], sizes = [32, 128], strides = [1, 1]} : vector<32x256xbf16> to vector<32x128xbf16>
    %8 = vector.extract_strided_slice %3 {offsets = [0, 11], sizes = [32, 128], strides = [1, 1]} : vector<32x256xbf16> to vector<32x128xbf16>
    %9 = vector.extract_strided_slice %3 {offsets = [0, 12], sizes = [32, 128], strides = [1, 1]} : vector<32x256xbf16> to vector<32x128xbf16>
    %10 = vector.extract_strided_slice %3 {offsets = [0, 20], sizes = [32, 128], strides = [1, 1]} : vector<32x256xbf16> to vector<32x128xbf16>
    %11 = vector.extract_strided_slice %3 {offsets = [0, 21], sizes = [32, 128], strides = [1, 1]} : vector<32x256xbf16> to vector<32x128xbf16>
    %12 = vector.extract_strided_slice %3 {offsets = [0, 22], sizes = [32, 128], strides = [1, 1]} : vector<32x256xbf16> to vector<32x128xbf16>
    %c1_i32 = arith.constant 1 : i32
    %13 = arith.addi %arg1, %c1_i32 : i32
    %c0_2 = arith.constant 0 : index
    %14 = arith.index_cast %13 : i32 to index
    %c0_3 = arith.constant 0 : index
    %c0_4 = arith.constant 0 : index
    %15 = vector.load %arg2[%c0_2, %14, %c0_3, %c0_4] : memref<1x10x32x256xbf16, #tpu.memory_space<vmem>>, vector<1x1x32x256xbf16>
    %16 = vector.shape_cast %15 : vector<1x1x32x256xbf16> to vector<32x256xbf16>
    %17 = vector.extract_strided_slice %16 {offsets = [0, 0], sizes = [32, 128], strides = [1, 1]} : vector<32x256xbf16> to vector<32x128xbf16>
    %18 = vector.extract_strided_slice %16 {offsets = [0, 1], sizes = [32, 128], strides = [1, 1]} : vector<32x256xbf16> to vector<32x128xbf16>
    %19 = vector.extract_strided_slice %16 {offsets = [0, 2], sizes = [32, 128], strides = [1, 1]} : vector<32x256xbf16> to vector<32x128xbf16>
    %20 = vector.extract_strided_slice %16 {offsets = [0, 10], sizes = [32, 128], strides = [1, 1]} : vector<32x256xbf16> to vector<32x128xbf16>
    %21 = vector.extract_strided_slice %16 {offsets = [0, 11], sizes = [32, 128], strides = [1, 1]} : vector<32x256xbf16> to vector<32x128xbf16>
    %22 = vector.extract_strided_slice %16 {offsets = [0, 12], sizes = [32, 128], strides = [1, 1]} : vector<32x256xbf16> to vector<32x128xbf16>
    %23 = vector.extract_strided_slice %16 {offsets = [0, 20], sizes = [32, 128], strides = [1, 1]} : vector<32x256xbf16> to vector<32x128xbf16>
    %24 = vector.extract_strided_slice %16 {offsets = [0, 21], sizes = [32, 128], strides = [1, 1]} : vector<32x256xbf16> to vector<32x128xbf16>
    %25 = vector.extract_strided_slice %16 {offsets = [0, 22], sizes = [32, 128], strides = [1, 1]} : vector<32x256xbf16> to vector<32x128xbf16>
    %c2_i32 = arith.constant 2 : i32
    %26 = arith.addi %arg1, %c2_i32 : i32
    %c0_5 = arith.constant 0 : index
    %27 = arith.index_cast %26 : i32 to index
    %c0_6 = arith.constant 0 : index
    %c0_7 = arith.constant 0 : index
    %28 = vector.load %arg2[%c0_5, %27, %c0_6, %c0_7] : memref<1x10x32x256xbf16, #tpu.memory_space<vmem>>, vector<1x1x32x256xbf16>
    %29 = vector.shape_cast %28 : vector<1x1x32x256xbf16> to vector<32x256xbf16>
    %30 = vector.extract_strided_slice %29 {offsets = [0, 0], sizes = [32, 128], strides = [1, 1]} : vector<32x256xbf16> to vector<32x128xbf16>
    %31 = vector.extract_strided_slice %29 {offsets = [0, 1], sizes = [32, 128], strides = [1, 1]} : vector<32x256xbf16> to vector<32x128xbf16>
    %32 = vector.extract_strided_slice %29 {offsets = [0, 2], sizes = [32, 128], strides = [1, 1]} : vector<32x256xbf16> to vector<32x128xbf16>
    %33 = vector.extract_strided_slice %29 {offsets = [0, 10], sizes = [32, 128], strides = [1, 1]} : vector<32x256xbf16> to vector<32x128xbf16>
    %34 = vector.extract_strided_slice %29 {offsets = [0, 11], sizes = [32, 128], strides = [1, 1]} : vector<32x256xbf16> to vector<32x128xbf16>
    %35 = vector.extract_strided_slice %29 {offsets = [0, 12], sizes = [32, 128], strides = [1, 1]} : vector<32x256xbf16> to vector<32x128xbf16>
    %36 = vector.extract_strided_slice %29 {offsets = [0, 20], sizes = [32, 128], strides = [1, 1]} : vector<32x256xbf16> to vector<32x128xbf16>
    %37 = vector.extract_strided_slice %29 {offsets = [0, 21], sizes = [32, 128], strides = [1, 1]} : vector<32x256xbf16> to vector<32x128xbf16>
    %38 = vector.extract_strided_slice %29 {offsets = [0, 22], sizes = [32, 128], strides = [1, 1]} : vector<32x256xbf16> to vector<32x128xbf16>
    %39 = tpu.concatenate %4, %5, %6, %7, %8, %9, %10, %11, %12, %17, %18, %19, %20, %21, %22, %23 in 0 : vector<32x128xbf16>, vector<32x128xbf16>, vector<32x128xbf16>, vector<32x128xbf16>, vector<32x128xbf16>, vector<32x128xbf16>, vector<32x128xbf16>, vector<32x128xbf16>, vector<32x128xbf16>, vector<32x128xbf16>, vector<32x128xbf16>, vector<32x128xbf16>, vector<32x128xbf16>, vector<32x128xbf16>, vector<32x128xbf16>, vector<32x128xbf16> -> vector<512x128xbf16>
    %40 = tpu.concatenate %24, %25, %30, %31, %32, %33, %34, %35, %36, %37, %38 in 0 : vector<32x128xbf16>, vector<32x128xbf16>, vector<32x128xbf16>, vector<32x128xbf16>, vector<32x128xbf16>, vector<32x128xbf16>, vector<32x128xbf16>, vector<32x128xbf16>, vector<32x128xbf16>, vector<32x128xbf16>, vector<32x128xbf16> -> vector<352x128xbf16>
    %41 = tpu.concatenate %39, %40 in 0 : vector<512x128xbf16>, vector<352x128xbf16> -> vector<864x128xbf16>
    %c0_8 = arith.constant 0 : index
    %c0_9 = arith.constant 0 : index
    %42 = vector.load %arg3[%c0_8, %c0_9] : memref<6x864xbf16, #tpu.memory_space<vmem>>, vector<6x864xbf16>
    %cst = arith.constant dense<0.000000e+00> : vector<6x128xf32>
    %43 = tpu.matmul %42, %41, %cst {dimension_numbers = #tpu.dot_dimension_numbers<[1], [0], [0], [1], [0, 0, 1, 1], [], []>} : vector<6x864xbf16>, vector<864x128xbf16>, vector<6x128xf32> -> vector<6x128xf32>
    %c0_10 = arith.constant 0 : index
    %c0_11 = arith.constant 0 : index
    %44 = vector.load %arg4[%c0_10, %c0_11] : memref<6x1xf32, #tpu.memory_space<vmem>>, vector<6x1xf32>
    %45 = vector.broadcast %44 : vector<6x1xf32> to vector<6x128xf32>
    %46 = arith.addf %43, %45 : vector<6x128xf32>
    %47 = arith.truncf %46 : vector<6x128xf32> to vector<6x128xbf16>
    %c0_12 = arith.constant 0 : index
    %c0_13 = arith.constant 0 : index
    %c0_14 = arith.constant 0 : index
    %c0_15 = arith.constant 0 : index
    %48 = vector.load %arg5[%c0_12, %c0_13, %c0_14, %c0_15] : memref<1x1x6x128xbf16, #tpu.memory_space<vmem>>, vector<1x1x6x128xbf16>
    %49 = vector.shape_cast %48 : vector<1x1x6x128xbf16> to vector<6x128xbf16>
    %50 = vector.shape_cast %47 : vector<6x128xbf16> to vector<1x1x6x128xbf16>
    tpu.vector_store %arg5[%c0_12, %c0_13, %c0_14, %c0_15], %50 {strides = array<i32>} : memref<1x1x6x128xbf16, #tpu.memory_space<vmem>>, vector<1x1x6x128xbf16>,
    return
  }
  func.func @transform_0(%arg0: i32, %arg1: i32) -> (i32, i32, i32, i32) {
    %c0_i32 = arith.constant 0 : i32
    %c0_i32_0 = arith.constant 0 : i32
    %c0_i32_1 = arith.constant 0 : i32
    %c0_i32_2 = arith.constant 0 : i32
    return %arg0, %c0_i32, %c0_i32_0, %c0_i32_1 : i32, i32, i32, i32
  }
  func.func @transform_1(%arg0: i32, %arg1: i32) -> (i32, i32) {
    %c0_i32 = arith.constant 0 : i32
    %c0_i32_0 = arith.constant 0 : i32
    %c0_i32_1 = arith.constant 0 : i32
    return %c0_i32, %c0_i32_0 : i32, i32
  }
  func.func @transform_2(%arg0: i32, %arg1: i32) -> (i32, i32) {
    %c0_i32 = arith.constant 0 : i32
    %c0_i32_0 = arith.constant 0 : i32
    %c0_i32_1 = arith.constant 0 : i32
    return %c0_i32, %c0_i32_0 : i32, i32
  }
  func.func @transform_3(%arg0: i32, %arg1: i32) -> (i32, i32, i32, i32) {
    %c0_i32 = arith.constant 0 : i32
    %c0_i32_0 = arith.constant 0 : i32
    %c0_i32_1 = arith.constant 0 : i32
    return %arg0, %arg1, %c0_i32, %c0_i32_0 : i32, i32, i32, i32
  }
}

module attributes {stable_mosaic.version = 11 : i64} {
  func.func @_conv3x3_kernel(%arg0: i32, %arg1: i32, %arg2: memref<1x10x16x256xbf16, #tpu.memory_space<vmem>>, %arg3: memref<6x432xbf16, #tpu.memory_space<vmem>>, %arg4: memref<6x1xf32, #tpu.memory_space<vmem>>, %arg5: memref<1x1x6x128xf32, #tpu.memory_space<vmem>>) attributes {dimension_semantics = [#tpu.dimension_semantics<parallel>, #tpu.dimension_semantics<parallel>], iteration_bounds = array<i64: 2, 8>, scalar_prefetch = 0 : i64, scratch_operands = 0 : i64, tpu.core_type = #tpu.core_type<tc>, window_params = [{transform_indices = @transform_0, window_bounds = array<i64: 1, 10, 16, 256>}, {pipeline_mode = #tpu.pipeline_mode<synchronous>, transform_indices = @transform_1, window_bounds = array<i64: 6, 432>}, {pipeline_mode = #tpu.pipeline_mode<synchronous>, transform_indices = @transform_2, window_bounds = array<i64: 6, 1>}, {transform_indices = @transform_3, window_bounds = array<i64: 1, 1, 6, 128>}]} {
    %c0_i32 = arith.constant 0 : i32
    %0 = arith.addi %arg1, %c0_i32 : i32
    %c0 = arith.constant 0 : index
    %1 = arith.index_cast %0 : i32 to index
    %c0_0 = arith.constant 0 : index
    %c0_1 = arith.constant 0 : index
    %2 = vector.load %arg2[%c0, %1, %c0_0, %c0_1] : memref<1x10x16x256xbf16, #tpu.memory_space<vmem>>, vector<1x1x16x256xbf16>
    %3 = vector.shape_cast %2 : vector<1x1x16x256xbf16> to vector<16x256xbf16>
    %4 = vector.extract_strided_slice %3 {offsets = [0, 0], sizes = [16, 128], strides = [1, 1]} : vector<16x256xbf16> to vector<16x128xbf16>
    %5 = vector.extract_strided_slice %3 {offsets = [0, 1], sizes = [16, 128], strides = [1, 1]} : vector<16x256xbf16> to vector<16x128xbf16>
    %6 = vector.extract_strided_slice %3 {offsets = [0, 2], sizes = [16, 128], strides = [1, 1]} : vector<16x256xbf16> to vector<16x128xbf16>
    %7 = vector.extract_strided_slice %3 {offsets = [0, 10], sizes = [16, 128], strides = [1, 1]} : vector<16x256xbf16> to vector<16x128xbf16>
    %8 = vector.extract_strided_slice %3 {offsets = [0, 11], sizes = [16, 128], strides = [1, 1]} : vector<16x256xbf16> to vector<16x128xbf16>
    %9 = vector.extract_strided_slice %3 {offsets = [0, 12], sizes = [16, 128], strides = [1, 1]} : vector<16x256xbf16> to vector<16x128xbf16>
    %10 = vector.extract_strided_slice %3 {offsets = [0, 20], sizes = [16, 128], strides = [1, 1]} : vector<16x256xbf16> to vector<16x128xbf16>
    %11 = vector.extract_strided_slice %3 {offsets = [0, 21], sizes = [16, 128], strides = [1, 1]} : vector<16x256xbf16> to vector<16x128xbf16>
    %12 = vector.extract_strided_slice %3 {offsets = [0, 22], sizes = [16, 128], strides = [1, 1]} : vector<16x256xbf16> to vector<16x128xbf16>
    %c1_i32 = arith.constant 1 : i32
    %13 = arith.addi %arg1, %c1_i32 : i32
    %c0_2 = arith.constant 0 : index
    %14 = arith.index_cast %13 : i32 to index
    %c0_3 = arith.constant 0 : index
    %c0_4 = arith.constant 0 : index
    %15 = vector.load %arg2[%c0_2, %14, %c0_3, %c0_4] : memref<1x10x16x256xbf16, #tpu.memory_space<vmem>>, vector<1x1x16x256xbf16>
    %16 = vector.shape_cast %15 : vector<1x1x16x256xbf16> to vector<16x256xbf16>
    %17 = vector.extract_strided_slice %16 {offsets = [0, 0], sizes = [16, 128], strides = [1, 1]} : vector<16x256xbf16> to vector<16x128xbf16>
    %18 = vector.extract_strided_slice %16 {offsets = [0, 1], sizes = [16, 128], strides = [1, 1]} : vector<16x256xbf16> to vector<16x128xbf16>
    %19 = vector.extract_strided_slice %16 {offsets = [0, 2], sizes = [16, 128], strides = [1, 1]} : vector<16x256xbf16> to vector<16x128xbf16>
    %20 = vector.extract_strided_slice %16 {offsets = [0, 10], sizes = [16, 128], strides = [1, 1]} : vector<16x256xbf16> to vector<16x128xbf16>
    %21 = vector.extract_strided_slice %16 {offsets = [0, 11], sizes = [16, 128], strides = [1, 1]} : vector<16x256xbf16> to vector<16x128xbf16>
    %22 = vector.extract_strided_slice %16 {offsets = [0, 12], sizes = [16, 128], strides = [1, 1]} : vector<16x256xbf16> to vector<16x128xbf16>
    %23 = vector.extract_strided_slice %16 {offsets = [0, 20], sizes = [16, 128], strides = [1, 1]} : vector<16x256xbf16> to vector<16x128xbf16>
    %24 = vector.extract_strided_slice %16 {offsets = [0, 21], sizes = [16, 128], strides = [1, 1]} : vector<16x256xbf16> to vector<16x128xbf16>
    %25 = vector.extract_strided_slice %16 {offsets = [0, 22], sizes = [16, 128], strides = [1, 1]} : vector<16x256xbf16> to vector<16x128xbf16>
    %c2_i32 = arith.constant 2 : i32
    %26 = arith.addi %arg1, %c2_i32 : i32
    %c0_5 = arith.constant 0 : index
    %27 = arith.index_cast %26 : i32 to index
    %c0_6 = arith.constant 0 : index
    %c0_7 = arith.constant 0 : index
    %28 = vector.load %arg2[%c0_5, %27, %c0_6, %c0_7] : memref<1x10x16x256xbf16, #tpu.memory_space<vmem>>, vector<1x1x16x256xbf16>
    %29 = vector.shape_cast %28 : vector<1x1x16x256xbf16> to vector<16x256xbf16>
    %30 = vector.extract_strided_slice %29 {offsets = [0, 0], sizes = [16, 128], strides = [1, 1]} : vector<16x256xbf16> to vector<16x128xbf16>
    %31 = vector.extract_strided_slice %29 {offsets = [0, 1], sizes = [16, 128], strides = [1, 1]} : vector<16x256xbf16> to vector<16x128xbf16>
    %32 = vector.extract_strided_slice %29 {offsets = [0, 2], sizes = [16, 128], strides = [1, 1]} : vector<16x256xbf16> to vector<16x128xbf16>
    %33 = vector.extract_strided_slice %29 {offsets = [0, 10], sizes = [16, 128], strides = [1, 1]} : vector<16x256xbf16> to vector<16x128xbf16>
    %34 = vector.extract_strided_slice %29 {offsets = [0, 11], sizes = [16, 128], strides = [1, 1]} : vector<16x256xbf16> to vector<16x128xbf16>
    %35 = vector.extract_strided_slice %29 {offsets = [0, 12], sizes = [16, 128], strides = [1, 1]} : vector<16x256xbf16> to vector<16x128xbf16>
    %36 = vector.extract_strided_slice %29 {offsets = [0, 20], sizes = [16, 128], strides = [1, 1]} : vector<16x256xbf16> to vector<16x128xbf16>
    %37 = vector.extract_strided_slice %29 {offsets = [0, 21], sizes = [16, 128], strides = [1, 1]} : vector<16x256xbf16> to vector<16x128xbf16>
    %38 = vector.extract_strided_slice %29 {offsets = [0, 22], sizes = [16, 128], strides = [1, 1]} : vector<16x256xbf16> to vector<16x128xbf16>
    %39 = tpu.concatenate %4, %5, %6, %7, %8, %9, %10, %11, %12, %17, %18, %19, %20, %21, %22, %23 in 0 : vector<16x128xbf16>, vector<16x128xbf16>, vector<16x128xbf16>, vector<16x128xbf16>, vector<16x128xbf16>, vector<16x128xbf16>, vector<16x128xbf16>, vector<16x128xbf16>, vector<16x128xbf16>, vector<16x128xbf16>, vector<16x128xbf16>, vector<16x128xbf16>, vector<16x128xbf16>, vector<16x128xbf16>, vector<16x128xbf16>, vector<16x128xbf16> -> vector<256x128xbf16>
    %40 = tpu.concatenate %24, %25, %30, %31, %32, %33, %34, %35, %36, %37, %38 in 0 : vector<16x128xbf16>, vector<16x128xbf16>, vector<16x128xbf16>, vector<16x128xbf16>, vector<16x128xbf16>, vector<16x128xbf16>, vector<16x128xbf16>, vector<16x128xbf16>, vector<16x128xbf16>, vector<16x128xbf16>, vector<16x128xbf16> -> vector<176x128xbf16>
    %41 = tpu.concatenate %39, %40 in 0 : vector<256x128xbf16>, vector<176x128xbf16> -> vector<432x128xbf16>
    %c0_8 = arith.constant 0 : index
    %c0_9 = arith.constant 0 : index
    %42 = vector.load %arg3[%c0_8, %c0_9] : memref<6x432xbf16, #tpu.memory_space<vmem>>, vector<6x432xbf16>
    %cst = arith.constant dense<0.000000e+00> : vector<6x128xf32>
    %43 = tpu.matmul %42, %41, %cst {dimension_numbers = #tpu.dot_dimension_numbers<[1], [0], [0], [1], [0, 0, 1, 1], [], []>} : vector<6x432xbf16>, vector<432x128xbf16>, vector<6x128xf32> -> vector<6x128xf32>
    %c0_10 = arith.constant 0 : index
    %c0_11 = arith.constant 0 : index
    %44 = vector.load %arg4[%c0_10, %c0_11] : memref<6x1xf32, #tpu.memory_space<vmem>>, vector<6x1xf32>
    %45 = vector.broadcast %44 : vector<6x1xf32> to vector<6x128xf32>
    %46 = arith.addf %43, %45 : vector<6x128xf32>
    %c0_12 = arith.constant 0 : index
    %c0_13 = arith.constant 0 : index
    %c0_14 = arith.constant 0 : index
    %c0_15 = arith.constant 0 : index
    %47 = vector.load %arg5[%c0_12, %c0_13, %c0_14, %c0_15] : memref<1x1x6x128xf32, #tpu.memory_space<vmem>>, vector<1x1x6x128xf32>
    %48 = vector.shape_cast %47 : vector<1x1x6x128xf32> to vector<6x128xf32>
    %49 = vector.shape_cast %46 : vector<6x128xf32> to vector<1x1x6x128xf32>
    tpu.vector_store %arg5[%c0_12, %c0_13, %c0_14, %c0_15], %49 {strides = array<i32>} : memref<1x1x6x128xf32, #tpu.memory_space<vmem>>, vector<1x1x6x128xf32>,
    return
  }
  func.func @transform_0(%arg0: i32, %arg1: i32) -> (i32, i32, i32, i32) {
    %c0_i32 = arith.constant 0 : i32
    %c0_i32_0 = arith.constant 0 : i32
    %c0_i32_1 = arith.constant 0 : i32
    %c0_i32_2 = arith.constant 0 : i32
    return %arg0, %c0_i32, %c0_i32_0, %c0_i32_1 : i32, i32, i32, i32
  }
  func.func @transform_1(%arg0: i32, %arg1: i32) -> (i32, i32) {
    %c0_i32 = arith.constant 0 : i32
    %c0_i32_0 = arith.constant 0 : i32
    %c0_i32_1 = arith.constant 0 : i32
    return %c0_i32, %c0_i32_0 : i32, i32
  }
  func.func @transform_2(%arg0: i32, %arg1: i32) -> (i32, i32) {
    %c0_i32 = arith.constant 0 : i32
    %c0_i32_0 = arith.constant 0 : i32
    %c0_i32_1 = arith.constant 0 : i32
    return %c0_i32, %c0_i32_0 : i32, i32
  }
  func.func @transform_3(%arg0: i32, %arg1: i32) -> (i32, i32, i32, i32) {
    %c0_i32 = arith.constant 0 : i32
    %c0_i32_0 = arith.constant 0 : i32
    %c0_i32_1 = arith.constant 0 : i32
    return %arg0, %arg1, %c0_i32, %c0_i32_0 : i32, i32, i32, i32
  }
}

module attributes {stable_mosaic.version = 11 : i64} {
  func.func @_mask_deform_kernel(%arg0: i32, %arg1: i32, %arg2: memref<30xf32, #tpu.memory_space<smem>>, %arg3: memref<30xf32, #tpu.memory_space<smem>>, %arg4: memref<1x3x128xf32, #tpu.memory_space<vmem>>, %arg5: memref<1x1x6x128xf32, #tpu.memory_space<vmem>>, %arg6: memref<1x1x6x128xf32, #tpu.memory_space<vmem>>, %arg7: memref<1x1x3x128xf32, #tpu.memory_space<vmem>>) attributes {dimension_semantics = [#tpu.dimension_semantics<parallel>, #tpu.dimension_semantics<parallel>], iteration_bounds = array<i64: 2, 8>, scalar_prefetch = 0 : i64, scratch_operands = 0 : i64, tpu.core_type = #tpu.core_type<tc>, window_params = [{transform_indices = @transform_0, window_bounds = array<i64: 30>}, {transform_indices = @transform_1, window_bounds = array<i64: 30>}, {transform_indices = @transform_2, window_bounds = array<i64: 1, 3, 128>}, {transform_indices = @transform_3, window_bounds = array<i64: 1, 1, 6, 128>}, {transform_indices = @transform_4, window_bounds = array<i64: 1, 1, 6, 128>}, {transform_indices = @transform_5, window_bounds = array<i64: 1, 1, 3, 128>}]} {
    %c15_i32 = arith.constant 15 : i32
    %0 = arith.muli %arg0, %c15_i32 : i32
    %c0 = arith.constant 0 : index
    %c0_0 = arith.constant 0 : index
    %c0_1 = arith.constant 0 : index
    %c0_2 = arith.constant 0 : index
    %1 = vector.load %arg5[%c0, %c0_0, %c0_1, %c0_2] : memref<1x1x6x128xf32, #tpu.memory_space<vmem>>, vector<1x1x1x128xf32>
    %2 = vector.shape_cast %1 : vector<1x1x1x128xf32> to vector<1x128xf32>
    %c0_3 = arith.constant 0 : index
    %c0_4 = arith.constant 0 : index
    %c1 = arith.constant 1 : index
    %c0_5 = arith.constant 0 : index
    %3 = vector.load %arg5[%c0_3, %c0_4, %c1, %c0_5] : memref<1x1x6x128xf32, #tpu.memory_space<vmem>>, vector<1x1x1x128xf32>
    %4 = vector.shape_cast %3 : vector<1x1x1x128xf32> to vector<1x128xf32>
    %c0_6 = arith.constant 0 : index
    %c0_7 = arith.constant 0 : index
    %c2 = arith.constant 2 : index
    %c0_8 = arith.constant 0 : index
    %5 = vector.load %arg5[%c0_6, %c0_7, %c2, %c0_8] : memref<1x1x6x128xf32, #tpu.memory_space<vmem>>, vector<1x1x1x128xf32>
    %6 = vector.shape_cast %5 : vector<1x1x1x128xf32> to vector<1x128xf32>
    %c0_9 = arith.constant 0 : index
    %c0_10 = arith.constant 0 : index
    %c3 = arith.constant 3 : index
    %c0_11 = arith.constant 0 : index
    %7 = vector.load %arg5[%c0_9, %c0_10, %c3, %c0_11] : memref<1x1x6x128xf32, #tpu.memory_space<vmem>>, vector<1x1x1x128xf32>
    %8 = vector.shape_cast %7 : vector<1x1x1x128xf32> to vector<1x128xf32>
    %c0_12 = arith.constant 0 : index
    %c0_13 = arith.constant 0 : index
    %c4 = arith.constant 4 : index
    %c0_14 = arith.constant 0 : index
    %9 = vector.load %arg5[%c0_12, %c0_13, %c4, %c0_14] : memref<1x1x6x128xf32, #tpu.memory_space<vmem>>, vector<1x1x1x128xf32>
    %10 = vector.shape_cast %9 : vector<1x1x1x128xf32> to vector<1x128xf32>
    %c0_15 = arith.constant 0 : index
    %c0_16 = arith.constant 0 : index
    %c5 = arith.constant 5 : index
    %c0_17 = arith.constant 0 : index
    %11 = vector.load %arg5[%c0_15, %c0_16, %c5, %c0_17] : memref<1x1x6x128xf32, #tpu.memory_space<vmem>>, vector<1x1x1x128xf32>
    %12 = vector.shape_cast %11 : vector<1x1x1x128xf32> to vector<1x128xf32>
    %13 = arith.maximumf %2, %4 : vector<1x128xf32>
    %14 = arith.maximumf %13, %6 : vector<1x128xf32>
    %15 = arith.maximumf %14, %8 : vector<1x128xf32>
    %16 = arith.maximumf %15, %10 : vector<1x128xf32>
    %17 = arith.maximumf %16, %12 : vector<1x128xf32>
    %18 = arith.subf %2, %17 : vector<1x128xf32>
    %19 = math.exp %18 : vector<1x128xf32>
    %20 = arith.subf %4, %17 : vector<1x128xf32>
    %21 = math.exp %20 : vector<1x128xf32>
    %22 = arith.subf %6, %17 : vector<1x128xf32>
    %23 = math.exp %22 : vector<1x128xf32>
    %24 = arith.subf %8, %17 : vector<1x128xf32>
    %25 = math.exp %24 : vector<1x128xf32>
    %26 = arith.subf %10, %17 : vector<1x128xf32>
    %27 = math.exp %26 : vector<1x128xf32>
    %28 = arith.subf %12, %17 : vector<1x128xf32>
    %29 = math.exp %28 : vector<1x128xf32>
    %30 = arith.addf %19, %21 : vector<1x128xf32>
    %31 = arith.addf %30, %23 : vector<1x128xf32>
    %32 = arith.addf %31, %25 : vector<1x128xf32>
    %33 = arith.addf %32, %27 : vector<1x128xf32>
    %34 = arith.addf %33, %29 : vector<1x128xf32>
    %cst = arith.constant 1.000000e+00 : f32
    %35 = vector.broadcast %cst : f32 to vector<1x128xf32>
    %36 = arith.divf %35, %34 : vector<1x128xf32>
    %37 = arith.mulf %19, %36 : vector<1x128xf32>
    %38 = arith.mulf %21, %36 : vector<1x128xf32>
    %39 = arith.mulf %23, %36 : vector<1x128xf32>
    %40 = arith.mulf %25, %36 : vector<1x128xf32>
    %41 = arith.mulf %27, %36 : vector<1x128xf32>
    %42 = arith.mulf %29, %36 : vector<1x128xf32>
    %c0_18 = arith.constant 0 : index
    %c0_19 = arith.constant 0 : index
    %c0_20 = arith.constant 0 : index
    %c0_21 = arith.constant 0 : index
    %43 = vector.load %arg6[%c0_18, %c0_19, %c0_20, %c0_21] : memref<1x1x6x128xf32, #tpu.memory_space<vmem>>, vector<1x1x1x128xf32>
    %44 = vector.shape_cast %43 : vector<1x1x1x128xf32> to vector<1x128xf32>
    %45 = vector.shape_cast %37 : vector<1x128xf32> to vector<1x1x1x128xf32>
    tpu.vector_store %arg6[%c0_18, %c0_19, %c0_20, %c0_21], %45 {strides = array<i32>} : memref<1x1x6x128xf32, #tpu.memory_space<vmem>>, vector<1x1x1x128xf32>,
    %c0_22 = arith.constant 0 : index
    %c0_23 = arith.constant 0 : index
    %c1_24 = arith.constant 1 : index
    %c0_25 = arith.constant 0 : index
    %46 = vector.load %arg6[%c0_22, %c0_23, %c1_24, %c0_25] : memref<1x1x6x128xf32, #tpu.memory_space<vmem>>, vector<1x1x1x128xf32>
    %47 = vector.shape_cast %46 : vector<1x1x1x128xf32> to vector<1x128xf32>
    %48 = vector.shape_cast %38 : vector<1x128xf32> to vector<1x1x1x128xf32>
    tpu.vector_store %arg6[%c0_22, %c0_23, %c1_24, %c0_25], %48 {strides = array<i32>} : memref<1x1x6x128xf32, #tpu.memory_space<vmem>>, vector<1x1x1x128xf32>,
    %c0_26 = arith.constant 0 : index
    %c0_27 = arith.constant 0 : index
    %c2_28 = arith.constant 2 : index
    %c0_29 = arith.constant 0 : index
    %49 = vector.load %arg6[%c0_26, %c0_27, %c2_28, %c0_29] : memref<1x1x6x128xf32, #tpu.memory_space<vmem>>, vector<1x1x1x128xf32>
    %50 = vector.shape_cast %49 : vector<1x1x1x128xf32> to vector<1x128xf32>
    %51 = vector.shape_cast %39 : vector<1x128xf32> to vector<1x1x1x128xf32>
    tpu.vector_store %arg6[%c0_26, %c0_27, %c2_28, %c0_29], %51 {strides = array<i32>} : memref<1x1x6x128xf32, #tpu.memory_space<vmem>>, vector<1x1x1x128xf32>,
    %c0_30 = arith.constant 0 : index
    %c0_31 = arith.constant 0 : index
    %c3_32 = arith.constant 3 : index
    %c0_33 = arith.constant 0 : index
    %52 = vector.load %arg6[%c0_30, %c0_31, %c3_32, %c0_33] : memref<1x1x6x128xf32, #tpu.memory_space<vmem>>, vector<1x1x1x128xf32>
    %53 = vector.shape_cast %52 : vector<1x1x1x128xf32> to vector<1x128xf32>
    %54 = vector.shape_cast %40 : vector<1x128xf32> to vector<1x1x1x128xf32>
    tpu.vector_store %arg6[%c0_30, %c0_31, %c3_32, %c0_33], %54 {strides = array<i32>} : memref<1x1x6x128xf32, #tpu.memory_space<vmem>>, vector<1x1x1x128xf32>,
    %c0_34 = arith.constant 0 : index
    %c0_35 = arith.constant 0 : index
    %c4_36 = arith.constant 4 : index
    %c0_37 = arith.constant 0 : index
    %55 = vector.load %arg6[%c0_34, %c0_35, %c4_36, %c0_37] : memref<1x1x6x128xf32, #tpu.memory_space<vmem>>, vector<1x1x1x128xf32>
    %56 = vector.shape_cast %55 : vector<1x1x1x128xf32> to vector<1x128xf32>
    %57 = vector.shape_cast %41 : vector<1x128xf32> to vector<1x1x1x128xf32>
    tpu.vector_store %arg6[%c0_34, %c0_35, %c4_36, %c0_37], %57 {strides = array<i32>} : memref<1x1x6x128xf32, #tpu.memory_space<vmem>>, vector<1x1x1x128xf32>,
    %c0_38 = arith.constant 0 : index
    %c0_39 = arith.constant 0 : index
    %c5_40 = arith.constant 5 : index
    %c0_41 = arith.constant 0 : index
    %58 = vector.load %arg6[%c0_38, %c0_39, %c5_40, %c0_41] : memref<1x1x6x128xf32, #tpu.memory_space<vmem>>, vector<1x1x1x128xf32>
    %59 = vector.shape_cast %58 : vector<1x1x1x128xf32> to vector<1x128xf32>
    %60 = vector.shape_cast %42 : vector<1x128xf32> to vector<1x1x1x128xf32>
    tpu.vector_store %arg6[%c0_38, %c0_39, %c5_40, %c0_41], %60 {strides = array<i32>} : memref<1x1x6x128xf32, #tpu.memory_space<vmem>>, vector<1x1x1x128xf32>,
    %c0_42 = arith.constant 0 : index
    %c0_43 = arith.constant 0 : index
    %c0_44 = arith.constant 0 : index
    %61 = vector.load %arg4[%c0_42, %c0_43, %c0_44] : memref<1x3x128xf32, #tpu.memory_space<vmem>>, vector<1x1x128xf32>
    %62 = vector.shape_cast %61 : vector<1x1x128xf32> to vector<1x128xf32>
    %63 = arith.mulf %37, %62 : vector<1x128xf32>
    %c0_i32 = arith.constant 0 : i32
    %64 = arith.addi %0, %c0_i32 : i32
    %c0_i32_45 = arith.constant 0 : i32
    %65 = arith.addi %64, %c0_i32_45 : i32
    %66 = arith.index_cast %65 : i32 to index
    %67 = memref.load %arg3[%66] : memref<30xf32, #tpu.memory_space<smem>>
    %c0_i32_46 = arith.constant 0 : i32
    %68 = arith.addi %0, %c0_i32_46 : i32
    %c0_i32_47 = arith.constant 0 : i32
    %69 = arith.addi %68, %c0_i32_47 : i32
    %70 = arith.index_cast %69 : i32 to index
    %71 = memref.load %arg2[%70] : memref<30xf32, #tpu.memory_space<smem>>
    %72 = arith.subf %67, %71 : f32
    %73 = vector.broadcast %72 : f32 to vector<1x128xf32>
    %74 = arith.addf %62, %73 : vector<1x128xf32>
    %75 = arith.mulf %38, %74 : vector<1x128xf32>
    %76 = arith.addf %63, %75 : vector<1x128xf32>
    %c3_i32 = arith.constant 3 : i32
    %77 = arith.addi %0, %c3_i32 : i32
    %c0_i32_48 = arith.constant 0 : i32
    %78 = arith.addi %77, %c0_i32_48 : i32
    %79 = arith.index_cast %78 : i32 to index
    %80 = memref.load %arg3[%79] : memref<30xf32, #tpu.memory_space<smem>>
    %c3_i32_49 = arith.constant 3 : i32
    %81 = arith.addi %0, %c3_i32_49 : i32
    %c0_i32_50 = arith.constant 0 : i32
    %82 = arith.addi %81, %c0_i32_50 : i32
    %83 = arith.index_cast %82 : i32 to index
    %84 = memref.load %arg2[%83] : memref<30xf32, #tpu.memory_space<smem>>
    %85 = arith.subf %80, %84 : f32
    %86 = vector.broadcast %85 : f32 to vector<1x128xf32>
    %87 = arith.addf %62, %86 : vector<1x128xf32>
    %88 = arith.mulf %39, %87 : vector<1x128xf32>
    %89 = arith.addf %76, %88 : vector<1x128xf32>
    %c6_i32 = arith.constant 6 : i32
    %90 = arith.addi %0, %c6_i32 : i32
    %c0_i32_51 = arith.constant 0 : i32
    %91 = arith.addi %90, %c0_i32_51 : i32
    %92 = arith.index_cast %91 : i32 to index
    %93 = memref.load %arg3[%92] : memref<30xf32, #tpu.memory_space<smem>>
    %c6_i32_52 = arith.constant 6 : i32
    %94 = arith.addi %0, %c6_i32_52 : i32
    %c0_i32_53 = arith.constant 0 : i32
    %95 = arith.addi %94, %c0_i32_53 : i32
    %96 = arith.index_cast %95 : i32 to index
    %97 = memref.load %arg2[%96] : memref<30xf32, #tpu.memory_space<smem>>
    %98 = arith.subf %93, %97 : f32
    %99 = vector.broadcast %98 : f32 to vector<1x128xf32>
    %100 = arith.addf %62, %99 : vector<1x128xf32>
    %101 = arith.mulf %40, %100 : vector<1x128xf32>
    %102 = arith.addf %89, %101 : vector<1x128xf32>
    %c9_i32 = arith.constant 9 : i32
    %103 = arith.addi %0, %c9_i32 : i32
    %c0_i32_54 = arith.constant 0 : i32
    %104 = arith.addi %103, %c0_i32_54 : i32
    %105 = arith.index_cast %104 : i32 to index
    %106 = memref.load %arg3[%105] : memref<30xf32, #tpu.memory_space<smem>>
    %c9_i32_55 = arith.constant 9 : i32
    %107 = arith.addi %0, %c9_i32_55 : i32
    %c0_i32_56 = arith.constant 0 : i32
    %108 = arith.addi %107, %c0_i32_56 : i32
    %109 = arith.index_cast %108 : i32 to index
    %110 = memref.load %arg2[%109] : memref<30xf32, #tpu.memory_space<smem>>
    %111 = arith.subf %106, %110 : f32
    %112 = vector.broadcast %111 : f32 to vector<1x128xf32>
    %113 = arith.addf %62, %112 : vector<1x128xf32>
    %114 = arith.mulf %41, %113 : vector<1x128xf32>
    %115 = arith.addf %102, %114 : vector<1x128xf32>
    %c12_i32 = arith.constant 12 : i32
    %116 = arith.addi %0, %c12_i32 : i32
    %c0_i32_57 = arith.constant 0 : i32
    %117 = arith.addi %116, %c0_i32_57 : i32
    %118 = arith.index_cast %117 : i32 to index
    %119 = memref.load %arg3[%118] : memref<30xf32, #tpu.memory_space<smem>>
    %c12_i32_58 = arith.constant 12 : i32
    %120 = arith.addi %0, %c12_i32_58 : i32
    %c0_i32_59 = arith.constant 0 : i32
    %121 = arith.addi %120, %c0_i32_59 : i32
    %122 = arith.index_cast %121 : i32 to index
    %123 = memref.load %arg2[%122] : memref<30xf32, #tpu.memory_space<smem>>
    %124 = arith.subf %119, %123 : f32
    %125 = vector.broadcast %124 : f32 to vector<1x128xf32>
    %126 = arith.addf %62, %125 : vector<1x128xf32>
    %127 = arith.mulf %42, %126 : vector<1x128xf32>
    %128 = arith.addf %115, %127 : vector<1x128xf32>
    %c0_60 = arith.constant 0 : index
    %c0_61 = arith.constant 0 : index
    %c0_62 = arith.constant 0 : index
    %c0_63 = arith.constant 0 : index
    %129 = vector.load %arg7[%c0_60, %c0_61, %c0_62, %c0_63] : memref<1x1x3x128xf32, #tpu.memory_space<vmem>>, vector<1x1x1x128xf32>
    %130 = vector.shape_cast %129 : vector<1x1x1x128xf32> to vector<1x128xf32>
    %131 = vector.shape_cast %128 : vector<1x128xf32> to vector<1x1x1x128xf32>
    tpu.vector_store %arg7[%c0_60, %c0_61, %c0_62, %c0_63], %131 {strides = array<i32>} : memref<1x1x3x128xf32, #tpu.memory_space<vmem>>, vector<1x1x1x128xf32>,
    %c0_64 = arith.constant 0 : index
    %c1_65 = arith.constant 1 : index
    %c0_66 = arith.constant 0 : index
    %132 = vector.load %arg4[%c0_64, %c1_65, %c0_66] : memref<1x3x128xf32, #tpu.memory_space<vmem>>, vector<1x1x128xf32>
    %133 = vector.shape_cast %132 : vector<1x1x128xf32> to vector<1x128xf32>
    %134 = arith.mulf %37, %133 : vector<1x128xf32>
    %c0_i32_67 = arith.constant 0 : i32
    %135 = arith.addi %0, %c0_i32_67 : i32
    %c1_i32 = arith.constant 1 : i32
    %136 = arith.addi %135, %c1_i32 : i32
    %137 = arith.index_cast %136 : i32 to index
    %138 = memref.load %arg3[%137] : memref<30xf32, #tpu.memory_space<smem>>
    %c0_i32_68 = arith.constant 0 : i32
    %139 = arith.addi %0, %c0_i32_68 : i32
    %c1_i32_69 = arith.constant 1 : i32
    %140 = arith.addi %139, %c1_i32_69 : i32
    %141 = arith.index_cast %140 : i32 to index
    %142 = memref.load %arg2[%141] : memref<30xf32, #tpu.memory_space<smem>>
    %143 = arith.subf %138, %142 : f32
    %144 = vector.broadcast %143 : f32 to vector<1x128xf32>
    %145 = arith.addf %133, %144 : vector<1x128xf32>
    %146 = arith.mulf %38, %145 : vector<1x128xf32>
    %147 = arith.addf %134, %146 : vector<1x128xf32>
    %c3_i32_70 = arith.constant 3 : i32
    %148 = arith.addi %0, %c3_i32_70 : i32
    %c1_i32_71 = arith.constant 1 : i32
    %149 = arith.addi %148, %c1_i32_71 : i32
    %150 = arith.index_cast %149 : i32 to index
    %151 = memref.load %arg3[%150] : memref<30xf32, #tpu.memory_space<smem>>
    %c3_i32_72 = arith.constant 3 : i32
    %152 = arith.addi %0, %c3_i32_72 : i32
    %c1_i32_73 = arith.constant 1 : i32
    %153 = arith.addi %152, %c1_i32_73 : i32
    %154 = arith.index_cast %153 : i32 to index
    %155 = memref.load %arg2[%154] : memref<30xf32, #tpu.memory_space<smem>>
    %156 = arith.subf %151, %155 : f32
    %157 = vector.broadcast %156 : f32 to vector<1x128xf32>
    %158 = arith.addf %133, %157 : vector<1x128xf32>
    %159 = arith.mulf %39, %158 : vector<1x128xf32>
    %160 = arith.addf %147, %159 : vector<1x128xf32>
    %c6_i32_74 = arith.constant 6 : i32
    %161 = arith.addi %0, %c6_i32_74 : i32
    %c1_i32_75 = arith.constant 1 : i32
    %162 = arith.addi %161, %c1_i32_75 : i32
    %163 = arith.index_cast %162 : i32 to index
    %164 = memref.load %arg3[%163] : memref<30xf32, #tpu.memory_space<smem>>
    %c6_i32_76 = arith.constant 6 : i32
    %165 = arith.addi %0, %c6_i32_76 : i32
    %c1_i32_77 = arith.constant 1 : i32
    %166 = arith.addi %165, %c1_i32_77 : i32
    %167 = arith.index_cast %166 : i32 to index
    %168 = memref.load %arg2[%167] : memref<30xf32, #tpu.memory_space<smem>>
    %169 = arith.subf %164, %168 : f32
    %170 = vector.broadcast %169 : f32 to vector<1x128xf32>
    %171 = arith.addf %133, %170 : vector<1x128xf32>
    %172 = arith.mulf %40, %171 : vector<1x128xf32>
    %173 = arith.addf %160, %172 : vector<1x128xf32>
    %c9_i32_78 = arith.constant 9 : i32
    %174 = arith.addi %0, %c9_i32_78 : i32
    %c1_i32_79 = arith.constant 1 : i32
    %175 = arith.addi %174, %c1_i32_79 : i32
    %176 = arith.index_cast %175 : i32 to index
    %177 = memref.load %arg3[%176] : memref<30xf32, #tpu.memory_space<smem>>
    %c9_i32_80 = arith.constant 9 : i32
    %178 = arith.addi %0, %c9_i32_80 : i32
    %c1_i32_81 = arith.constant 1 : i32
    %179 = arith.addi %178, %c1_i32_81 : i32
    %180 = arith.index_cast %179 : i32 to index
    %181 = memref.load %arg2[%180] : memref<30xf32, #tpu.memory_space<smem>>
    %182 = arith.subf %177, %181 : f32
    %183 = vector.broadcast %182 : f32 to vector<1x128xf32>
    %184 = arith.addf %133, %183 : vector<1x128xf32>
    %185 = arith.mulf %41, %184 : vector<1x128xf32>
    %186 = arith.addf %173, %185 : vector<1x128xf32>
    %c12_i32_82 = arith.constant 12 : i32
    %187 = arith.addi %0, %c12_i32_82 : i32
    %c1_i32_83 = arith.constant 1 : i32
    %188 = arith.addi %187, %c1_i32_83 : i32
    %189 = arith.index_cast %188 : i32 to index
    %190 = memref.load %arg3[%189] : memref<30xf32, #tpu.memory_space<smem>>
    %c12_i32_84 = arith.constant 12 : i32
    %191 = arith.addi %0, %c12_i32_84 : i32
    %c1_i32_85 = arith.constant 1 : i32
    %192 = arith.addi %191, %c1_i32_85 : i32
    %193 = arith.index_cast %192 : i32 to index
    %194 = memref.load %arg2[%193] : memref<30xf32, #tpu.memory_space<smem>>
    %195 = arith.subf %190, %194 : f32
    %196 = vector.broadcast %195 : f32 to vector<1x128xf32>
    %197 = arith.addf %133, %196 : vector<1x128xf32>
    %198 = arith.mulf %42, %197 : vector<1x128xf32>
    %199 = arith.addf %186, %198 : vector<1x128xf32>
    %c0_86 = arith.constant 0 : index
    %c0_87 = arith.constant 0 : index
    %c1_88 = arith.constant 1 : index
    %c0_89 = arith.constant 0 : index
    %200 = vector.load %arg7[%c0_86, %c0_87, %c1_88, %c0_89] : memref<1x1x3x128xf32, #tpu.memory_space<vmem>>, vector<1x1x1x128xf32>
    %201 = vector.shape_cast %200 : vector<1x1x1x128xf32> to vector<1x128xf32>
    %202 = vector.shape_cast %199 : vector<1x128xf32> to vector<1x1x1x128xf32>
    tpu.vector_store %arg7[%c0_86, %c0_87, %c1_88, %c0_89], %202 {strides = array<i32>} : memref<1x1x3x128xf32, #tpu.memory_space<vmem>>, vector<1x1x1x128xf32>,
    %c0_90 = arith.constant 0 : index
    %c2_91 = arith.constant 2 : index
    %c0_92 = arith.constant 0 : index
    %203 = vector.load %arg4[%c0_90, %c2_91, %c0_92] : memref<1x3x128xf32, #tpu.memory_space<vmem>>, vector<1x1x128xf32>
    %204 = vector.shape_cast %203 : vector<1x1x128xf32> to vector<1x128xf32>
    %205 = arith.mulf %37, %204 : vector<1x128xf32>
    %c0_i32_93 = arith.constant 0 : i32
    %206 = arith.addi %0, %c0_i32_93 : i32
    %c2_i32 = arith.constant 2 : i32
    %207 = arith.addi %206, %c2_i32 : i32
    %208 = arith.index_cast %207 : i32 to index
    %209 = memref.load %arg3[%208] : memref<30xf32, #tpu.memory_space<smem>>
    %c0_i32_94 = arith.constant 0 : i32
    %210 = arith.addi %0, %c0_i32_94 : i32
    %c2_i32_95 = arith.constant 2 : i32
    %211 = arith.addi %210, %c2_i32_95 : i32
    %212 = arith.index_cast %211 : i32 to index
    %213 = memref.load %arg2[%212] : memref<30xf32, #tpu.memory_space<smem>>
    %214 = arith.subf %209, %213 : f32
    %215 = vector.broadcast %214 : f32 to vector<1x128xf32>
    %216 = arith.addf %204, %215 : vector<1x128xf32>
    %217 = arith.mulf %38, %216 : vector<1x128xf32>
    %218 = arith.addf %205, %217 : vector<1x128xf32>
    %c3_i32_96 = arith.constant 3 : i32
    %219 = arith.addi %0, %c3_i32_96 : i32
    %c2_i32_97 = arith.constant 2 : i32
    %220 = arith.addi %219, %c2_i32_97 : i32
    %221 = arith.index_cast %220 : i32 to index
    %222 = memref.load %arg3[%221] : memref<30xf32, #tpu.memory_space<smem>>
    %c3_i32_98 = arith.constant 3 : i32
    %223 = arith.addi %0, %c3_i32_98 : i32
    %c2_i32_99 = arith.constant 2 : i32
    %224 = arith.addi %223, %c2_i32_99 : i32
    %225 = arith.index_cast %224 : i32 to index
    %226 = memref.load %arg2[%225] : memref<30xf32, #tpu.memory_space<smem>>
    %227 = arith.subf %222, %226 : f32
    %228 = vector.broadcast %227 : f32 to vector<1x128xf32>
    %229 = arith.addf %204, %228 : vector<1x128xf32>
    %230 = arith.mulf %39, %229 : vector<1x128xf32>
    %231 = arith.addf %218, %230 : vector<1x128xf32>
    %c6_i32_100 = arith.constant 6 : i32
    %232 = arith.addi %0, %c6_i32_100 : i32
    %c2_i32_101 = arith.constant 2 : i32
    %233 = arith.addi %232, %c2_i32_101 : i32
    %234 = arith.index_cast %233 : i32 to index
    %235 = memref.load %arg3[%234] : memref<30xf32, #tpu.memory_space<smem>>
    %c6_i32_102 = arith.constant 6 : i32
    %236 = arith.addi %0, %c6_i32_102 : i32
    %c2_i32_103 = arith.constant 2 : i32
    %237 = arith.addi %236, %c2_i32_103 : i32
    %238 = arith.index_cast %237 : i32 to index
    %239 = memref.load %arg2[%238] : memref<30xf32, #tpu.memory_space<smem>>
    %240 = arith.subf %235, %239 : f32
    %241 = vector.broadcast %240 : f32 to vector<1x128xf32>
    %242 = arith.addf %204, %241 : vector<1x128xf32>
    %243 = arith.mulf %40, %242 : vector<1x128xf32>
    %244 = arith.addf %231, %243 : vector<1x128xf32>
    %c9_i32_104 = arith.constant 9 : i32
    %245 = arith.addi %0, %c9_i32_104 : i32
    %c2_i32_105 = arith.constant 2 : i32
    %246 = arith.addi %245, %c2_i32_105 : i32
    %247 = arith.index_cast %246 : i32 to index
    %248 = memref.load %arg3[%247] : memref<30xf32, #tpu.memory_space<smem>>
    %c9_i32_106 = arith.constant 9 : i32
    %249 = arith.addi %0, %c9_i32_106 : i32
    %c2_i32_107 = arith.constant 2 : i32
    %250 = arith.addi %249, %c2_i32_107 : i32
    %251 = arith.index_cast %250 : i32 to index
    %252 = memref.load %arg2[%251] : memref<30xf32, #tpu.memory_space<smem>>
    %253 = arith.subf %248, %252 : f32
    %254 = vector.broadcast %253 : f32 to vector<1x128xf32>
    %255 = arith.addf %204, %254 : vector<1x128xf32>
    %256 = arith.mulf %41, %255 : vector<1x128xf32>
    %257 = arith.addf %244, %256 : vector<1x128xf32>
    %c12_i32_108 = arith.constant 12 : i32
    %258 = arith.addi %0, %c12_i32_108 : i32
    %c2_i32_109 = arith.constant 2 : i32
    %259 = arith.addi %258, %c2_i32_109 : i32
    %260 = arith.index_cast %259 : i32 to index
    %261 = memref.load %arg3[%260] : memref<30xf32, #tpu.memory_space<smem>>
    %c12_i32_110 = arith.constant 12 : i32
    %262 = arith.addi %0, %c12_i32_110 : i32
    %c2_i32_111 = arith.constant 2 : i32
    %263 = arith.addi %262, %c2_i32_111 : i32
    %264 = arith.index_cast %263 : i32 to index
    %265 = memref.load %arg2[%264] : memref<30xf32, #tpu.memory_space<smem>>
    %266 = arith.subf %261, %265 : f32
    %267 = vector.broadcast %266 : f32 to vector<1x128xf32>
    %268 = arith.addf %204, %267 : vector<1x128xf32>
    %269 = arith.mulf %42, %268 : vector<1x128xf32>
    %270 = arith.addf %257, %269 : vector<1x128xf32>
    %c0_112 = arith.constant 0 : index
    %c0_113 = arith.constant 0 : index
    %c2_114 = arith.constant 2 : index
    %c0_115 = arith.constant 0 : index
    %271 = vector.load %arg7[%c0_112, %c0_113, %c2_114, %c0_115] : memref<1x1x3x128xf32, #tpu.memory_space<vmem>>, vector<1x1x1x128xf32>
    %272 = vector.shape_cast %271 : vector<1x1x1x128xf32> to vector<1x128xf32>
    %273 = vector.shape_cast %270 : vector<1x128xf32> to vector<1x1x1x128xf32>
    tpu.vector_store %arg7[%c0_112, %c0_113, %c2_114, %c0_115], %273 {strides = array<i32>} : memref<1x1x3x128xf32, #tpu.memory_space<vmem>>, vector<1x1x1x128xf32>,
    return
  }
  func.func @transform_0(%arg0: i32, %arg1: i32) -> i32 {
    %c0_i32 = arith.constant 0 : i32
    %c0_i32_0 = arith.constant 0 : i32
    return %c0_i32 : i32
  }
  func.func @transform_1(%arg0: i32, %arg1: i32) -> i32 {
    %c0_i32 = arith.constant 0 : i32
    %c0_i32_0 = arith.constant 0 : i32
    return %c0_i32 : i32
  }
  func.func @transform_2(%arg0: i32, %arg1: i32) -> (i32, i32, i32) {
    %c0_i32 = arith.constant 0 : i32
    %c0_i32_0 = arith.constant 0 : i32
    %c0_i32_1 = arith.constant 0 : i32
    return %arg1, %c0_i32, %c0_i32_0 : i32, i32, i32
  }
  func.func @transform_3(%arg0: i32, %arg1: i32) -> (i32, i32, i32, i32) {
    %c0_i32 = arith.constant 0 : i32
    %c0_i32_0 = arith.constant 0 : i32
    %c0_i32_1 = arith.constant 0 : i32
    return %arg0, %arg1, %c0_i32, %c0_i32_0 : i32, i32, i32, i32
  }
  func.func @transform_4(%arg0: i32, %arg1: i32) -> (i32, i32, i32, i32) {
    %c0_i32 = arith.constant 0 : i32
    %c0_i32_0 = arith.constant 0 : i32
    %c0_i32_1 = arith.constant 0 : i32
    return %arg0, %arg1, %c0_i32, %c0_i32_0 : i32, i32, i32, i32
  }
  func.func @transform_5(%arg0: i32, %arg1: i32) -> (i32, i32, i32, i32) {
    %c0_i32 = arith.constant 0 : i32
    %c0_i32_0 = arith.constant 0 : i32
    %c0_i32_1 = arith.constant 0 : i32
    return %arg0, %arg1, %c0_i32, %c0_i32_0 : i32, i32, i32, i32
  }
}

</mosaic_0001>

<llo_original>
// kernel: squeeze.7
$region0: #{squeeze.7}
  %s0 = inlined_call_operand.hbm [shape: f32[2,1,8,8,8], index: 0, kind: input, shape index: {}]
  %s1 = inlined_call_operand.vmem [shape: f32[2,512], index: 1, kind: output, shape index: {}]
  $region1: #{squeeze.7} parent=0
    #allocation0 [shape = 'u8[65536]{0}', space=vmem, size = 0x10000, scoped, tag = 'operand span for operand 0']
    #allocation1 [shape = 's32[1]{0}', space=sflag, size = 0x4, scoped, tag = 'scoped memory for squeeze.7']
    #allocation2 [shape = 'u8[16384]{0}', space=vmem, size = 0x4000, scoped, tag = 'scoped mem for output reshape']
    %2 = vsyncpa [#allocation1], 0
    %4 = vsyncadd [#allocation1], 0
    %s6 = sshll.u32 %s0, 4
    %s7 = int_to_ptr.hbm [resolvable:$true] %s6
    %s8 = sshll.u32 [#allocation0], 4
    %s9 = int_to_ptr.vmem [resolvable:$true] %s8
    %11 = dma.hbm_to_vmem [thread:$0]  %s7, 2048, %s9, [#allocation1]
    %13 = dma.done [#allocation1], 2048
    %s14 = smov 3
    %v15 = vld [vmem:[#allocation0] ss:$16 sm:%s14]
    %s16 = smov 12
    %v17 = vld [vmem:[#allocation0] ss:$16 sm:%s16]
    %vm18 = vcmask 1043458
    %v19 = vsel %vm18, %v17, %v15
    %s20 = smov 48
    %v21 = vld [vmem:[#allocation0] ss:$16 sm:%s20]
    %vm22 = vcmask 1045508
    %v23 = vsel %vm22, %v21, %v19
    %s24 = smov 192
    %v25 = vld [vmem:[#allocation0] ss:$16 sm:%s24]
    %vm26 = vcmask 1047558
    %v27 = vsel %vm26, %v25, %v23
    %vm28 = vcmask 64512
    %29 = vst.msk [vmem:[#allocation2] ss:$8 sm:$0xf] %vm28, %v27
    %s30 = scalar_lea.vmem [#allocation2], 4294967265
    %31 = vst.msk [vmem:[%s30] ss:$8 sm:$0xf0] %vm28, %v27
    %s32 = scalar_lea.vmem [#allocation0], 15
    %v33 = vld [vmem:[%s32] sm:$0x1]
    %s34 = scalar_lea.vmem [#allocation0], 127
    %s35 = smov 6
    %v36 = vld [vmem:[%s34] ss:$-48 sm:%s35]
    %vm37 = vcmask 1042433
    %v38 = vsel %vm37, %v36, %v33
    %s39 = scalar_lea.vmem [#allocation0], 239
    %s40 = smov 24
    %v41 = vld [vmem:[%s39] ss:$-48 sm:%s40]
    %vm42 = vcmask 1044483
    %v43 = vsel %vm42, %v41, %v38
    %s44 = scalar_lea.vmem [#allocation0], 351
    %s45 = smov 96
    %v46 = vld [vmem:[%s44] ss:$-48 sm:%s45]
    %vm47 = vcmask 1046533
    %v48 = vsel %vm47, %v46, %v43
    %s49 = scalar_lea.vmem [#allocation0], 120
    %v50 = vld [vmem:[%s49] sm:$0x80]
    %vm51 = vcmask 1047559
    %v52 = vsel %vm51, %v50, %v48
    %53 = vrot.lane.b32.xlu0 %v52, 120
    %v54 = vpop.permute.xlu0 %53
    %vm55 = vcmask 1048512
    %56 = vst.msk [vmem:[#allocation2] sm:$0x3] %vm55, %v54
    %s57 = scalar_lea.vmem [#allocation2], 6
    %58 = vst.msk [vmem:[%s57] sm:$0xc] %vm55, %v54
    %s59 = scalar_lea.vmem [#allocation2], 12
    %60 = vst.msk [vmem:[%s59] sm:$0x30] %vm55, %v54
    %s61 = scalar_lea.vmem [#allocation2], 18
    %62 = vst.msk [vmem:[%s61] sm:$0xc0] %vm55, %v54
    %s63 = scalar_lea.vmem [#allocation0], 14
    %v64 = vld [vmem:[%s63] sm:$0x1]
    %s65 = scalar_lea.vmem [#allocation0], 126
    %s66 = smov 6
    %v67 = vld [vmem:[%s65] ss:$-48 sm:%s66]
    %vm68 = vcmask 1042433
    %v69 = vsel %vm68, %v67, %v64
    %s70 = scalar_lea.vmem [#allocation0], 238
    %s71 = smov 24
    %v72 = vld [vmem:[%s70] ss:$-48 sm:%s71]
    %vm73 = vcmask 1044483
    %v74 = vsel %vm73, %v72, %v69
    %s75 = scalar_lea.vmem [#allocation0], 350
    %s76 = smov 96
    %v77 = vld [vmem:[%s75] ss:$-48 sm:%s76]
    %vm78 = vcmask 1046533
    %v79 = vsel %vm78, %v77, %v74
    %s80 = scalar_lea.vmem [#allocation0], 119
    %v81 = vld [vmem:[%s80] sm:$0x80]
    %vm82 = vcmask 1047559
    %v83 = vsel %vm82, %v81, %v79
    %84 = vrot.lane.b32.xlu0 %v83, 112
    %v85 = vpop.permute.xlu0 %84
    %vm86 = vcmask 982912
    %87 = vst.msk [vmem:[#allocation2] sm:$0x3] %vm86, %v85
    %s88 = scalar_lea.vmem [#allocation2], 6
    %89 = vst.msk [vmem:[%s88] sm:$0xc] %vm86, %v85
    %s90 = scalar_lea.vmem [#allocation2], 12
    %91 = vst.msk [vmem:[%s90] sm:$0x30] %vm86, %v85
    %s92 = scalar_lea.vmem [#allocation2], 18
    %93 = vst.msk [vmem:[%s92] sm:$0xc0] %vm86, %v85
    %s94 = scalar_lea.vmem [#allocation0], 13
    %v95 = vld [vmem:[%s94] sm:$0x1]
    %s96 = scalar_lea.vmem [#allocation0], 125
    %s97 = smov 6
    %v98 = vld [vmem:[%s96] ss:$-48 sm:%s97]
    %vm99 = vcmask 1042433
    %v100 = vsel %vm99, %v98, %v95
    %s101 = scalar_lea.vmem [#allocation0], 237
    %s102 = smov 24
    %v103 = vld [vmem:[%s101] ss:$-48 sm:%s102]
    %vm104 = vcmask 1044483
    %v105 = vsel %vm104, %v103, %v100
    %s106 = scalar_lea.vmem [#allocation0], 349
    %s107 = smov 96
    %v108 = vld [vmem:[%s106] ss:$-48 sm:%s107]
    %vm109 = vcmask 1046533
    %v110 = vsel %vm109, %v108, %v105
    %s111 = scalar_lea.vmem [#allocation0], 118
    %v112 = vld [vmem:[%s111] sm:$0x80]
    %vm113 = vcmask 1047559
    %v114 = vsel %vm113, %v112, %v110
    %115 = vrot.lane.b32.xlu0 %v114, 104
    %v116 = vpop.permute.xlu0 %115
    %vm117 = vcmask 917312
    %118 = vst.msk [vmem:[#allocation2] sm:$0x3] %vm117, %v116
    %s119 = scalar_lea.vmem [#allocation2], 6
    %120 = vst.msk [vmem:[%s119] sm:$0xc] %vm117, %v116
    %s121 = scalar_lea.vmem [#allocation2], 12
    %122 = vst.msk [vmem:[%s121] sm:$0x30] %vm117, %v116
    %s123 = scalar_lea.vmem [#allocation2], 18
    %124 = vst.msk [vmem:[%s123] sm:$0xc0] %vm117, %v116
    %s125 = scalar_lea.vmem [#allocation0], 12
    %v126 = vld [vmem:[%s125] sm:$0x1]
    %s127 = scalar_lea.vmem [#allocation0], 124
    %s128 = smov 6
    %v129 = vld [vmem:[%s127] ss:$-48 sm:%s128]
    %vm130 = vcmask 1042433
    %v131 = vsel %vm130, %v129, %v126
    %s132 = scalar_lea.vmem [#allocation0], 236
    %s133 = smov 24
    %v134 = vld [vmem:[%s132] ss:$-48 sm:%s133]
    %vm135 = vcmask 1044483
    %v136 = vsel %vm135, %v134, %v131
    %s137 = scalar_lea.vmem [#allocation0], 348
    %s138 = smov 96
    %v139 = vld [vmem:[%s137] ss:$-48 sm:%s138]
    %vm140 = vcmask 1046533
    %v141 = vsel %vm140, %v139, %v136
    %s142 = scalar_lea.vmem [#allocation0], 117
    %v143 = vld [vmem:[%s142] sm:$0x80]
    %vm144 = vcmask 1047559
    %v145 = vsel %vm144, %v143, %v141
    %146 = vrot.lane.b32.xlu0 %v145, 96
    %v147 = vpop.permute.xlu0 %146
    %vm148 = vcmask 851712
    %149 = vst.msk [vmem:[#allocation2] sm:$0x3] %vm148, %v147
    %s150 = scalar_lea.vmem [#allocation2], 6
    %151 = vst.msk [vmem:[%s150] sm:$0xc] %vm148, %v147
    %s152 = scalar_lea.vmem [#allocation2], 12
    %153 = vst.msk [vmem:[%s152] sm:$0x30] %vm148, %v147
    %s154 = scalar_lea.vmem [#allocation2], 18
    %155 = vst.msk [vmem:[%s154] sm:$0xc0] %vm148, %v147
    %s156 = scalar_lea.vmem [#allocation0], 11
    %v157 = vld [vmem:[%s156] sm:$0x1]
    %s158 = scalar_lea.vmem [#allocation0], 123
    %s159 = smov 6
    %v160 = vld [vmem:[%s158] ss:$-48 sm:%s159]
    %vm161 = vcmask 1042433
    %v162 = vsel %vm161, %v160, %v157
    %s163 = scalar_lea.vmem [#allocation0], 235
    %s164 = smov 24
    %v165 = vld [vmem:[%s163] ss:$-48 sm:%s164]
    %vm166 = vcmask 1044483
    %v167 = vsel %vm166, %v165, %v162
    %s168 = scalar_lea.vmem [#allocation0], 347
    %s169 = smov 96
    %v170 = vld [vmem:[%s168] ss:$-48 sm:%s169]
    %vm171 = vcmask 1046533
    %v172 = vsel %vm171, %v170, %v167
    %s173 = scalar_lea.vmem [#allocation0], 116
    %v174 = vld [vmem:[%s173] sm:$0x80]
    %vm175 = vcmask 1047559
    %v176 = vsel %vm175, %v174, %v172
    %177 = vrot.lane.b32.xlu0 %v176, 88
    %v178 = vpop.permute.xlu0 %177
    %vm179 = vcmask 786112
    %180 = vst.msk [vmem:[#allocation2] sm:$0x3] %vm179, %v178
    %s181 = scalar_lea.vmem [#allocation2], 6
    %182 = vst.msk [vmem:[%s181] sm:$0xc] %vm179, %v178
    %s183 = scalar_lea.vmem [#allocation2], 12
    %184 = vst.msk [vmem:[%s183] sm:$0x30] %vm179, %v178
    %s185 = scalar_lea.vmem [#allocation2], 18
    %186 = vst.msk [vmem:[%s185] sm:$0xc0] %vm179, %v178
    %s187 = scalar_lea.vmem [#allocation0], 10
    %v188 = vld [vmem:[%s187] sm:$0x1]
    %s189 = scalar_lea.vmem [#allocation0], 122
    %s190 = smov 6
    %v191 = vld [vmem:[%s189] ss:$-48 sm:%s190]
    %vm192 = vcmask 1042433
    %v193 = vsel %vm192, %v191, %v188
    %s194 = scalar_lea.vmem [#allocation0], 234
    %s195 = smov 24
    %v196 = vld [vmem:[%s194] ss:$-48 sm:%s195]
    %vm197 = vcmask 1044483
    %v198 = vsel %vm197, %v196, %v193
    %s199 = scalar_lea.vmem [#allocation0], 346
    %s200 = smov 96
    %v201 = vld [vmem:[%s199] ss:$-48 sm:%s200]
    %vm202 = vcmask 1046533
    %v203 = vsel %vm202, %v201, %v198
    %s204 = scalar_lea.vmem [#allocation0], 115
    %v205 = vld [vmem:[%s204] sm:$0x80]
    %vm206 = vcmask 1047559
    %v207 = vsel %vm206, %v205, %v203
    %208 = vrot.lane.b32.xlu0 %v207, 80
    %v209 = vpop.permute.xlu0 %208
    %vm210 = vcmask 720512
    %211 = vst.msk [vmem:[#allocation2] sm:$0x3] %vm210, %v209
    %s212 = scalar_lea.vmem [#allocation2], 6
    %213 = vst.msk [vmem:[%s212] sm:$0xc] %vm210, %v209
    %s214 = scalar_lea.vmem [#allocation2], 12
    %215 = vst.msk [vmem:[%s214] sm:$0x30] %vm210, %v209
    %s216 = scalar_lea.vmem [#allocation2], 18
    %217 = vst.msk [vmem:[%s216] sm:$0xc0] %vm210, %v209
    %s218 = scalar_lea.vmem [#allocation0], 9
    %v219 = vld [vmem:[%s218] sm:$0x1]
    %s220 = scalar_lea.vmem [#allocation0], 121
    %s221 = smov 6
    %v222 = vld [vmem:[%s220] ss:$-48 sm:%s221]
    %vm223 = vcmask 1042433
    %v224 = vsel %vm223, %v222, %v219
    %s225 = scalar_lea.vmem [#allocation0], 233
    %s226 = smov 24
    %v227 = vld [vmem:[%s225] ss:$-48 sm:%s226]
    %vm228 = vcmask 1044483
    %v229 = vsel %vm228, %v227, %v224
    %s230 = scalar_lea.vmem [#allocation0], 345
    %s231 = smov 96
    %v232 = vld [vmem:[%s230] ss:$-48 sm:%s231]
    %vm233 = vcmask 1046533
    %v234 = vsel %vm233, %v232, %v229
    %s235 = scalar_lea.vmem [#allocation0], 114
    %v236 = vld [vmem:[%s235] sm:$0x80]
    %vm237 = vcmask 1047559
    %v238 = vsel %vm237, %v236, %v234
    %239 = vrot.lane.b32.xlu0 %v238, 72
    %v240 = vpop.permute.xlu0 %239
    %vm241 = vcmask 654912
    %242 = vst.msk [vmem:[#allocation2] sm:$0x3] %vm241, %v240
    %s243 = scalar_lea.vmem [#allocation2], 6
    %244 = vst.msk [vmem:[%s243] sm:$0xc] %vm241, %v240
    %s245 = scalar_lea.vmem [#allocation2], 12
    %246 = vst.msk [vmem:[%s245] sm:$0x30] %vm241, %v240
    %s247 = scalar_lea.vmem [#allocation2], 18
    %248 = vst.msk [vmem:[%s247] sm:$0xc0] %vm241, %v240
    %s249 = scalar_lea.vmem [#allocation0], 8
    %v250 = vld [vmem:[%s249] sm:$0x1]
    %s251 = scalar_lea.vmem [#allocation0], 120
    %s252 = smov 6
    %v253 = vld [vmem:[%s251] ss:$-48 sm:%s252]
    %vm254 = vcmask 1042433
    %v255 = vsel %vm254, %v253, %v250
    %s256 = scalar_lea.vmem [#allocation0], 232
    %s257 = smov 24
    %v258 = vld [vmem:[%s256] ss:$-48 sm:%s257]
    %vm259 = vcmask 1044483
    %v260 = vsel %vm259, %v258, %v255
    %s261 = scalar_lea.vmem [#allocation0], 344
    %s262 = smov 96
    %v263 = vld [vmem:[%s261] ss:$-48 sm:%s262]
    %vm264 = vcmask 1046533
    %v265 = vsel %vm264, %v263, %v260
    %s266 = scalar_lea.vmem [#allocation0], 113
    %v267 = vld [vmem:[%s266] sm:$0x80]
    %vm268 = vcmask 1047559
    %v269 = vsel %vm268, %v267, %v265
    %270 = vrot.lane.b32.xlu0 %v269, 64
    %v271 = vpop.permute.xlu0 %270
    %vm272 = vcmask 589312
    %273 = vst.msk [vmem:[#allocation2] sm:$0x3] %vm272, %v271
    %s274 = scalar_lea.vmem [#allocation2], 6
    %275 = vst.msk [vmem:[%s274] sm:$0xc] %vm272, %v271
    %s276 = scalar_lea.vmem [#allocation2], 12
    %277 = vst.msk [vmem:[%s276] sm:$0x30] %vm272, %v271
    %s278 = scalar_lea.vmem [#allocation2], 18
    %279 = vst.msk [vmem:[%s278] sm:$0xc0] %vm272, %v271
    %s280 = scalar_lea.vmem [#allocation0], 7
    %v281 = vld [vmem:[%s280] sm:$0x1]
    %s282 = scalar_lea.vmem [#allocation0], 119
    %s283 = smov 6
    %v284 = vld [vmem:[%s282] ss:$-48 sm:%s283]
    %vm285 = vcmask 1042433
    %v286 = vsel %vm285, %v284, %v281
    %s287 = scalar_lea.vmem [#allocation0], 231
    %s288 = smov 24
    %v289 = vld [vmem:[%s287] ss:$-48 sm:%s288]
    %vm290 = vcmask 1044483
    %v291 = vsel %vm290, %v289, %v286
    %s292 = scalar_lea.vmem [#allocation0], 343
    %s293 = smov 96
    %v294 = vld [vmem:[%s292] ss:$-48 sm:%s293]
    %vm295 = vcmask 1046533
    %v296 = vsel %vm295, %v294, %v291
    %s297 = scalar_lea.vmem [#allocation0], 112
    %v298 = vld [vmem:[%s297] sm:$0x80]
    %vm299 = vcmask 1047559
    %v300 = vsel %vm299, %v298, %v296
    %301 = vrot.lane.b32.xlu0 %v300, 56
    %v302 = vpop.permute.xlu0 %301
    %vm303 = vcmask 523712
    %304 = vst.msk [vmem:[#allocation2] sm:$0x3] %vm303, %v302
    %s305 = scalar_lea.vmem [#allocation2], 6
    %306 = vst.msk [vmem:[%s305] sm:$0xc] %vm303, %v302
    %s307 = scalar_lea.vmem [#allocation2], 12
    %308 = vst.msk [vmem:[%s307] sm:$0x30] %vm303, %v302
    %s309 = scalar_lea.vmem [#allocation2], 18
    %310 = vst.msk [vmem:[%s309] sm:$0xc0] %vm303, %v302
    %s311 = scalar_lea.vmem [#allocation0], 6
    %v312 = vld [vmem:[%s311] sm:$0x1]
    %s313 = scalar_lea.vmem [#allocation0], 118
    %s314 = smov 6
    %v315 = vld [vmem:[%s313] ss:$-48 sm:%s314]
    %vm316 = vcmask 1042433
    %v317 = vsel %vm316, %v315, %v312
    %s318 = scalar_lea.vmem [#allocation0], 230
    %s319 = smov 24
    %v320 = vld [vmem:[%s318] ss:$-48 sm:%s319]
    %vm321 = vcmask 1044483
    %v322 = vsel %vm321, %v320, %v317
    %s323 = scalar_lea.vmem [#allocation0], 342
    %s324 = smov 96
    %v325 = vld [vmem:[%s323] ss:$-48 sm:%s324]
    %vm326 = vcmask 1046533
    %v327 = vsel %vm326, %v325, %v322
    %s328 = scalar_lea.vmem [#allocation0], 111
    %v329 = vld [vmem:[%s328] sm:$0x80]
    %vm330 = vcmask 1047559
    %v331 = vsel %vm330, %v329, %v327
    %332 = vrot.lane.b32.xlu0 %v331, 48
    %v333 = vpop.permute.xlu0 %332
    %vm334 = vcmask 458112
    %335 = vst.msk [vmem:[#allocation2] sm:$0x3] %vm334, %v333
    %s336 = scalar_lea.vmem [#allocation2], 6
    %337 = vst.msk [vmem:[%s336] sm:$0xc] %vm334, %v333
    %s338 = scalar_lea.vmem [#allocation2], 12
    %339 = vst.msk [vmem:[%s338] sm:$0x30] %vm334, %v333
    %s340 = scalar_lea.vmem [#allocation2], 18
    %341 = vst.msk [vmem:[%s340] sm:$0xc0] %vm334, %v333
    %s342 = scalar_lea.vmem [#allocation0], 5
    %v343 = vld [vmem:[%s342] sm:$0x1]
    %s344 = scalar_lea.vmem [#allocation0], 117
    %s345 = smov 6
    %v346 = vld [vmem:[%s344] ss:$-48 sm:%s345]
    %vm347 = vcmask 1042433
    %v348 = vsel %vm347, %v346, %v343
    %s349 = scalar_lea.vmem [#allocation0], 229
    %s350 = smov 24
    %v351 = vld [vmem:[%s349] ss:$-48 sm:%s350]
    %vm352 = vcmask 1044483
    %v353 = vsel %vm352, %v351, %v348
    %s354 = scalar_lea.vmem [#allocation0], 341
    %s355 = smov 96
    %v356 = vld [vmem:[%s354] ss:$-48 sm:%s355]
    %vm357 = vcmask 1046533
    %v358 = vsel %vm357, %v356, %v353
    %s359 = scalar_lea.vmem [#allocation0], 110
    %v360 = vld [vmem:[%s359] sm:$0x80]
    %vm361 = vcmask 1047559
    %v362 = vsel %vm361, %v360, %v358
    %363 = vrot.lane.b32.xlu0 %v362, 40
    %v364 = vpop.permute.xlu0 %363
    %vm365 = vcmask 392512
    %366 = vst.msk [vmem:[#allocation2] sm:$0x3] %vm365, %v364
    %s367 = scalar_lea.vmem [#allocation2], 6
    %368 = vst.msk [vmem:[%s367] sm:$0xc] %vm365, %v364
    %s369 = scalar_lea.vmem [#allocation2], 12
    %370 = vst.msk [vmem:[%s369] sm:$0x30] %vm365, %v364
    %s371 = scalar_lea.vmem [#allocation2], 18
    %372 = vst.msk [vmem:[%s371] sm:$0xc0] %vm365, %v364
    %s373 = scalar_lea.vmem [#allocation0], 4
    %v374 = vld [vmem:[%s373] sm:$0x1]
    %s375 = scalar_lea.vmem [#allocation0], 116
    %s376 = smov 6
    %v377 = vld [vmem:[%s375] ss:$-48 sm:%s376]
    %vm378 = vcmask 1042433
    %v379 = vsel %vm378, %v377, %v374
    %s380 = scalar_lea.vmem [#allocation0], 228
    %s381 = smov 24
    %v382 = vld [vmem:[%s380] ss:$-48 sm:%s381]
    %vm383 = vcmask 1044483
    %v384 = vsel %vm383, %v382, %v379
    %s385 = scalar_lea.vmem [#allocation0], 340
    %s386 = smov 96
    %v387 = vld [vmem:[%s385] ss:$-48 sm:%s386]
    %vm388 = vcmask 1046533
    %v389 = vsel %vm388, %v387, %v384
    %s390 = scalar_lea.vmem [#allocation0], 109
    %v391 = vld [vmem:[%s390] sm:$0x80]
    %vm392 = vcmask 1047559
    %v393 = vsel %vm392, %v391, %v389
    %394 = vrot.lane.b32.xlu0 %v393, 32
    %v395 = vpop.permute.xlu0 %394
    %vm396 = vcmask 326912
    %397 = vst.msk [vmem:[#allocation2] sm:$0x3] %vm396, %v395
    %s398 = scalar_lea.vmem [#allocation2], 6
    %399 = vst.msk [vmem:[%s398] sm:$0xc] %vm396, %v395
    %s400 = scalar_lea.vmem [#allocation2], 12
    %401 = vst.msk [vmem:[%s400] sm:$0x30] %vm396, %v395
    %s402 = scalar_lea.vmem [#allocation2], 18
    %403 = vst.msk [vmem:[%s402] sm:$0xc0] %vm396, %v395
    %s404 = scalar_lea.vmem [#allocation0], 3
    %v405 = vld [vmem:[%s404] sm:$0x1]
    %s406 = scalar_lea.vmem [#allocation0], 115
    %s407 = smov 6
    %v408 = vld [vmem:[%s406] ss:$-48 sm:%s407]
    %vm409 = vcmask 1042433
    %v410 = vsel %vm409, %v408, %v405
    %s411 = scalar_lea.vmem [#allocation0], 227
    %s412 = smov 24
    %v413 = vld [vmem:[%s411] ss:$-48 sm:%s412]
    %vm414 = vcmask 1044483
    %v415 = vsel %vm414, %v413, %v410
    %s416 = scalar_lea.vmem [#allocation0], 339
    %s417 = smov 96
    %v418 = vld [vmem:[%s416] ss:$-48 sm:%s417]
    %vm419 = vcmask 1046533
    %v420 = vsel %vm419, %v418, %v415
    %s421 = scalar_lea.vmem [#allocation0], 108
    %v422 = vld [vmem:[%s421] sm:$0x80]
    %vm423 = vcmask 1047559
    %v424 = vsel %vm423, %v422, %v420
    %425 = vrot.lane.b32.xlu0 %v424, 24
    %v426 = vpop.permute.xlu0 %425
    %vm427 = vcmask 261312
    %428 = vst.msk [vmem:[#allocation2] sm:$0x3] %vm427, %v426
    %s429 = scalar_lea.vmem [#allocation2], 6
    %430 = vst.msk [vmem:[%s429] sm:$0xc] %vm427, %v426
    %s431 = scalar_lea.vmem [#allocation2], 12
    %432 = vst.msk [vmem:[%s431] sm:$0x30] %vm427, %v426
    %s433 = scalar_lea.vmem [#allocation2], 18
    %434 = vst.msk [vmem:[%s433] sm:$0xc0] %vm427, %v426
    %s435 = scalar_lea.vmem [#allocation0], 2
    %v436 = vld [vmem:[%s435] sm:$0x1]
    %s437 = scalar_lea.vmem [#allocation0], 114
    %s438 = smov 6
    %v439 = vld [vmem:[%s437] ss:$-48 sm:%s438]
    %vm440 = vcmask 1042433
    %v441 = vsel %vm440, %v439, %v436
    %s442 = scalar_lea.vmem [#allocation0], 226
    %s443 = smov 24
    %v444 = vld [vmem:[%s442] ss:$-48 sm:%s443]
    %vm445 = vcmask 1044483
    %v446 = vsel %vm445, %v444, %v441
    %s447 = scalar_lea.vmem [#allocation0], 338
    %s448 = smov 96
    %v449 = vld [vmem:[%s447] ss:$-48 sm:%s448]
    %vm450 = vcmask 1046533
    %v451 = vsel %vm450, %v449, %v446
    %s452 = scalar_lea.vmem [#allocation0], 107
    %v453 = vld [vmem:[%s452] sm:$0x80]
    %vm454 = vcmask 1047559
    %v455 = vsel %vm454, %v453, %v451
    %456 = vrot.lane.b32.xlu0 %v455, 16
    %v457 = vpop.permute.xlu0 %456
    %vm458 = vcmask 195712
    %459 = vst.msk [vmem:[#allocation2] sm:$0x3] %vm458, %v457
    %s460 = scalar_lea.vmem [#allocation2], 6
    %461 = vst.msk [vmem:[%s460] sm:$0xc] %vm458, %v457
    %s462 = scalar_lea.vmem [#allocation2], 12
    %463 = vst.msk [vmem:[%s462] sm:$0x30] %vm458, %v457
    %s464 = scalar_lea.vmem [#allocation2], 18
    %465 = vst.msk [vmem:[%s464] sm:$0xc0] %vm458, %v457
    %s466 = scalar_lea.vmem [#allocation0], 1
    %v467 = vld [vmem:[%s466] sm:$0x1]
    %s468 = scalar_lea.vmem [#allocation0], 113
    %s469 = smov 6
    %v470 = vld [vmem:[%s468] ss:$-48 sm:%s469]
    %vm471 = vcmask 1042433
    %v472 = vsel %vm471, %v470, %v467
    %s473 = scalar_lea.vmem [#allocation0], 225
    %s474 = smov 24
    %v475 = vld [vmem:[%s473] ss:$-48 sm:%s474]
    %vm476 = vcmask 1044483
    %v477 = vsel %vm476, %v475, %v472
    %s478 = scalar_lea.vmem [#allocation0], 337
    %s479 = smov 96
    %v480 = vld [vmem:[%s478] ss:$-48 sm:%s479]
    %vm481 = vcmask 1046533
    %v482 = vsel %vm481, %v480, %v477
    %s483 = scalar_lea.vmem [#allocation0], 106
    %v484 = vld [vmem:[%s483] sm:$0x80]
    %vm485 = vcmask 1047559
    %v486 = vsel %vm485, %v484, %v482
    %487 = vrot.lane.b32.xlu0 %v486, 8
    %v488 = vpop.permute.xlu0 %487
    %vm489 = vcmask 130112
    %490 = vst.msk [vmem:[#allocation2] sm:$0x3] %vm489, %v488
    %s491 = scalar_lea.vmem [#allocation2], 6
    %492 = vst.msk [vmem:[%s491] sm:$0xc] %vm489, %v488
    %s493 = scalar_lea.vmem [#allocation2], 12
    %494 = vst.msk [vmem:[%s493] sm:$0x30] %vm489, %v488
    %s495 = scalar_lea.vmem [#allocation2], 18
    %496 = vst.msk [vmem:[%s495] sm:$0xc0] %vm489, %v488
    %s498 = ssub.s32 4, 1
    %v499 = vld [vmem:[#allocation2] sm:%s498]
    %s501 = ssub.s32 4, 1
    %502 = vst [vmem:[%s1] sm:%s501] %v499
    %s503 = scalar_lea.vmem [#allocation2], 8
    %v504 = vld [vmem:[%s503] sm:%s498]
    %s506 = ssub.s32 4, 1
    %s507 = scalar_lea.vmem %s1, 2
    %508 = vst [vmem:[%s507] sm:%s506] %v504
    %s509 = scalar_lea.vmem [#allocation2], 16
    %v510 = vld [vmem:[%s509] sm:%s498]
    %s512 = ssub.s32 4, 1
    %s513 = scalar_lea.vmem %s1, 4
    %514 = vst [vmem:[%s513] sm:%s512] %v510
    %s515 = scalar_lea.vmem [#allocation2], 24
    %v516 = vld [vmem:[%s515] sm:%s498]
    %s518 = ssub.s32 4, 1
    %s519 = scalar_lea.vmem %s1, 6
    %520 = vst [vmem:[%s519] sm:%s518] %v516
    %521 = vsyncpa [#allocation1], 1

// kernel: dense_motion_forward.8
$region0: #{dense_motion_forward.8}
  #allocation0 [shape = 'u32[]', space=smem, size = 0x4, offset = 0x4, fixed_abs, tag = 'smem constant byte address 0x4 - core index']
  #allocation1 [shape = 'u32[72,128]{1,0:T(1,128)}', space=vmem, size = 0x9000, scoped, tag = 'internal scratch']
  %s0 = inlined_call_operand.vmem [shape: f32[30], index: 0, kind: input, shape index: {}]
  %s1 = inlined_call_operand.vmem [shape: f32[30], index: 1, kind: input, shape index: {}]
  %s2 = inlined_call_operand.vmem [shape: f32[8,3,128], index: 2, kind: input, shape index: {}]
  %s3 = inlined_call_operand.vmem [shape: f32[2,8,6,128], index: 3, kind: output, shape index: {0}]
  %s4 = inlined_call_operand.vmem [shape: f32[2,8,1,128], index: 4, kind: output, shape index: {1}]
  %5 = xla_tuple %s3, %s4
  %s6 = sld [smem:[#allocation0]]
  $region61: #{dense_motion_forward.8} parent=0
    _
  %s8 = ssub.s32 1, %s6
  %s9 = scalar_select 0, %s8, %s6
  $region1: #{dense_motion_forward.8} parent=0
    #allocation2 [shape = 'u8[512]{0}', space=smem, size = 0x200, scoped, tag = 'input window, operand 0, single buffered']
    #allocation3 [shape = 's32[2]{0}', space=sflag, size = 0x8, scoped, tag = 'scoped memory for dense_motion_forward.8']
    #allocation4 [shape = 'u8[512]{0}', space=smem, size = 0x200, scoped, tag = 'input window, operand 1, single buffered']
    #allocation5 [shape = 's32[1]{0}', space=sflag, size = 0x4, scoped, tag = 'scoped memory for dense_motion_forward.8']
    %10 = vsyncpa [#allocation3], 0
    %11 = vsyncpa [#allocation5], 0
    loop: start=0, step=1, limit=18
    $region2: #{dense_motion_forward.8} parent=1 // loop_pre_header
      _
    $region3: #{dense_motion_forward.8} parent=1 // loop_header
      %s13 = sphi 0, %s17
      %p14 = scmp.ge.s32.totalorder %s13, 18
      %s20 = sphi 0, %s32
      %s21 = sphi 0, %s28
      %s22 = sphi 0, %s20
      %s23 = sphi 0, %s21
      %s24 = sphi 0, %s22
      %s25 = sphi 0, %s23
      %s33 = sphi 0, %s33
      %s35 = sphi 0, %s33
      %s36 = sphi 0, %s35
      %s50 = sphi 0, %s36
      %s54 = sphi 0, %s54
      %s56 = sphi 0, %s54
      %s57 = sphi 0, %s56
      %s71 = sphi 0, %s57
      %s77 = sphi 0, %s79
      %s80 = sphi 0, %s77
      %s81 = sphi 0, %s80
      %s97 = sphi 0, %s81
      %s105 = sphi 0, %s107
      %s108 = sphi 0, %s105
      %s109 = sphi 0, %s108
      %s125 = sphi 0, %s109
      %s133 = sphi 0, %s135
      %s136 = sphi 0, %s133
      %s137 = sphi 0, %s136
      %s153 = sphi 0, %s137
    $region4: #{dense_motion_forward.8} parent=1 // loop_header_branch
      %16 = sbr.rel (%p14) target = $region8
    $region5: #{dense_motion_forward.8} parent=1 // loop_body
      %s18 = ssub.s32 %s13, 1
      %s19 = ssub.s32 %s13, 2
      %s26 = sadd.s32 1, %s21
      %p27 = scmp.ge.s32.totalorder %s26, 8
      %s28 = scalar_select %p27, 0, %s26
      %s29 = sadd.s32 1, %s20
      %s30 = scalar_select %p27, %s29, %s20
      %p31 = scmp.ge.s32.totalorder %s30, 2
      %s32 = scalar_select %p31, 0, %s30
      %s34 = sadd.s32 %s33, 1
      %p37 = scmp.eq.s32.totalorder %s13, 15
      %p38 = scmp.ne.s32.totalorder %s33, %s35
      %p39 = scmp.eq.s32.totalorder %s13, 0
      %p40 = por %p38, %p39
      %p41 = scmp.ne.s32.totalorder %s33, %s35
      %p42 = scmp.eq.s32.totalorder %s18, 15
      %p43 = por %p41, %p42
      %p44 = scmp.ne.s32.totalorder %s35, %s36
      %p45 = scmp.eq.s32.totalorder %s18, 0
      %p46 = por %p44, %p45
      %p47 = scmp.ne.s32.totalorder %s35, %s36
      %p48 = scmp.eq.s32.totalorder %s19, 15
      %p49 = por %p47, %p48
      %p51 = scmp.ne.s32.totalorder %s36, %s50
      %p52 = scmp.eq.s32.totalorder %s19, 0
      %p53 = por %p51, %p52
      %s55 = sadd.s32 %s54, 1
      %p58 = scmp.eq.s32.totalorder %s13, 15
      %p59 = scmp.ne.s32.totalorder %s54, %s56
      %p60 = scmp.eq.s32.totalorder %s13, 0
      %p61 = por %p59, %p60
      %p62 = scmp.ne.s32.totalorder %s54, %s56
      %p63 = scmp.eq.s32.totalorder %s18, 15
      %p64 = por %p62, %p63
      %p65 = scmp.ne.s32.totalorder %s56, %s57
      %p66 = scmp.eq.s32.totalorder %s18, 0
      %p67 = por %p65, %p66
      %p68 = scmp.ne.s32.totalorder %s56, %s57
      %p69 = scmp.eq.s32.totalorder %s19, 15
      %p70 = por %p68, %p69
      %p72 = scmp.ne.s32.totalorder %s57, %s71
      %p73 = scmp.eq.s32.totalorder %s19, 0
      %p74 = por %p72, %p73
      %s75 = ssub.s32 %s21, %s28
      %p76 = scmp.eq.s32.totalorder %s75, 0
      %s78 = sadd.s32 %s77, 1
      %s79 = scalar_select %p76, %s77, %s78
      %p82 = pneg %p76
      %p83 = scmp.eq.s32.totalorder %s13, 15
      %p84 = por %p82, %p83
      %p85 = scmp.ne.s32.totalorder %s77, %s80
      %p86 = scmp.eq.s32.totalorder %s13, 0
      %p87 = por %p85, %p86
      %p88 = scmp.ne.s32.totalorder %s77, %s80
      %p89 = scmp.eq.s32.totalorder %s18, 15
      %p90 = por %p88, %p89
      %p91 = scmp.ne.s32.totalorder %s80, %s81
      %p92 = scmp.eq.s32.totalorder %s18, 0
      %p93 = por %p91, %p92
      %p94 = scmp.ne.s32.totalorder %s80, %s81
      %p95 = scmp.eq.s32.totalorder %s19, 15
      %p96 = por %p94, %p95
      %p98 = scmp.ne.s32.totalorder %s81, %s97
      %p99 = scmp.eq.s32.totalorder %s19, 0
      %p100 = por %p98, %p99
      %s101 = ssub.s32 %s20, %s32
      %s102 = ssub.s32 %s21, %s28
      %s103 = sor.u32 %s101, %s102
      %p104 = scmp.eq.s32.totalorder %s103, 0
      %s106 = sadd.s32 %s105, 1
      %s107 = scalar_select %p104, %s105, %s106
      %p110 = pneg %p104
      %p111 = scmp.eq.s32.totalorder %s13, 15
      %p112 = por %p110, %p111
      %p113 = scmp.ne.s32.totalorder %s105, %s108
      %p114 = scmp.eq.s32.totalorder %s13, 0
      %p115 = por %p113, %p114
      %p116 = scmp.ne.s32.totalorder %s105, %s108
      %p117 = scmp.eq.s32.totalorder %s18, 15
      %p118 = por %p116, %p117
      %p119 = scmp.ne.s32.totalorder %s108, %s109
      %p120 = scmp.eq.s32.totalorder %s18, 0
      %p121 = por %p119, %p120
      %p122 = scmp.ne.s32.totalorder %s108, %s109
      %p123 = scmp.eq.s32.totalorder %s19, 15
      %p124 = por %p122, %p123
      %p126 = scmp.ne.s32.totalorder %s109, %s125
      %p127 = scmp.eq.s32.totalorder %s19, 0
      %p128 = por %p126, %p127
      %s129 = ssub.s32 %s20, %s32
      %s130 = ssub.s32 %s21, %s28
      %s131 = sor.u32 %s129, %s130
      %p132 = scmp.eq.s32.totalorder %s131, 0
      %s134 = sadd.s32 %s133, 1
      %s135 = scalar_select %p132, %s133, %s134
      %p138 = pneg %p132
      %p139 = scmp.eq.s32.totalorder %s13, 15
      %p140 = por %p138, %p139
      %p141 = scmp.ne.s32.totalorder %s133, %s136
      %p142 = scmp.eq.s32.totalorder %s13, 0
      %p143 = por %p141, %p142
      %p144 = scmp.ne.s32.totalorder %s133, %s136
      %p145 = scmp.eq.s32.totalorder %s18, 15
      %p146 = por %p144, %p145
      %p147 = scmp.ne.s32.totalorder %s136, %s137
      %p148 = scmp.eq.s32.totalorder %s18, 0
      %p149 = por %p147, %p148
      %p150 = scmp.ne.s32.totalorder %s136, %s137
      %p151 = scmp.eq.s32.totalorder %s19, 15
      %p152 = por %p150, %p151
      %p154 = scmp.ne.s32.totalorder %s137, %s153
      %p155 = scmp.eq.s32.totalorder %s19, 0
      %p156 = por %p154, %p155
      %p157 = scmp.le.s32.totalorder 1, %s13
      %p158 = scmp.lt.s32.totalorder %s13, 17
      %p159 = pnand %p157, %p158
      %p160 = pneg %p159
      // Predicated region
      $region9: #{dense_motion_forward.8} parent=5 // pred_check
        _
      $region10: #{dense_motion_forward.8} parent=5 // pred_check_branch
        %162 = sbr.rel (%p159) target = $region12
      $region11: #{dense_motion_forward.8} parent=5 // pred_region
        %s163 = ssub.s32 %s13, 1
        // Predicated region
        $region13: #{dense_motion_forward.8} parent=11 // pred_check
          %p164 = pneg %p46
        $region14: #{dense_motion_forward.8} parent=11 // pred_check_branch
          %166 = sbr.rel (%p164) target = $region16
        $region15: #{dense_motion_forward.8} parent=11 // pred_region
          %168 = vsyncadd [#allocation3], 0
          %s170 = sshll.u32 %s0, 4
          %s171 = int_to_ptr.vmem [resolvable:$true] %s170
          %173 = dma.vmem_to_smem %s171, 16, [#allocation2], [#allocation3]
        $region16: #{dense_motion_forward.8} parent=11 // pred_fallthru
          _
        // Predicated region
        $region17: #{dense_motion_forward.8} parent=11 // pred_check
          %p174 = pneg %p67
        $region18: #{dense_motion_forward.8} parent=11 // pred_check_branch
          %176 = sbr.rel (%p174) target = $region20
        $region19: #{dense_motion_forward.8} parent=11 // pred_region
          %178 = vsyncadd [#allocation5], 0
          %s180 = sshll.u32 %s1, 4
          %s181 = int_to_ptr.vmem [resolvable:$true] %s180
          %183 = dma.vmem_to_smem %s181, 16, [#allocation4], [#allocation5]
        $region20: #{dense_motion_forward.8} parent=11 // pred_fallthru
          _
      $region12: #{dense_motion_forward.8} parent=5 // pred_fallthru
        _
      %p184 = scmp.lt.s32.totalorder %s13, 16
      // Predicated region
      $region21: #{dense_motion_forward.8} parent=5 // pred_check
        %p185 = pneg %p184
      $region22: #{dense_motion_forward.8} parent=5 // pred_check_branch
        %187 = sbr.rel (%p185) target = $region24
      $region23: #{dense_motion_forward.8} parent=5 // pred_region
        // Predicated region
        $region25: #{dense_motion_forward.8} parent=23 // pred_check
          %p188 = pneg %p87
        $region26: #{dense_motion_forward.8} parent=23 // pred_check_branch
          %190 = sbr.rel (%p188) target = $region28
        $region27: #{dense_motion_forward.8} parent=23 // pred_region
          %p191 = scmp.lt.s32.totalorder %s21, 7
          %s192 = scalar_select %p191, %s21, 7
          %s193 = smul.addr %s192, 4
          %s194 = scalar_lea.vmem %s2, %s193
        $region28: #{dense_motion_forward.8} parent=23 // pred_fallthru
          _
      $region24: #{dense_motion_forward.8} parent=5 // pred_fallthru
        _
      %p195 = scmp.le.s32.totalorder 1, %s13
      %p196 = scmp.lt.s32.totalorder %s13, 17
      %p197 = pnand %p195, %p196
      %p198 = pneg %p197
      // Predicated region
      $region29: #{dense_motion_forward.8} parent=5 // pred_check
        _
      $region30: #{dense_motion_forward.8} parent=5 // pred_check_branch
        %200 = sbr.rel (%p197) target = $region32
      $region31: #{dense_motion_forward.8} parent=5 // pred_region
        %s201 = ssub.s32 %s13, 1
        // Predicated region
        $region33: #{dense_motion_forward.8} parent=31 // pred_check
          %p202 = pneg %p46
        $region34: #{dense_motion_forward.8} parent=31 // pred_check_branch
          %204 = sbr.rel (%p202) target = $region36
        $region35: #{dense_motion_forward.8} parent=31 // pred_region
          %206 = dma.done [#allocation3], 16
        $region36: #{dense_motion_forward.8} parent=31 // pred_fallthru
          _
        // Predicated region
        $region37: #{dense_motion_forward.8} parent=31 // pred_check
          %p207 = pneg %p67
        $region38: #{dense_motion_forward.8} parent=31 // pred_check_branch
          %209 = sbr.rel (%p207) target = $region40
        $region39: #{dense_motion_forward.8} parent=31 // pred_region
          %211 = dma.done [#allocation5], 16
        $region40: #{dense_motion_forward.8} parent=31 // pred_fallthru
          _
        %212 = sfence
        %p213 = pneg %p46
        %p214 = pneg %p43
        %p215 = pneg %p67
        %p216 = pneg %p64
        %p217 = scmp.lt.s32.totalorder %s23, 7
        %s218 = scalar_select %p217, %s23, 7
        %s219 = smul.addr %s218, 4
        %s220 = scalar_lea.vmem %s2, %s219
        %p221 = pneg %p93
        %p222 = pneg %p90
        %p223 = pneg %p121
        %p224 = pneg %p118
        %p225 = scmp.lt.s32.totalorder %s22, 1
        %s226 = scalar_select %p225, %s22, 1
        %p227 = scmp.lt.s32.totalorder %s23, 7
        %s228 = scalar_select %p227, %s23, 7
        %s229 = smul.addr %s226, 8
        %s230 = sadd.s32 %s228, %s229
        %s231 = smul.addr %s230, 8
        %s232 = scalar_lea.vmem %s3, %s231
        %p233 = pneg %p149
        %p234 = pneg %p146
        %p235 = scmp.lt.s32.totalorder %s22, 1
        %s236 = scalar_select %p235, %s22, 1
        %p237 = scmp.lt.s32.totalorder %s23, 7
        %s238 = scalar_select %p237, %s23, 7
        %s239 = smul.addr %s236, 8
        %s240 = sadd.s32 %s238, %s239
        %s241 = scalar_lea.vmem %s4, %s240
        %p242 = scmp.lt.s32.totalorder %s23, 7
        %s243 = scalar_select %p242, %s23, 7
        %s244 = smul.addr %s243, 4
        %s245 = scalar_lea.vmem %s2, %s244
        %p246 = scmp.lt.s32.totalorder %s22, 1
        %s247 = scalar_select %p246, %s22, 1
        %p248 = scmp.lt.s32.totalorder %s23, 7
        %s249 = scalar_select %p248, %s23, 7
        %s250 = smul.addr %s247, 8
        %s251 = sadd.s32 %s249, %s250
        %s252 = smul.addr %s251, 8
        %s253 = scalar_lea.vmem %s3, %s252
        %p254 = scmp.lt.s32.totalorder %s22, 1
        %s255 = scalar_select %p254, %s22, 1
        %p256 = scmp.lt.s32.totalorder %s23, 7
        %s257 = scalar_select %p256, %s23, 7
        %s258 = smul.addr %s255, 8
        %s259 = sadd.s32 %s257, %s258
        %s260 = scalar_lea.vmem %s4, %s259
        %v261 = vld [vmem:[%s245] sm:$0x1]
        %v262 = vld [vmem:[%s245 + $0x1] sm:$0x1]
        %v263 = vld [vmem:[%s245 + $0x2] sm:$0x1]
        %s264 = smul.u32 %s22, 15
        %265 = vst [vmem:[%s253] sm:$0x1] 0.0
        %s266 = sld [smem:[#allocation2 + %s264]]
        %v267 = vstv %s266
        %v268 = vsub.f32 %v261, %v267
        %s269 = sadd.s32 %s264, 1
        %s270 = sld [smem:[#allocation2 + %s269]]
        %v271 = vstv %s270
        %v272 = vsub.f32 %v262, %v271
        %s273 = sadd.s32 %s264, 2
        %s274 = sld [smem:[#allocation2 + %s273]]
        %v275 = vstv %s274
        %v276 = vsub.f32 %v263, %v275
        %v277 = vmul.f32 %v268, %v268
        %v278 = vmul.f32 %v272, %v272
        %v279 = vadd.f32 %v277, %v278
        %v280 = vmul.f32 %v276, %v276
        %v281 = vadd.f32 %v279, %v280
        %v282 = vmul.f32 %v281, -50.0
        %v283 = vmul.f32 %v282, 1.442695
        %v284 = vpow.pop %v283
        %s285 = sld [smem:[#allocation4 + %s264]]
        %v286 = vstv %s285
        %v287 = vsub.f32 %v261, %v286
        %s288 = sld [smem:[#allocation4 + %s269]]
        %v289 = vstv %s288
        %v290 = vsub.f32 %v262, %v289
        %s291 = sld [smem:[#allocation4 + %s273]]
        %v292 = vstv %s291
        %v293 = vsub.f32 %v263, %v292
        %v294 = vmul.f32 %v287, %v287
        %v295 = vmul.f32 %v290, %v290
        %v296 = vadd.f32 %v294, %v295
        %v297 = vmul.f32 %v293, %v293
        %v298 = vadd.f32 %v296, %v297
        %v299 = vmul.f32 %v298, -50.0
        %v300 = vmul.f32 %v299, 1.442695
        %v301 = vpow.pop %v300
        %v302 = vsub.f32 %v284, %v301
        %303 = vst [vmem:[%s253 + $0x1] sm:$0x1] %v302
        %v304 = vadd.f32 %v301, 0.0
        %s305 = sadd.s32 %s264, 3
        %s306 = sld [smem:[#allocation2 + %s305]]
        %v307 = vstv %s306
        %v308 = vsub.f32 %v261, %v307
        %s309 = sadd.s32 %s264, 4
        %s310 = sld [smem:[#allocation2 + %s309]]
        %v311 = vstv %s310
        %v312 = vsub.f32 %v262, %v311
        %s313 = sadd.s32 %s264, 5
        %s314 = sld [smem:[#allocation2 + %s313]]
        %v315 = vstv %s314
        %v316 = vsub.f32 %v263, %v315
        %v317 = vmul.f32 %v308, %v308
        %v318 = vmul.f32 %v312, %v312
        %v319 = vadd.f32 %v317, %v318
        %v320 = vmul.f32 %v316, %v316
        %v321 = vadd.f32 %v319, %v320
        %v322 = vmul.f32 %v321, -50.0
        %v323 = vmul.f32 %v322, 1.442695
        %v324 = vpow.pop %v323
        %s325 = sld [smem:[#allocation4 + %s305]]
        %v326 = vstv %s325
        %v327 = vsub.f32 %v261, %v326
        %s328 = sld [smem:[#allocation4 + %s309]]
        %v329 = vstv %s328
        %v330 = vsub.f32 %v262, %v329
        %s331 = sld [smem:[#allocation4 + %s313]]
        %v332 = vstv %s331
        %v333 = vsub.f32 %v263, %v332
        %v334 = vmul.f32 %v327, %v327
        %v335 = vmul.f32 %v330, %v330
        %v336 = vadd.f32 %v334, %v335
        %v337 = vmul.f32 %v333, %v333
        %v338 = vadd.f32 %v336, %v337
        %v339 = vmul.f32 %v338, -50.0
        %v340 = vmul.f32 %v339, 1.442695
        %v341 = vpow.pop %v340
        %v342 = vsub.f32 %v324, %v341
        %343 = vst [vmem:[%s253 + $0x2] sm:$0x1] %v342
        %v344 = vadd.f32 %v304, %v341
        %s345 = sadd.s32 %s264, 6
        %s346 = sld [smem:[#allocation2 + %s345]]
        %v347 = vstv %s346
        %v348 = vsub.f32 %v261, %v347
        %s349 = sadd.s32 %s264, 7
        %s350 = sld [smem:[#allocation2 + %s349]]
        %v351 = vstv %s350
        %v352 = vsub.f32 %v262, %v351
        %s353 = sadd.s32 %s264, 8
        %s354 = sld [smem:[#allocation2 + %s353]]
        %v355 = vstv %s354
        %v356 = vsub.f32 %v263, %v355
        %v357 = vmul.f32 %v348, %v348
        %v358 = vmul.f32 %v352, %v352
        %v359 = vadd.f32 %v357, %v358
        %v360 = vmul.f32 %v356, %v356
        %v361 = vadd.f32 %v359, %v360
        %v362 = vmul.f32 %v361, -50.0
        %v363 = vmul.f32 %v362, 1.442695
        %v364 = vpow.pop %v363
        %s365 = sld [smem:[#allocation4 + %s345]]
        %v366 = vstv %s365
        %v367 = vsub.f32 %v261, %v366
        %s368 = sld [smem:[#allocation4 + %s349]]
        %v369 = vstv %s368
        %v370 = vsub.f32 %v262, %v369
        %s371 = sld [smem:[#allocation4 + %s353]]
        %v372 = vstv %s371
        %v373 = vsub.f32 %v263, %v372
        %v374 = vmul.f32 %v367, %v367
        %v375 = vmul.f32 %v370, %v370
        %v376 = vadd.f32 %v374, %v375
        %v377 = vmul.f32 %v373, %v373
        %v378 = vadd.f32 %v376, %v377
        %v379 = vmul.f32 %v378, -50.0
        %v380 = vmul.f32 %v379, 1.442695
        %v381 = vpow.pop %v380
        %v382 = vsub.f32 %v364, %v381
        %383 = vst [vmem:[%s253 + $0x3] sm:$0x1] %v382
        %v384 = vadd.f32 %v344, %v381
        %s385 = sadd.s32 %s264, 9
        %s386 = sld [smem:[#allocation2 + %s385]]
        %v387 = vstv %s386
        %v388 = vsub.f32 %v261, %v387
        %s389 = sadd.s32 %s264, 10
        %s390 = sld [smem:[#allocation2 + %s389]]
        %v391 = vstv %s390
        %v392 = vsub.f32 %v262, %v391
        %s393 = sadd.s32 %s264, 11
        %s394 = sld [smem:[#allocation2 + %s393]]
        %v395 = vstv %s394
        %v396 = vsub.f32 %v263, %v395
        %v397 = vmul.f32 %v388, %v388
        %v398 = vmul.f32 %v392, %v392
        %v399 = vadd.f32 %v397, %v398
        %v400 = vmul.f32 %v396, %v396
        %v401 = vadd.f32 %v399, %v400
        %v402 = vmul.f32 %v401, -50.0
        %v403 = vmul.f32 %v402, 1.442695
        %v404 = vpow.pop %v403
        %s405 = sld [smem:[#allocation4 + %s385]]
        %v406 = vstv %s405
        %v407 = vsub.f32 %v261, %v406
        %s408 = sld [smem:[#allocation4 + %s389]]
        %v409 = vstv %s408
        %v410 = vsub.f32 %v262, %v409
        %s411 = sld [smem:[#allocation4 + %s393]]
        %v412 = vstv %s411
        %v413 = vsub.f32 %v263, %v412
        %v414 = vmul.f32 %v407, %v407
        %v415 = vmul.f32 %v410, %v410
        %v416 = vadd.f32 %v414, %v415
        %v417 = vmul.f32 %v413, %v413
        %v418 = vadd.f32 %v416, %v417
        %v419 = vmul.f32 %v418, -50.0
        %v420 = vmul.f32 %v419, 1.442695
        %v421 = vpow.pop %v420
        %v422 = vsub.f32 %v404, %v421
        %423 = vst [vmem:[%s253 + $0x4] sm:$0x1] %v422
        %v424 = vadd.f32 %v384, %v421
        %s425 = sadd.s32 %s264, 12
        %s426 = sld [smem:[#allocation2 + %s425]]
        %v427 = vstv %s426
        %v428 = vsub.f32 %v261, %v427
        %s429 = sadd.s32 %s264, 13
        %s430 = sld [smem:[#allocation2 + %s429]]
        %v431 = vstv %s430
        %v432 = vsub.f32 %v262, %v431
        %s433 = sadd.s32 %s264, 14
        %s434 = sld [smem:[#allocation2 + %s433]]
        %v435 = vstv %s434
        %v436 = vsub.f32 %v263, %v435
        %v437 = vmul.f32 %v428, %v428
        %v438 = vmul.f32 %v432, %v432
        %v439 = vadd.f32 %v437, %v438
        %v440 = vmul.f32 %v436, %v436
        %v441 = vadd.f32 %v439, %v440
        %v442 = vmul.f32 %v441, -50.0
        %v443 = vmul.f32 %v442, 1.442695
        %v444 = vpow.pop %v443
        %s445 = sld [smem:[#allocation4 + %s425]]
        %v446 = vstv %s445
        %v447 = vsub.f32 %v261, %v446
        %s448 = sld [smem:[#allocation4 + %s429]]
        %v449 = vstv %s448
        %v450 = vsub.f32 %v262, %v449
        %s451 = sld [smem:[#allocation4 + %s433]]
        %v452 = vstv %s451
        %v453 = vsub.f32 %v263, %v452
        %v454 = vmul.f32 %v447, %v447
        %v455 = vmul.f32 %v450, %v450
        %v456 = vadd.f32 %v454, %v455
        %v457 = vmul.f32 %v453, %v453
        %v458 = vadd.f32 %v456, %v457
        %v459 = vmul.f32 %v458, -50.0
        %v460 = vmul.f32 %v459, 1.442695
        %v461 = vpow.pop %v460
        %v462 = vsub.f32 %v444, %v461
        %463 = vst [vmem:[%s253 + $0x5] sm:$0x1] %v462
        %v464 = vadd.f32 %v424, %v461
        %465 = vst [vmem:[%s260] sm:$0x1] %v464
        %p466 = scmp.lt.s32.totalorder %s22, 1
        %s467 = scalar_select %p466, %s22, 1
        %p468 = scmp.lt.s32.totalorder %s23, 7
        %s469 = scalar_select %p468, %s23, 7
        %s470 = smul.addr %s467, 8
        %s471 = sadd.s32 %s469, %s470
        %s472 = smul.addr %s471, 8
        %s473 = scalar_lea.vmem %s3, %s472
        %p474 = scmp.lt.s32.totalorder %s22, 1
        %s475 = scalar_select %p474, %s22, 1
        %p476 = scmp.lt.s32.totalorder %s23, 7
        %s477 = scalar_select %p476, %s23, 7
        %s478 = smul.addr %s475, 8
        %s479 = sadd.s32 %s477, %s478
        %s480 = scalar_lea.vmem %s4, %s479
        // Predicated region
        $region41: #{dense_motion_forward.8} parent=31 // pred_check
          %p481 = pneg %p118
        $region42: #{dense_motion_forward.8} parent=31 // pred_check_branch
          %483 = sbr.rel (%p481) target = $region44
        $region43: #{dense_motion_forward.8} parent=31 // pred_region
          _
        $region44: #{dense_motion_forward.8} parent=31 // pred_fallthru
          _
        // Predicated region
        $region45: #{dense_motion_forward.8} parent=31 // pred_check
          %p484 = pneg %p146
        $region46: #{dense_motion_forward.8} parent=31 // pred_check_branch
          %486 = sbr.rel (%p484) target = $region48
        $region47: #{dense_motion_forward.8} parent=31 // pred_region
          _
        $region48: #{dense_motion_forward.8} parent=31 // pred_fallthru
          _
      $region32: #{dense_motion_forward.8} parent=5 // pred_fallthru
        _
      %p487 = scmp.le.s32.totalorder 2, %s13
      // Predicated region
      $region49: #{dense_motion_forward.8} parent=5 // pred_check
        %p488 = pneg %p487
      $region50: #{dense_motion_forward.8} parent=5 // pred_check_branch
        %490 = sbr.rel (%p488) target = $region52
      $region51: #{dense_motion_forward.8} parent=5 // pred_region
        %s491 = ssub.s32 %s13, 2
        // Predicated region
        $region53: #{dense_motion_forward.8} parent=51 // pred_check
          %p492 = pneg %p124
        $region54: #{dense_motion_forward.8} parent=51 // pred_check_branch
          %494 = sbr.rel (%p492) target = $region56
        $region55: #{dense_motion_forward.8} parent=51 // pred_region
          %p495 = scmp.lt.s32.totalorder %s24, 1
          %s496 = scalar_select %p495, %s24, 1
          %p497 = scmp.lt.s32.totalorder %s25, 7
          %s498 = scalar_select %p497, %s25, 7
          %s499 = smul.addr %s496, 8
          %s500 = sadd.s32 %s498, %s499
          %s501 = smul.addr %s500, 8
          %s502 = scalar_lea.vmem %s3, %s501
        $region56: #{dense_motion_forward.8} parent=51 // pred_fallthru
          _
        // Predicated region
        $region57: #{dense_motion_forward.8} parent=51 // pred_check
          %p503 = pneg %p152
        $region58: #{dense_motion_forward.8} parent=51 // pred_check_branch
          %505 = sbr.rel (%p503) target = $region60
        $region59: #{dense_motion_forward.8} parent=51 // pred_region
          %p506 = scmp.lt.s32.totalorder %s24, 1
          %s507 = scalar_select %p506, %s24, 1
          %p508 = scmp.lt.s32.totalorder %s25, 7
          %s509 = scalar_select %p508, %s25, 7
          %s510 = smul.addr %s507, 8
          %s511 = sadd.s32 %s509, %s510
          %s512 = scalar_lea.vmem %s4, %s511
        $region60: #{dense_motion_forward.8} parent=51 // pred_fallthru
          _
      $region52: #{dense_motion_forward.8} parent=5 // pred_fallthru
        _
    $region6: #{dense_motion_forward.8} parent=1 // loop_footer
      %s17 = sadd.s32 1, %s13
    $region7: #{dense_motion_forward.8} parent=1 // loop_footer_branch
      %12 = sbr.rel target = $region3
    $region8: #{dense_motion_forward.8} parent=1 // loop_exit
      _
    %513 = vsyncpa [#allocation3], 1
    %s514 = scalar_lea.sflag [#allocation3], 1
    %515 = vsyncpa %s514, 1
    %516 = vsyncpa [#allocation5], 1

// kernel: dense_motion_forward.9
$region0: #{dense_motion_forward.9}
  #allocation0 [shape = 'u32[]', space=smem, size = 0x4, offset = 0x4, fixed_abs, tag = 'smem constant byte address 0x4 - core index']
  #allocation1 [shape = 'u32[72,128]{1,0:T(1,128)}', space=vmem, size = 0x9000, scoped, tag = 'internal scratch']
  %s0 = inlined_call_operand.vmem [shape: bf16[2,10,16,256], index: 0, kind: input, shape index: {}]
  %s1 = inlined_call_operand.vmem [shape: bf16[16,432], index: 1, kind: input, shape index: {}]
  %s2 = inlined_call_operand.vmem [shape: f32[16,1], index: 2, kind: input, shape index: {}]
  %s3 = inlined_call_operand.vmem [shape: bf16[2,8,16,128], index: 3, kind: output, shape index: {}]
  %s4 = sld [smem:[#allocation0]]
  $region45: #{dense_motion_forward.9} parent=0
    _
  %s6 = ssub.s32 1, %s4
  %s7 = scalar_select 0, %s6, %s4
  loop: start=0, step=1, limit=18
  $region2: #{dense_motion_forward.9} parent=0 // loop_pre_header
    _
  $region3: #{dense_motion_forward.9} parent=0 // loop_header
    %s9 = sphi 0, %s13
    %p10 = scmp.ge.s32.totalorder %s9, 18
    %s16 = sphi 0, %s28
    %s17 = sphi 0, %s24
    %s18 = sphi 0, %s16
    %s19 = sphi 0, %s17
    %s20 = sphi 0, %s18
    %s21 = sphi 0, %s19
    %s31 = sphi 0, %s33
    %s34 = sphi 0, %s31
    %s35 = sphi 0, %s34
    %s51 = sphi 0, %s35
    %s55 = sphi 0, %s55
    %s57 = sphi 0, %s55
    %s58 = sphi 0, %s57
    %s72 = sphi 0, %s58
    %s76 = sphi 0, %s76
    %s78 = sphi 0, %s76
    %s79 = sphi 0, %s78
    %s93 = sphi 0, %s79
    %s101 = sphi 0, %s103
    %s104 = sphi 0, %s101
    %s105 = sphi 0, %s104
    %s121 = sphi 0, %s105
  $region4: #{dense_motion_forward.9} parent=0 // loop_header_branch
    %12 = sbr.rel (%p10) target = $region8
  $region5: #{dense_motion_forward.9} parent=0 // loop_body
    %s14 = ssub.s32 %s9, 1
    %s15 = ssub.s32 %s9, 2
    %s22 = sadd.s32 1, %s17
    %p23 = scmp.ge.s32.totalorder %s22, 8
    %s24 = scalar_select %p23, 0, %s22
    %s25 = sadd.s32 1, %s16
    %s26 = scalar_select %p23, %s25, %s16
    %p27 = scmp.ge.s32.totalorder %s26, 2
    %s28 = scalar_select %p27, 0, %s26
    %s29 = ssub.s32 %s16, %s28
    %p30 = scmp.eq.s32.totalorder %s29, 0
    %s32 = sadd.s32 %s31, 1
    %s33 = scalar_select %p30, %s31, %s32
    %p36 = pneg %p30
    %p37 = scmp.eq.s32.totalorder %s9, 15
    %p38 = por %p36, %p37
    %p39 = scmp.ne.s32.totalorder %s31, %s34
    %p40 = scmp.eq.s32.totalorder %s9, 0
    %p41 = por %p39, %p40
    %p42 = scmp.ne.s32.totalorder %s31, %s34
    %p43 = scmp.eq.s32.totalorder %s14, 15
    %p44 = por %p42, %p43
    %p45 = scmp.ne.s32.totalorder %s34, %s35
    %p46 = scmp.eq.s32.totalorder %s14, 0
    %p47 = por %p45, %p46
    %p48 = scmp.ne.s32.totalorder %s34, %s35
    %p49 = scmp.eq.s32.totalorder %s15, 15
    %p50 = por %p48, %p49
    %p52 = scmp.ne.s32.totalorder %s35, %s51
    %p53 = scmp.eq.s32.totalorder %s15, 0
    %p54 = por %p52, %p53
    %s56 = sadd.s32 %s55, 1
    %p59 = scmp.eq.s32.totalorder %s9, 15
    %p60 = scmp.ne.s32.totalorder %s55, %s57
    %p61 = scmp.eq.s32.totalorder %s9, 0
    %p62 = por %p60, %p61
    %p63 = scmp.ne.s32.totalorder %s55, %s57
    %p64 = scmp.eq.s32.totalorder %s14, 15
    %p65 = por %p63, %p64
    %p66 = scmp.ne.s32.totalorder %s57, %s58
    %p67 = scmp.eq.s32.totalorder %s14, 0
    %p68 = por %p66, %p67
    %p69 = scmp.ne.s32.totalorder %s57, %s58
    %p70 = scmp.eq.s32.totalorder %s15, 15
    %p71 = por %p69, %p70
    %p73 = scmp.ne.s32.totalorder %s58, %s72
    %p74 = scmp.eq.s32.totalorder %s15, 0
    %p75 = por %p73, %p74
    %s77 = sadd.s32 %s76, 1
    %p80 = scmp.eq.s32.totalorder %s9, 15
    %p81 = scmp.ne.s32.totalorder %s76, %s78
    %p82 = scmp.eq.s32.totalorder %s9, 0
    %p83 = por %p81, %p82
    %p84 = scmp.ne.s32.totalorder %s76, %s78
    %p85 = scmp.eq.s32.totalorder %s14, 15
    %p86 = por %p84, %p85
    %p87 = scmp.ne.s32.totalorder %s78, %s79
    %p88 = scmp.eq.s32.totalorder %s14, 0
    %p89 = por %p87, %p88
    %p90 = scmp.ne.s32.totalorder %s78, %s79
    %p91 = scmp.eq.s32.totalorder %s15, 15
    %p92 = por %p90, %p91
    %p94 = scmp.ne.s32.totalorder %s79, %s93
    %p95 = scmp.eq.s32.totalorder %s15, 0
    %p96 = por %p94, %p95
    %s97 = ssub.s32 %s16, %s28
    %s98 = ssub.s32 %s17, %s24
    %s99 = sor.u32 %s97, %s98
    %p100 = scmp.eq.s32.totalorder %s99, 0
    %s102 = sadd.s32 %s101, 1
    %s103 = scalar_select %p100, %s101, %s102
    %p106 = pneg %p100
    %p107 = scmp.eq.s32.totalorder %s9, 15
    %p108 = por %p106, %p107
    %p109 = scmp.ne.s32.totalorder %s101, %s104
    %p110 = scmp.eq.s32.totalorder %s9, 0
    %p111 = por %p109, %p110
    %p112 = scmp.ne.s32.totalorder %s101, %s104
    %p113 = scmp.eq.s32.totalorder %s14, 15
    %p114 = por %p112, %p113
    %p115 = scmp.ne.s32.totalorder %s104, %s105
    %p116 = scmp.eq.s32.totalorder %s14, 0
    %p117 = por %p115, %p116
    %p118 = scmp.ne.s32.totalorder %s104, %s105
    %p119 = scmp.eq.s32.totalorder %s15, 15
    %p120 = por %p118, %p119
    %p122 = scmp.ne.s32.totalorder %s105, %s121
    %p123 = scmp.eq.s32.totalorder %s15, 0
    %p124 = por %p122, %p123
    %p125 = scmp.le.s32.totalorder 1, %s9
    %p126 = scmp.lt.s32.totalorder %s9, 17
    %p127 = pnand %p125, %p126
    %p128 = pneg %p127
    // Predicated region
    $region9: #{dense_motion_forward.9} parent=5 // pred_check
      _
    $region10: #{dense_motion_forward.9} parent=5 // pred_check_branch
      %130 = sbr.rel (%p127) target = $region12
    $region11: #{dense_motion_forward.9} parent=5 // pred_region
      %s131 = ssub.s32 %s9, 1
      // Predicated region
      $region13: #{dense_motion_forward.9} parent=11 // pred_check
        %p132 = pneg %p68
      $region14: #{dense_motion_forward.9} parent=11 // pred_check_branch
        %134 = sbr.rel (%p132) target = $region16
      $region15: #{dense_motion_forward.9} parent=11 // pred_region
        _
      $region16: #{dense_motion_forward.9} parent=11 // pred_fallthru
        _
      // Predicated region
      $region17: #{dense_motion_forward.9} parent=11 // pred_check
        %p135 = pneg %p89
      $region18: #{dense_motion_forward.9} parent=11 // pred_check_branch
        %137 = sbr.rel (%p135) target = $region20
      $region19: #{dense_motion_forward.9} parent=11 // pred_region
        _
      $region20: #{dense_motion_forward.9} parent=11 // pred_fallthru
        _
    $region12: #{dense_motion_forward.9} parent=5 // pred_fallthru
      _
    %p138 = scmp.lt.s32.totalorder %s9, 16
    // Predicated region
    $region21: #{dense_motion_forward.9} parent=5 // pred_check
      %p139 = pneg %p138
    $region22: #{dense_motion_forward.9} parent=5 // pred_check_branch
      %141 = sbr.rel (%p139) target = $region24
    $region23: #{dense_motion_forward.9} parent=5 // pred_region
      // Predicated region
      $region25: #{dense_motion_forward.9} parent=23 // pred_check
        %p142 = pneg %p41
      $region26: #{dense_motion_forward.9} parent=23 // pred_check_branch
        %144 = sbr.rel (%p142) target = $region28
      $region27: #{dense_motion_forward.9} parent=23 // pred_region
        %p145 = scmp.lt.s32.totalorder %s16, 1
        %s146 = scalar_select %p145, %s16, 1
        %s147 = smul.addr %s146, 40
        %s148 = smul.addr %s147, 4
        %s149 = scalar_lea.vmem %s0, %s148
      $region28: #{dense_motion_forward.9} parent=23 // pred_fallthru
        _
    $region24: #{dense_motion_forward.9} parent=5 // pred_fallthru
      _
    %p150 = scmp.le.s32.totalorder 1, %s9
    %p151 = scmp.lt.s32.totalorder %s9, 17
    %p152 = pnand %p150, %p151
    %p153 = pneg %p152
    // Predicated region
    $region29: #{dense_motion_forward.9} parent=5 // pred_check
      _
    $region30: #{dense_motion_forward.9} parent=5 // pred_check_branch
      %155 = sbr.rel (%p152) target = $region32
    $region31: #{dense_motion_forward.9} parent=5 // pred_region
      %s156 = ssub.s32 %s9, 1
      %p157 = scmp.lt.s32.totalorder %s18, 1
      %s158 = scalar_select %p157, %s18, 1
      %s159 = smul.addr %s158, 40
      %s160 = smul.addr %s159, 4
      %s161 = scalar_lea.vmem %s0, %s160
      %p162 = pneg %p47
      %p163 = pneg %p44
      %p164 = pneg %p68
      %p165 = pneg %p65
      %p166 = pneg %p89
      %p167 = pneg %p86
      %p168 = pneg %p117
      %p169 = pneg %p114
      %p170 = scmp.lt.s32.totalorder %s18, 1
      %s171 = scalar_select %p170, %s18, 1
      %p172 = scmp.lt.s32.totalorder %s19, 7
      %s173 = scalar_select %p172, %s19, 7
      %s174 = smul.addr %s173, 2
      %s175 = smul.addr %s171, 16
      %s176 = sadd.s32 %s174, %s175
      %s177 = smul.addr %s176, 4
      %s178 = scalar_lea.vmem %s3, %s177
      %p179 = scmp.lt.s32.totalorder %s18, 1
      %s180 = scalar_select %p179, %s18, 1
      %s181 = smul.addr %s180, 40
      %s182 = smul.addr %s181, 4
      %s183 = scalar_lea.vmem %s0, %s182
      %p184 = scmp.lt.s32.totalorder %s18, 1
      %s185 = scalar_select %p184, %s18, 1
      %p186 = scmp.lt.s32.totalorder %s19, 7
      %s187 = scalar_select %p186, %s19, 7
      %s188 = smul.addr %s187, 2
      %s189 = smul.addr %s185, 16
      %s190 = sadd.s32 %s188, %s189
      %s191 = smul.addr %s190, 4
      %s192 = scalar_lea.vmem %s3, %s191
      %s194 = smul.u32 %s19, 4
      %s195 = smul.addr %s194, 4
      %s196 = scalar_lea.vmem %s183, %s195
      %v197 = vld [vmem:[%s196] sm:$0xff]
      %v198 = vld [vmem:[%s196 + $0x8] sm:$0xff]
      %s199 = sadd.s32 %s19, 1
      %s200 = smul.u32 %s199, 4
      %s201 = smul.addr %s200, 4
      %s202 = scalar_lea.vmem %s183, %s201
      %v203 = vld [vmem:[%s202] sm:$0xff]
      %v204 = vld [vmem:[%s202 + $0x8] sm:$0xff]
      %s205 = sadd.s32 %s19, 2
      %s206 = smul.u32 %s205, 4
      %s207 = smul.addr %s206, 4
      %s208 = scalar_lea.vmem %s183, %s207
      %v209 = vld [vmem:[%s208] sm:$0xff]
      %v210 = vld [vmem:[%s208 + $0x8] sm:$0xff]
      %v213 = vunpack.c.l.b16 %v197
      %v214 = vunpack.c.l.b16 %v198
      %v215 = vpack.c.b16 %v214, %v213
      %v217 = vunpack.c.h.b16 %v197
      %v218 = vunpack.c.h.b16 %v198
      %v219 = vpack.c.b16 %v218, %v217
      %220 = vrot.lane.b32.xlu0 %v215, 127
      %v221 = vpop.permute.xlu0 %220
      %222 = vrot.lane.b32.xlu0 %v219, 127
      %v223 = vpop.permute.xlu0 %222
      %vm224 = vcmask 1039360
      %v225 = vsel %vm224, %v221, %v223
      %227 = vrot.lane.b32.xlu0 %v215, 126
      %v228 = vpop.permute.xlu0 %227
      %229 = vrot.lane.b32.xlu0 %v219, 126
      %v230 = vpop.permute.xlu0 %229
      %vm231 = vcmask 1031168
      %v232 = vsel %vm231, %v228, %v230
      %234 = vrot.lane.b32.xlu0 %v215, 118
      %v235 = vpop.permute.xlu0 %234
      %236 = vrot.lane.b32.xlu0 %v219, 118
      %v237 = vpop.permute.xlu0 %236
      %vm238 = vcmask 965632
      %v239 = vsel %vm238, %v235, %v237
      %241 = vrot.lane.b32.xlu0 %v215, 117
      %v242 = vpop.permute.xlu0 %241
      %243 = vrot.lane.b32.xlu0 %v219, 117
      %v244 = vpop.permute.xlu0 %243
      %vm245 = vcmask 957440
      %v246 = vsel %vm245, %v242, %v244
      %248 = vrot.lane.b32.xlu0 %v215, 116
      %v249 = vpop.permute.xlu0 %248
      %250 = vrot.lane.b32.xlu0 %v219, 116
      %v251 = vpop.permute.xlu0 %250
      %vm252 = vcmask 949248
      %v253 = vsel %vm252, %v249, %v251
      %255 = vrot.lane.b32.xlu0 %v215, 108
      %v256 = vpop.permute.xlu0 %255
      %257 = vrot.lane.b32.xlu0 %v219, 108
      %v258 = vpop.permute.xlu0 %257
      %vm259 = vcmask 883712
      %v260 = vsel %vm259, %v256, %v258
      %262 = vrot.lane.b32.xlu0 %v215, 107
      %v263 = vpop.permute.xlu0 %262
      %264 = vrot.lane.b32.xlu0 %v219, 107
      %v265 = vpop.permute.xlu0 %264
      %vm266 = vcmask 875520
      %v267 = vsel %vm266, %v263, %v265
      %269 = vrot.lane.b32.xlu0 %v215, 106
      %v270 = vpop.permute.xlu0 %269
      %271 = vrot.lane.b32.xlu0 %v219, 106
      %v272 = vpop.permute.xlu0 %271
      %vm273 = vcmask 867328
      %v274 = vsel %vm273, %v270, %v272
      %v278 = vunpack.c.l.b16 %v203
      %v279 = vunpack.c.l.b16 %v204
      %v280 = vpack.c.b16 %v279, %v278
      %v282 = vunpack.c.h.b16 %v203
      %v283 = vunpack.c.h.b16 %v204
      %v284 = vpack.c.b16 %v283, %v282
      %285 = vrot.lane.b32.xlu0 %v280, 127
      %v286 = vpop.permute.xlu0 %285
      %287 = vrot.lane.b32.xlu0 %v284, 127
      %v288 = vpop.permute.xlu0 %287
      %v289 = vsel %vm224, %v286, %v288
      %291 = vrot.lane.b32.xlu0 %v280, 126
      %v292 = vpop.permute.xlu0 %291
      %293 = vrot.lane.b32.xlu0 %v284, 126
      %v294 = vpop.permute.xlu0 %293
      %v295 = vsel %vm231, %v292, %v294
      %297 = vrot.lane.b32.xlu0 %v280, 118
      %v298 = vpop.permute.xlu0 %297
      %299 = vrot.lane.b32.xlu0 %v284, 118
      %v300 = vpop.permute.xlu0 %299
      %v301 = vsel %vm238, %v298, %v300
      %303 = vrot.lane.b32.xlu0 %v280, 117
      %v304 = vpop.permute.xlu0 %303
      %305 = vrot.lane.b32.xlu0 %v284, 117
      %v306 = vpop.permute.xlu0 %305
      %v307 = vsel %vm245, %v304, %v306
      %309 = vrot.lane.b32.xlu0 %v280, 116
      %v310 = vpop.permute.xlu0 %309
      %311 = vrot.lane.b32.xlu0 %v284, 116
      %v312 = vpop.permute.xlu0 %311
      %v313 = vsel %vm252, %v310, %v312
      %315 = vrot.lane.b32.xlu0 %v280, 108
      %v316 = vpop.permute.xlu0 %315
      %317 = vrot.lane.b32.xlu0 %v284, 108
      %v318 = vpop.permute.xlu0 %317
      %v319 = vsel %vm259, %v316, %v318
      %v323 = vunpack.c.l.b16 %v209
      %v324 = vunpack.c.l.b16 %v210
      %v325 = vpack.c.b16 %v324, %v323
      %326 = vrot.lane.b32.xlu0 %v325, 21
      %v327 = vpop.permute.xlu0 %326
      %v328 = vunpack.c.h.b16 %v209
      %v329 = vunpack.c.h.b16 %v210
      %v330 = vpack.c.b16 %v329, %v328
      %331 = vrot.lane.b32.xlu0 %v325, 20
      %v332 = vpop.permute.xlu0 %331
      %333 = vrot.lane.b32.xlu0 %v330, 20
      %v334 = vpop.permute.xlu0 %333
      %vm335 = vcmask 162816
      %v336 = vsel %vm335, %v332, %v334
      %337 = vrot.lane.b32.xlu0 %v325, 19
      %v338 = vpop.permute.xlu0 %337
      %339 = vrot.lane.b32.xlu0 %v330, 19
      %v340 = vpop.permute.xlu0 %339
      %vm341 = vcmask 154624
      %v342 = vsel %vm341, %v338, %v340
      %343 = vrot.lane.b32.xlu0 %v325, 11
      %v344 = vpop.permute.xlu0 %343
      %345 = vrot.lane.b32.xlu0 %v330, 11
      %v346 = vpop.permute.xlu0 %345
      %vm347 = vcmask 89088
      %v348 = vsel %vm347, %v344, %v346
      %349 = vrot.lane.b32.xlu0 %v325, 10
      %v350 = vpop.permute.xlu0 %349
      %351 = vrot.lane.b32.xlu0 %v330, 10
      %v352 = vpop.permute.xlu0 %351
      %vm353 = vcmask 80896
      %v354 = vsel %vm353, %v350, %v352
      %355 = vrot.lane.b32.xlu0 %v325, 9
      %v356 = vpop.permute.xlu0 %355
      %357 = vrot.lane.b32.xlu0 %v330, 9
      %v358 = vpop.permute.xlu0 %357
      %vm359 = vcmask 72704
      %v360 = vsel %vm359, %v356, %v358
      %361 = vrot.lane.b32.xlu0 %v325, 1
      %v362 = vpop.permute.xlu0 %361
      %363 = vrot.lane.b32.xlu0 %v330, 1
      %v364 = vpop.permute.xlu0 %363
      %vm365 = vcmask 7168
      %v366 = vsel %vm365, %v362, %v364
      %367 = vrot.lane.b32.xlu0 %v325, 127
      %v368 = vpop.permute.xlu0 %367
      %369 = vrot.lane.b32.xlu0 %v330, 127
      %v370 = vpop.permute.xlu0 %369
      %v371 = vsel %vm224, %v368, %v370
      %372 = vrot.lane.b32.xlu0 %v280, 107
      %v373 = vpop.permute.xlu0 %372
      %374 = vrot.lane.b32.xlu0 %v284, 107
      %v375 = vpop.permute.xlu0 %374
      %376 = vrot.lane.b32.xlu0 %v289, 107
      %v377 = vpop.permute.xlu0 %376
      %378 = vrot.lane.b32.xlu0 %v288, 107
      %v379 = vpop.permute.xlu0 %378
      %380 = vrot.lane.b32.xlu0 %v327, 107
      %v381 = vpop.permute.xlu0 %380
      %382 = vrot.lane.b32.xlu0 %v332, 107
      %v383 = vpop.permute.xlu0 %382
      %384 = vrot.lane.b32.xlu0 %v336, 107
      %v385 = vpop.permute.xlu0 %384
      %386 = vrot.lane.b32.xlu0 %v338, 107
      %v387 = vpop.permute.xlu0 %386
      %388 = vrot.lane.b32.xlu0 %v342, 107
      %v389 = vpop.permute.xlu0 %388
      %390 = vrot.lane.b32.xlu0 %v344, 107
      %v391 = vpop.permute.xlu0 %390
      %392 = vrot.lane.b32.xlu0 %v348, 107
      %v393 = vpop.permute.xlu0 %392
      %394 = vrot.lane.b32.xlu0 %v350, 107
      %v395 = vpop.permute.xlu0 %394
      %396 = vrot.lane.b32.xlu0 %v354, 107
      %v397 = vpop.permute.xlu0 %396
      %398 = vrot.lane.b32.xlu0 %v356, 107
      %v399 = vpop.permute.xlu0 %398
      %400 = vrot.lane.b32.xlu0 %v360, 107
      %v401 = vpop.permute.xlu0 %400
      %402 = vrot.lane.b32.xlu0 %v362, 107
      %v403 = vpop.permute.xlu0 %402
      %404 = vrot.lane.b32.xlu0 %v366, 107
      %v405 = vpop.permute.xlu0 %404
      %406 = vrot.lane.b32.xlu0 %v325, 107
      %v407 = vpop.permute.xlu0 %406
      %408 = vrot.lane.b32.xlu0 %v330, 107
      %v409 = vpop.permute.xlu0 %408
      %410 = vrot.lane.b32.xlu0 %v371, 107
      %v411 = vpop.permute.xlu0 %410
      %412 = vrot.lane.b32.xlu0 %v370, 107
      %v413 = vpop.permute.xlu0 %412
      %v414 = vsel %vm266, %v373, %v375
      %v415 = vsel %vm266, %v377, %v379
      %v416 = vsel %vm266, %v383, %v385
      %v417 = vsel %vm266, %v387, %v389
      %v418 = vsel %vm266, %v391, %v393
      %v419 = vsel %vm266, %v395, %v397
      %v420 = vsel %vm266, %v399, %v401
      %v421 = vsel %vm266, %v403, %v405
      %v422 = vsel %vm266, %v407, %v409
      %v423 = vsel %vm266, %v411, %v413
      %v435 = vld [vmem:[%s1] sm:$0xff]
      %v436 = vld [vmem:[%s1 + $0x8] sm:$0xff]
      %v437 = vld [vmem:[%s1 + $0x10] sm:$0xff]
      %v438 = vld [vmem:[%s1 + $0x18] sm:$0xff]
      %v439 = vld [vmem:[%s2] sm:$0xff]
      %v440 = vld [vmem:[%s2 + $0x8] sm:$0xff]
      %442 = vset.pattern.permute.xlu0 0
      %443 = vperm.xlu0 %442, %v439
      %v444 = vpop.permute.xlu0 %443
      %447 = vset.pattern.permute.xlu0 0
      %448 = vperm.xlu0 %447, %v440
      %v449 = vpop.permute.xlu0 %448
      %v455 = vunpack.c.l.b16 %v435
      %v456 = vunpack.c.h.b16 %v435
      %v457 = vunpack.c.l.b16 %v436
      %v458 = vunpack.c.h.b16 %v436
      %v459 = vunpack.c.l.b16 %v437
      %v460 = vunpack.c.h.b16 %v437
      %v461 = vunpack.c.l.b16 %v438
      %v462 = vunpack.c.h.b16 %v438
      %v463 = vpack.c.b16 %v459, %v455
      %v464 = vpack.c.b16 %v460, %v456
      %v465 = vpack.c.b16 %v461, %v457
      %v466 = vpack.c.b16 %v462, %v458
      %vm470 = vcmask 392192
      %v472 = vsel %vm470, %v466, 0
      %474 = vmatpush.bf16.msra.mxu0 %v267
      %475 = vmatpush.bf16.msra.mxu0 %v260
      %476 = vmatpush.bf16.msra.mxu0 %v253
      %477 = vmatpush.bf16.msra.mxu0 %v246
      %478 = vmatpush.bf16.msra.mxu0 %v239
      %479 = vmatpush.bf16.msra.mxu0 %v232
      %480 = vmatpush.bf16.msra.mxu0 %v225
      %481 = vmatpush.bf16.msra.mxu0 %v215
      %482 = vmatmul.bf16.gmra.mxu0 %v463
      %v483 = vpop.f32.mrf.mxu0
      %v484 = vadd.f32 %v444, %v483
      %v485 = vpop.f32.mrf.mxu0
      %v486 = vadd.f32 %v449, %v485
      %487 = vdwg.mxu0
      %488 = vmatpush.bf16.msra.mxu0 %v319
      %489 = vmatpush.bf16.msra.mxu0 %v313
      %490 = vmatpush.bf16.msra.mxu0 %v307
      %491 = vmatpush.bf16.msra.mxu0 %v301
      %492 = vmatpush.bf16.msra.mxu0 %v295
      %493 = vmatpush.bf16.msra.mxu0 %v289
      %494 = vmatpush.bf16.msra.mxu0 %v280
      %495 = vmatpush.bf16.msra.mxu0 %v274
      %496 = vmatmul.bf16.gmra.mxu0 %v464
      %v497 = vpop.f32.mrf.mxu0
      %v498 = vadd.f32 %v484, %v497
      %v499 = vpop.f32.mrf.mxu0
      %v500 = vadd.f32 %v486, %v499
      %501 = vdwg.mxu0
      %502 = vmatpush.bf16.msra.mxu0 %v420
      %503 = vmatpush.bf16.msra.mxu0 %v419
      %504 = vmatpush.bf16.msra.mxu0 %v418
      %505 = vmatpush.bf16.msra.mxu0 %v417
      %506 = vmatpush.bf16.msra.mxu0 %v416
      %507 = vmatpush.bf16.msra.mxu0 %v381
      %508 = vmatpush.bf16.msra.mxu0 %v415
      %509 = vmatpush.bf16.msra.mxu0 %v414
      %510 = vmatmul.bf16.gmra.mxu0 %v465
      %v511 = vpop.f32.mrf.mxu0
      %v512 = vadd.f32 %v498, %v511
      %v513 = vpop.f32.mrf.mxu0
      %v514 = vadd.f32 %v500, %v513
      %515 = vdwg.mxu0
      %516 = vmatpush.bf16.msra.mxu0 0
      %517 = vmatpush.bf16.msra.mxu0 0
      %518 = vmatpush.bf16.msra.mxu0 0
      %519 = vmatpush.bf16.msra.mxu0 0
      %520 = vmatpush.bf16.msra.mxu0 0
      %521 = vmatpush.bf16.msra.mxu0 %v423
      %522 = vmatpush.bf16.msra.mxu0 %v422
      %523 = vmatpush.bf16.msra.mxu0 %v421
      %524 = vmatmul.bf16.gmra.mxu0 %v472
      %v525 = vpop.f32.mrf.mxu0
      %v526 = vadd.f32 %v512, %v525
      %v527 = vpop.f32.mrf.mxu0
      %v528 = vadd.f32 %v514, %v527
      %529 = vdwg.mxu0
      %v530 = vmax.f32 %v526, 0.0
      %v531 = vmax.f32 %v528, 0.0
      %v532 = vpack.c.bf16 %v530, %v530
      %v533 = vpack.c.bf16 %v531, %v531
      %534 = vst [vmem:[%s192] sm:$0xf] %v532
      %535 = vst [vmem:[%s192 + $0x4] sm:$0xf] %v533
      %p536 = scmp.lt.s32.totalorder %s18, 1
      %s537 = scalar_select %p536, %s18, 1
      %p538 = scmp.lt.s32.totalorder %s19, 7
      %s539 = scalar_select %p538, %s19, 7
      %s540 = smul.addr %s539, 2
      %s541 = smul.addr %s537, 16
      %s542 = sadd.s32 %s540, %s541
      %s543 = smul.addr %s542, 4
      %s544 = scalar_lea.vmem %s3, %s543
      // Predicated region
      $region33: #{dense_motion_forward.9} parent=31 // pred_check
        %p545 = pneg %p114
      $region34: #{dense_motion_forward.9} parent=31 // pred_check_branch
        %547 = sbr.rel (%p545) target = $region36
      $region35: #{dense_motion_forward.9} parent=31 // pred_region
        _
      $region36: #{dense_motion_forward.9} parent=31 // pred_fallthru
        _
    $region32: #{dense_motion_forward.9} parent=5 // pred_fallthru
      _
    %p548 = scmp.le.s32.totalorder 2, %s9
    // Predicated region
    $region37: #{dense_motion_forward.9} parent=5 // pred_check
      %p549 = pneg %p548
    $region38: #{dense_motion_forward.9} parent=5 // pred_check_branch
      %551 = sbr.rel (%p549) target = $region40
    $region39: #{dense_motion_forward.9} parent=5 // pred_region
      %s552 = ssub.s32 %s9, 2
      // Predicated region
      $region41: #{dense_motion_forward.9} parent=39 // pred_check
        %p553 = pneg %p120
      $region42: #{dense_motion_forward.9} parent=39 // pred_check_branch
        %555 = sbr.rel (%p553) target = $region44
      $region43: #{dense_motion_forward.9} parent=39 // pred_region
        %p556 = scmp.lt.s32.totalorder %s20, 1
        %s557 = scalar_select %p556, %s20, 1
        %p558 = scmp.lt.s32.totalorder %s21, 7
        %s559 = scalar_select %p558, %s21, 7
        %s560 = smul.addr %s559, 2
        %s561 = smul.addr %s557, 16
        %s562 = sadd.s32 %s560, %s561
        %s563 = smul.addr %s562, 4
        %s564 = scalar_lea.vmem %s3, %s563
      $region44: #{dense_motion_forward.9} parent=39 // pred_fallthru
        _
    $region40: #{dense_motion_forward.9} parent=5 // pred_fallthru
      _
  $region6: #{dense_motion_forward.9} parent=0 // loop_footer
    %s13 = sadd.s32 1, %s9
  $region7: #{dense_motion_forward.9} parent=0 // loop_footer_branch
    %8 = sbr.rel target = $region3
  $region8: #{dense_motion_forward.9} parent=0 // loop_exit
    _

// kernel: dense_motion_forward.10
$region0: #{dense_motion_forward.10}
  #allocation0 [shape = 'u32[]', space=smem, size = 0x4, offset = 0x4, fixed_abs, tag = 'smem constant byte address 0x4 - core index']
  #allocation1 [shape = 'u32[72,128]{1,0:T(1,128)}', space=vmem, size = 0x9000, scoped, tag = 'internal scratch']
  %s0 = inlined_call_operand.vmem [shape: bf16[2,6,16,256], index: 0, kind: input, shape index: {}]
  %s1 = inlined_call_operand.vmem [shape: bf16[32,432], index: 1, kind: input, shape index: {}]
  %s2 = inlined_call_operand.vmem [shape: f32[32,1], index: 2, kind: input, shape index: {}]
  %s3 = inlined_call_operand.vmem [shape: bf16[2,4,32,128], index: 3, kind: output, shape index: {}]
  %s4 = sld [smem:[#allocation0]]
  $region45: #{dense_motion_forward.10} parent=0
    _
  %s6 = ssub.s32 1, %s4
  %s7 = scalar_select 0, %s6, %s4
  loop: start=0, step=1, limit=10
  $region2: #{dense_motion_forward.10} parent=0 // loop_pre_header
    _
  $region3: #{dense_motion_forward.10} parent=0 // loop_header
    %s9 = sphi 0, %s13
    %p10 = scmp.ge.s32.totalorder %s9, 10
    %s16 = sphi 0, %s28
    %s17 = sphi 0, %s24
    %s18 = sphi 0, %s16
    %s19 = sphi 0, %s17
    %s20 = sphi 0, %s18
    %s21 = sphi 0, %s19
    %s31 = sphi 0, %s33
    %s34 = sphi 0, %s31
    %s35 = sphi 0, %s34
    %s51 = sphi 0, %s35
    %s55 = sphi 0, %s55
    %s57 = sphi 0, %s55
    %s58 = sphi 0, %s57
    %s72 = sphi 0, %s58
    %s76 = sphi 0, %s76
    %s78 = sphi 0, %s76
    %s79 = sphi 0, %s78
    %s93 = sphi 0, %s79
    %s101 = sphi 0, %s103
    %s104 = sphi 0, %s101
    %s105 = sphi 0, %s104
    %s121 = sphi 0, %s105
  $region4: #{dense_motion_forward.10} parent=0 // loop_header_branch
    %12 = sbr.rel (%p10) target = $region8
  $region5: #{dense_motion_forward.10} parent=0 // loop_body
    %s14 = ssub.s32 %s9, 1
    %s15 = ssub.s32 %s9, 2
    %s22 = sadd.s32 1, %s17
    %p23 = scmp.ge.s32.totalorder %s22, 4
    %s24 = scalar_select %p23, 0, %s22
    %s25 = sadd.s32 1, %s16
    %s26 = scalar_select %p23, %s25, %s16
    %p27 = scmp.ge.s32.totalorder %s26, 2
    %s28 = scalar_select %p27, 0, %s26
    %s29 = ssub.s32 %s16, %s28
    %p30 = scmp.eq.s32.totalorder %s29, 0
    %s32 = sadd.s32 %s31, 1
    %s33 = scalar_select %p30, %s31, %s32
    %p36 = pneg %p30
    %p37 = scmp.eq.s32.totalorder %s9, 7
    %p38 = por %p36, %p37
    %p39 = scmp.ne.s32.totalorder %s31, %s34
    %p40 = scmp.eq.s32.totalorder %s9, 0
    %p41 = por %p39, %p40
    %p42 = scmp.ne.s32.totalorder %s31, %s34
    %p43 = scmp.eq.s32.totalorder %s14, 7
    %p44 = por %p42, %p43
    %p45 = scmp.ne.s32.totalorder %s34, %s35
    %p46 = scmp.eq.s32.totalorder %s14, 0
    %p47 = por %p45, %p46
    %p48 = scmp.ne.s32.totalorder %s34, %s35
    %p49 = scmp.eq.s32.totalorder %s15, 7
    %p50 = por %p48, %p49
    %p52 = scmp.ne.s32.totalorder %s35, %s51
    %p53 = scmp.eq.s32.totalorder %s15, 0
    %p54 = por %p52, %p53
    %s56 = sadd.s32 %s55, 1
    %p59 = scmp.eq.s32.totalorder %s9, 7
    %p60 = scmp.ne.s32.totalorder %s55, %s57
    %p61 = scmp.eq.s32.totalorder %s9, 0
    %p62 = por %p60, %p61
    %p63 = scmp.ne.s32.totalorder %s55, %s57
    %p64 = scmp.eq.s32.totalorder %s14, 7
    %p65 = por %p63, %p64
    %p66 = scmp.ne.s32.totalorder %s57, %s58
    %p67 = scmp.eq.s32.totalorder %s14, 0
    %p68 = por %p66, %p67
    %p69 = scmp.ne.s32.totalorder %s57, %s58
    %p70 = scmp.eq.s32.totalorder %s15, 7
    %p71 = por %p69, %p70
    %p73 = scmp.ne.s32.totalorder %s58, %s72
    %p74 = scmp.eq.s32.totalorder %s15, 0
    %p75 = por %p73, %p74
    %s77 = sadd.s32 %s76, 1
    %p80 = scmp.eq.s32.totalorder %s9, 7
    %p81 = scmp.ne.s32.totalorder %s76, %s78
    %p82 = scmp.eq.s32.totalorder %s9, 0
    %p83 = por %p81, %p82
    %p84 = scmp.ne.s32.totalorder %s76, %s78
    %p85 = scmp.eq.s32.totalorder %s14, 7
    %p86 = por %p84, %p85
    %p87 = scmp.ne.s32.totalorder %s78, %s79
    %p88 = scmp.eq.s32.totalorder %s14, 0
    %p89 = por %p87, %p88
    %p90 = scmp.ne.s32.totalorder %s78, %s79
    %p91 = scmp.eq.s32.totalorder %s15, 7
    %p92 = por %p90, %p91
    %p94 = scmp.ne.s32.totalorder %s79, %s93
    %p95 = scmp.eq.s32.totalorder %s15, 0
    %p96 = por %p94, %p95
    %s97 = ssub.s32 %s16, %s28
    %s98 = ssub.s32 %s17, %s24
    %s99 = sor.u32 %s97, %s98
    %p100 = scmp.eq.s32.totalorder %s99, 0
    %s102 = sadd.s32 %s101, 1
    %s103 = scalar_select %p100, %s101, %s102
    %p106 = pneg %p100
    %p107 = scmp.eq.s32.totalorder %s9, 7
    %p108 = por %p106, %p107
    %p109 = scmp.ne.s32.totalorder %s101, %s104
    %p110 = scmp.eq.s32.totalorder %s9, 0
    %p111 = por %p109, %p110
    %p112 = scmp.ne.s32.totalorder %s101, %s104
    %p113 = scmp.eq.s32.totalorder %s14, 7
    %p114 = por %p112, %p113
    %p115 = scmp.ne.s32.totalorder %s104, %s105
    %p116 = scmp.eq.s32.totalorder %s14, 0
    %p117 = por %p115, %p116
    %p118 = scmp.ne.s32.totalorder %s104, %s105
    %p119 = scmp.eq.s32.totalorder %s15, 7
    %p120 = por %p118, %p119
    %p122 = scmp.ne.s32.totalorder %s105, %s121
    %p123 = scmp.eq.s32.totalorder %s15, 0
    %p124 = por %p122, %p123
    %p125 = scmp.le.s32.totalorder 1, %s9
    %p126 = scmp.lt.s32.totalorder %s9, 9
    %p127 = pnand %p125, %p126
    %p128 = pneg %p127
    // Predicated region
    $region9: #{dense_motion_forward.10} parent=5 // pred_check
      _
    $region10: #{dense_motion_forward.10} parent=5 // pred_check_branch
      %130 = sbr.rel (%p127) target = $region12
    $region11: #{dense_motion_forward.10} parent=5 // pred_region
      %s131 = ssub.s32 %s9, 1
      // Predicated region
      $region13: #{dense_motion_forward.10} parent=11 // pred_check
        %p132 = pneg %p68
      $region14: #{dense_motion_forward.10} parent=11 // pred_check_branch
        %134 = sbr.rel (%p132) target = $region16
      $region15: #{dense_motion_forward.10} parent=11 // pred_region
        _
      $region16: #{dense_motion_forward.10} parent=11 // pred_fallthru
        _
      // Predicated region
      $region17: #{dense_motion_forward.10} parent=11 // pred_check
        %p135 = pneg %p89
      $region18: #{dense_motion_forward.10} parent=11 // pred_check_branch
        %137 = sbr.rel (%p135) target = $region20
      $region19: #{dense_motion_forward.10} parent=11 // pred_region
        _
      $region20: #{dense_motion_forward.10} parent=11 // pred_fallthru
        _
    $region12: #{dense_motion_forward.10} parent=5 // pred_fallthru
      _
    %p138 = scmp.lt.s32.totalorder %s9, 8
    // Predicated region
    $region21: #{dense_motion_forward.10} parent=5 // pred_check
      %p139 = pneg %p138
    $region22: #{dense_motion_forward.10} parent=5 // pred_check_branch
      %141 = sbr.rel (%p139) target = $region24
    $region23: #{dense_motion_forward.10} parent=5 // pred_region
      // Predicated region
      $region25: #{dense_motion_forward.10} parent=23 // pred_check
        %p142 = pneg %p41
      $region26: #{dense_motion_forward.10} parent=23 // pred_check_branch
        %144 = sbr.rel (%p142) target = $region28
      $region27: #{dense_motion_forward.10} parent=23 // pred_region
        %p145 = scmp.lt.s32.totalorder %s16, 1
        %s146 = scalar_select %p145, %s16, 1
        %s147 = smul.addr %s146, 24
        %s148 = smul.addr %s147, 4
        %s149 = scalar_lea.vmem %s0, %s148
      $region28: #{dense_motion_forward.10} parent=23 // pred_fallthru
        _
    $region24: #{dense_motion_forward.10} parent=5 // pred_fallthru
      _
    %p150 = scmp.le.s32.totalorder 1, %s9
    %p151 = scmp.lt.s32.totalorder %s9, 9
    %p152 = pnand %p150, %p151
    %p153 = pneg %p152
    // Predicated region
    $region29: #{dense_motion_forward.10} parent=5 // pred_check
      _
    $region30: #{dense_motion_forward.10} parent=5 // pred_check_branch
      %155 = sbr.rel (%p152) target = $region32
    $region31: #{dense_motion_forward.10} parent=5 // pred_region
      %s156 = ssub.s32 %s9, 1
      %p157 = scmp.lt.s32.totalorder %s18, 1
      %s158 = scalar_select %p157, %s18, 1
      %s159 = smul.addr %s158, 24
      %s160 = smul.addr %s159, 4
      %s161 = scalar_lea.vmem %s0, %s160
      %p162 = pneg %p47
      %p163 = pneg %p44
      %p164 = pneg %p68
      %p165 = pneg %p65
      %p166 = pneg %p89
      %p167 = pneg %p86
      %p168 = pneg %p117
      %p169 = pneg %p114
      %p170 = scmp.lt.s32.totalorder %s18, 1
      %s171 = scalar_select %p170, %s18, 1
      %p172 = scmp.lt.s32.totalorder %s19, 3
      %s173 = scalar_select %p172, %s19, 3
      %s174 = smul.addr %s173, 4
      %s175 = smul.addr %s171, 16
      %s176 = sadd.s32 %s174, %s175
      %s177 = smul.addr %s176, 4
      %s178 = scalar_lea.vmem %s3, %s177
      %p179 = scmp.lt.s32.totalorder %s18, 1
      %s180 = scalar_select %p179, %s18, 1
      %s181 = smul.addr %s180, 24
      %s182 = smul.addr %s181, 4
      %s183 = scalar_lea.vmem %s0, %s182
      %p184 = scmp.lt.s32.totalorder %s18, 1
      %s185 = scalar_select %p184, %s18, 1
      %p186 = scmp.lt.s32.totalorder %s19, 3
      %s187 = scalar_select %p186, %s19, 3
      %s188 = smul.addr %s187, 4
      %s189 = smul.addr %s185, 16
      %s190 = sadd.s32 %s188, %s189
      %s191 = smul.addr %s190, 4
      %s192 = scalar_lea.vmem %s3, %s191
      %s194 = smul.u32 %s19, 4
      %s195 = smul.addr %s194, 4
      %s196 = scalar_lea.vmem %s183, %s195
      %v197 = vld [vmem:[%s196] sm:$0xff]
      %v198 = vld [vmem:[%s196 + $0x8] sm:$0xff]
      %s199 = sadd.s32 %s19, 1
      %s200 = smul.u32 %s199, 4
      %s201 = smul.addr %s200, 4
      %s202 = scalar_lea.vmem %s183, %s201
      %v203 = vld [vmem:[%s202] sm:$0xff]
      %v204 = vld [vmem:[%s202 + $0x8] sm:$0xff]
      %s205 = sadd.s32 %s19, 2
      %s206 = smul.u32 %s205, 4
      %s207 = smul.addr %s206, 4
      %s208 = scalar_lea.vmem %s183, %s207
      %v209 = vld [vmem:[%s208] sm:$0xff]
      %v210 = vld [vmem:[%s208 + $0x8] sm:$0xff]
      %v213 = vunpack.c.l.b16 %v197
      %v214 = vunpack.c.l.b16 %v198
      %v215 = vpack.c.b16 %v214, %v213
      %v217 = vunpack.c.h.b16 %v197
      %v218 = vunpack.c.h.b16 %v198
      %v219 = vpack.c.b16 %v218, %v217
      %220 = vrot.lane.b32.xlu0 %v215, 127
      %v221 = vpop.permute.xlu0 %220
      %222 = vrot.lane.b32.xlu0 %v219, 127
      %v223 = vpop.permute.xlu0 %222
      %vm224 = vcmask 1039360
      %v225 = vsel %vm224, %v221, %v223
      %227 = vrot.lane.b32.xlu0 %v215, 126
      %v228 = vpop.permute.xlu0 %227
      %229 = vrot.lane.b32.xlu0 %v219, 126
      %v230 = vpop.permute.xlu0 %229
      %vm231 = vcmask 1031168
      %v232 = vsel %vm231, %v228, %v230
      %234 = vrot.lane.b32.xlu0 %v215, 122
      %v235 = vpop.permute.xlu0 %234
      %236 = vrot.lane.b32.xlu0 %v219, 122
      %v237 = vpop.permute.xlu0 %236
      %vm238 = vcmask 998400
      %v239 = vsel %vm238, %v235, %v237
      %241 = vrot.lane.b32.xlu0 %v215, 121
      %v242 = vpop.permute.xlu0 %241
      %243 = vrot.lane.b32.xlu0 %v219, 121
      %v244 = vpop.permute.xlu0 %243
      %vm245 = vcmask 990208
      %v246 = vsel %vm245, %v242, %v244
      %248 = vrot.lane.b32.xlu0 %v215, 120
      %v249 = vpop.permute.xlu0 %248
      %250 = vrot.lane.b32.xlu0 %v219, 120
      %v251 = vpop.permute.xlu0 %250
      %vm252 = vcmask 982016
      %v253 = vsel %vm252, %v249, %v251
      %255 = vrot.lane.b32.xlu0 %v215, 116
      %v256 = vpop.permute.xlu0 %255
      %257 = vrot.lane.b32.xlu0 %v219, 116
      %v258 = vpop.permute.xlu0 %257
      %vm259 = vcmask 949248
      %v260 = vsel %vm259, %v256, %v258
      %262 = vrot.lane.b32.xlu0 %v215, 115
      %v263 = vpop.permute.xlu0 %262
      %264 = vrot.lane.b32.xlu0 %v219, 115
      %v265 = vpop.permute.xlu0 %264
      %vm266 = vcmask 941056
      %v267 = vsel %vm266, %v263, %v265
      %269 = vrot.lane.b32.xlu0 %v215, 114
      %v270 = vpop.permute.xlu0 %269
      %271 = vrot.lane.b32.xlu0 %v219, 114
      %v272 = vpop.permute.xlu0 %271
      %vm273 = vcmask 932864
      %v274 = vsel %vm273, %v270, %v272
      %v278 = vunpack.c.l.b16 %v203
      %v279 = vunpack.c.l.b16 %v204
      %v280 = vpack.c.b16 %v279, %v278
      %v282 = vunpack.c.h.b16 %v203
      %v283 = vunpack.c.h.b16 %v204
      %v284 = vpack.c.b16 %v283, %v282
      %285 = vrot.lane.b32.xlu0 %v280, 127
      %v286 = vpop.permute.xlu0 %285
      %287 = vrot.lane.b32.xlu0 %v284, 127
      %v288 = vpop.permute.xlu0 %287
      %v289 = vsel %vm224, %v286, %v288
      %291 = vrot.lane.b32.xlu0 %v280, 126
      %v292 = vpop.permute.xlu0 %291
      %293 = vrot.lane.b32.xlu0 %v284, 126
      %v294 = vpop.permute.xlu0 %293
      %v295 = vsel %vm231, %v292, %v294
      %297 = vrot.lane.b32.xlu0 %v280, 122
      %v298 = vpop.permute.xlu0 %297
      %299 = vrot.lane.b32.xlu0 %v284, 122
      %v300 = vpop.permute.xlu0 %299
      %v301 = vsel %vm238, %v298, %v300
      %303 = vrot.lane.b32.xlu0 %v280, 121
      %v304 = vpop.permute.xlu0 %303
      %305 = vrot.lane.b32.xlu0 %v284, 121
      %v306 = vpop.permute.xlu0 %305
      %v307 = vsel %vm245, %v304, %v306
      %309 = vrot.lane.b32.xlu0 %v280, 120
      %v310 = vpop.permute.xlu0 %309
      %311 = vrot.lane.b32.xlu0 %v284, 120
      %v312 = vpop.permute.xlu0 %311
      %v313 = vsel %vm252, %v310, %v312
      %315 = vrot.lane.b32.xlu0 %v280, 116
      %v316 = vpop.permute.xlu0 %315
      %317 = vrot.lane.b32.xlu0 %v284, 116
      %v318 = vpop.permute.xlu0 %317
      %v319 = vsel %vm259, %v316, %v318
      %v323 = vunpack.c.l.b16 %v209
      %v324 = vunpack.c.l.b16 %v210
      %v325 = vpack.c.b16 %v324, %v323
      %326 = vrot.lane.b32.xlu0 %v325, 13
      %v327 = vpop.permute.xlu0 %326
      %v328 = vunpack.c.h.b16 %v209
      %v329 = vunpack.c.h.b16 %v210
      %v330 = vpack.c.b16 %v329, %v328
      %331 = vrot.lane.b32.xlu0 %v325, 12
      %v332 = vpop.permute.xlu0 %331
      %333 = vrot.lane.b32.xlu0 %v330, 12
      %v334 = vpop.permute.xlu0 %333
      %vm335 = vcmask 97280
      %v336 = vsel %vm335, %v332, %v334
      %337 = vrot.lane.b32.xlu0 %v325, 11
      %v338 = vpop.permute.xlu0 %337
      %339 = vrot.lane.b32.xlu0 %v330, 11
      %v340 = vpop.permute.xlu0 %339
      %vm341 = vcmask 89088
      %v342 = vsel %vm341, %v338, %v340
      %343 = vrot.lane.b32.xlu0 %v325, 7
      %v344 = vpop.permute.xlu0 %343
      %345 = vrot.lane.b32.xlu0 %v330, 7
      %v346 = vpop.permute.xlu0 %345
      %vm347 = vcmask 56320
      %v348 = vsel %vm347, %v344, %v346
      %349 = vrot.lane.b32.xlu0 %v325, 6
      %v350 = vpop.permute.xlu0 %349
      %351 = vrot.lane.b32.xlu0 %v330, 6
      %v352 = vpop.permute.xlu0 %351
      %vm353 = vcmask 48128
      %v354 = vsel %vm353, %v350, %v352
      %355 = vrot.lane.b32.xlu0 %v325, 5
      %v356 = vpop.permute.xlu0 %355
      %357 = vrot.lane.b32.xlu0 %v330, 5
      %v358 = vpop.permute.xlu0 %357
      %vm359 = vcmask 39936
      %v360 = vsel %vm359, %v356, %v358
      %361 = vrot.lane.b32.xlu0 %v325, 1
      %v362 = vpop.permute.xlu0 %361
      %363 = vrot.lane.b32.xlu0 %v330, 1
      %v364 = vpop.permute.xlu0 %363
      %vm365 = vcmask 7168
      %v366 = vsel %vm365, %v362, %v364
      %367 = vrot.lane.b32.xlu0 %v325, 127
      %v368 = vpop.permute.xlu0 %367
      %369 = vrot.lane.b32.xlu0 %v330, 127
      %v370 = vpop.permute.xlu0 %369
      %v371 = vsel %vm224, %v368, %v370
      %372 = vrot.lane.b32.xlu0 %v280, 115
      %v373 = vpop.permute.xlu0 %372
      %374 = vrot.lane.b32.xlu0 %v284, 115
      %v375 = vpop.permute.xlu0 %374
      %376 = vrot.lane.b32.xlu0 %v289, 115
      %v377 = vpop.permute.xlu0 %376
      %378 = vrot.lane.b32.xlu0 %v288, 115
      %v379 = vpop.permute.xlu0 %378
      %380 = vrot.lane.b32.xlu0 %v327, 115
      %v381 = vpop.permute.xlu0 %380
      %382 = vrot.lane.b32.xlu0 %v332, 115
      %v383 = vpop.permute.xlu0 %382
      %384 = vrot.lane.b32.xlu0 %v336, 115
      %v385 = vpop.permute.xlu0 %384
      %386 = vrot.lane.b32.xlu0 %v338, 115
      %v387 = vpop.permute.xlu0 %386
      %388 = vrot.lane.b32.xlu0 %v342, 115
      %v389 = vpop.permute.xlu0 %388
      %390 = vrot.lane.b32.xlu0 %v344, 115
      %v391 = vpop.permute.xlu0 %390
      %392 = vrot.lane.b32.xlu0 %v348, 115
      %v393 = vpop.permute.xlu0 %392
      %394 = vrot.lane.b32.xlu0 %v350, 115
      %v395 = vpop.permute.xlu0 %394
      %396 = vrot.lane.b32.xlu0 %v354, 115
      %v397 = vpop.permute.xlu0 %396
      %398 = vrot.lane.b32.xlu0 %v356, 115
      %v399 = vpop.permute.xlu0 %398
      %400 = vrot.lane.b32.xlu0 %v360, 115
      %v401 = vpop.permute.xlu0 %400
      %402 = vrot.lane.b32.xlu0 %v362, 115
      %v403 = vpop.permute.xlu0 %402
      %404 = vrot.lane.b32.xlu0 %v366, 115
      %v405 = vpop.permute.xlu0 %404
      %406 = vrot.lane.b32.xlu0 %v325, 115
      %v407 = vpop.permute.xlu0 %406
      %408 = vrot.lane.b32.xlu0 %v330, 115
      %v409 = vpop.permute.xlu0 %408
      %410 = vrot.lane.b32.xlu0 %v371, 115
      %v411 = vpop.permute.xlu0 %410
      %412 = vrot.lane.b32.xlu0 %v370, 115
      %v413 = vpop.permute.xlu0 %412
      %v414 = vsel %vm266, %v373, %v375
      %v415 = vsel %vm266, %v377, %v379
      %v416 = vsel %vm266, %v383, %v385
      %v417 = vsel %vm266, %v387, %v389
      %v418 = vsel %vm266, %v391, %v393
      %v419 = vsel %vm266, %v395, %v397
      %v420 = vsel %vm266, %v399, %v401
      %v421 = vsel %vm266, %v403, %v405
      %v422 = vsel %vm266, %v407, %v409
      %v423 = vsel %vm266, %v411, %v413
      %v435 = vld [vmem:[%s1] sm:$0xff]
      %v436 = vld [vmem:[%s1 + $0x8] sm:$0xff]
      %v437 = vld [vmem:[%s1 + $0x10] sm:$0xff]
      %v438 = vld [vmem:[%s1 + $0x18] sm:$0xff]
      %v439 = vld [vmem:[%s1 + $0x20] sm:$0xff]
      %v440 = vld [vmem:[%s1 + $0x28] sm:$0xff]
      %v441 = vld [vmem:[%s1 + $0x30] sm:$0xff]
      %v442 = vld [vmem:[%s1 + $0x38] sm:$0xff]
      %v443 = vld [vmem:[%s2] sm:$0xff]
      %v444 = vld [vmem:[%s2 + $0x8] sm:$0xff]
      %v445 = vld [vmem:[%s2 + $0x10] sm:$0xff]
      %v446 = vld [vmem:[%s2 + $0x18] sm:$0xff]
      %448 = vset.pattern.permute.xlu0 0
      %449 = vperm.xlu0 %448, %v443
      %v450 = vpop.permute.xlu0 %449
      %453 = vset.pattern.permute.xlu0 0
      %454 = vperm.xlu0 %453, %v444
      %v455 = vpop.permute.xlu0 %454
      %458 = vset.pattern.permute.xlu0 0
      %459 = vperm.xlu0 %458, %v445
      %v460 = vpop.permute.xlu0 %459
      %463 = vset.pattern.permute.xlu0 0
      %464 = vperm.xlu0 %463, %v446
      %v465 = vpop.permute.xlu0 %464
      %v475 = vunpack.c.l.b16 %v435
      %v476 = vunpack.c.h.b16 %v435
      %v477 = vunpack.c.l.b16 %v436
      %v478 = vunpack.c.h.b16 %v436
      %v479 = vunpack.c.l.b16 %v437
      %v480 = vunpack.c.h.b16 %v437
      %v481 = vunpack.c.l.b16 %v438
      %v482 = vunpack.c.h.b16 %v438
      %v483 = vunpack.c.l.b16 %v439
      %v484 = vunpack.c.h.b16 %v439
      %v485 = vunpack.c.l.b16 %v440
      %v486 = vunpack.c.h.b16 %v440
      %v487 = vunpack.c.l.b16 %v441
      %v488 = vunpack.c.h.b16 %v441
      %v489 = vunpack.c.l.b16 %v442
      %v490 = vunpack.c.h.b16 %v442
      %v491 = vpack.c.b16 %v479, %v475
      %v492 = vpack.c.b16 %v480, %v476
      %v493 = vpack.c.b16 %v481, %v477
      %v494 = vpack.c.b16 %v482, %v478
      %v495 = vpack.c.b16 %v487, %v483
      %v496 = vpack.c.b16 %v488, %v484
      %v497 = vpack.c.b16 %v489, %v485
      %v498 = vpack.c.b16 %v490, %v486
      %vm505 = vcmask 392192
      %v507 = vsel %vm505, %v494, 0
      %v510 = vsel %vm505, %v498, 0
      %512 = vmatpush.bf16.msra.mxu0 %v267
      %513 = vmatpush.bf16.msra.mxu0 %v260
      %514 = vmatpush.bf16.msra.mxu0 %v253
      %515 = vmatpush.bf16.msra.mxu0 %v246
      %516 = vmatpush.bf16.msra.mxu0 %v239
      %517 = vmatpush.bf16.msra.mxu0 %v232
      %518 = vmatpush.bf16.msra.mxu0 %v225
      %519 = vmatpush.bf16.msra.mxu0 %v215
      %520 = vmatmul.bf16.gmra.mxu0 %v491
      %v521 = vpop.f32.mrf.mxu0
      %v522 = vadd.f32 %v450, %v521
      %v523 = vpop.f32.mrf.mxu0
      %v524 = vadd.f32 %v455, %v523
      %525 = vmatmul.bf16.gmra.mxu0 %v495
      %v526 = vpop.f32.mrf.mxu0
      %v527 = vadd.f32 %v460, %v526
      %v528 = vpop.f32.mrf.mxu0
      %v529 = vadd.f32 %v465, %v528
      %530 = vdwg.mxu0
      %531 = vmatpush.bf16.msra.mxu0 %v319
      %532 = vmatpush.bf16.msra.mxu0 %v313
      %533 = vmatpush.bf16.msra.mxu0 %v307
      %534 = vmatpush.bf16.msra.mxu0 %v301
      %535 = vmatpush.bf16.msra.mxu0 %v295
      %536 = vmatpush.bf16.msra.mxu0 %v289
      %537 = vmatpush.bf16.msra.mxu0 %v280
      %538 = vmatpush.bf16.msra.mxu0 %v274
      %539 = vmatmul.bf16.gmra.mxu0 %v492
      %v540 = vpop.f32.mrf.mxu0
      %v541 = vadd.f32 %v522, %v540
      %v542 = vpop.f32.mrf.mxu0
      %v543 = vadd.f32 %v524, %v542
      %544 = vmatmul.bf16.gmra.mxu0 %v496
      %v545 = vpop.f32.mrf.mxu0
      %v546 = vadd.f32 %v527, %v545
      %v547 = vpop.f32.mrf.mxu0
      %v548 = vadd.f32 %v529, %v547
      %549 = vdwg.mxu0
      %550 = vmatpush.bf16.msra.mxu0 %v420
      %551 = vmatpush.bf16.msra.mxu0 %v419
      %552 = vmatpush.bf16.msra.mxu0 %v418
      %553 = vmatpush.bf16.msra.mxu0 %v417
      %554 = vmatpush.bf16.msra.mxu0 %v416
      %555 = vmatpush.bf16.msra.mxu0 %v381
      %556 = vmatpush.bf16.msra.mxu0 %v415
      %557 = vmatpush.bf16.msra.mxu0 %v414
      %558 = vmatmul.bf16.gmra.mxu0 %v493
      %v559 = vpop.f32.mrf.mxu0
      %v560 = vadd.f32 %v541, %v559
      %v561 = vpop.f32.mrf.mxu0
      %v562 = vadd.f32 %v543, %v561
      %563 = vmatmul.bf16.gmra.mxu0 %v497
      %v564 = vpop.f32.mrf.mxu0
      %v565 = vadd.f32 %v546, %v564
      %v566 = vpop.f32.mrf.mxu0
      %v567 = vadd.f32 %v548, %v566
      %568 = vdwg.mxu0
      %569 = vmatpush.bf16.msra.mxu0 0
      %570 = vmatpush.bf16.msra.mxu0 0
      %571 = vmatpush.bf16.msra.mxu0 0
      %572 = vmatpush.bf16.msra.mxu0 0
      %573 = vmatpush.bf16.msra.mxu0 0
      %574 = vmatpush.bf16.msra.mxu0 %v423
      %575 = vmatpush.bf16.msra.mxu0 %v422
      %576 = vmatpush.bf16.msra.mxu0 %v421
      %577 = vmatmul.bf16.gmra.mxu0 %v507
      %v578 = vpop.f32.mrf.mxu0
      %v579 = vadd.f32 %v560, %v578
      %v580 = vpop.f32.mrf.mxu0
      %v581 = vadd.f32 %v562, %v580
      %582 = vmatmul.bf16.gmra.mxu0 %v510
      %v583 = vpop.f32.mrf.mxu0
      %v584 = vadd.f32 %v565, %v583
      %v585 = vpop.f32.mrf.mxu0
      %v586 = vadd.f32 %v567, %v585
      %587 = vdwg.mxu0
      %v588 = vmax.f32 %v579, 0.0
      %v589 = vmax.f32 %v581, 0.0
      %v590 = vmax.f32 %v584, 0.0
      %v591 = vmax.f32 %v586, 0.0
      %v592 = vpack.c.bf16 %v588, %v588
      %v593 = vpack.c.bf16 %v589, %v589
      %v594 = vpack.c.bf16 %v590, %v590
      %v595 = vpack.c.bf16 %v591, %v591
      %596 = vst [vmem:[%s192] sm:$0xf] %v592
      %597 = vst [vmem:[%s192 + $0x4] sm:$0xf] %v593
      %598 = vst [vmem:[%s192 + $0x8] sm:$0xf] %v594
      %599 = vst [vmem:[%s192 + $0xc] sm:$0xf] %v595
      %p600 = scmp.lt.s32.totalorder %s18, 1
      %s601 = scalar_select %p600, %s18, 1
      %p602 = scmp.lt.s32.totalorder %s19, 3
      %s603 = scalar_select %p602, %s19, 3
      %s604 = smul.addr %s603, 4
      %s605 = smul.addr %s601, 16
      %s606 = sadd.s32 %s604, %s605
      %s607 = smul.addr %s606, 4
      %s608 = scalar_lea.vmem %s3, %s607
      // Predicated region
      $region33: #{dense_motion_forward.10} parent=31 // pred_check
        %p609 = pneg %p114
      $region34: #{dense_motion_forward.10} parent=31 // pred_check_branch
        %611 = sbr.rel (%p609) target = $region36
      $region35: #{dense_motion_forward.10} parent=31 // pred_region
        _
      $region36: #{dense_motion_forward.10} parent=31 // pred_fallthru
        _
    $region32: #{dense_motion_forward.10} parent=5 // pred_fallthru
      _
    %p612 = scmp.le.s32.totalorder 2, %s9
    // Predicated region
    $region37: #{dense_motion_forward.10} parent=5 // pred_check
      %p613 = pneg %p612
    $region38: #{dense_motion_forward.10} parent=5 // pred_check_branch
      %615 = sbr.rel (%p613) target = $region40
    $region39: #{dense_motion_forward.10} parent=5 // pred_region
      %s616 = ssub.s32 %s9, 2
      // Predicated region
      $region41: #{dense_motion_forward.10} parent=39 // pred_check
        %p617 = pneg %p120
      $region42: #{dense_motion_forward.10} parent=39 // pred_check_branch
        %619 = sbr.rel (%p617) target = $region44
      $region43: #{dense_motion_forward.10} parent=39 // pred_region
        %p620 = scmp.lt.s32.totalorder %s20, 1
        %s621 = scalar_select %p620, %s20, 1
        %p622 = scmp.lt.s32.totalorder %s21, 3
        %s623 = scalar_select %p622, %s21, 3
        %s624 = smul.addr %s623, 4
        %s625 = smul.addr %s621, 16
        %s626 = sadd.s32 %s624, %s625
        %s627 = smul.addr %s626, 4
        %s628 = scalar_lea.vmem %s3, %s627
      $region44: #{dense_motion_forward.10} parent=39 // pred_fallthru
        _
    $region40: #{dense_motion_forward.10} parent=5 // pred_fallthru
      _
  $region6: #{dense_motion_forward.10} parent=0 // loop_footer
    %s13 = sadd.s32 1, %s9
  $region7: #{dense_motion_forward.10} parent=0 // loop_footer_branch
    %8 = sbr.rel target = $region3
  $region8: #{dense_motion_forward.10} parent=0 // loop_exit
    _

// kernel: dense_motion_forward.11
$region0: #{dense_motion_forward.11}
  #allocation0 [shape = 'u32[]', space=smem, size = 0x4, offset = 0x4, fixed_abs, tag = 'smem constant byte address 0x4 - core index']
  #allocation1 [shape = 'u32[72,128]{1,0:T(1,128)}', space=vmem, size = 0x9000, scoped, tag = 'internal scratch']
  %s0 = inlined_call_operand.vmem [shape: bf16[2,6,32,256], index: 0, kind: input, shape index: {}]
  %s1 = inlined_call_operand.vmem [shape: bf16[16,864], index: 1, kind: input, shape index: {}]
  %s2 = inlined_call_operand.vmem [shape: f32[16,1], index: 2, kind: input, shape index: {}]
  %s3 = inlined_call_operand.vmem [shape: bf16[2,4,16,128], index: 3, kind: output, shape index: {}]
  %s4 = sld [smem:[#allocation0]]
  $region45: #{dense_motion_forward.11} parent=0
    _
  %s6 = ssub.s32 1, %s4
  %s7 = scalar_select 0, %s6, %s4
  loop: start=0, step=1, limit=10
  $region2: #{dense_motion_forward.11} parent=0 // loop_pre_header
    _
  $region3: #{dense_motion_forward.11} parent=0 // loop_header
    %s9 = sphi 0, %s13
    %p10 = scmp.ge.s32.totalorder %s9, 10
    %s16 = sphi 0, %s28
    %s17 = sphi 0, %s24
    %s18 = sphi 0, %s16
    %s19 = sphi 0, %s17
    %s20 = sphi 0, %s18
    %s21 = sphi 0, %s19
    %s31 = sphi 0, %s33
    %s34 = sphi 0, %s31
    %s35 = sphi 0, %s34
    %s51 = sphi 0, %s35
    %s55 = sphi 0, %s55
    %s57 = sphi 0, %s55
    %s58 = sphi 0, %s57
    %s72 = sphi 0, %s58
    %s76 = sphi 0, %s76
    %s78 = sphi 0, %s76
    %s79 = sphi 0, %s78
    %s93 = sphi 0, %s79
    %s101 = sphi 0, %s103
    %s104 = sphi 0, %s101
    %s105 = sphi 0, %s104
    %s121 = sphi 0, %s105
  $region4: #{dense_motion_forward.11} parent=0 // loop_header_branch
    %12 = sbr.rel (%p10) target = $region8
  $region5: #{dense_motion_forward.11} parent=0 // loop_body
    %s14 = ssub.s32 %s9, 1
    %s15 = ssub.s32 %s9, 2
    %s22 = sadd.s32 1, %s17
    %p23 = scmp.ge.s32.totalorder %s22, 4
    %s24 = scalar_select %p23, 0, %s22
    %s25 = sadd.s32 1, %s16
    %s26 = scalar_select %p23, %s25, %s16
    %p27 = scmp.ge.s32.totalorder %s26, 2
    %s28 = scalar_select %p27, 0, %s26
    %s29 = ssub.s32 %s16, %s28
    %p30 = scmp.eq.s32.totalorder %s29, 0
    %s32 = sadd.s32 %s31, 1
    %s33 = scalar_select %p30, %s31, %s32
    %p36 = pneg %p30
    %p37 = scmp.eq.s32.totalorder %s9, 7
    %p38 = por %p36, %p37
    %p39 = scmp.ne.s32.totalorder %s31, %s34
    %p40 = scmp.eq.s32.totalorder %s9, 0
    %p41 = por %p39, %p40
    %p42 = scmp.ne.s32.totalorder %s31, %s34
    %p43 = scmp.eq.s32.totalorder %s14, 7
    %p44 = por %p42, %p43
    %p45 = scmp.ne.s32.totalorder %s34, %s35
    %p46 = scmp.eq.s32.totalorder %s14, 0
    %p47 = por %p45, %p46
    %p48 = scmp.ne.s32.totalorder %s34, %s35
    %p49 = scmp.eq.s32.totalorder %s15, 7
    %p50 = por %p48, %p49
    %p52 = scmp.ne.s32.totalorder %s35, %s51
    %p53 = scmp.eq.s32.totalorder %s15, 0
    %p54 = por %p52, %p53
    %s56 = sadd.s32 %s55, 1
    %p59 = scmp.eq.s32.totalorder %s9, 7
    %p60 = scmp.ne.s32.totalorder %s55, %s57
    %p61 = scmp.eq.s32.totalorder %s9, 0
    %p62 = por %p60, %p61
    %p63 = scmp.ne.s32.totalorder %s55, %s57
    %p64 = scmp.eq.s32.totalorder %s14, 7
    %p65 = por %p63, %p64
    %p66 = scmp.ne.s32.totalorder %s57, %s58
    %p67 = scmp.eq.s32.totalorder %s14, 0
    %p68 = por %p66, %p67
    %p69 = scmp.ne.s32.totalorder %s57, %s58
    %p70 = scmp.eq.s32.totalorder %s15, 7
    %p71 = por %p69, %p70
    %p73 = scmp.ne.s32.totalorder %s58, %s72
    %p74 = scmp.eq.s32.totalorder %s15, 0
    %p75 = por %p73, %p74
    %s77 = sadd.s32 %s76, 1
    %p80 = scmp.eq.s32.totalorder %s9, 7
    %p81 = scmp.ne.s32.totalorder %s76, %s78
    %p82 = scmp.eq.s32.totalorder %s9, 0
    %p83 = por %p81, %p82
    %p84 = scmp.ne.s32.totalorder %s76, %s78
    %p85 = scmp.eq.s32.totalorder %s14, 7
    %p86 = por %p84, %p85
    %p87 = scmp.ne.s32.totalorder %s78, %s79
    %p88 = scmp.eq.s32.totalorder %s14, 0
    %p89 = por %p87, %p88
    %p90 = scmp.ne.s32.totalorder %s78, %s79
    %p91 = scmp.eq.s32.totalorder %s15, 7
    %p92 = por %p90, %p91
    %p94 = scmp.ne.s32.totalorder %s79, %s93
    %p95 = scmp.eq.s32.totalorder %s15, 0
    %p96 = por %p94, %p95
    %s97 = ssub.s32 %s16, %s28
    %s98 = ssub.s32 %s17, %s24
    %s99 = sor.u32 %s97, %s98
    %p100 = scmp.eq.s32.totalorder %s99, 0
    %s102 = sadd.s32 %s101, 1
    %s103 = scalar_select %p100, %s101, %s102
    %p106 = pneg %p100
    %p107 = scmp.eq.s32.totalorder %s9, 7
    %p108 = por %p106, %p107
    %p109 = scmp.ne.s32.totalorder %s101, %s104
    %p110 = scmp.eq.s32.totalorder %s9, 0
    %p111 = por %p109, %p110
    %p112 = scmp.ne.s32.totalorder %s101, %s104
    %p113 = scmp.eq.s32.totalorder %s14, 7
    %p114 = por %p112, %p113
    %p115 = scmp.ne.s32.totalorder %s104, %s105
    %p116 = scmp.eq.s32.totalorder %s14, 0
    %p117 = por %p115, %p116
    %p118 = scmp.ne.s32.totalorder %s104, %s105
    %p119 = scmp.eq.s32.totalorder %s15, 7
    %p120 = por %p118, %p119
    %p122 = scmp.ne.s32.totalorder %s105, %s121
    %p123 = scmp.eq.s32.totalorder %s15, 0
    %p124 = por %p122, %p123
    %p125 = scmp.le.s32.totalorder 1, %s9
    %p126 = scmp.lt.s32.totalorder %s9, 9
    %p127 = pnand %p125, %p126
    %p128 = pneg %p127
    // Predicated region
    $region9: #{dense_motion_forward.11} parent=5 // pred_check
      _
    $region10: #{dense_motion_forward.11} parent=5 // pred_check_branch
      %130 = sbr.rel (%p127) target = $region12
    $region11: #{dense_motion_forward.11} parent=5 // pred_region
      %s131 = ssub.s32 %s9, 1
      // Predicated region
      $region13: #{dense_motion_forward.11} parent=11 // pred_check
        %p132 = pneg %p68
      $region14: #{dense_motion_forward.11} parent=11 // pred_check_branch
        %134 = sbr.rel (%p132) target = $region16
      $region15: #{dense_motion_forward.11} parent=11 // pred_region
        _
      $region16: #{dense_motion_forward.11} parent=11 // pred_fallthru
        _
      // Predicated region
      $region17: #{dense_motion_forward.11} parent=11 // pred_check
        %p135 = pneg %p89
      $region18: #{dense_motion_forward.11} parent=11 // pred_check_branch
        %137 = sbr.rel (%p135) target = $region20
      $region19: #{dense_motion_forward.11} parent=11 // pred_region
        _
      $region20: #{dense_motion_forward.11} parent=11 // pred_fallthru
        _
    $region12: #{dense_motion_forward.11} parent=5 // pred_fallthru
      _
    %p138 = scmp.lt.s32.totalorder %s9, 8
    // Predicated region
    $region21: #{dense_motion_forward.11} parent=5 // pred_check
      %p139 = pneg %p138
    $region22: #{dense_motion_forward.11} parent=5 // pred_check_branch
      %141 = sbr.rel (%p139) target = $region24
    $region23: #{dense_motion_forward.11} parent=5 // pred_region
      // Predicated region
      $region25: #{dense_motion_forward.11} parent=23 // pred_check
        %p142 = pneg %p41
      $region26: #{dense_motion_forward.11} parent=23 // pred_check_branch
        %144 = sbr.rel (%p142) target = $region28
      $region27: #{dense_motion_forward.11} parent=23 // pred_region
        %p145 = scmp.lt.s32.totalorder %s16, 1
        %s146 = scalar_select %p145, %s16, 1
        %s147 = smul.addr %s146, 48
        %s148 = smul.addr %s147, 4
        %s149 = scalar_lea.vmem %s0, %s148
      $region28: #{dense_motion_forward.11} parent=23 // pred_fallthru
        _
    $region24: #{dense_motion_forward.11} parent=5 // pred_fallthru
      _
    %p150 = scmp.le.s32.totalorder 1, %s9
    %p151 = scmp.lt.s32.totalorder %s9, 9
    %p152 = pnand %p150, %p151
    %p153 = pneg %p152
    // Predicated region
    $region29: #{dense_motion_forward.11} parent=5 // pred_check
      _
    $region30: #{dense_motion_forward.11} parent=5 // pred_check_branch
      %155 = sbr.rel (%p152) target = $region32
    $region31: #{dense_motion_forward.11} parent=5 // pred_region
      %s156 = ssub.s32 %s9, 1
      %p157 = scmp.lt.s32.totalorder %s18, 1
      %s158 = scalar_select %p157, %s18, 1
      %s159 = smul.addr %s158, 48
      %s160 = smul.addr %s159, 4
      %s161 = scalar_lea.vmem %s0, %s160
      %p162 = pneg %p47
      %p163 = pneg %p44
      %p164 = pneg %p68
      %p165 = pneg %p65
      %p166 = pneg %p89
      %p167 = pneg %p86
      %p168 = pneg %p117
      %p169 = pneg %p114
      %p170 = scmp.lt.s32.totalorder %s18, 1
      %s171 = scalar_select %p170, %s18, 1
      %p172 = scmp.lt.s32.totalorder %s19, 3
      %s173 = scalar_select %p172, %s19, 3
      %s174 = smul.addr %s173, 2
      %s175 = smul.addr %s171, 8
      %s176 = sadd.s32 %s174, %s175
      %s177 = smul.addr %s176, 4
      %s178 = scalar_lea.vmem %s3, %s177
      %p179 = scmp.lt.s32.totalorder %s18, 1
      %s180 = scalar_select %p179, %s18, 1
      %s181 = smul.addr %s180, 48
      %s182 = smul.addr %s181, 4
      %s183 = scalar_lea.vmem %s0, %s182
      %p184 = scmp.lt.s32.totalorder %s18, 1
      %s185 = scalar_select %p184, %s18, 1
      %p186 = scmp.lt.s32.totalorder %s19, 3
      %s187 = scalar_select %p186, %s19, 3
      %s188 = smul.addr %s187, 2
      %s189 = smul.addr %s185, 8
      %s190 = sadd.s32 %s188, %s189
      %s191 = smul.addr %s190, 4
      %s192 = scalar_lea.vmem %s3, %s191
      %s194 = smul.u32 %s19, 8
      %s195 = smul.addr %s194, 4
      %s196 = scalar_lea.vmem %s183, %s195
      %v197 = vld [vmem:[%s196] sm:$0xff]
      %v198 = vld [vmem:[%s196 + $0x8] sm:$0xff]
      %v199 = vld [vmem:[%s196 + $0x10] sm:$0xff]
      %v200 = vld [vmem:[%s196 + $0x18] sm:$0xff]
      %s201 = sadd.s32 %s19, 1
      %s202 = smul.u32 %s201, 8
      %s203 = smul.addr %s202, 4
      %s204 = scalar_lea.vmem %s183, %s203
      %v205 = vld [vmem:[%s204] sm:$0xff]
      %v206 = vld [vmem:[%s204 + $0x8] sm:$0xff]
      %v207 = vld [vmem:[%s204 + $0x10] sm:$0xff]
      %v208 = vld [vmem:[%s204 + $0x18] sm:$0xff]
      %s209 = sadd.s32 %s19, 2
      %s210 = smul.u32 %s209, 8
      %s211 = smul.addr %s210, 4
      %s212 = scalar_lea.vmem %s183, %s211
      %v213 = vld [vmem:[%s212] sm:$0xff]
      %v214 = vld [vmem:[%s212 + $0x8] sm:$0xff]
      %v215 = vld [vmem:[%s212 + $0x10] sm:$0xff]
      %v216 = vld [vmem:[%s212 + $0x18] sm:$0xff]
      %v221 = vunpack.c.l.b16 %v197
      %v222 = vunpack.c.l.b16 %v198
      %v223 = vunpack.c.l.b16 %v199
      %v224 = vunpack.c.l.b16 %v200
      %v225 = vpack.c.b16 %v222, %v221
      %v226 = vpack.c.b16 %v224, %v223
      %v229 = vunpack.c.h.b16 %v197
      %v230 = vunpack.c.h.b16 %v198
      %v231 = vunpack.c.h.b16 %v199
      %v232 = vunpack.c.h.b16 %v200
      %v233 = vpack.c.b16 %v230, %v229
      %v234 = vpack.c.b16 %v232, %v231
      %235 = vrot.lane.b32.xlu0 %v225, 127
      %v236 = vpop.permute.xlu0 %235
      %237 = vrot.lane.b32.xlu0 %v233, 127
      %v238 = vpop.permute.xlu0 %237
      %239 = vrot.lane.b32.xlu0 %v226, 127
      %v240 = vpop.permute.xlu0 %239
      %241 = vrot.lane.b32.xlu0 %v234, 127
      %v242 = vpop.permute.xlu0 %241
      %vm243 = vcmask 1039360
      %v244 = vsel %vm243, %v236, %v238
      %v245 = vsel %vm243, %v240, %v242
      %248 = vrot.lane.b32.xlu0 %v225, 126
      %v249 = vpop.permute.xlu0 %248
      %250 = vrot.lane.b32.xlu0 %v233, 126
      %v251 = vpop.permute.xlu0 %250
      %252 = vrot.lane.b32.xlu0 %v226, 126
      %v253 = vpop.permute.xlu0 %252
      %254 = vrot.lane.b32.xlu0 %v234, 126
      %v255 = vpop.permute.xlu0 %254
      %vm256 = vcmask 1031168
      %v257 = vsel %vm256, %v249, %v251
      %v258 = vsel %vm256, %v253, %v255
      %261 = vrot.lane.b32.xlu0 %v225, 122
      %v262 = vpop.permute.xlu0 %261
      %263 = vrot.lane.b32.xlu0 %v233, 122
      %v264 = vpop.permute.xlu0 %263
      %265 = vrot.lane.b32.xlu0 %v226, 122
      %v266 = vpop.permute.xlu0 %265
      %267 = vrot.lane.b32.xlu0 %v234, 122
      %v268 = vpop.permute.xlu0 %267
      %vm269 = vcmask 998400
      %v270 = vsel %vm269, %v262, %v264
      %v271 = vsel %vm269, %v266, %v268
      %274 = vrot.lane.b32.xlu0 %v225, 121
      %v275 = vpop.permute.xlu0 %274
      %276 = vrot.lane.b32.xlu0 %v233, 121
      %v277 = vpop.permute.xlu0 %276
      %278 = vrot.lane.b32.xlu0 %v226, 121
      %v279 = vpop.permute.xlu0 %278
      %280 = vrot.lane.b32.xlu0 %v234, 121
      %v281 = vpop.permute.xlu0 %280
      %vm282 = vcmask 990208
      %v283 = vsel %vm282, %v275, %v277
      %v284 = vsel %vm282, %v279, %v281
      %287 = vrot.lane.b32.xlu0 %v225, 120
      %v288 = vpop.permute.xlu0 %287
      %289 = vrot.lane.b32.xlu0 %v233, 120
      %v290 = vpop.permute.xlu0 %289
      %291 = vrot.lane.b32.xlu0 %v226, 120
      %v292 = vpop.permute.xlu0 %291
      %293 = vrot.lane.b32.xlu0 %v234, 120
      %v294 = vpop.permute.xlu0 %293
      %vm295 = vcmask 982016
      %v296 = vsel %vm295, %v288, %v290
      %v297 = vsel %vm295, %v292, %v294
      %300 = vrot.lane.b32.xlu0 %v225, 116
      %v301 = vpop.permute.xlu0 %300
      %302 = vrot.lane.b32.xlu0 %v233, 116
      %v303 = vpop.permute.xlu0 %302
      %304 = vrot.lane.b32.xlu0 %v226, 116
      %v305 = vpop.permute.xlu0 %304
      %306 = vrot.lane.b32.xlu0 %v234, 116
      %v307 = vpop.permute.xlu0 %306
      %vm308 = vcmask 949248
      %v309 = vsel %vm308, %v301, %v303
      %v310 = vsel %vm308, %v305, %v307
      %313 = vrot.lane.b32.xlu0 %v225, 115
      %v314 = vpop.permute.xlu0 %313
      %315 = vrot.lane.b32.xlu0 %v233, 115
      %v316 = vpop.permute.xlu0 %315
      %317 = vrot.lane.b32.xlu0 %v226, 115
      %v318 = vpop.permute.xlu0 %317
      %319 = vrot.lane.b32.xlu0 %v234, 115
      %v320 = vpop.permute.xlu0 %319
      %vm321 = vcmask 941056
      %v322 = vsel %vm321, %v314, %v316
      %v323 = vsel %vm321, %v318, %v320
      %326 = vrot.lane.b32.xlu0 %v225, 114
      %v327 = vpop.permute.xlu0 %326
      %328 = vrot.lane.b32.xlu0 %v233, 114
      %v329 = vpop.permute.xlu0 %328
      %330 = vrot.lane.b32.xlu0 %v226, 114
      %v331 = vpop.permute.xlu0 %330
      %332 = vrot.lane.b32.xlu0 %v234, 114
      %v333 = vpop.permute.xlu0 %332
      %vm334 = vcmask 932864
      %v335 = vsel %vm334, %v327, %v329
      %v336 = vsel %vm334, %v331, %v333
      %v343 = vunpack.c.l.b16 %v205
      %v344 = vunpack.c.l.b16 %v206
      %v345 = vunpack.c.l.b16 %v207
      %v346 = vunpack.c.l.b16 %v208
      %v347 = vpack.c.b16 %v344, %v343
      %v348 = vpack.c.b16 %v346, %v345
      %v351 = vunpack.c.h.b16 %v205
      %v352 = vunpack.c.h.b16 %v206
      %v353 = vunpack.c.h.b16 %v207
      %v354 = vunpack.c.h.b16 %v208
      %v355 = vpack.c.b16 %v352, %v351
      %v356 = vpack.c.b16 %v354, %v353
      %357 = vrot.lane.b32.xlu0 %v347, 127
      %v358 = vpop.permute.xlu0 %357
      %359 = vrot.lane.b32.xlu0 %v355, 127
      %v360 = vpop.permute.xlu0 %359
      %361 = vrot.lane.b32.xlu0 %v348, 127
      %v362 = vpop.permute.xlu0 %361
      %363 = vrot.lane.b32.xlu0 %v356, 127
      %v364 = vpop.permute.xlu0 %363
      %v365 = vsel %vm243, %v358, %v360
      %v366 = vsel %vm243, %v362, %v364
      %369 = vrot.lane.b32.xlu0 %v347, 126
      %v370 = vpop.permute.xlu0 %369
      %371 = vrot.lane.b32.xlu0 %v355, 126
      %v372 = vpop.permute.xlu0 %371
      %373 = vrot.lane.b32.xlu0 %v348, 126
      %v374 = vpop.permute.xlu0 %373
      %375 = vrot.lane.b32.xlu0 %v356, 126
      %v376 = vpop.permute.xlu0 %375
      %v377 = vsel %vm256, %v370, %v372
      %v378 = vsel %vm256, %v374, %v376
      %381 = vrot.lane.b32.xlu0 %v347, 122
      %v382 = vpop.permute.xlu0 %381
      %383 = vrot.lane.b32.xlu0 %v355, 122
      %v384 = vpop.permute.xlu0 %383
      %385 = vrot.lane.b32.xlu0 %v348, 122
      %v386 = vpop.permute.xlu0 %385
      %387 = vrot.lane.b32.xlu0 %v356, 122
      %v388 = vpop.permute.xlu0 %387
      %v389 = vsel %vm269, %v382, %v384
      %v390 = vsel %vm269, %v386, %v388
      %393 = vrot.lane.b32.xlu0 %v347, 121
      %v394 = vpop.permute.xlu0 %393
      %395 = vrot.lane.b32.xlu0 %v355, 121
      %v396 = vpop.permute.xlu0 %395
      %397 = vrot.lane.b32.xlu0 %v348, 121
      %v398 = vpop.permute.xlu0 %397
      %399 = vrot.lane.b32.xlu0 %v356, 121
      %v400 = vpop.permute.xlu0 %399
      %v401 = vsel %vm282, %v394, %v396
      %v402 = vsel %vm282, %v398, %v400
      %405 = vrot.lane.b32.xlu0 %v347, 120
      %v406 = vpop.permute.xlu0 %405
      %407 = vrot.lane.b32.xlu0 %v355, 120
      %v408 = vpop.permute.xlu0 %407
      %409 = vrot.lane.b32.xlu0 %v348, 120
      %v410 = vpop.permute.xlu0 %409
      %411 = vrot.lane.b32.xlu0 %v356, 120
      %v412 = vpop.permute.xlu0 %411
      %v413 = vsel %vm295, %v406, %v408
      %v414 = vsel %vm295, %v410, %v412
      %417 = vrot.lane.b32.xlu0 %v347, 116
      %v418 = vpop.permute.xlu0 %417
      %419 = vrot.lane.b32.xlu0 %v355, 116
      %v420 = vpop.permute.xlu0 %419
      %421 = vrot.lane.b32.xlu0 %v348, 116
      %v422 = vpop.permute.xlu0 %421
      %423 = vrot.lane.b32.xlu0 %v356, 116
      %v424 = vpop.permute.xlu0 %423
      %v425 = vsel %vm308, %v418, %v420
      %v426 = vsel %vm308, %v422, %v424
      %v433 = vunpack.c.l.b16 %v213
      %v434 = vunpack.c.l.b16 %v214
      %v435 = vunpack.c.l.b16 %v215
      %v436 = vunpack.c.l.b16 %v216
      %v437 = vpack.c.b16 %v434, %v433
      %v438 = vpack.c.b16 %v436, %v435
      %439 = vrot.lane.b32.xlu0 %v437, 13
      %v440 = vpop.permute.xlu0 %439
      %441 = vrot.lane.b32.xlu0 %v438, 13
      %v442 = vpop.permute.xlu0 %441
      %v443 = vunpack.c.h.b16 %v213
      %v444 = vunpack.c.h.b16 %v214
      %v445 = vunpack.c.h.b16 %v215
      %v446 = vunpack.c.h.b16 %v216
      %v447 = vpack.c.b16 %v444, %v443
      %v448 = vpack.c.b16 %v446, %v445
      %449 = vrot.lane.b32.xlu0 %v437, 12
      %v450 = vpop.permute.xlu0 %449
      %451 = vrot.lane.b32.xlu0 %v447, 12
      %v452 = vpop.permute.xlu0 %451
      %453 = vrot.lane.b32.xlu0 %v438, 12
      %v454 = vpop.permute.xlu0 %453
      %455 = vrot.lane.b32.xlu0 %v448, 12
      %v456 = vpop.permute.xlu0 %455
      %vm457 = vcmask 97280
      %v458 = vsel %vm457, %v450, %v452
      %v459 = vsel %vm457, %v454, %v456
      %460 = vrot.lane.b32.xlu0 %v437, 11
      %v461 = vpop.permute.xlu0 %460
      %462 = vrot.lane.b32.xlu0 %v447, 11
      %v463 = vpop.permute.xlu0 %462
      %464 = vrot.lane.b32.xlu0 %v438, 11
      %v465 = vpop.permute.xlu0 %464
      %466 = vrot.lane.b32.xlu0 %v448, 11
      %v467 = vpop.permute.xlu0 %466
      %vm468 = vcmask 89088
      %v469 = vsel %vm468, %v461, %v463
      %v470 = vsel %vm468, %v465, %v467
      %471 = vrot.lane.b32.xlu0 %v437, 7
      %v472 = vpop.permute.xlu0 %471
      %473 = vrot.lane.b32.xlu0 %v447, 7
      %v474 = vpop.permute.xlu0 %473
      %475 = vrot.lane.b32.xlu0 %v438, 7
      %v476 = vpop.permute.xlu0 %475
      %477 = vrot.lane.b32.xlu0 %v448, 7
      %v478 = vpop.permute.xlu0 %477
      %vm479 = vcmask 56320
      %v480 = vsel %vm479, %v472, %v474
      %v481 = vsel %vm479, %v476, %v478
      %482 = vrot.lane.b32.xlu0 %v437, 6
      %v483 = vpop.permute.xlu0 %482
      %484 = vrot.lane.b32.xlu0 %v447, 6
      %v485 = vpop.permute.xlu0 %484
      %486 = vrot.lane.b32.xlu0 %v438, 6
      %v487 = vpop.permute.xlu0 %486
      %488 = vrot.lane.b32.xlu0 %v448, 6
      %v489 = vpop.permute.xlu0 %488
      %vm490 = vcmask 48128
      %v491 = vsel %vm490, %v483, %v485
      %v492 = vsel %vm490, %v487, %v489
      %493 = vrot.lane.b32.xlu0 %v437, 5
      %v494 = vpop.permute.xlu0 %493
      %495 = vrot.lane.b32.xlu0 %v447, 5
      %v496 = vpop.permute.xlu0 %495
      %497 = vrot.lane.b32.xlu0 %v438, 5
      %v498 = vpop.permute.xlu0 %497
      %499 = vrot.lane.b32.xlu0 %v448, 5
      %v500 = vpop.permute.xlu0 %499
      %vm501 = vcmask 39936
      %v502 = vsel %vm501, %v494, %v496
      %v503 = vsel %vm501, %v498, %v500
      %504 = vrot.lane.b32.xlu0 %v437, 1
      %v505 = vpop.permute.xlu0 %504
      %506 = vrot.lane.b32.xlu0 %v447, 1
      %v507 = vpop.permute.xlu0 %506
      %508 = vrot.lane.b32.xlu0 %v438, 1
      %v509 = vpop.permute.xlu0 %508
      %510 = vrot.lane.b32.xlu0 %v448, 1
      %v511 = vpop.permute.xlu0 %510
      %vm512 = vcmask 7168
      %v513 = vsel %vm512, %v505, %v507
      %v514 = vsel %vm512, %v509, %v511
      %515 = vrot.lane.b32.xlu0 %v437, 127
      %v516 = vpop.permute.xlu0 %515
      %517 = vrot.lane.b32.xlu0 %v447, 127
      %v518 = vpop.permute.xlu0 %517
      %519 = vrot.lane.b32.xlu0 %v438, 127
      %v520 = vpop.permute.xlu0 %519
      %521 = vrot.lane.b32.xlu0 %v448, 127
      %v522 = vpop.permute.xlu0 %521
      %v523 = vsel %vm243, %v516, %v518
      %v524 = vsel %vm243, %v520, %v522
      %525 = vrot.lane.b32.xlu0 %v347, 115
      %v526 = vpop.permute.xlu0 %525
      %527 = vrot.lane.b32.xlu0 %v355, 115
      %v528 = vpop.permute.xlu0 %527
      %529 = vrot.lane.b32.xlu0 %v348, 115
      %v530 = vpop.permute.xlu0 %529
      %531 = vrot.lane.b32.xlu0 %v356, 115
      %v532 = vpop.permute.xlu0 %531
      %533 = vrot.lane.b32.xlu0 %v365, 115
      %v534 = vpop.permute.xlu0 %533
      %535 = vrot.lane.b32.xlu0 %v360, 115
      %v536 = vpop.permute.xlu0 %535
      %537 = vrot.lane.b32.xlu0 %v366, 115
      %v538 = vpop.permute.xlu0 %537
      %539 = vrot.lane.b32.xlu0 %v364, 115
      %v540 = vpop.permute.xlu0 %539
      %541 = vrot.lane.b32.xlu0 %v440, 115
      %v542 = vpop.permute.xlu0 %541
      %543 = vrot.lane.b32.xlu0 %v442, 115
      %v544 = vpop.permute.xlu0 %543
      %545 = vrot.lane.b32.xlu0 %v450, 115
      %v546 = vpop.permute.xlu0 %545
      %547 = vrot.lane.b32.xlu0 %v458, 115
      %v548 = vpop.permute.xlu0 %547
      %549 = vrot.lane.b32.xlu0 %v454, 115
      %v550 = vpop.permute.xlu0 %549
      %551 = vrot.lane.b32.xlu0 %v459, 115
      %v552 = vpop.permute.xlu0 %551
      %553 = vrot.lane.b32.xlu0 %v461, 115
      %v554 = vpop.permute.xlu0 %553
      %555 = vrot.lane.b32.xlu0 %v469, 115
      %v556 = vpop.permute.xlu0 %555
      %557 = vrot.lane.b32.xlu0 %v465, 115
      %v558 = vpop.permute.xlu0 %557
      %559 = vrot.lane.b32.xlu0 %v470, 115
      %v560 = vpop.permute.xlu0 %559
      %561 = vrot.lane.b32.xlu0 %v472, 115
      %v562 = vpop.permute.xlu0 %561
      %563 = vrot.lane.b32.xlu0 %v480, 115
      %v564 = vpop.permute.xlu0 %563
      %565 = vrot.lane.b32.xlu0 %v476, 115
      %v566 = vpop.permute.xlu0 %565
      %567 = vrot.lane.b32.xlu0 %v481, 115
      %v568 = vpop.permute.xlu0 %567
      %569 = vrot.lane.b32.xlu0 %v483, 115
      %v570 = vpop.permute.xlu0 %569
      %571 = vrot.lane.b32.xlu0 %v491, 115
      %v572 = vpop.permute.xlu0 %571
      %573 = vrot.lane.b32.xlu0 %v487, 115
      %v574 = vpop.permute.xlu0 %573
      %575 = vrot.lane.b32.xlu0 %v492, 115
      %v576 = vpop.permute.xlu0 %575
      %577 = vrot.lane.b32.xlu0 %v494, 115
      %v578 = vpop.permute.xlu0 %577
      %579 = vrot.lane.b32.xlu0 %v502, 115
      %v580 = vpop.permute.xlu0 %579
      %581 = vrot.lane.b32.xlu0 %v498, 115
      %v582 = vpop.permute.xlu0 %581
      %583 = vrot.lane.b32.xlu0 %v503, 115
      %v584 = vpop.permute.xlu0 %583
      %585 = vrot.lane.b32.xlu0 %v505, 115
      %v586 = vpop.permute.xlu0 %585
      %587 = vrot.lane.b32.xlu0 %v513, 115
      %v588 = vpop.permute.xlu0 %587
      %589 = vrot.lane.b32.xlu0 %v509, 115
      %v590 = vpop.permute.xlu0 %589
      %591 = vrot.lane.b32.xlu0 %v514, 115
      %v592 = vpop.permute.xlu0 %591
      %593 = vrot.lane.b32.xlu0 %v437, 115
      %v594 = vpop.permute.xlu0 %593
      %595 = vrot.lane.b32.xlu0 %v447, 115
      %v596 = vpop.permute.xlu0 %595
      %597 = vrot.lane.b32.xlu0 %v438, 115
      %v598 = vpop.permute.xlu0 %597
      %599 = vrot.lane.b32.xlu0 %v448, 115
      %v600 = vpop.permute.xlu0 %599
      %601 = vrot.lane.b32.xlu0 %v523, 115
      %v602 = vpop.permute.xlu0 %601
      %603 = vrot.lane.b32.xlu0 %v518, 115
      %v604 = vpop.permute.xlu0 %603
      %605 = vrot.lane.b32.xlu0 %v524, 115
      %v606 = vpop.permute.xlu0 %605
      %607 = vrot.lane.b32.xlu0 %v522, 115
      %v608 = vpop.permute.xlu0 %607
      %v609 = vsel %vm321, %v526, %v528
      %v610 = vsel %vm321, %v530, %v532
      %v611 = vsel %vm321, %v534, %v536
      %v612 = vsel %vm321, %v538, %v540
      %v613 = vsel %vm321, %v546, %v548
      %v614 = vsel %vm321, %v550, %v552
      %v615 = vsel %vm321, %v554, %v556
      %v616 = vsel %vm321, %v558, %v560
      %v617 = vsel %vm321, %v562, %v564
      %v618 = vsel %vm321, %v566, %v568
      %v619 = vsel %vm321, %v570, %v572
      %v620 = vsel %vm321, %v574, %v576
      %v621 = vsel %vm321, %v578, %v580
      %v622 = vsel %vm321, %v582, %v584
      %v623 = vsel %vm321, %v586, %v588
      %v624 = vsel %vm321, %v590, %v592
      %v625 = vsel %vm321, %v594, %v596
      %v626 = vsel %vm321, %v598, %v600
      %v627 = vsel %vm321, %v602, %v604
      %v628 = vsel %vm321, %v606, %v608
      %v651 = vld [vmem:[%s1] sm:$0xff]
      %v652 = vld [vmem:[%s1 + $0x8] sm:$0xff]
      %v653 = vld [vmem:[%s1 + $0x10] sm:$0xff]
      %v654 = vld [vmem:[%s1 + $0x18] sm:$0xf]
      %v655 = vld [vmem:[%s1 + $0x1c] sm:$0xff]
      %v656 = vld [vmem:[%s1 + $0x24] sm:$0xff]
      %v657 = vld [vmem:[%s1 + $0x2c] sm:$0xff]
      %v658 = vld [vmem:[%s1 + $0x34] sm:$0xf]
      %v659 = vld [vmem:[%s2] sm:$0xff]
      %v660 = vld [vmem:[%s2 + $0x8] sm:$0xff]
      %662 = vset.pattern.permute.xlu0 0
      %663 = vperm.xlu0 %662, %v659
      %v664 = vpop.permute.xlu0 %663
      %667 = vset.pattern.permute.xlu0 0
      %668 = vperm.xlu0 %667, %v660
      %v669 = vpop.permute.xlu0 %668
      %v679 = vunpack.c.l.b16 %v651
      %v680 = vunpack.c.h.b16 %v651
      %v681 = vunpack.c.l.b16 %v652
      %v682 = vunpack.c.h.b16 %v652
      %v683 = vunpack.c.l.b16 %v653
      %v684 = vunpack.c.h.b16 %v653
      %v685 = vunpack.c.l.b16 %v654
      %v686 = vunpack.c.l.b16 %v655
      %v687 = vunpack.c.h.b16 %v655
      %v688 = vunpack.c.l.b16 %v656
      %v689 = vunpack.c.h.b16 %v656
      %v690 = vunpack.c.l.b16 %v657
      %v691 = vunpack.c.h.b16 %v657
      %v692 = vunpack.c.l.b16 %v658
      %v693 = vpack.c.b16 %v686, %v679
      %v694 = vpack.c.b16 %v687, %v680
      %v695 = vpack.c.b16 %v688, %v681
      %v696 = vpack.c.b16 %v689, %v682
      %v697 = vpack.c.b16 %v690, %v683
      %v698 = vpack.c.b16 %v691, %v684
      %v699 = vpack.c.b16 %v692, %v685
      %vm706 = vcmask 785408
      %v708 = vsel %vm706, %v699, 0
      %710 = vmatpush.bf16.msra.mxu0 %v271
      %711 = vmatpush.bf16.msra.mxu0 %v270
      %712 = vmatpush.bf16.msra.mxu0 %v258
      %713 = vmatpush.bf16.msra.mxu0 %v257
      %714 = vmatpush.bf16.msra.mxu0 %v245
      %715 = vmatpush.bf16.msra.mxu0 %v244
      %716 = vmatpush.bf16.msra.mxu0 %v226
      %717 = vmatpush.bf16.msra.mxu0 %v225
      %718 = vmatmul.bf16.gmra.mxu0 %v693
      %v719 = vpop.f32.mrf.mxu0
      %v720 = vadd.f32 %v664, %v719
      %v721 = vpop.f32.mrf.mxu0
      %v722 = vadd.f32 %v669, %v721
      %723 = vdwg.mxu0
      %724 = vmatpush.bf16.msra.mxu0 %v323
      %725 = vmatpush.bf16.msra.mxu0 %v322
      %726 = vmatpush.bf16.msra.mxu0 %v310
      %727 = vmatpush.bf16.msra.mxu0 %v309
      %728 = vmatpush.bf16.msra.mxu0 %v297
      %729 = vmatpush.bf16.msra.mxu0 %v296
      %730 = vmatpush.bf16.msra.mxu0 %v284
      %731 = vmatpush.bf16.msra.mxu0 %v283
      %732 = vmatmul.bf16.gmra.mxu0 %v694
      %v733 = vpop.f32.mrf.mxu0
      %v734 = vadd.f32 %v720, %v733
      %v735 = vpop.f32.mrf.mxu0
      %v736 = vadd.f32 %v722, %v735
      %737 = vdwg.mxu0
      %738 = vmatpush.bf16.msra.mxu0 %v378
      %739 = vmatpush.bf16.msra.mxu0 %v377
      %740 = vmatpush.bf16.msra.mxu0 %v366
      %741 = vmatpush.bf16.msra.mxu0 %v365
      %742 = vmatpush.bf16.msra.mxu0 %v348
      %743 = vmatpush.bf16.msra.mxu0 %v347
      %744 = vmatpush.bf16.msra.mxu0 %v336
      %745 = vmatpush.bf16.msra.mxu0 %v335
      %746 = vmatmul.bf16.gmra.mxu0 %v695
      %v747 = vpop.f32.mrf.mxu0
      %v748 = vadd.f32 %v734, %v747
      %v749 = vpop.f32.mrf.mxu0
      %v750 = vadd.f32 %v736, %v749
      %751 = vdwg.mxu0
      %752 = vmatpush.bf16.msra.mxu0 %v426
      %753 = vmatpush.bf16.msra.mxu0 %v425
      %754 = vmatpush.bf16.msra.mxu0 %v414
      %755 = vmatpush.bf16.msra.mxu0 %v413
      %756 = vmatpush.bf16.msra.mxu0 %v402
      %757 = vmatpush.bf16.msra.mxu0 %v401
      %758 = vmatpush.bf16.msra.mxu0 %v390
      %759 = vmatpush.bf16.msra.mxu0 %v389
      %760 = vmatmul.bf16.gmra.mxu0 %v696
      %v761 = vpop.f32.mrf.mxu0
      %v762 = vadd.f32 %v748, %v761
      %v763 = vpop.f32.mrf.mxu0
      %v764 = vadd.f32 %v750, %v763
      %765 = vdwg.mxu0
      %766 = vmatpush.bf16.msra.mxu0 %v614
      %767 = vmatpush.bf16.msra.mxu0 %v613
      %768 = vmatpush.bf16.msra.mxu0 %v544
      %769 = vmatpush.bf16.msra.mxu0 %v542
      %770 = vmatpush.bf16.msra.mxu0 %v612
      %771 = vmatpush.bf16.msra.mxu0 %v611
      %772 = vmatpush.bf16.msra.mxu0 %v610
      %773 = vmatpush.bf16.msra.mxu0 %v609
      %774 = vmatmul.bf16.gmra.mxu0 %v697
      %v775 = vpop.f32.mrf.mxu0
      %v776 = vadd.f32 %v762, %v775
      %v777 = vpop.f32.mrf.mxu0
      %v778 = vadd.f32 %v764, %v777
      %779 = vdwg.mxu0
      %780 = vmatpush.bf16.msra.mxu0 %v622
      %781 = vmatpush.bf16.msra.mxu0 %v621
      %782 = vmatpush.bf16.msra.mxu0 %v620
      %783 = vmatpush.bf16.msra.mxu0 %v619
      %784 = vmatpush.bf16.msra.mxu0 %v618
      %785 = vmatpush.bf16.msra.mxu0 %v617
      %786 = vmatpush.bf16.msra.mxu0 %v616
      %787 = vmatpush.bf16.msra.mxu0 %v615
      %788 = vmatmul.bf16.gmra.mxu0 %v698
      %v789 = vpop.f32.mrf.mxu0
      %v790 = vadd.f32 %v776, %v789
      %v791 = vpop.f32.mrf.mxu0
      %v792 = vadd.f32 %v778, %v791
      %793 = vdwg.mxu0
      %794 = vmatpush.bf16.msra.mxu0 0
      %795 = vmatpush.bf16.msra.mxu0 0
      %796 = vmatpush.bf16.msra.mxu0 %v628
      %797 = vmatpush.bf16.msra.mxu0 %v627
      %798 = vmatpush.bf16.msra.mxu0 %v626
      %799 = vmatpush.bf16.msra.mxu0 %v625
      %800 = vmatpush.bf16.msra.mxu0 %v624
      %801 = vmatpush.bf16.msra.mxu0 %v623
      %802 = vmatmul.bf16.gmra.mxu0 %v708
      %v803 = vpop.f32.mrf.mxu0
      %v804 = vadd.f32 %v790, %v803
      %v805 = vpop.f32.mrf.mxu0
      %v806 = vadd.f32 %v792, %v805
      %807 = vdwg.mxu0
      %v808 = vmax.f32 %v804, 0.0
      %v809 = vmax.f32 %v806, 0.0
      %v810 = vpack.c.bf16 %v808, %v808
      %v811 = vpack.c.bf16 %v809, %v809
      %812 = vst [vmem:[%s192] sm:$0xf] %v810
      %813 = vst [vmem:[%s192 + $0x4] sm:$0xf] %v811
      %p814 = scmp.lt.s32.totalorder %s18, 1
      %s815 = scalar_select %p814, %s18, 1
      %p816 = scmp.lt.s32.totalorder %s19, 3
      %s817 = scalar_select %p816, %s19, 3
      %s818 = smul.addr %s817, 2
      %s819 = smul.addr %s815, 8
      %s820 = sadd.s32 %s818, %s819
      %s821 = smul.addr %s820, 4
      %s822 = scalar_lea.vmem %s3, %s821
      // Predicated region
      $region33: #{dense_motion_forward.11} parent=31 // pred_check
        %p823 = pneg %p114
      $region34: #{dense_motion_forward.11} parent=31 // pred_check_branch
        %825 = sbr.rel (%p823) target = $region36
      $region35: #{dense_motion_forward.11} parent=31 // pred_region
        _
      $region36: #{dense_motion_forward.11} parent=31 // pred_fallthru
        _
    $region32: #{dense_motion_forward.11} parent=5 // pred_fallthru
      _
    %p826 = scmp.le.s32.totalorder 2, %s9
    // Predicated region
    $region37: #{dense_motion_forward.11} parent=5 // pred_check
      %p827 = pneg %p826
    $region38: #{dense_motion_forward.11} parent=5 // pred_check_branch
      %829 = sbr.rel (%p827) target = $region40
    $region39: #{dense_motion_forward.11} parent=5 // pred_region
      %s830 = ssub.s32 %s9, 2
      // Predicated region
      $region41: #{dense_motion_forward.11} parent=39 // pred_check
        %p831 = pneg %p120
      $region42: #{dense_motion_forward.11} parent=39 // pred_check_branch
        %833 = sbr.rel (%p831) target = $region44
      $region43: #{dense_motion_forward.11} parent=39 // pred_region
        %p834 = scmp.lt.s32.totalorder %s20, 1
        %s835 = scalar_select %p834, %s20, 1
        %p836 = scmp.lt.s32.totalorder %s21, 3
        %s837 = scalar_select %p836, %s21, 3
        %s838 = smul.addr %s837, 2
        %s839 = smul.addr %s835, 8
        %s840 = sadd.s32 %s838, %s839
        %s841 = smul.addr %s840, 4
        %s842 = scalar_lea.vmem %s3, %s841
      $region44: #{dense_motion_forward.11} parent=39 // pred_fallthru
        _
    $region40: #{dense_motion_forward.11} parent=5 // pred_fallthru
      _
  $region6: #{dense_motion_forward.11} parent=0 // loop_footer
    %s13 = sadd.s32 1, %s9
  $region7: #{dense_motion_forward.11} parent=0 // loop_footer_branch
    %8 = sbr.rel target = $region3
  $region8: #{dense_motion_forward.11} parent=0 // loop_exit
    _

// kernel: dense_motion_forward.12
$region0: #{dense_motion_forward.12}
  #allocation0 [shape = 'u32[]', space=smem, size = 0x4, offset = 0x4, fixed_abs, tag = 'smem constant byte address 0x4 - core index']
  #allocation1 [shape = 'u32[72,128]{1,0:T(1,128)}', space=vmem, size = 0x9000, scoped, tag = 'internal scratch']
  %s0 = inlined_call_operand.vmem [shape: bf16[2,10,32,256], index: 0, kind: input, shape index: {}]
  %s1 = inlined_call_operand.vmem [shape: bf16[8,864], index: 1, kind: input, shape index: {}]
  %s2 = inlined_call_operand.vmem [shape: f32[8,1], index: 2, kind: input, shape index: {}]
  %s3 = inlined_call_operand.vmem [shape: bf16[2,8,8,128], index: 3, kind: output, shape index: {}]
  %s4 = sld [smem:[#allocation0]]
  $region45: #{dense_motion_forward.12} parent=0
    _
  %s6 = ssub.s32 1, %s4
  %s7 = scalar_select 0, %s6, %s4
  loop: start=0, step=1, limit=18
  $region2: #{dense_motion_forward.12} parent=0 // loop_pre_header
    _
  $region3: #{dense_motion_forward.12} parent=0 // loop_header
    %s9 = sphi 0, %s13
    %p10 = scmp.ge.s32.totalorder %s9, 18
    %s16 = sphi 0, %s28
    %s17 = sphi 0, %s24
    %s18 = sphi 0, %s16
    %s19 = sphi 0, %s17
    %s20 = sphi 0, %s18
    %s21 = sphi 0, %s19
    %s31 = sphi 0, %s33
    %s34 = sphi 0, %s31
    %s35 = sphi 0, %s34
    %s51 = sphi 0, %s35
    %s55 = sphi 0, %s55
    %s57 = sphi 0, %s55
    %s58 = sphi 0, %s57
    %s72 = sphi 0, %s58
    %s76 = sphi 0, %s76
    %s78 = sphi 0, %s76
    %s79 = sphi 0, %s78
    %s93 = sphi 0, %s79
    %s101 = sphi 0, %s103
    %s104 = sphi 0, %s101
    %s105 = sphi 0, %s104
    %s121 = sphi 0, %s105
  $region4: #{dense_motion_forward.12} parent=0 // loop_header_branch
    %12 = sbr.rel (%p10) target = $region8
  $region5: #{dense_motion_forward.12} parent=0 // loop_body
    %s14 = ssub.s32 %s9, 1
    %s15 = ssub.s32 %s9, 2
    %s22 = sadd.s32 1, %s17
    %p23 = scmp.ge.s32.totalorder %s22, 8
    %s24 = scalar_select %p23, 0, %s22
    %s25 = sadd.s32 1, %s16
    %s26 = scalar_select %p23, %s25, %s16
    %p27 = scmp.ge.s32.totalorder %s26, 2
    %s28 = scalar_select %p27, 0, %s26
    %s29 = ssub.s32 %s16, %s28
    %p30 = scmp.eq.s32.totalorder %s29, 0
    %s32 = sadd.s32 %s31, 1
    %s33 = scalar_select %p30, %s31, %s32
    %p36 = pneg %p30
    %p37 = scmp.eq.s32.totalorder %s9, 15
    %p38 = por %p36, %p37
    %p39 = scmp.ne.s32.totalorder %s31, %s34
    %p40 = scmp.eq.s32.totalorder %s9, 0
    %p41 = por %p39, %p40
    %p42 = scmp.ne.s32.totalorder %s31, %s34
    %p43 = scmp.eq.s32.totalorder %s14, 15
    %p44 = por %p42, %p43
    %p45 = scmp.ne.s32.totalorder %s34, %s35
    %p46 = scmp.eq.s32.totalorder %s14, 0
    %p47 = por %p45, %p46
    %p48 = scmp.ne.s32.totalorder %s34, %s35
    %p49 = scmp.eq.s32.totalorder %s15, 15
    %p50 = por %p48, %p49
    %p52 = scmp.ne.s32.totalorder %s35, %s51
    %p53 = scmp.eq.s32.totalorder %s15, 0
    %p54 = por %p52, %p53
    %s56 = sadd.s32 %s55, 1
    %p59 = scmp.eq.s32.totalorder %s9, 15
    %p60 = scmp.ne.s32.totalorder %s55, %s57
    %p61 = scmp.eq.s32.totalorder %s9, 0
    %p62 = por %p60, %p61
    %p63 = scmp.ne.s32.totalorder %s55, %s57
    %p64 = scmp.eq.s32.totalorder %s14, 15
    %p65 = por %p63, %p64
    %p66 = scmp.ne.s32.totalorder %s57, %s58
    %p67 = scmp.eq.s32.totalorder %s14, 0
    %p68 = por %p66, %p67
    %p69 = scmp.ne.s32.totalorder %s57, %s58
    %p70 = scmp.eq.s32.totalorder %s15, 15
    %p71 = por %p69, %p70
    %p73 = scmp.ne.s32.totalorder %s58, %s72
    %p74 = scmp.eq.s32.totalorder %s15, 0
    %p75 = por %p73, %p74
    %s77 = sadd.s32 %s76, 1
    %p80 = scmp.eq.s32.totalorder %s9, 15
    %p81 = scmp.ne.s32.totalorder %s76, %s78
    %p82 = scmp.eq.s32.totalorder %s9, 0
    %p83 = por %p81, %p82
    %p84 = scmp.ne.s32.totalorder %s76, %s78
    %p85 = scmp.eq.s32.totalorder %s14, 15
    %p86 = por %p84, %p85
    %p87 = scmp.ne.s32.totalorder %s78, %s79
    %p88 = scmp.eq.s32.totalorder %s14, 0
    %p89 = por %p87, %p88
    %p90 = scmp.ne.s32.totalorder %s78, %s79
    %p91 = scmp.eq.s32.totalorder %s15, 15
    %p92 = por %p90, %p91
    %p94 = scmp.ne.s32.totalorder %s79, %s93
    %p95 = scmp.eq.s32.totalorder %s15, 0
    %p96 = por %p94, %p95
    %s97 = ssub.s32 %s16, %s28
    %s98 = ssub.s32 %s17, %s24
    %s99 = sor.u32 %s97, %s98
    %p100 = scmp.eq.s32.totalorder %s99, 0
    %s102 = sadd.s32 %s101, 1
    %s103 = scalar_select %p100, %s101, %s102
    %p106 = pneg %p100
    %p107 = scmp.eq.s32.totalorder %s9, 15
    %p108 = por %p106, %p107
    %p109 = scmp.ne.s32.totalorder %s101, %s104
    %p110 = scmp.eq.s32.totalorder %s9, 0
    %p111 = por %p109, %p110
    %p112 = scmp.ne.s32.totalorder %s101, %s104
    %p113 = scmp.eq.s32.totalorder %s14, 15
    %p114 = por %p112, %p113
    %p115 = scmp.ne.s32.totalorder %s104, %s105
    %p116 = scmp.eq.s32.totalorder %s14, 0
    %p117 = por %p115, %p116
    %p118 = scmp.ne.s32.totalorder %s104, %s105
    %p119 = scmp.eq.s32.totalorder %s15, 15
    %p120 = por %p118, %p119
    %p122 = scmp.ne.s32.totalorder %s105, %s121
    %p123 = scmp.eq.s32.totalorder %s15, 0
    %p124 = por %p122, %p123
    %p125 = scmp.le.s32.totalorder 1, %s9
    %p126 = scmp.lt.s32.totalorder %s9, 17
    %p127 = pnand %p125, %p126
    %p128 = pneg %p127
    // Predicated region
    $region9: #{dense_motion_forward.12} parent=5 // pred_check
      _
    $region10: #{dense_motion_forward.12} parent=5 // pred_check_branch
      %130 = sbr.rel (%p127) target = $region12
    $region11: #{dense_motion_forward.12} parent=5 // pred_region
      %s131 = ssub.s32 %s9, 1
      // Predicated region
      $region13: #{dense_motion_forward.12} parent=11 // pred_check
        %p132 = pneg %p68
      $region14: #{dense_motion_forward.12} parent=11 // pred_check_branch
        %134 = sbr.rel (%p132) target = $region16
      $region15: #{dense_motion_forward.12} parent=11 // pred_region
        _
      $region16: #{dense_motion_forward.12} parent=11 // pred_fallthru
        _
      // Predicated region
      $region17: #{dense_motion_forward.12} parent=11 // pred_check
        %p135 = pneg %p89
      $region18: #{dense_motion_forward.12} parent=11 // pred_check_branch
        %137 = sbr.rel (%p135) target = $region20
      $region19: #{dense_motion_forward.12} parent=11 // pred_region
        _
      $region20: #{dense_motion_forward.12} parent=11 // pred_fallthru
        _
    $region12: #{dense_motion_forward.12} parent=5 // pred_fallthru
      _
    %p138 = scmp.lt.s32.totalorder %s9, 16
    // Predicated region
    $region21: #{dense_motion_forward.12} parent=5 // pred_check
      %p139 = pneg %p138
    $region22: #{dense_motion_forward.12} parent=5 // pred_check_branch
      %141 = sbr.rel (%p139) target = $region24
    $region23: #{dense_motion_forward.12} parent=5 // pred_region
      // Predicated region
      $region25: #{dense_motion_forward.12} parent=23 // pred_check
        %p142 = pneg %p41
      $region26: #{dense_motion_forward.12} parent=23 // pred_check_branch
        %144 = sbr.rel (%p142) target = $region28
      $region27: #{dense_motion_forward.12} parent=23 // pred_region
        %p145 = scmp.lt.s32.totalorder %s16, 1
        %s146 = scalar_select %p145, %s16, 1
        %s147 = smul.addr %s146, 80
        %s148 = smul.addr %s147, 4
        %s149 = scalar_lea.vmem %s0, %s148
      $region28: #{dense_motion_forward.12} parent=23 // pred_fallthru
        _
    $region24: #{dense_motion_forward.12} parent=5 // pred_fallthru
      _
    %p150 = scmp.le.s32.totalorder 1, %s9
    %p151 = scmp.lt.s32.totalorder %s9, 17
    %p152 = pnand %p150, %p151
    %p153 = pneg %p152
    // Predicated region
    $region29: #{dense_motion_forward.12} parent=5 // pred_check
      _
    $region30: #{dense_motion_forward.12} parent=5 // pred_check_branch
      %155 = sbr.rel (%p152) target = $region32
    $region31: #{dense_motion_forward.12} parent=5 // pred_region
      %s156 = ssub.s32 %s9, 1
      %p157 = scmp.lt.s32.totalorder %s18, 1
      %s158 = scalar_select %p157, %s18, 1
      %s159 = smul.addr %s158, 80
      %s160 = smul.addr %s159, 4
      %s161 = scalar_lea.vmem %s0, %s160
      %p162 = pneg %p47
      %p163 = pneg %p44
      %p164 = pneg %p68
      %p165 = pneg %p65
      %p166 = pneg %p89
      %p167 = pneg %p86
      %p168 = pneg %p117
      %p169 = pneg %p114
      %p170 = scmp.lt.s32.totalorder %s18, 1
      %s171 = scalar_select %p170, %s18, 1
      %p172 = scmp.lt.s32.totalorder %s19, 7
      %s173 = scalar_select %p172, %s19, 7
      %s174 = smul.addr %s171, 8
      %s175 = sadd.s32 %s173, %s174
      %s176 = smul.addr %s175, 4
      %s177 = scalar_lea.vmem %s3, %s176
      %p178 = scmp.lt.s32.totalorder %s18, 1
      %s179 = scalar_select %p178, %s18, 1
      %s180 = smul.addr %s179, 80
      %s181 = smul.addr %s180, 4
      %s182 = scalar_lea.vmem %s0, %s181
      %p183 = scmp.lt.s32.totalorder %s18, 1
      %s184 = scalar_select %p183, %s18, 1
      %p185 = scmp.lt.s32.totalorder %s19, 7
      %s186 = scalar_select %p185, %s19, 7
      %s187 = smul.addr %s184, 8
      %s188 = sadd.s32 %s186, %s187
      %s189 = smul.addr %s188, 4
      %s190 = scalar_lea.vmem %s3, %s189
      %s192 = smul.u32 %s19, 8
      %s193 = smul.addr %s192, 4
      %s194 = scalar_lea.vmem %s182, %s193
      %v195 = vld [vmem:[%s194] sm:$0xff]
      %v196 = vld [vmem:[%s194 + $0x8] sm:$0xff]
      %v197 = vld [vmem:[%s194 + $0x10] sm:$0xff]
      %v198 = vld [vmem:[%s194 + $0x18] sm:$0xff]
      %s199 = sadd.s32 %s19, 1
      %s200 = smul.u32 %s199, 8
      %s201 = smul.addr %s200, 4
      %s202 = scalar_lea.vmem %s182, %s201
      %v203 = vld [vmem:[%s202] sm:$0xff]
      %v204 = vld [vmem:[%s202 + $0x8] sm:$0xff]
      %v205 = vld [vmem:[%s202 + $0x10] sm:$0xff]
      %v206 = vld [vmem:[%s202 + $0x18] sm:$0xff]
      %s207 = sadd.s32 %s19, 2
      %s208 = smul.u32 %s207, 8
      %s209 = smul.addr %s208, 4
      %s210 = scalar_lea.vmem %s182, %s209
      %v211 = vld [vmem:[%s210] sm:$0xff]
      %v212 = vld [vmem:[%s210 + $0x8] sm:$0xff]
      %v213 = vld [vmem:[%s210 + $0x10] sm:$0xff]
      %v214 = vld [vmem:[%s210 + $0x18] sm:$0xff]
      %v219 = vunpack.c.l.b16 %v195
      %v220 = vunpack.c.l.b16 %v196
      %v221 = vunpack.c.l.b16 %v197
      %v222 = vunpack.c.l.b16 %v198
      %v223 = vpack.c.b16 %v220, %v219
      %v224 = vpack.c.b16 %v222, %v221
      %v227 = vunpack.c.h.b16 %v195
      %v228 = vunpack.c.h.b16 %v196
      %v229 = vunpack.c.h.b16 %v197
      %v230 = vunpack.c.h.b16 %v198
      %v231 = vpack.c.b16 %v228, %v227
      %v232 = vpack.c.b16 %v230, %v229
      %233 = vrot.lane.b32.xlu0 %v223, 127
      %v234 = vpop.permute.xlu0 %233
      %235 = vrot.lane.b32.xlu0 %v231, 127
      %v236 = vpop.permute.xlu0 %235
      %237 = vrot.lane.b32.xlu0 %v224, 127
      %v238 = vpop.permute.xlu0 %237
      %239 = vrot.lane.b32.xlu0 %v232, 127
      %v240 = vpop.permute.xlu0 %239
      %vm241 = vcmask 1039360
      %v242 = vsel %vm241, %v234, %v236
      %v243 = vsel %vm241, %v238, %v240
      %246 = vrot.lane.b32.xlu0 %v223, 126
      %v247 = vpop.permute.xlu0 %246
      %248 = vrot.lane.b32.xlu0 %v231, 126
      %v249 = vpop.permute.xlu0 %248
      %250 = vrot.lane.b32.xlu0 %v224, 126
      %v251 = vpop.permute.xlu0 %250
      %252 = vrot.lane.b32.xlu0 %v232, 126
      %v253 = vpop.permute.xlu0 %252
      %vm254 = vcmask 1031168
      %v255 = vsel %vm254, %v247, %v249
      %v256 = vsel %vm254, %v251, %v253
      %259 = vrot.lane.b32.xlu0 %v223, 118
      %v260 = vpop.permute.xlu0 %259
      %261 = vrot.lane.b32.xlu0 %v231, 118
      %v262 = vpop.permute.xlu0 %261
      %263 = vrot.lane.b32.xlu0 %v224, 118
      %v264 = vpop.permute.xlu0 %263
      %265 = vrot.lane.b32.xlu0 %v232, 118
      %v266 = vpop.permute.xlu0 %265
      %vm267 = vcmask 965632
      %v268 = vsel %vm267, %v260, %v262
      %v269 = vsel %vm267, %v264, %v266
      %272 = vrot.lane.b32.xlu0 %v223, 117
      %v273 = vpop.permute.xlu0 %272
      %274 = vrot.lane.b32.xlu0 %v231, 117
      %v275 = vpop.permute.xlu0 %274
      %276 = vrot.lane.b32.xlu0 %v224, 117
      %v277 = vpop.permute.xlu0 %276
      %278 = vrot.lane.b32.xlu0 %v232, 117
      %v279 = vpop.permute.xlu0 %278
      %vm280 = vcmask 957440
      %v281 = vsel %vm280, %v273, %v275
      %v282 = vsel %vm280, %v277, %v279
      %285 = vrot.lane.b32.xlu0 %v223, 116
      %v286 = vpop.permute.xlu0 %285
      %287 = vrot.lane.b32.xlu0 %v231, 116
      %v288 = vpop.permute.xlu0 %287
      %289 = vrot.lane.b32.xlu0 %v224, 116
      %v290 = vpop.permute.xlu0 %289
      %291 = vrot.lane.b32.xlu0 %v232, 116
      %v292 = vpop.permute.xlu0 %291
      %vm293 = vcmask 949248
      %v294 = vsel %vm293, %v286, %v288
      %v295 = vsel %vm293, %v290, %v292
      %298 = vrot.lane.b32.xlu0 %v223, 108
      %v299 = vpop.permute.xlu0 %298
      %300 = vrot.lane.b32.xlu0 %v231, 108
      %v301 = vpop.permute.xlu0 %300
      %302 = vrot.lane.b32.xlu0 %v224, 108
      %v303 = vpop.permute.xlu0 %302
      %304 = vrot.lane.b32.xlu0 %v232, 108
      %v305 = vpop.permute.xlu0 %304
      %vm306 = vcmask 883712
      %v307 = vsel %vm306, %v299, %v301
      %v308 = vsel %vm306, %v303, %v305
      %311 = vrot.lane.b32.xlu0 %v223, 107
      %v312 = vpop.permute.xlu0 %311
      %313 = vrot.lane.b32.xlu0 %v231, 107
      %v314 = vpop.permute.xlu0 %313
      %315 = vrot.lane.b32.xlu0 %v224, 107
      %v316 = vpop.permute.xlu0 %315
      %317 = vrot.lane.b32.xlu0 %v232, 107
      %v318 = vpop.permute.xlu0 %317
      %vm319 = vcmask 875520
      %v320 = vsel %vm319, %v312, %v314
      %v321 = vsel %vm319, %v316, %v318
      %324 = vrot.lane.b32.xlu0 %v223, 106
      %v325 = vpop.permute.xlu0 %324
      %326 = vrot.lane.b32.xlu0 %v231, 106
      %v327 = vpop.permute.xlu0 %326
      %328 = vrot.lane.b32.xlu0 %v224, 106
      %v329 = vpop.permute.xlu0 %328
      %330 = vrot.lane.b32.xlu0 %v232, 106
      %v331 = vpop.permute.xlu0 %330
      %vm332 = vcmask 867328
      %v333 = vsel %vm332, %v325, %v327
      %v334 = vsel %vm332, %v329, %v331
      %v341 = vunpack.c.l.b16 %v203
      %v342 = vunpack.c.l.b16 %v204
      %v343 = vunpack.c.l.b16 %v205
      %v344 = vunpack.c.l.b16 %v206
      %v345 = vpack.c.b16 %v342, %v341
      %v346 = vpack.c.b16 %v344, %v343
      %v349 = vunpack.c.h.b16 %v203
      %v350 = vunpack.c.h.b16 %v204
      %v351 = vunpack.c.h.b16 %v205
      %v352 = vunpack.c.h.b16 %v206
      %v353 = vpack.c.b16 %v350, %v349
      %v354 = vpack.c.b16 %v352, %v351
      %355 = vrot.lane.b32.xlu0 %v345, 127
      %v356 = vpop.permute.xlu0 %355
      %357 = vrot.lane.b32.xlu0 %v353, 127
      %v358 = vpop.permute.xlu0 %357
      %359 = vrot.lane.b32.xlu0 %v346, 127
      %v360 = vpop.permute.xlu0 %359
      %361 = vrot.lane.b32.xlu0 %v354, 127
      %v362 = vpop.permute.xlu0 %361
      %v363 = vsel %vm241, %v356, %v358
      %v364 = vsel %vm241, %v360, %v362
      %367 = vrot.lane.b32.xlu0 %v345, 126
      %v368 = vpop.permute.xlu0 %367
      %369 = vrot.lane.b32.xlu0 %v353, 126
      %v370 = vpop.permute.xlu0 %369
      %371 = vrot.lane.b32.xlu0 %v346, 126
      %v372 = vpop.permute.xlu0 %371
      %373 = vrot.lane.b32.xlu0 %v354, 126
      %v374 = vpop.permute.xlu0 %373
      %v375 = vsel %vm254, %v368, %v370
      %v376 = vsel %vm254, %v372, %v374
      %379 = vrot.lane.b32.xlu0 %v345, 118
      %v380 = vpop.permute.xlu0 %379
      %381 = vrot.lane.b32.xlu0 %v353, 118
      %v382 = vpop.permute.xlu0 %381
      %383 = vrot.lane.b32.xlu0 %v346, 118
      %v384 = vpop.permute.xlu0 %383
      %385 = vrot.lane.b32.xlu0 %v354, 118
      %v386 = vpop.permute.xlu0 %385
      %v387 = vsel %vm267, %v380, %v382
      %v388 = vsel %vm267, %v384, %v386
      %391 = vrot.lane.b32.xlu0 %v345, 117
      %v392 = vpop.permute.xlu0 %391
      %393 = vrot.lane.b32.xlu0 %v353, 117
      %v394 = vpop.permute.xlu0 %393
      %395 = vrot.lane.b32.xlu0 %v346, 117
      %v396 = vpop.permute.xlu0 %395
      %397 = vrot.lane.b32.xlu0 %v354, 117
      %v398 = vpop.permute.xlu0 %397
      %v399 = vsel %vm280, %v392, %v394
      %v400 = vsel %vm280, %v396, %v398
      %403 = vrot.lane.b32.xlu0 %v345, 116
      %v404 = vpop.permute.xlu0 %403
      %405 = vrot.lane.b32.xlu0 %v353, 116
      %v406 = vpop.permute.xlu0 %405
      %407 = vrot.lane.b32.xlu0 %v346, 116
      %v408 = vpop.permute.xlu0 %407
      %409 = vrot.lane.b32.xlu0 %v354, 116
      %v410 = vpop.permute.xlu0 %409
      %v411 = vsel %vm293, %v404, %v406
      %v412 = vsel %vm293, %v408, %v410
      %415 = vrot.lane.b32.xlu0 %v345, 108
      %v416 = vpop.permute.xlu0 %415
      %417 = vrot.lane.b32.xlu0 %v353, 108
      %v418 = vpop.permute.xlu0 %417
      %419 = vrot.lane.b32.xlu0 %v346, 108
      %v420 = vpop.permute.xlu0 %419
      %421 = vrot.lane.b32.xlu0 %v354, 108
      %v422 = vpop.permute.xlu0 %421
      %v423 = vsel %vm306, %v416, %v418
      %v424 = vsel %vm306, %v420, %v422
      %v431 = vunpack.c.l.b16 %v211
      %v432 = vunpack.c.l.b16 %v212
      %v433 = vunpack.c.l.b16 %v213
      %v434 = vunpack.c.l.b16 %v214
      %v435 = vpack.c.b16 %v432, %v431
      %v436 = vpack.c.b16 %v434, %v433
      %437 = vrot.lane.b32.xlu0 %v435, 21
      %v438 = vpop.permute.xlu0 %437
      %439 = vrot.lane.b32.xlu0 %v436, 21
      %v440 = vpop.permute.xlu0 %439
      %v441 = vunpack.c.h.b16 %v211
      %v442 = vunpack.c.h.b16 %v212
      %v443 = vunpack.c.h.b16 %v213
      %v444 = vunpack.c.h.b16 %v214
      %v445 = vpack.c.b16 %v442, %v441
      %v446 = vpack.c.b16 %v444, %v443
      %447 = vrot.lane.b32.xlu0 %v435, 20
      %v448 = vpop.permute.xlu0 %447
      %449 = vrot.lane.b32.xlu0 %v445, 20
      %v450 = vpop.permute.xlu0 %449
      %451 = vrot.lane.b32.xlu0 %v436, 20
      %v452 = vpop.permute.xlu0 %451
      %453 = vrot.lane.b32.xlu0 %v446, 20
      %v454 = vpop.permute.xlu0 %453
      %vm455 = vcmask 162816
      %v456 = vsel %vm455, %v448, %v450
      %v457 = vsel %vm455, %v452, %v454
      %458 = vrot.lane.b32.xlu0 %v435, 19
      %v459 = vpop.permute.xlu0 %458
      %460 = vrot.lane.b32.xlu0 %v445, 19
      %v461 = vpop.permute.xlu0 %460
      %462 = vrot.lane.b32.xlu0 %v436, 19
      %v463 = vpop.permute.xlu0 %462
      %464 = vrot.lane.b32.xlu0 %v446, 19
      %v465 = vpop.permute.xlu0 %464
      %vm466 = vcmask 154624
      %v467 = vsel %vm466, %v459, %v461
      %v468 = vsel %vm466, %v463, %v465
      %469 = vrot.lane.b32.xlu0 %v435, 11
      %v470 = vpop.permute.xlu0 %469
      %471 = vrot.lane.b32.xlu0 %v445, 11
      %v472 = vpop.permute.xlu0 %471
      %473 = vrot.lane.b32.xlu0 %v436, 11
      %v474 = vpop.permute.xlu0 %473
      %475 = vrot.lane.b32.xlu0 %v446, 11
      %v476 = vpop.permute.xlu0 %475
      %vm477 = vcmask 89088
      %v478 = vsel %vm477, %v470, %v472
      %v479 = vsel %vm477, %v474, %v476
      %480 = vrot.lane.b32.xlu0 %v435, 10
      %v481 = vpop.permute.xlu0 %480
      %482 = vrot.lane.b32.xlu0 %v445, 10
      %v483 = vpop.permute.xlu0 %482
      %484 = vrot.lane.b32.xlu0 %v436, 10
      %v485 = vpop.permute.xlu0 %484
      %486 = vrot.lane.b32.xlu0 %v446, 10
      %v487 = vpop.permute.xlu0 %486
      %vm488 = vcmask 80896
      %v489 = vsel %vm488, %v481, %v483
      %v490 = vsel %vm488, %v485, %v487
      %491 = vrot.lane.b32.xlu0 %v435, 9
      %v492 = vpop.permute.xlu0 %491
      %493 = vrot.lane.b32.xlu0 %v445, 9
      %v494 = vpop.permute.xlu0 %493
      %495 = vrot.lane.b32.xlu0 %v436, 9
      %v496 = vpop.permute.xlu0 %495
      %497 = vrot.lane.b32.xlu0 %v446, 9
      %v498 = vpop.permute.xlu0 %497
      %vm499 = vcmask 72704
      %v500 = vsel %vm499, %v492, %v494
      %v501 = vsel %vm499, %v496, %v498
      %502 = vrot.lane.b32.xlu0 %v435, 1
      %v503 = vpop.permute.xlu0 %502
      %504 = vrot.lane.b32.xlu0 %v445, 1
      %v505 = vpop.permute.xlu0 %504
      %506 = vrot.lane.b32.xlu0 %v436, 1
      %v507 = vpop.permute.xlu0 %506
      %508 = vrot.lane.b32.xlu0 %v446, 1
      %v509 = vpop.permute.xlu0 %508
      %vm510 = vcmask 7168
      %v511 = vsel %vm510, %v503, %v505
      %v512 = vsel %vm510, %v507, %v509
      %513 = vrot.lane.b32.xlu0 %v435, 127
      %v514 = vpop.permute.xlu0 %513
      %515 = vrot.lane.b32.xlu0 %v445, 127
      %v516 = vpop.permute.xlu0 %515
      %517 = vrot.lane.b32.xlu0 %v436, 127
      %v518 = vpop.permute.xlu0 %517
      %519 = vrot.lane.b32.xlu0 %v446, 127
      %v520 = vpop.permute.xlu0 %519
      %v521 = vsel %vm241, %v514, %v516
      %v522 = vsel %vm241, %v518, %v520
      %523 = vrot.lane.b32.xlu0 %v345, 107
      %v524 = vpop.permute.xlu0 %523
      %525 = vrot.lane.b32.xlu0 %v353, 107
      %v526 = vpop.permute.xlu0 %525
      %527 = vrot.lane.b32.xlu0 %v346, 107
      %v528 = vpop.permute.xlu0 %527
      %529 = vrot.lane.b32.xlu0 %v354, 107
      %v530 = vpop.permute.xlu0 %529
      %531 = vrot.lane.b32.xlu0 %v363, 107
      %v532 = vpop.permute.xlu0 %531
      %533 = vrot.lane.b32.xlu0 %v358, 107
      %v534 = vpop.permute.xlu0 %533
      %535 = vrot.lane.b32.xlu0 %v364, 107
      %v536 = vpop.permute.xlu0 %535
      %537 = vrot.lane.b32.xlu0 %v362, 107
      %v538 = vpop.permute.xlu0 %537
      %539 = vrot.lane.b32.xlu0 %v438, 107
      %v540 = vpop.permute.xlu0 %539
      %541 = vrot.lane.b32.xlu0 %v440, 107
      %v542 = vpop.permute.xlu0 %541
      %543 = vrot.lane.b32.xlu0 %v448, 107
      %v544 = vpop.permute.xlu0 %543
      %545 = vrot.lane.b32.xlu0 %v456, 107
      %v546 = vpop.permute.xlu0 %545
      %547 = vrot.lane.b32.xlu0 %v452, 107
      %v548 = vpop.permute.xlu0 %547
      %549 = vrot.lane.b32.xlu0 %v457, 107
      %v550 = vpop.permute.xlu0 %549
      %551 = vrot.lane.b32.xlu0 %v459, 107
      %v552 = vpop.permute.xlu0 %551
      %553 = vrot.lane.b32.xlu0 %v467, 107
      %v554 = vpop.permute.xlu0 %553
      %555 = vrot.lane.b32.xlu0 %v463, 107
      %v556 = vpop.permute.xlu0 %555
      %557 = vrot.lane.b32.xlu0 %v468, 107
      %v558 = vpop.permute.xlu0 %557
      %559 = vrot.lane.b32.xlu0 %v470, 107
      %v560 = vpop.permute.xlu0 %559
      %561 = vrot.lane.b32.xlu0 %v478, 107
      %v562 = vpop.permute.xlu0 %561
      %563 = vrot.lane.b32.xlu0 %v474, 107
      %v564 = vpop.permute.xlu0 %563
      %565 = vrot.lane.b32.xlu0 %v479, 107
      %v566 = vpop.permute.xlu0 %565
      %567 = vrot.lane.b32.xlu0 %v481, 107
      %v568 = vpop.permute.xlu0 %567
      %569 = vrot.lane.b32.xlu0 %v489, 107
      %v570 = vpop.permute.xlu0 %569
      %571 = vrot.lane.b32.xlu0 %v485, 107
      %v572 = vpop.permute.xlu0 %571
      %573 = vrot.lane.b32.xlu0 %v490, 107
      %v574 = vpop.permute.xlu0 %573
      %575 = vrot.lane.b32.xlu0 %v492, 107
      %v576 = vpop.permute.xlu0 %575
      %577 = vrot.lane.b32.xlu0 %v500, 107
      %v578 = vpop.permute.xlu0 %577
      %579 = vrot.lane.b32.xlu0 %v496, 107
      %v580 = vpop.permute.xlu0 %579
      %581 = vrot.lane.b32.xlu0 %v501, 107
      %v582 = vpop.permute.xlu0 %581
      %583 = vrot.lane.b32.xlu0 %v503, 107
      %v584 = vpop.permute.xlu0 %583
      %585 = vrot.lane.b32.xlu0 %v511, 107
      %v586 = vpop.permute.xlu0 %585
      %587 = vrot.lane.b32.xlu0 %v507, 107
      %v588 = vpop.permute.xlu0 %587
      %589 = vrot.lane.b32.xlu0 %v512, 107
      %v590 = vpop.permute.xlu0 %589
      %591 = vrot.lane.b32.xlu0 %v435, 107
      %v592 = vpop.permute.xlu0 %591
      %593 = vrot.lane.b32.xlu0 %v445, 107
      %v594 = vpop.permute.xlu0 %593
      %595 = vrot.lane.b32.xlu0 %v436, 107
      %v596 = vpop.permute.xlu0 %595
      %597 = vrot.lane.b32.xlu0 %v446, 107
      %v598 = vpop.permute.xlu0 %597
      %599 = vrot.lane.b32.xlu0 %v521, 107
      %v600 = vpop.permute.xlu0 %599
      %601 = vrot.lane.b32.xlu0 %v516, 107
      %v602 = vpop.permute.xlu0 %601
      %603 = vrot.lane.b32.xlu0 %v522, 107
      %v604 = vpop.permute.xlu0 %603
      %605 = vrot.lane.b32.xlu0 %v520, 107
      %v606 = vpop.permute.xlu0 %605
      %v607 = vsel %vm319, %v524, %v526
      %v608 = vsel %vm319, %v528, %v530
      %v609 = vsel %vm319, %v532, %v534
      %v610 = vsel %vm319, %v536, %v538
      %v611 = vsel %vm319, %v544, %v546
      %v612 = vsel %vm319, %v548, %v550
      %v613 = vsel %vm319, %v552, %v554
      %v614 = vsel %vm319, %v556, %v558
      %v615 = vsel %vm319, %v560, %v562
      %v616 = vsel %vm319, %v564, %v566
      %v617 = vsel %vm319, %v568, %v570
      %v618 = vsel %vm319, %v572, %v574
      %v619 = vsel %vm319, %v576, %v578
      %v620 = vsel %vm319, %v580, %v582
      %v621 = vsel %vm319, %v584, %v586
      %v622 = vsel %vm319, %v588, %v590
      %v623 = vsel %vm319, %v592, %v594
      %v624 = vsel %vm319, %v596, %v598
      %v625 = vsel %vm319, %v600, %v602
      %v626 = vsel %vm319, %v604, %v606
      %v649 = vld [vmem:[%s1] sm:$0xff]
      %v650 = vld [vmem:[%s1 + $0x8] sm:$0xff]
      %v651 = vld [vmem:[%s1 + $0x10] sm:$0xff]
      %v652 = vld [vmem:[%s1 + $0x18] sm:$0xf]
      %v653 = vld [vmem:[%s2] sm:$0xff]
      %655 = vset.pattern.permute.xlu0 0
      %656 = vperm.xlu0 %655, %v653
      %v657 = vpop.permute.xlu0 %656
      %v663 = vunpack.c.l.b16 %v649
      %v664 = vunpack.c.h.b16 %v649
      %v665 = vunpack.c.l.b16 %v650
      %v666 = vunpack.c.h.b16 %v650
      %v667 = vunpack.c.l.b16 %v651
      %v668 = vunpack.c.h.b16 %v651
      %v669 = vunpack.c.l.b16 %v652
      %v670 = vpack.c.b16 %v663, %v663
      %v671 = vpack.c.b16 %v664, %v664
      %v672 = vpack.c.b16 %v665, %v665
      %v673 = vpack.c.b16 %v666, %v666
      %v674 = vpack.c.b16 %v667, %v667
      %v675 = vpack.c.b16 %v668, %v668
      %v676 = vpack.c.b16 %v669, %v669
      %vm683 = vcmask 785408
      %v685 = vsel %vm683, %v676, 0
      %687 = vmatpush.bf16.msra.mxu0 %v269
      %688 = vmatpush.bf16.msra.mxu0 %v268
      %689 = vmatpush.bf16.msra.mxu0 %v256
      %690 = vmatpush.bf16.msra.mxu0 %v255
      %691 = vmatpush.bf16.msra.mxu0 %v243
      %692 = vmatpush.bf16.msra.mxu0 %v242
      %693 = vmatpush.bf16.msra.mxu0 %v224
      %694 = vmatpush.bf16.msra.mxu0 %v223
      %695 = vmatmul.bf16.gmra.mxu0 %v670
      %v696 = vpop.f32.mrf.mxu0
      %v697 = vadd.f32 %v657, %v696
      %v698 = vpop.f32.mrf.mxu0
      %699 = vdwg.mxu0
      %700 = vmatpush.bf16.msra.mxu0 %v321
      %701 = vmatpush.bf16.msra.mxu0 %v320
      %702 = vmatpush.bf16.msra.mxu0 %v308
      %703 = vmatpush.bf16.msra.mxu0 %v307
      %704 = vmatpush.bf16.msra.mxu0 %v295
      %705 = vmatpush.bf16.msra.mxu0 %v294
      %706 = vmatpush.bf16.msra.mxu0 %v282
      %707 = vmatpush.bf16.msra.mxu0 %v281
      %708 = vmatmul.bf16.gmra.mxu0 %v671
      %v709 = vpop.f32.mrf.mxu0
      %v710 = vadd.f32 %v697, %v709
      %v711 = vpop.f32.mrf.mxu0
      %712 = vdwg.mxu0
      %713 = vmatpush.bf16.msra.mxu0 %v376
      %714 = vmatpush.bf16.msra.mxu0 %v375
      %715 = vmatpush.bf16.msra.mxu0 %v364
      %716 = vmatpush.bf16.msra.mxu0 %v363
      %717 = vmatpush.bf16.msra.mxu0 %v346
      %718 = vmatpush.bf16.msra.mxu0 %v345
      %719 = vmatpush.bf16.msra.mxu0 %v334
      %720 = vmatpush.bf16.msra.mxu0 %v333
      %721 = vmatmul.bf16.gmra.mxu0 %v672
      %v722 = vpop.f32.mrf.mxu0
      %v723 = vadd.f32 %v710, %v722
      %v724 = vpop.f32.mrf.mxu0
      %725 = vdwg.mxu0
      %726 = vmatpush.bf16.msra.mxu0 %v424
      %727 = vmatpush.bf16.msra.mxu0 %v423
      %728 = vmatpush.bf16.msra.mxu0 %v412
      %729 = vmatpush.bf16.msra.mxu0 %v411
      %730 = vmatpush.bf16.msra.mxu0 %v400
      %731 = vmatpush.bf16.msra.mxu0 %v399
      %732 = vmatpush.bf16.msra.mxu0 %v388
      %733 = vmatpush.bf16.msra.mxu0 %v387
      %734 = vmatmul.bf16.gmra.mxu0 %v673
      %v735 = vpop.f32.mrf.mxu0
      %v736 = vadd.f32 %v723, %v735
      %v737 = vpop.f32.mrf.mxu0
      %738 = vdwg.mxu0
      %739 = vmatpush.bf16.msra.mxu0 %v612
      %740 = vmatpush.bf16.msra.mxu0 %v611
      %741 = vmatpush.bf16.msra.mxu0 %v542
      %742 = vmatpush.bf16.msra.mxu0 %v540
      %743 = vmatpush.bf16.msra.mxu0 %v610
      %744 = vmatpush.bf16.msra.mxu0 %v609
      %745 = vmatpush.bf16.msra.mxu0 %v608
      %746 = vmatpush.bf16.msra.mxu0 %v607
      %747 = vmatmul.bf16.gmra.mxu0 %v674
      %v748 = vpop.f32.mrf.mxu0
      %v749 = vadd.f32 %v736, %v748
      %v750 = vpop.f32.mrf.mxu0
      %751 = vdwg.mxu0
      %752 = vmatpush.bf16.msra.mxu0 %v620
      %753 = vmatpush.bf16.msra.mxu0 %v619
      %754 = vmatpush.bf16.msra.mxu0 %v618
      %755 = vmatpush.bf16.msra.mxu0 %v617
      %756 = vmatpush.bf16.msra.mxu0 %v616
      %757 = vmatpush.bf16.msra.mxu0 %v615
      %758 = vmatpush.bf16.msra.mxu0 %v614
      %759 = vmatpush.bf16.msra.mxu0 %v613
      %760 = vmatmul.bf16.gmra.mxu0 %v675
      %v761 = vpop.f32.mrf.mxu0
      %v762 = vadd.f32 %v749, %v761
      %v763 = vpop.f32.mrf.mxu0
      %764 = vdwg.mxu0
      %765 = vmatpush.bf16.msra.mxu0 0
      %766 = vmatpush.bf16.msra.mxu0 0
      %767 = vmatpush.bf16.msra.mxu0 %v626
      %768 = vmatpush.bf16.msra.mxu0 %v625
      %769 = vmatpush.bf16.msra.mxu0 %v624
      %770 = vmatpush.bf16.msra.mxu0 %v623
      %771 = vmatpush.bf16.msra.mxu0 %v622
      %772 = vmatpush.bf16.msra.mxu0 %v621
      %773 = vmatmul.bf16.gmra.mxu0 %v685
      %v774 = vpop.f32.mrf.mxu0
      %v775 = vadd.f32 %v762, %v774
      %v776 = vpop.f32.mrf.mxu0
      %777 = vdwg.mxu0
      %v778 = vmax.f32 %v775, 0.0
      %v779 = vpack.c.bf16 %v778, %v778
      %780 = vst [vmem:[%s190] sm:$0xf] %v779
      %p781 = scmp.lt.s32.totalorder %s18, 1
      %s782 = scalar_select %p781, %s18, 1
      %p783 = scmp.lt.s32.totalorder %s19, 7
      %s784 = scalar_select %p783, %s19, 7
      %s785 = smul.addr %s782, 8
      %s786 = sadd.s32 %s784, %s785
      %s787 = smul.addr %s786, 4
      %s788 = scalar_lea.vmem %s3, %s787
      // Predicated region
      $region33: #{dense_motion_forward.12} parent=31 // pred_check
        %p789 = pneg %p114
      $region34: #{dense_motion_forward.12} parent=31 // pred_check_branch
        %791 = sbr.rel (%p789) target = $region36
      $region35: #{dense_motion_forward.12} parent=31 // pred_region
        _
      $region36: #{dense_motion_forward.12} parent=31 // pred_fallthru
        _
    $region32: #{dense_motion_forward.12} parent=5 // pred_fallthru
      _
    %p792 = scmp.le.s32.totalorder 2, %s9
    // Predicated region
    $region37: #{dense_motion_forward.12} parent=5 // pred_check
      %p793 = pneg %p792
    $region38: #{dense_motion_forward.12} parent=5 // pred_check_branch
      %795 = sbr.rel (%p793) target = $region40
    $region39: #{dense_motion_forward.12} parent=5 // pred_region
      %s796 = ssub.s32 %s9, 2
      // Predicated region
      $region41: #{dense_motion_forward.12} parent=39 // pred_check
        %p797 = pneg %p120
      $region42: #{dense_motion_forward.12} parent=39 // pred_check_branch
        %799 = sbr.rel (%p797) target = $region44
      $region43: #{dense_motion_forward.12} parent=39 // pred_region
        %p800 = scmp.lt.s32.totalorder %s20, 1
        %s801 = scalar_select %p800, %s20, 1
        %p802 = scmp.lt.s32.totalorder %s21, 7
        %s803 = scalar_select %p802, %s21, 7
        %s804 = smul.addr %s801, 8
        %s805 = sadd.s32 %s803, %s804
        %s806 = smul.addr %s805, 4
        %s807 = scalar_lea.vmem %s3, %s806
      $region44: #{dense_motion_forward.12} parent=39 // pred_fallthru
        _
    $region40: #{dense_motion_forward.12} parent=5 // pred_fallthru
      _
  $region6: #{dense_motion_forward.12} parent=0 // loop_footer
    %s13 = sadd.s32 1, %s9
  $region7: #{dense_motion_forward.12} parent=0 // loop_footer_branch
    %8 = sbr.rel target = $region3
  $region8: #{dense_motion_forward.12} parent=0 // loop_exit
    _

// kernel: dense_motion_forward.13
$region0: #{dense_motion_forward.13}
  #allocation0 [shape = 'u32[]', space=smem, size = 0x4, offset = 0x4, fixed_abs, tag = 'smem constant byte address 0x4 - core index']
  #allocation1 [shape = 'u32[72,128]{1,0:T(1,128)}', space=vmem, size = 0x9000, scoped, tag = 'internal scratch']
  %s0 = inlined_call_operand.vmem [shape: bf16[2,10,32,256], index: 0, kind: input, shape index: {}]
  %s1 = inlined_call_operand.vmem [shape: bf16[6,864], index: 1, kind: input, shape index: {}]
  %s2 = inlined_call_operand.vmem [shape: f32[6,1], index: 2, kind: input, shape index: {}]
  %s3 = inlined_call_operand.vmem [shape: bf16[2,8,6,128], index: 3, kind: output, shape index: {}]
  %s4 = sld [smem:[#allocation0]]
  $region45: #{dense_motion_forward.13} parent=0
    _
  %s6 = ssub.s32 1, %s4
  %s7 = scalar_select 0, %s6, %s4
  loop: start=0, step=1, limit=18
  $region2: #{dense_motion_forward.13} parent=0 // loop_pre_header
    _
  $region3: #{dense_motion_forward.13} parent=0 // loop_header
    %s9 = sphi 0, %s13
    %p10 = scmp.ge.s32.totalorder %s9, 18
    %s16 = sphi 0, %s28
    %s17 = sphi 0, %s24
    %s18 = sphi 0, %s16
    %s19 = sphi 0, %s17
    %s20 = sphi 0, %s18
    %s21 = sphi 0, %s19
    %s31 = sphi 0, %s33
    %s34 = sphi 0, %s31
    %s35 = sphi 0, %s34
    %s51 = sphi 0, %s35
    %s55 = sphi 0, %s55
    %s57 = sphi 0, %s55
    %s58 = sphi 0, %s57
    %s72 = sphi 0, %s58
    %s76 = sphi 0, %s76
    %s78 = sphi 0, %s76
    %s79 = sphi 0, %s78
    %s93 = sphi 0, %s79
    %s101 = sphi 0, %s103
    %s104 = sphi 0, %s101
    %s105 = sphi 0, %s104
    %s121 = sphi 0, %s105
  $region4: #{dense_motion_forward.13} parent=0 // loop_header_branch
    %12 = sbr.rel (%p10) target = $region8
  $region5: #{dense_motion_forward.13} parent=0 // loop_body
    %s14 = ssub.s32 %s9, 1
    %s15 = ssub.s32 %s9, 2
    %s22 = sadd.s32 1, %s17
    %p23 = scmp.ge.s32.totalorder %s22, 8
    %s24 = scalar_select %p23, 0, %s22
    %s25 = sadd.s32 1, %s16
    %s26 = scalar_select %p23, %s25, %s16
    %p27 = scmp.ge.s32.totalorder %s26, 2
    %s28 = scalar_select %p27, 0, %s26
    %s29 = ssub.s32 %s16, %s28
    %p30 = scmp.eq.s32.totalorder %s29, 0
    %s32 = sadd.s32 %s31, 1
    %s33 = scalar_select %p30, %s31, %s32
    %p36 = pneg %p30
    %p37 = scmp.eq.s32.totalorder %s9, 15
    %p38 = por %p36, %p37
    %p39 = scmp.ne.s32.totalorder %s31, %s34
    %p40 = scmp.eq.s32.totalorder %s9, 0
    %p41 = por %p39, %p40
    %p42 = scmp.ne.s32.totalorder %s31, %s34
    %p43 = scmp.eq.s32.totalorder %s14, 15
    %p44 = por %p42, %p43
    %p45 = scmp.ne.s32.totalorder %s34, %s35
    %p46 = scmp.eq.s32.totalorder %s14, 0
    %p47 = por %p45, %p46
    %p48 = scmp.ne.s32.totalorder %s34, %s35
    %p49 = scmp.eq.s32.totalorder %s15, 15
    %p50 = por %p48, %p49
    %p52 = scmp.ne.s32.totalorder %s35, %s51
    %p53 = scmp.eq.s32.totalorder %s15, 0
    %p54 = por %p52, %p53
    %s56 = sadd.s32 %s55, 1
    %p59 = scmp.eq.s32.totalorder %s9, 15
    %p60 = scmp.ne.s32.totalorder %s55, %s57
    %p61 = scmp.eq.s32.totalorder %s9, 0
    %p62 = por %p60, %p61
    %p63 = scmp.ne.s32.totalorder %s55, %s57
    %p64 = scmp.eq.s32.totalorder %s14, 15
    %p65 = por %p63, %p64
    %p66 = scmp.ne.s32.totalorder %s57, %s58
    %p67 = scmp.eq.s32.totalorder %s14, 0
    %p68 = por %p66, %p67
    %p69 = scmp.ne.s32.totalorder %s57, %s58
    %p70 = scmp.eq.s32.totalorder %s15, 15
    %p71 = por %p69, %p70
    %p73 = scmp.ne.s32.totalorder %s58, %s72
    %p74 = scmp.eq.s32.totalorder %s15, 0
    %p75 = por %p73, %p74
    %s77 = sadd.s32 %s76, 1
    %p80 = scmp.eq.s32.totalorder %s9, 15
    %p81 = scmp.ne.s32.totalorder %s76, %s78
    %p82 = scmp.eq.s32.totalorder %s9, 0
    %p83 = por %p81, %p82
    %p84 = scmp.ne.s32.totalorder %s76, %s78
    %p85 = scmp.eq.s32.totalorder %s14, 15
    %p86 = por %p84, %p85
    %p87 = scmp.ne.s32.totalorder %s78, %s79
    %p88 = scmp.eq.s32.totalorder %s14, 0
    %p89 = por %p87, %p88
    %p90 = scmp.ne.s32.totalorder %s78, %s79
    %p91 = scmp.eq.s32.totalorder %s15, 15
    %p92 = por %p90, %p91
    %p94 = scmp.ne.s32.totalorder %s79, %s93
    %p95 = scmp.eq.s32.totalorder %s15, 0
    %p96 = por %p94, %p95
    %s97 = ssub.s32 %s16, %s28
    %s98 = ssub.s32 %s17, %s24
    %s99 = sor.u32 %s97, %s98
    %p100 = scmp.eq.s32.totalorder %s99, 0
    %s102 = sadd.s32 %s101, 1
    %s103 = scalar_select %p100, %s101, %s102
    %p106 = pneg %p100
    %p107 = scmp.eq.s32.totalorder %s9, 15
    %p108 = por %p106, %p107
    %p109 = scmp.ne.s32.totalorder %s101, %s104
    %p110 = scmp.eq.s32.totalorder %s9, 0
    %p111 = por %p109, %p110
    %p112 = scmp.ne.s32.totalorder %s101, %s104
    %p113 = scmp.eq.s32.totalorder %s14, 15
    %p114 = por %p112, %p113
    %p115 = scmp.ne.s32.totalorder %s104, %s105
    %p116 = scmp.eq.s32.totalorder %s14, 0
    %p117 = por %p115, %p116
    %p118 = scmp.ne.s32.totalorder %s104, %s105
    %p119 = scmp.eq.s32.totalorder %s15, 15
    %p120 = por %p118, %p119
    %p122 = scmp.ne.s32.totalorder %s105, %s121
    %p123 = scmp.eq.s32.totalorder %s15, 0
    %p124 = por %p122, %p123
    %p125 = scmp.le.s32.totalorder 1, %s9
    %p126 = scmp.lt.s32.totalorder %s9, 17
    %p127 = pnand %p125, %p126
    %p128 = pneg %p127
    // Predicated region
    $region9: #{dense_motion_forward.13} parent=5 // pred_check
      _
    $region10: #{dense_motion_forward.13} parent=5 // pred_check_branch
      %130 = sbr.rel (%p127) target = $region12
    $region11: #{dense_motion_forward.13} parent=5 // pred_region
      %s131 = ssub.s32 %s9, 1
      // Predicated region
      $region13: #{dense_motion_forward.13} parent=11 // pred_check
        %p132 = pneg %p68
      $region14: #{dense_motion_forward.13} parent=11 // pred_check_branch
        %134 = sbr.rel (%p132) target = $region16
      $region15: #{dense_motion_forward.13} parent=11 // pred_region
        _
      $region16: #{dense_motion_forward.13} parent=11 // pred_fallthru
        _
      // Predicated region
      $region17: #{dense_motion_forward.13} parent=11 // pred_check
        %p135 = pneg %p89
      $region18: #{dense_motion_forward.13} parent=11 // pred_check_branch
        %137 = sbr.rel (%p135) target = $region20
      $region19: #{dense_motion_forward.13} parent=11 // pred_region
        _
      $region20: #{dense_motion_forward.13} parent=11 // pred_fallthru
        _
    $region12: #{dense_motion_forward.13} parent=5 // pred_fallthru
      _
    %p138 = scmp.lt.s32.totalorder %s9, 16
    // Predicated region
    $region21: #{dense_motion_forward.13} parent=5 // pred_check
      %p139 = pneg %p138
    $region22: #{dense_motion_forward.13} parent=5 // pred_check_branch
      %141 = sbr.rel (%p139) target = $region24
    $region23: #{dense_motion_forward.13} parent=5 // pred_region
      // Predicated region
      $region25: #{dense_motion_forward.13} parent=23 // pred_check
        %p142 = pneg %p41
      $region26: #{dense_motion_forward.13} parent=23 // pred_check_branch
        %144 = sbr.rel (%p142) target = $region28
      $region27: #{dense_motion_forward.13} parent=23 // pred_region
        %p145 = scmp.lt.s32.totalorder %s16, 1
        %s146 = scalar_select %p145, %s16, 1
        %s147 = smul.addr %s146, 80
        %s148 = smul.addr %s147, 4
        %s149 = scalar_lea.vmem %s0, %s148
      $region28: #{dense_motion_forward.13} parent=23 // pred_fallthru
        _
    $region24: #{dense_motion_forward.13} parent=5 // pred_fallthru
      _
    %p150 = scmp.le.s32.totalorder 1, %s9
    %p151 = scmp.lt.s32.totalorder %s9, 17
    %p152 = pnand %p150, %p151
    %p153 = pneg %p152
    // Predicated region
    $region29: #{dense_motion_forward.13} parent=5 // pred_check
      _
    $region30: #{dense_motion_forward.13} parent=5 // pred_check_branch
      %155 = sbr.rel (%p152) target = $region32
    $region31: #{dense_motion_forward.13} parent=5 // pred_region
      %s156 = ssub.s32 %s9, 1
      %p157 = scmp.lt.s32.totalorder %s18, 1
      %s158 = scalar_select %p157, %s18, 1
      %s159 = smul.addr %s158, 80
      %s160 = smul.addr %s159, 4
      %s161 = scalar_lea.vmem %s0, %s160
      %p162 = pneg %p47
      %p163 = pneg %p44
      %p164 = pneg %p68
      %p165 = pneg %p65
      %p166 = pneg %p89
      %p167 = pneg %p86
      %p168 = pneg %p117
      %p169 = pneg %p114
      %p170 = scmp.lt.s32.totalorder %s18, 1
      %s171 = scalar_select %p170, %s18, 1
      %p172 = scmp.lt.s32.totalorder %s19, 7
      %s173 = scalar_select %p172, %s19, 7
      %s174 = smul.addr %s171, 8
      %s175 = sadd.s32 %s173, %s174
      %s176 = smul.addr %s175, 4
      %s177 = scalar_lea.vmem %s3, %s176
      %p178 = scmp.lt.s32.totalorder %s18, 1
      %s179 = scalar_select %p178, %s18, 1
      %s180 = smul.addr %s179, 80
      %s181 = smul.addr %s180, 4
      %s182 = scalar_lea.vmem %s0, %s181
      %p183 = scmp.lt.s32.totalorder %s18, 1
      %s184 = scalar_select %p183, %s18, 1
      %p185 = scmp.lt.s32.totalorder %s19, 7
      %s186 = scalar_select %p185, %s19, 7
      %s187 = smul.addr %s184, 8
      %s188 = sadd.s32 %s186, %s187
      %s189 = smul.addr %s188, 4
      %s190 = scalar_lea.vmem %s3, %s189
      %s192 = smul.u32 %s19, 8
      %s193 = smul.addr %s192, 4
      %s194 = scalar_lea.vmem %s182, %s193
      %v195 = vld [vmem:[%s194] sm:$0xff]
      %v196 = vld [vmem:[%s194 + $0x8] sm:$0xff]
      %v197 = vld [vmem:[%s194 + $0x10] sm:$0xff]
      %v198 = vld [vmem:[%s194 + $0x18] sm:$0xff]
      %s199 = sadd.s32 %s19, 1
      %s200 = smul.u32 %s199, 8
      %s201 = smul.addr %s200, 4
      %s202 = scalar_lea.vmem %s182, %s201
      %v203 = vld [vmem:[%s202] sm:$0xff]
      %v204 = vld [vmem:[%s202 + $0x8] sm:$0xff]
      %v205 = vld [vmem:[%s202 + $0x10] sm:$0xff]
      %v206 = vld [vmem:[%s202 + $0x18] sm:$0xff]
      %s207 = sadd.s32 %s19, 2
      %s208 = smul.u32 %s207, 8
      %s209 = smul.addr %s208, 4
      %s210 = scalar_lea.vmem %s182, %s209
      %v211 = vld [vmem:[%s210] sm:$0xff]
      %v212 = vld [vmem:[%s210 + $0x8] sm:$0xff]
      %v213 = vld [vmem:[%s210 + $0x10] sm:$0xff]
      %v214 = vld [vmem:[%s210 + $0x18] sm:$0xff]
      %v219 = vunpack.c.l.b16 %v195
      %v220 = vunpack.c.l.b16 %v196
      %v221 = vunpack.c.l.b16 %v197
      %v222 = vunpack.c.l.b16 %v198
      %v223 = vpack.c.b16 %v220, %v219
      %v224 = vpack.c.b16 %v222, %v221
      %v227 = vunpack.c.h.b16 %v195
      %v228 = vunpack.c.h.b16 %v196
      %v229 = vunpack.c.h.b16 %v197
      %v230 = vunpack.c.h.b16 %v198
      %v231 = vpack.c.b16 %v228, %v227
      %v232 = vpack.c.b16 %v230, %v229
      %233 = vrot.lane.b32.xlu0 %v223, 127
      %v234 = vpop.permute.xlu0 %233
      %235 = vrot.lane.b32.xlu0 %v231, 127
      %v236 = vpop.permute.xlu0 %235
      %237 = vrot.lane.b32.xlu0 %v224, 127
      %v238 = vpop.permute.xlu0 %237
      %239 = vrot.lane.b32.xlu0 %v232, 127
      %v240 = vpop.permute.xlu0 %239
      %vm241 = vcmask 1039360
      %v242 = vsel %vm241, %v234, %v236
      %v243 = vsel %vm241, %v238, %v240
      %246 = vrot.lane.b32.xlu0 %v223, 126
      %v247 = vpop.permute.xlu0 %246
      %248 = vrot.lane.b32.xlu0 %v231, 126
      %v249 = vpop.permute.xlu0 %248
      %250 = vrot.lane.b32.xlu0 %v224, 126
      %v251 = vpop.permute.xlu0 %250
      %252 = vrot.lane.b32.xlu0 %v232, 126
      %v253 = vpop.permute.xlu0 %252
      %vm254 = vcmask 1031168
      %v255 = vsel %vm254, %v247, %v249
      %v256 = vsel %vm254, %v251, %v253
      %259 = vrot.lane.b32.xlu0 %v223, 118
      %v260 = vpop.permute.xlu0 %259
      %261 = vrot.lane.b32.xlu0 %v231, 118
      %v262 = vpop.permute.xlu0 %261
      %263 = vrot.lane.b32.xlu0 %v224, 118
      %v264 = vpop.permute.xlu0 %263
      %265 = vrot.lane.b32.xlu0 %v232, 118
      %v266 = vpop.permute.xlu0 %265
      %vm267 = vcmask 965632
      %v268 = vsel %vm267, %v260, %v262
      %v269 = vsel %vm267, %v264, %v266
      %272 = vrot.lane.b32.xlu0 %v223, 117
      %v273 = vpop.permute.xlu0 %272
      %274 = vrot.lane.b32.xlu0 %v231, 117
      %v275 = vpop.permute.xlu0 %274
      %276 = vrot.lane.b32.xlu0 %v224, 117
      %v277 = vpop.permute.xlu0 %276
      %278 = vrot.lane.b32.xlu0 %v232, 117
      %v279 = vpop.permute.xlu0 %278
      %vm280 = vcmask 957440
      %v281 = vsel %vm280, %v273, %v275
      %v282 = vsel %vm280, %v277, %v279
      %285 = vrot.lane.b32.xlu0 %v223, 116
      %v286 = vpop.permute.xlu0 %285
      %287 = vrot.lane.b32.xlu0 %v231, 116
      %v288 = vpop.permute.xlu0 %287
      %289 = vrot.lane.b32.xlu0 %v224, 116
      %v290 = vpop.permute.xlu0 %289
      %291 = vrot.lane.b32.xlu0 %v232, 116
      %v292 = vpop.permute.xlu0 %291
      %vm293 = vcmask 949248
      %v294 = vsel %vm293, %v286, %v288
      %v295 = vsel %vm293, %v290, %v292
      %298 = vrot.lane.b32.xlu0 %v223, 108
      %v299 = vpop.permute.xlu0 %298
      %300 = vrot.lane.b32.xlu0 %v231, 108
      %v301 = vpop.permute.xlu0 %300
      %302 = vrot.lane.b32.xlu0 %v224, 108
      %v303 = vpop.permute.xlu0 %302
      %304 = vrot.lane.b32.xlu0 %v232, 108
      %v305 = vpop.permute.xlu0 %304
      %vm306 = vcmask 883712
      %v307 = vsel %vm306, %v299, %v301
      %v308 = vsel %vm306, %v303, %v305
      %311 = vrot.lane.b32.xlu0 %v223, 107
      %v312 = vpop.permute.xlu0 %311
      %313 = vrot.lane.b32.xlu0 %v231, 107
      %v314 = vpop.permute.xlu0 %313
      %315 = vrot.lane.b32.xlu0 %v224, 107
      %v316 = vpop.permute.xlu0 %315
      %317 = vrot.lane.b32.xlu0 %v232, 107
      %v318 = vpop.permute.xlu0 %317
      %vm319 = vcmask 875520
      %v320 = vsel %vm319, %v312, %v314
      %v321 = vsel %vm319, %v316, %v318
      %324 = vrot.lane.b32.xlu0 %v223, 106
      %v325 = vpop.permute.xlu0 %324
      %326 = vrot.lane.b32.xlu0 %v231, 106
      %v327 = vpop.permute.xlu0 %326
      %328 = vrot.lane.b32.xlu0 %v224, 106
      %v329 = vpop.permute.xlu0 %328
      %330 = vrot.lane.b32.xlu0 %v232, 106
      %v331 = vpop.permute.xlu0 %330
      %vm332 = vcmask 867328
      %v333 = vsel %vm332, %v325, %v327
      %v334 = vsel %vm332, %v329, %v331
      %v341 = vunpack.c.l.b16 %v203
      %v342 = vunpack.c.l.b16 %v204
      %v343 = vunpack.c.l.b16 %v205
      %v344 = vunpack.c.l.b16 %v206
      %v345 = vpack.c.b16 %v342, %v341
      %v346 = vpack.c.b16 %v344, %v343
      %v349 = vunpack.c.h.b16 %v203
      %v350 = vunpack.c.h.b16 %v204
      %v351 = vunpack.c.h.b16 %v205
      %v352 = vunpack.c.h.b16 %v206
      %v353 = vpack.c.b16 %v350, %v349
      %v354 = vpack.c.b16 %v352, %v351
      %355 = vrot.lane.b32.xlu0 %v345, 127
      %v356 = vpop.permute.xlu0 %355
      %357 = vrot.lane.b32.xlu0 %v353, 127
      %v358 = vpop.permute.xlu0 %357
      %359 = vrot.lane.b32.xlu0 %v346, 127
      %v360 = vpop.permute.xlu0 %359
      %361 = vrot.lane.b32.xlu0 %v354, 127
      %v362 = vpop.permute.xlu0 %361
      %v363 = vsel %vm241, %v356, %v358
      %v364 = vsel %vm241, %v360, %v362
      %367 = vrot.lane.b32.xlu0 %v345, 126
      %v368 = vpop.permute.xlu0 %367
      %369 = vrot.lane.b32.xlu0 %v353, 126
      %v370 = vpop.permute.xlu0 %369
      %371 = vrot.lane.b32.xlu0 %v346, 126
      %v372 = vpop.permute.xlu0 %371
      %373 = vrot.lane.b32.xlu0 %v354, 126
      %v374 = vpop.permute.xlu0 %373
      %v375 = vsel %vm254, %v368, %v370
      %v376 = vsel %vm254, %v372, %v374
      %379 = vrot.lane.b32.xlu0 %v345, 118
      %v380 = vpop.permute.xlu0 %379
      %381 = vrot.lane.b32.xlu0 %v353, 118
      %v382 = vpop.permute.xlu0 %381
      %383 = vrot.lane.b32.xlu0 %v346, 118
      %v384 = vpop.permute.xlu0 %383
      %385 = vrot.lane.b32.xlu0 %v354, 118
      %v386 = vpop.permute.xlu0 %385
      %v387 = vsel %vm267, %v380, %v382
      %v388 = vsel %vm267, %v384, %v386
      %391 = vrot.lane.b32.xlu0 %v345, 117
      %v392 = vpop.permute.xlu0 %391
      %393 = vrot.lane.b32.xlu0 %v353, 117
      %v394 = vpop.permute.xlu0 %393
      %395 = vrot.lane.b32.xlu0 %v346, 117
      %v396 = vpop.permute.xlu0 %395
      %397 = vrot.lane.b32.xlu0 %v354, 117
      %v398 = vpop.permute.xlu0 %397
      %v399 = vsel %vm280, %v392, %v394
      %v400 = vsel %vm280, %v396, %v398
      %403 = vrot.lane.b32.xlu0 %v345, 116
      %v404 = vpop.permute.xlu0 %403
      %405 = vrot.lane.b32.xlu0 %v353, 116
      %v406 = vpop.permute.xlu0 %405
      %407 = vrot.lane.b32.xlu0 %v346, 116
      %v408 = vpop.permute.xlu0 %407
      %409 = vrot.lane.b32.xlu0 %v354, 116
      %v410 = vpop.permute.xlu0 %409
      %v411 = vsel %vm293, %v404, %v406
      %v412 = vsel %vm293, %v408, %v410
      %415 = vrot.lane.b32.xlu0 %v345, 108
      %v416 = vpop.permute.xlu0 %415
      %417 = vrot.lane.b32.xlu0 %v353, 108
      %v418 = vpop.permute.xlu0 %417
      %419 = vrot.lane.b32.xlu0 %v346, 108
      %v420 = vpop.permute.xlu0 %419
      %421 = vrot.lane.b32.xlu0 %v354, 108
      %v422 = vpop.permute.xlu0 %421
      %v423 = vsel %vm306, %v416, %v418
      %v424 = vsel %vm306, %v420, %v422
      %v431 = vunpack.c.l.b16 %v211
      %v432 = vunpack.c.l.b16 %v212
      %v433 = vunpack.c.l.b16 %v213
      %v434 = vunpack.c.l.b16 %v214
      %v435 = vpack.c.b16 %v432, %v431
      %v436 = vpack.c.b16 %v434, %v433
      %437 = vrot.lane.b32.xlu0 %v435, 21
      %v438 = vpop.permute.xlu0 %437
      %439 = vrot.lane.b32.xlu0 %v436, 21
      %v440 = vpop.permute.xlu0 %439
      %v441 = vunpack.c.h.b16 %v211
      %v442 = vunpack.c.h.b16 %v212
      %v443 = vunpack.c.h.b16 %v213
      %v444 = vunpack.c.h.b16 %v214
      %v445 = vpack.c.b16 %v442, %v441
      %v446 = vpack.c.b16 %v444, %v443
      %447 = vrot.lane.b32.xlu0 %v435, 20
      %v448 = vpop.permute.xlu0 %447
      %449 = vrot.lane.b32.xlu0 %v445, 20
      %v450 = vpop.permute.xlu0 %449
      %451 = vrot.lane.b32.xlu0 %v436, 20
      %v452 = vpop.permute.xlu0 %451
      %453 = vrot.lane.b32.xlu0 %v446, 20
      %v454 = vpop.permute.xlu0 %453
      %vm455 = vcmask 162816
      %v456 = vsel %vm455, %v448, %v450
      %v457 = vsel %vm455, %v452, %v454
      %458 = vrot.lane.b32.xlu0 %v435, 19
      %v459 = vpop.permute.xlu0 %458
      %460 = vrot.lane.b32.xlu0 %v445, 19
      %v461 = vpop.permute.xlu0 %460
      %462 = vrot.lane.b32.xlu0 %v436, 19
      %v463 = vpop.permute.xlu0 %462
      %464 = vrot.lane.b32.xlu0 %v446, 19
      %v465 = vpop.permute.xlu0 %464
      %vm466 = vcmask 154624
      %v467 = vsel %vm466, %v459, %v461
      %v468 = vsel %vm466, %v463, %v465
      %469 = vrot.lane.b32.xlu0 %v435, 11
      %v470 = vpop.permute.xlu0 %469
      %471 = vrot.lane.b32.xlu0 %v445, 11
      %v472 = vpop.permute.xlu0 %471
      %473 = vrot.lane.b32.xlu0 %v436, 11
      %v474 = vpop.permute.xlu0 %473
      %475 = vrot.lane.b32.xlu0 %v446, 11
      %v476 = vpop.permute.xlu0 %475
      %vm477 = vcmask 89088
      %v478 = vsel %vm477, %v470, %v472
      %v479 = vsel %vm477, %v474, %v476
      %480 = vrot.lane.b32.xlu0 %v435, 10
      %v481 = vpop.permute.xlu0 %480
      %482 = vrot.lane.b32.xlu0 %v445, 10
      %v483 = vpop.permute.xlu0 %482
      %484 = vrot.lane.b32.xlu0 %v436, 10
      %v485 = vpop.permute.xlu0 %484
      %486 = vrot.lane.b32.xlu0 %v446, 10
      %v487 = vpop.permute.xlu0 %486
      %vm488 = vcmask 80896
      %v489 = vsel %vm488, %v481, %v483
      %v490 = vsel %vm488, %v485, %v487
      %491 = vrot.lane.b32.xlu0 %v435, 9
      %v492 = vpop.permute.xlu0 %491
      %493 = vrot.lane.b32.xlu0 %v445, 9
      %v494 = vpop.permute.xlu0 %493
      %495 = vrot.lane.b32.xlu0 %v436, 9
      %v496 = vpop.permute.xlu0 %495
      %497 = vrot.lane.b32.xlu0 %v446, 9
      %v498 = vpop.permute.xlu0 %497
      %vm499 = vcmask 72704
      %v500 = vsel %vm499, %v492, %v494
      %v501 = vsel %vm499, %v496, %v498
      %502 = vrot.lane.b32.xlu0 %v435, 1
      %v503 = vpop.permute.xlu0 %502
      %504 = vrot.lane.b32.xlu0 %v445, 1
      %v505 = vpop.permute.xlu0 %504
      %506 = vrot.lane.b32.xlu0 %v436, 1
      %v507 = vpop.permute.xlu0 %506
      %508 = vrot.lane.b32.xlu0 %v446, 1
      %v509 = vpop.permute.xlu0 %508
      %vm510 = vcmask 7168
      %v511 = vsel %vm510, %v503, %v505
      %v512 = vsel %vm510, %v507, %v509
      %513 = vrot.lane.b32.xlu0 %v435, 127
      %v514 = vpop.permute.xlu0 %513
      %515 = vrot.lane.b32.xlu0 %v445, 127
      %v516 = vpop.permute.xlu0 %515
      %517 = vrot.lane.b32.xlu0 %v436, 127
      %v518 = vpop.permute.xlu0 %517
      %519 = vrot.lane.b32.xlu0 %v446, 127
      %v520 = vpop.permute.xlu0 %519
      %v521 = vsel %vm241, %v514, %v516
      %v522 = vsel %vm241, %v518, %v520
      %523 = vrot.lane.b32.xlu0 %v345, 107
      %v524 = vpop.permute.xlu0 %523
      %525 = vrot.lane.b32.xlu0 %v353, 107
      %v526 = vpop.permute.xlu0 %525
      %527 = vrot.lane.b32.xlu0 %v346, 107
      %v528 = vpop.permute.xlu0 %527
      %529 = vrot.lane.b32.xlu0 %v354, 107
      %v530 = vpop.permute.xlu0 %529
      %531 = vrot.lane.b32.xlu0 %v363, 107
      %v532 = vpop.permute.xlu0 %531
      %533 = vrot.lane.b32.xlu0 %v358, 107
      %v534 = vpop.permute.xlu0 %533
      %535 = vrot.lane.b32.xlu0 %v364, 107
      %v536 = vpop.permute.xlu0 %535
      %537 = vrot.lane.b32.xlu0 %v362, 107
      %v538 = vpop.permute.xlu0 %537
      %539 = vrot.lane.b32.xlu0 %v438, 107
      %v540 = vpop.permute.xlu0 %539
      %541 = vrot.lane.b32.xlu0 %v440, 107
      %v542 = vpop.permute.xlu0 %541
      %543 = vrot.lane.b32.xlu0 %v448, 107
      %v544 = vpop.permute.xlu0 %543
      %545 = vrot.lane.b32.xlu0 %v456, 107
      %v546 = vpop.permute.xlu0 %545
      %547 = vrot.lane.b32.xlu0 %v452, 107
      %v548 = vpop.permute.xlu0 %547
      %549 = vrot.lane.b32.xlu0 %v457, 107
      %v550 = vpop.permute.xlu0 %549
      %551 = vrot.lane.b32.xlu0 %v459, 107
      %v552 = vpop.permute.xlu0 %551
      %553 = vrot.lane.b32.xlu0 %v467, 107
      %v554 = vpop.permute.xlu0 %553
      %555 = vrot.lane.b32.xlu0 %v463, 107
      %v556 = vpop.permute.xlu0 %555
      %557 = vrot.lane.b32.xlu0 %v468, 107
      %v558 = vpop.permute.xlu0 %557
      %559 = vrot.lane.b32.xlu0 %v470, 107
      %v560 = vpop.permute.xlu0 %559
      %561 = vrot.lane.b32.xlu0 %v478, 107
      %v562 = vpop.permute.xlu0 %561
      %563 = vrot.lane.b32.xlu0 %v474, 107
      %v564 = vpop.permute.xlu0 %563
      %565 = vrot.lane.b32.xlu0 %v479, 107
      %v566 = vpop.permute.xlu0 %565
      %567 = vrot.lane.b32.xlu0 %v481, 107
      %v568 = vpop.permute.xlu0 %567
      %569 = vrot.lane.b32.xlu0 %v489, 107
      %v570 = vpop.permute.xlu0 %569
      %571 = vrot.lane.b32.xlu0 %v485, 107
      %v572 = vpop.permute.xlu0 %571
      %573 = vrot.lane.b32.xlu0 %v490, 107
      %v574 = vpop.permute.xlu0 %573
      %575 = vrot.lane.b32.xlu0 %v492, 107
      %v576 = vpop.permute.xlu0 %575
      %577 = vrot.lane.b32.xlu0 %v500, 107
      %v578 = vpop.permute.xlu0 %577
      %579 = vrot.lane.b32.xlu0 %v496, 107
      %v580 = vpop.permute.xlu0 %579
      %581 = vrot.lane.b32.xlu0 %v501, 107
      %v582 = vpop.permute.xlu0 %581
      %583 = vrot.lane.b32.xlu0 %v503, 107
      %v584 = vpop.permute.xlu0 %583
      %585 = vrot.lane.b32.xlu0 %v511, 107
      %v586 = vpop.permute.xlu0 %585
      %587 = vrot.lane.b32.xlu0 %v507, 107
      %v588 = vpop.permute.xlu0 %587
      %589 = vrot.lane.b32.xlu0 %v512, 107
      %v590 = vpop.permute.xlu0 %589
      %591 = vrot.lane.b32.xlu0 %v435, 107
      %v592 = vpop.permute.xlu0 %591
      %593 = vrot.lane.b32.xlu0 %v445, 107
      %v594 = vpop.permute.xlu0 %593
      %595 = vrot.lane.b32.xlu0 %v436, 107
      %v596 = vpop.permute.xlu0 %595
      %597 = vrot.lane.b32.xlu0 %v446, 107
      %v598 = vpop.permute.xlu0 %597
      %599 = vrot.lane.b32.xlu0 %v521, 107
      %v600 = vpop.permute.xlu0 %599
      %601 = vrot.lane.b32.xlu0 %v516, 107
      %v602 = vpop.permute.xlu0 %601
      %603 = vrot.lane.b32.xlu0 %v522, 107
      %v604 = vpop.permute.xlu0 %603
      %605 = vrot.lane.b32.xlu0 %v520, 107
      %v606 = vpop.permute.xlu0 %605
      %v607 = vsel %vm319, %v524, %v526
      %v608 = vsel %vm319, %v528, %v530
      %v609 = vsel %vm319, %v532, %v534
      %v610 = vsel %vm319, %v536, %v538
      %v611 = vsel %vm319, %v544, %v546
      %v612 = vsel %vm319, %v548, %v550
      %v613 = vsel %vm319, %v552, %v554
      %v614 = vsel %vm319, %v556, %v558
      %v615 = vsel %vm319, %v560, %v562
      %v616 = vsel %vm319, %v564, %v566
      %v617 = vsel %vm319, %v568, %v570
      %v618 = vsel %vm319, %v572, %v574
      %v619 = vsel %vm319, %v576, %v578
      %v620 = vsel %vm319, %v580, %v582
      %v621 = vsel %vm319, %v584, %v586
      %v622 = vsel %vm319, %v588, %v590
      %v623 = vsel %vm319, %v592, %v594
      %v624 = vsel %vm319, %v596, %v598
      %v625 = vsel %vm319, %v600, %v602
      %v626 = vsel %vm319, %v604, %v606
      %v649 = vld [vmem:[%s1] sm:$0x77]
      %v650 = vld [vmem:[%s1 + $0x8] sm:$0x77]
      %v651 = vld [vmem:[%s1 + $0x10] sm:$0x77]
      %v652 = vld [vmem:[%s1 + $0x18] sm:$0x7]
      %v653 = vld [vmem:[%s2] sm:$0x3f]
      %655 = vset.pattern.permute.xlu0 0
      %656 = vperm.xlu0 %655, %v653
      %v657 = vpop.permute.xlu0 %656
      %v663 = vunpack.c.l.b16 %v649
      %v664 = vunpack.c.h.b16 %v649
      %v665 = vunpack.c.l.b16 %v650
      %v666 = vunpack.c.h.b16 %v650
      %v667 = vunpack.c.l.b16 %v651
      %v668 = vunpack.c.h.b16 %v651
      %v669 = vunpack.c.l.b16 %v652
      %v670 = vpack.c.b16 %v663, %v663
      %v671 = vpack.c.b16 %v664, %v664
      %v672 = vpack.c.b16 %v665, %v665
      %v673 = vpack.c.b16 %v666, %v666
      %v674 = vpack.c.b16 %v667, %v667
      %v675 = vpack.c.b16 %v668, %v668
      %v676 = vpack.c.b16 %v669, %v669
      %vm683 = vcmask 785408
      %v685 = vsel %vm683, %v676, 0
      %687 = vmatpush.bf16.msra.mxu0 %v269
      %688 = vmatpush.bf16.msra.mxu0 %v268
      %689 = vmatpush.bf16.msra.mxu0 %v256
      %690 = vmatpush.bf16.msra.mxu0 %v255
      %691 = vmatpush.bf16.msra.mxu0 %v243
      %692 = vmatpush.bf16.msra.mxu0 %v242
      %693 = vmatpush.bf16.msra.mxu0 %v224
      %694 = vmatpush.bf16.msra.mxu0 %v223
      %695 = vmatmul.bf16.gmra.mxu0 %v670
      %v696 = vpop.f32.mrf.mxu0
      %v697 = vadd.f32 %v657, %v696
      %v698 = vpop.f32.mrf.mxu0
      %699 = vdwg.mxu0
      %700 = vmatpush.bf16.msra.mxu0 %v321
      %701 = vmatpush.bf16.msra.mxu0 %v320
      %702 = vmatpush.bf16.msra.mxu0 %v308
      %703 = vmatpush.bf16.msra.mxu0 %v307
      %704 = vmatpush.bf16.msra.mxu0 %v295
      %705 = vmatpush.bf16.msra.mxu0 %v294
      %706 = vmatpush.bf16.msra.mxu0 %v282
      %707 = vmatpush.bf16.msra.mxu0 %v281
      %708 = vmatmul.bf16.gmra.mxu0 %v671
      %v709 = vpop.f32.mrf.mxu0
      %v710 = vadd.f32 %v697, %v709
      %v711 = vpop.f32.mrf.mxu0
      %712 = vdwg.mxu0
      %713 = vmatpush.bf16.msra.mxu0 %v376
      %714 = vmatpush.bf16.msra.mxu0 %v375
      %715 = vmatpush.bf16.msra.mxu0 %v364
      %716 = vmatpush.bf16.msra.mxu0 %v363
      %717 = vmatpush.bf16.msra.mxu0 %v346
      %718 = vmatpush.bf16.msra.mxu0 %v345
      %719 = vmatpush.bf16.msra.mxu0 %v334
      %720 = vmatpush.bf16.msra.mxu0 %v333
      %721 = vmatmul.bf16.gmra.mxu0 %v672
      %v722 = vpop.f32.mrf.mxu0
      %v723 = vadd.f32 %v710, %v722
      %v724 = vpop.f32.mrf.mxu0
      %725 = vdwg.mxu0
      %726 = vmatpush.bf16.msra.mxu0 %v424
      %727 = vmatpush.bf16.msra.mxu0 %v423
      %728 = vmatpush.bf16.msra.mxu0 %v412
      %729 = vmatpush.bf16.msra.mxu0 %v411
      %730 = vmatpush.bf16.msra.mxu0 %v400
      %731 = vmatpush.bf16.msra.mxu0 %v399
      %732 = vmatpush.bf16.msra.mxu0 %v388
      %733 = vmatpush.bf16.msra.mxu0 %v387
      %734 = vmatmul.bf16.gmra.mxu0 %v673
      %v735 = vpop.f32.mrf.mxu0
      %v736 = vadd.f32 %v723, %v735
      %v737 = vpop.f32.mrf.mxu0
      %738 = vdwg.mxu0
      %739 = vmatpush.bf16.msra.mxu0 %v612
      %740 = vmatpush.bf16.msra.mxu0 %v611
      %741 = vmatpush.bf16.msra.mxu0 %v542
      %742 = vmatpush.bf16.msra.mxu0 %v540
      %743 = vmatpush.bf16.msra.mxu0 %v610
      %744 = vmatpush.bf16.msra.mxu0 %v609
      %745 = vmatpush.bf16.msra.mxu0 %v608
      %746 = vmatpush.bf16.msra.mxu0 %v607
      %747 = vmatmul.bf16.gmra.mxu0 %v674
      %v748 = vpop.f32.mrf.mxu0
      %v749 = vadd.f32 %v736, %v748
      %v750 = vpop.f32.mrf.mxu0
      %751 = vdwg.mxu0
      %752 = vmatpush.bf16.msra.mxu0 %v620
      %753 = vmatpush.bf16.msra.mxu0 %v619
      %754 = vmatpush.bf16.msra.mxu0 %v618
      %755 = vmatpush.bf16.msra.mxu0 %v617
      %756 = vmatpush.bf16.msra.mxu0 %v616
      %757 = vmatpush.bf16.msra.mxu0 %v615
      %758 = vmatpush.bf16.msra.mxu0 %v614
      %759 = vmatpush.bf16.msra.mxu0 %v613
      %760 = vmatmul.bf16.gmra.mxu0 %v675
      %v761 = vpop.f32.mrf.mxu0
      %v762 = vadd.f32 %v749, %v761
      %v763 = vpop.f32.mrf.mxu0
      %764 = vdwg.mxu0
      %765 = vmatpush.bf16.msra.mxu0 0
      %766 = vmatpush.bf16.msra.mxu0 0
      %767 = vmatpush.bf16.msra.mxu0 %v626
      %768 = vmatpush.bf16.msra.mxu0 %v625
      %769 = vmatpush.bf16.msra.mxu0 %v624
      %770 = vmatpush.bf16.msra.mxu0 %v623
      %771 = vmatpush.bf16.msra.mxu0 %v622
      %772 = vmatpush.bf16.msra.mxu0 %v621
      %773 = vmatmul.bf16.gmra.mxu0 %v685
      %v774 = vpop.f32.mrf.mxu0
      %v775 = vadd.f32 %v762, %v774
      %v776 = vpop.f32.mrf.mxu0
      %777 = vdwg.mxu0
      %v778 = vpack.c.bf16 %v775, %v775
      %779 = vst [vmem:[%s190] sm:$0x7] %v778
      %p780 = scmp.lt.s32.totalorder %s18, 1
      %s781 = scalar_select %p780, %s18, 1
      %p782 = scmp.lt.s32.totalorder %s19, 7
      %s783 = scalar_select %p782, %s19, 7
      %s784 = smul.addr %s781, 8
      %s785 = sadd.s32 %s783, %s784
      %s786 = smul.addr %s785, 4
      %s787 = scalar_lea.vmem %s3, %s786
      // Predicated region
      $region33: #{dense_motion_forward.13} parent=31 // pred_check
        %p788 = pneg %p114
      $region34: #{dense_motion_forward.13} parent=31 // pred_check_branch
        %790 = sbr.rel (%p788) target = $region36
      $region35: #{dense_motion_forward.13} parent=31 // pred_region
        _
      $region36: #{dense_motion_forward.13} parent=31 // pred_fallthru
        _
    $region32: #{dense_motion_forward.13} parent=5 // pred_fallthru
      _
    %p791 = scmp.le.s32.totalorder 2, %s9
    // Predicated region
    $region37: #{dense_motion_forward.13} parent=5 // pred_check
      %p792 = pneg %p791
    $region38: #{dense_motion_forward.13} parent=5 // pred_check_branch
      %794 = sbr.rel (%p792) target = $region40
    $region39: #{dense_motion_forward.13} parent=5 // pred_region
      %s795 = ssub.s32 %s9, 2
      // Predicated region
      $region41: #{dense_motion_forward.13} parent=39 // pred_check
        %p796 = pneg %p120
      $region42: #{dense_motion_forward.13} parent=39 // pred_check_branch
        %798 = sbr.rel (%p796) target = $region44
      $region43: #{dense_motion_forward.13} parent=39 // pred_region
        %p799 = scmp.lt.s32.totalorder %s20, 1
        %s800 = scalar_select %p799, %s20, 1
        %p801 = scmp.lt.s32.totalorder %s21, 7
        %s802 = scalar_select %p801, %s21, 7
        %s803 = smul.addr %s800, 8
        %s804 = sadd.s32 %s802, %s803
        %s805 = smul.addr %s804, 4
        %s806 = scalar_lea.vmem %s3, %s805
      $region44: #{dense_motion_forward.13} parent=39 // pred_fallthru
        _
    $region40: #{dense_motion_forward.13} parent=5 // pred_fallthru
      _
  $region6: #{dense_motion_forward.13} parent=0 // loop_footer
    %s13 = sadd.s32 1, %s9
  $region7: #{dense_motion_forward.13} parent=0 // loop_footer_branch
    %8 = sbr.rel target = $region3
  $region8: #{dense_motion_forward.13} parent=0 // loop_exit
    _

// kernel: dense_motion_forward.14
$region0: #{dense_motion_forward.14}
  #allocation0 [shape = 'u32[]', space=smem, size = 0x4, offset = 0x4, fixed_abs, tag = 'smem constant byte address 0x4 - core index']
  #allocation1 [shape = 'u32[72,128]{1,0:T(1,128)}', space=vmem, size = 0x9000, scoped, tag = 'internal scratch']
  %s0 = inlined_call_operand.vmem [shape: bf16[2,10,16,256], index: 0, kind: input, shape index: {}]
  %s1 = inlined_call_operand.vmem [shape: bf16[6,432], index: 1, kind: input, shape index: {}]
  %s2 = inlined_call_operand.vmem [shape: f32[6,1], index: 2, kind: input, shape index: {}]
  %s3 = inlined_call_operand.vmem [shape: f32[2,8,6,128], index: 3, kind: output, shape index: {}]
  %s4 = sld [smem:[#allocation0]]
  $region45: #{dense_motion_forward.14} parent=0
    _
  %s6 = ssub.s32 1, %s4
  %s7 = scalar_select 0, %s6, %s4
  loop: start=0, step=1, limit=18
  $region2: #{dense_motion_forward.14} parent=0 // loop_pre_header
    _
  $region3: #{dense_motion_forward.14} parent=0 // loop_header
    %s9 = sphi 0, %s13
    %p10 = scmp.ge.s32.totalorder %s9, 18
    %s16 = sphi 0, %s28
    %s17 = sphi 0, %s24
    %s18 = sphi 0, %s16
    %s19 = sphi 0, %s17
    %s20 = sphi 0, %s18
    %s21 = sphi 0, %s19
    %s31 = sphi 0, %s33
    %s34 = sphi 0, %s31
    %s35 = sphi 0, %s34
    %s51 = sphi 0, %s35
    %s55 = sphi 0, %s55
    %s57 = sphi 0, %s55
    %s58 = sphi 0, %s57
    %s72 = sphi 0, %s58
    %s76 = sphi 0, %s76
    %s78 = sphi 0, %s76
    %s79 = sphi 0, %s78
    %s93 = sphi 0, %s79
    %s101 = sphi 0, %s103
    %s104 = sphi 0, %s101
    %s105 = sphi 0, %s104
    %s121 = sphi 0, %s105
  $region4: #{dense_motion_forward.14} parent=0 // loop_header_branch
    %12 = sbr.rel (%p10) target = $region8
  $region5: #{dense_motion_forward.14} parent=0 // loop_body
    %s14 = ssub.s32 %s9, 1
    %s15 = ssub.s32 %s9, 2
    %s22 = sadd.s32 1, %s17
    %p23 = scmp.ge.s32.totalorder %s22, 8
    %s24 = scalar_select %p23, 0, %s22
    %s25 = sadd.s32 1, %s16
    %s26 = scalar_select %p23, %s25, %s16
    %p27 = scmp.ge.s32.totalorder %s26, 2
    %s28 = scalar_select %p27, 0, %s26
    %s29 = ssub.s32 %s16, %s28
    %p30 = scmp.eq.s32.totalorder %s29, 0
    %s32 = sadd.s32 %s31, 1
    %s33 = scalar_select %p30, %s31, %s32
    %p36 = pneg %p30
    %p37 = scmp.eq.s32.totalorder %s9, 15
    %p38 = por %p36, %p37
    %p39 = scmp.ne.s32.totalorder %s31, %s34
    %p40 = scmp.eq.s32.totalorder %s9, 0
    %p41 = por %p39, %p40
    %p42 = scmp.ne.s32.totalorder %s31, %s34
    %p43 = scmp.eq.s32.totalorder %s14, 15
    %p44 = por %p42, %p43
    %p45 = scmp.ne.s32.totalorder %s34, %s35
    %p46 = scmp.eq.s32.totalorder %s14, 0
    %p47 = por %p45, %p46
    %p48 = scmp.ne.s32.totalorder %s34, %s35
    %p49 = scmp.eq.s32.totalorder %s15, 15
    %p50 = por %p48, %p49
    %p52 = scmp.ne.s32.totalorder %s35, %s51
    %p53 = scmp.eq.s32.totalorder %s15, 0
    %p54 = por %p52, %p53
    %s56 = sadd.s32 %s55, 1
    %p59 = scmp.eq.s32.totalorder %s9, 15
    %p60 = scmp.ne.s32.totalorder %s55, %s57
    %p61 = scmp.eq.s32.totalorder %s9, 0
    %p62 = por %p60, %p61
    %p63 = scmp.ne.s32.totalorder %s55, %s57
    %p64 = scmp.eq.s32.totalorder %s14, 15
    %p65 = por %p63, %p64
    %p66 = scmp.ne.s32.totalorder %s57, %s58
    %p67 = scmp.eq.s32.totalorder %s14, 0
    %p68 = por %p66, %p67
    %p69 = scmp.ne.s32.totalorder %s57, %s58
    %p70 = scmp.eq.s32.totalorder %s15, 15
    %p71 = por %p69, %p70
    %p73 = scmp.ne.s32.totalorder %s58, %s72
    %p74 = scmp.eq.s32.totalorder %s15, 0
    %p75 = por %p73, %p74
    %s77 = sadd.s32 %s76, 1
    %p80 = scmp.eq.s32.totalorder %s9, 15
    %p81 = scmp.ne.s32.totalorder %s76, %s78
    %p82 = scmp.eq.s32.totalorder %s9, 0
    %p83 = por %p81, %p82
    %p84 = scmp.ne.s32.totalorder %s76, %s78
    %p85 = scmp.eq.s32.totalorder %s14, 15
    %p86 = por %p84, %p85
    %p87 = scmp.ne.s32.totalorder %s78, %s79
    %p88 = scmp.eq.s32.totalorder %s14, 0
    %p89 = por %p87, %p88
    %p90 = scmp.ne.s32.totalorder %s78, %s79
    %p91 = scmp.eq.s32.totalorder %s15, 15
    %p92 = por %p90, %p91
    %p94 = scmp.ne.s32.totalorder %s79, %s93
    %p95 = scmp.eq.s32.totalorder %s15, 0
    %p96 = por %p94, %p95
    %s97 = ssub.s32 %s16, %s28
    %s98 = ssub.s32 %s17, %s24
    %s99 = sor.u32 %s97, %s98
    %p100 = scmp.eq.s32.totalorder %s99, 0
    %s102 = sadd.s32 %s101, 1
    %s103 = scalar_select %p100, %s101, %s102
    %p106 = pneg %p100
    %p107 = scmp.eq.s32.totalorder %s9, 15
    %p108 = por %p106, %p107
    %p109 = scmp.ne.s32.totalorder %s101, %s104
    %p110 = scmp.eq.s32.totalorder %s9, 0
    %p111 = por %p109, %p110
    %p112 = scmp.ne.s32.totalorder %s101, %s104
    %p113 = scmp.eq.s32.totalorder %s14, 15
    %p114 = por %p112, %p113
    %p115 = scmp.ne.s32.totalorder %s104, %s105
    %p116 = scmp.eq.s32.totalorder %s14, 0
    %p117 = por %p115, %p116
    %p118 = scmp.ne.s32.totalorder %s104, %s105
    %p119 = scmp.eq.s32.totalorder %s15, 15
    %p120 = por %p118, %p119
    %p122 = scmp.ne.s32.totalorder %s105, %s121
    %p123 = scmp.eq.s32.totalorder %s15, 0
    %p124 = por %p122, %p123
    %p125 = scmp.le.s32.totalorder 1, %s9
    %p126 = scmp.lt.s32.totalorder %s9, 17
    %p127 = pnand %p125, %p126
    %p128 = pneg %p127
    // Predicated region
    $region9: #{dense_motion_forward.14} parent=5 // pred_check
      _
    $region10: #{dense_motion_forward.14} parent=5 // pred_check_branch
      %130 = sbr.rel (%p127) target = $region12
    $region11: #{dense_motion_forward.14} parent=5 // pred_region
      %s131 = ssub.s32 %s9, 1
      // Predicated region
      $region13: #{dense_motion_forward.14} parent=11 // pred_check
        %p132 = pneg %p68
      $region14: #{dense_motion_forward.14} parent=11 // pred_check_branch
        %134 = sbr.rel (%p132) target = $region16
      $region15: #{dense_motion_forward.14} parent=11 // pred_region
        _
      $region16: #{dense_motion_forward.14} parent=11 // pred_fallthru
        _
      // Predicated region
      $region17: #{dense_motion_forward.14} parent=11 // pred_check
        %p135 = pneg %p89
      $region18: #{dense_motion_forward.14} parent=11 // pred_check_branch
        %137 = sbr.rel (%p135) target = $region20
      $region19: #{dense_motion_forward.14} parent=11 // pred_region
        _
      $region20: #{dense_motion_forward.14} parent=11 // pred_fallthru
        _
    $region12: #{dense_motion_forward.14} parent=5 // pred_fallthru
      _
    %p138 = scmp.lt.s32.totalorder %s9, 16
    // Predicated region
    $region21: #{dense_motion_forward.14} parent=5 // pred_check
      %p139 = pneg %p138
    $region22: #{dense_motion_forward.14} parent=5 // pred_check_branch
      %141 = sbr.rel (%p139) target = $region24
    $region23: #{dense_motion_forward.14} parent=5 // pred_region
      // Predicated region
      $region25: #{dense_motion_forward.14} parent=23 // pred_check
        %p142 = pneg %p41
      $region26: #{dense_motion_forward.14} parent=23 // pred_check_branch
        %144 = sbr.rel (%p142) target = $region28
      $region27: #{dense_motion_forward.14} parent=23 // pred_region
        %p145 = scmp.lt.s32.totalorder %s16, 1
        %s146 = scalar_select %p145, %s16, 1
        %s147 = smul.addr %s146, 40
        %s148 = smul.addr %s147, 4
        %s149 = scalar_lea.vmem %s0, %s148
      $region28: #{dense_motion_forward.14} parent=23 // pred_fallthru
        _
    $region24: #{dense_motion_forward.14} parent=5 // pred_fallthru
      _
    %p150 = scmp.le.s32.totalorder 1, %s9
    %p151 = scmp.lt.s32.totalorder %s9, 17
    %p152 = pnand %p150, %p151
    %p153 = pneg %p152
    // Predicated region
    $region29: #{dense_motion_forward.14} parent=5 // pred_check
      _
    $region30: #{dense_motion_forward.14} parent=5 // pred_check_branch
      %155 = sbr.rel (%p152) target = $region32
    $region31: #{dense_motion_forward.14} parent=5 // pred_region
      %s156 = ssub.s32 %s9, 1
      %p157 = scmp.lt.s32.totalorder %s18, 1
      %s158 = scalar_select %p157, %s18, 1
      %s159 = smul.addr %s158, 40
      %s160 = smul.addr %s159, 4
      %s161 = scalar_lea.vmem %s0, %s160
      %p162 = pneg %p47
      %p163 = pneg %p44
      %p164 = pneg %p68
      %p165 = pneg %p65
      %p166 = pneg %p89
      %p167 = pneg %p86
      %p168 = pneg %p117
      %p169 = pneg %p114
      %p170 = scmp.lt.s32.totalorder %s18, 1
      %s171 = scalar_select %p170, %s18, 1
      %p172 = scmp.lt.s32.totalorder %s19, 7
      %s173 = scalar_select %p172, %s19, 7
      %s174 = smul.addr %s171, 8
      %s175 = sadd.s32 %s173, %s174
      %s176 = smul.addr %s175, 8
      %s177 = scalar_lea.vmem %s3, %s176
      %p178 = scmp.lt.s32.totalorder %s18, 1
      %s179 = scalar_select %p178, %s18, 1
      %s180 = smul.addr %s179, 40
      %s181 = smul.addr %s180, 4
      %s182 = scalar_lea.vmem %s0, %s181
      %p183 = scmp.lt.s32.totalorder %s18, 1
      %s184 = scalar_select %p183, %s18, 1
      %p185 = scmp.lt.s32.totalorder %s19, 7
      %s186 = scalar_select %p185, %s19, 7
      %s187 = smul.addr %s184, 8
      %s188 = sadd.s32 %s186, %s187
      %s189 = smul.addr %s188, 8
      %s190 = scalar_lea.vmem %s3, %s189
      %s192 = smul.u32 %s19, 4
      %s193 = smul.addr %s192, 4
      %s194 = scalar_lea.vmem %s182, %s193
      %v195 = vld [vmem:[%s194] sm:$0xff]
      %v196 = vld [vmem:[%s194 + $0x8] sm:$0xff]
      %s197 = sadd.s32 %s19, 1
      %s198 = smul.u32 %s197, 4
      %s199 = smul.addr %s198, 4
      %s200 = scalar_lea.vmem %s182, %s199
      %v201 = vld [vmem:[%s200] sm:$0xff]
      %v202 = vld [vmem:[%s200 + $0x8] sm:$0xff]
      %s203 = sadd.s32 %s19, 2
      %s204 = smul.u32 %s203, 4
      %s205 = smul.addr %s204, 4
      %s206 = scalar_lea.vmem %s182, %s205
      %v207 = vld [vmem:[%s206] sm:$0xff]
      %v208 = vld [vmem:[%s206 + $0x8] sm:$0xff]
      %v211 = vunpack.c.l.b16 %v195
      %v212 = vunpack.c.l.b16 %v196
      %v213 = vpack.c.b16 %v212, %v211
      %v215 = vunpack.c.h.b16 %v195
      %v216 = vunpack.c.h.b16 %v196
      %v217 = vpack.c.b16 %v216, %v215
      %218 = vrot.lane.b32.xlu0 %v213, 127
      %v219 = vpop.permute.xlu0 %218
      %220 = vrot.lane.b32.xlu0 %v217, 127
      %v221 = vpop.permute.xlu0 %220
      %vm222 = vcmask 1039360
      %v223 = vsel %vm222, %v219, %v221
      %225 = vrot.lane.b32.xlu0 %v213, 126
      %v226 = vpop.permute.xlu0 %225
      %227 = vrot.lane.b32.xlu0 %v217, 126
      %v228 = vpop.permute.xlu0 %227
      %vm229 = vcmask 1031168
      %v230 = vsel %vm229, %v226, %v228
      %232 = vrot.lane.b32.xlu0 %v213, 118
      %v233 = vpop.permute.xlu0 %232
      %234 = vrot.lane.b32.xlu0 %v217, 118
      %v235 = vpop.permute.xlu0 %234
      %vm236 = vcmask 965632
      %v237 = vsel %vm236, %v233, %v235
      %239 = vrot.lane.b32.xlu0 %v213, 117
      %v240 = vpop.permute.xlu0 %239
      %241 = vrot.lane.b32.xlu0 %v217, 117
      %v242 = vpop.permute.xlu0 %241
      %vm243 = vcmask 957440
      %v244 = vsel %vm243, %v240, %v242
      %246 = vrot.lane.b32.xlu0 %v213, 116
      %v247 = vpop.permute.xlu0 %246
      %248 = vrot.lane.b32.xlu0 %v217, 116
      %v249 = vpop.permute.xlu0 %248
      %vm250 = vcmask 949248
      %v251 = vsel %vm250, %v247, %v249
      %253 = vrot.lane.b32.xlu0 %v213, 108
      %v254 = vpop.permute.xlu0 %253
      %255 = vrot.lane.b32.xlu0 %v217, 108
      %v256 = vpop.permute.xlu0 %255
      %vm257 = vcmask 883712
      %v258 = vsel %vm257, %v254, %v256
      %260 = vrot.lane.b32.xlu0 %v213, 107
      %v261 = vpop.permute.xlu0 %260
      %262 = vrot.lane.b32.xlu0 %v217, 107
      %v263 = vpop.permute.xlu0 %262
      %vm264 = vcmask 875520
      %v265 = vsel %vm264, %v261, %v263
      %267 = vrot.lane.b32.xlu0 %v213, 106
      %v268 = vpop.permute.xlu0 %267
      %269 = vrot.lane.b32.xlu0 %v217, 106
      %v270 = vpop.permute.xlu0 %269
      %vm271 = vcmask 867328
      %v272 = vsel %vm271, %v268, %v270
      %v276 = vunpack.c.l.b16 %v201
      %v277 = vunpack.c.l.b16 %v202
      %v278 = vpack.c.b16 %v277, %v276
      %v280 = vunpack.c.h.b16 %v201
      %v281 = vunpack.c.h.b16 %v202
      %v282 = vpack.c.b16 %v281, %v280
      %283 = vrot.lane.b32.xlu0 %v278, 127
      %v284 = vpop.permute.xlu0 %283
      %285 = vrot.lane.b32.xlu0 %v282, 127
      %v286 = vpop.permute.xlu0 %285
      %v287 = vsel %vm222, %v284, %v286
      %289 = vrot.lane.b32.xlu0 %v278, 126
      %v290 = vpop.permute.xlu0 %289
      %291 = vrot.lane.b32.xlu0 %v282, 126
      %v292 = vpop.permute.xlu0 %291
      %v293 = vsel %vm229, %v290, %v292
      %295 = vrot.lane.b32.xlu0 %v278, 118
      %v296 = vpop.permute.xlu0 %295
      %297 = vrot.lane.b32.xlu0 %v282, 118
      %v298 = vpop.permute.xlu0 %297
      %v299 = vsel %vm236, %v296, %v298
      %301 = vrot.lane.b32.xlu0 %v278, 117
      %v302 = vpop.permute.xlu0 %301
      %303 = vrot.lane.b32.xlu0 %v282, 117
      %v304 = vpop.permute.xlu0 %303
      %v305 = vsel %vm243, %v302, %v304
      %307 = vrot.lane.b32.xlu0 %v278, 116
      %v308 = vpop.permute.xlu0 %307
      %309 = vrot.lane.b32.xlu0 %v282, 116
      %v310 = vpop.permute.xlu0 %309
      %v311 = vsel %vm250, %v308, %v310
      %313 = vrot.lane.b32.xlu0 %v278, 108
      %v314 = vpop.permute.xlu0 %313
      %315 = vrot.lane.b32.xlu0 %v282, 108
      %v316 = vpop.permute.xlu0 %315
      %v317 = vsel %vm257, %v314, %v316
      %v321 = vunpack.c.l.b16 %v207
      %v322 = vunpack.c.l.b16 %v208
      %v323 = vpack.c.b16 %v322, %v321
      %324 = vrot.lane.b32.xlu0 %v323, 21
      %v325 = vpop.permute.xlu0 %324
      %v326 = vunpack.c.h.b16 %v207
      %v327 = vunpack.c.h.b16 %v208
      %v328 = vpack.c.b16 %v327, %v326
      %329 = vrot.lane.b32.xlu0 %v323, 20
      %v330 = vpop.permute.xlu0 %329
      %331 = vrot.lane.b32.xlu0 %v328, 20
      %v332 = vpop.permute.xlu0 %331
      %vm333 = vcmask 162816
      %v334 = vsel %vm333, %v330, %v332
      %335 = vrot.lane.b32.xlu0 %v323, 19
      %v336 = vpop.permute.xlu0 %335
      %337 = vrot.lane.b32.xlu0 %v328, 19
      %v338 = vpop.permute.xlu0 %337
      %vm339 = vcmask 154624
      %v340 = vsel %vm339, %v336, %v338
      %341 = vrot.lane.b32.xlu0 %v323, 11
      %v342 = vpop.permute.xlu0 %341
      %343 = vrot.lane.b32.xlu0 %v328, 11
      %v344 = vpop.permute.xlu0 %343
      %vm345 = vcmask 89088
      %v346 = vsel %vm345, %v342, %v344
      %347 = vrot.lane.b32.xlu0 %v323, 10
      %v348 = vpop.permute.xlu0 %347
      %349 = vrot.lane.b32.xlu0 %v328, 10
      %v350 = vpop.permute.xlu0 %349
      %vm351 = vcmask 80896
      %v352 = vsel %vm351, %v348, %v350
      %353 = vrot.lane.b32.xlu0 %v323, 9
      %v354 = vpop.permute.xlu0 %353
      %355 = vrot.lane.b32.xlu0 %v328, 9
      %v356 = vpop.permute.xlu0 %355
      %vm357 = vcmask 72704
      %v358 = vsel %vm357, %v354, %v356
      %359 = vrot.lane.b32.xlu0 %v323, 1
      %v360 = vpop.permute.xlu0 %359
      %361 = vrot.lane.b32.xlu0 %v328, 1
      %v362 = vpop.permute.xlu0 %361
      %vm363 = vcmask 7168
      %v364 = vsel %vm363, %v360, %v362
      %365 = vrot.lane.b32.xlu0 %v323, 127
      %v366 = vpop.permute.xlu0 %365
      %367 = vrot.lane.b32.xlu0 %v328, 127
      %v368 = vpop.permute.xlu0 %367
      %v369 = vsel %vm222, %v366, %v368
      %370 = vrot.lane.b32.xlu0 %v278, 107
      %v371 = vpop.permute.xlu0 %370
      %372 = vrot.lane.b32.xlu0 %v282, 107
      %v373 = vpop.permute.xlu0 %372
      %374 = vrot.lane.b32.xlu0 %v287, 107
      %v375 = vpop.permute.xlu0 %374
      %376 = vrot.lane.b32.xlu0 %v286, 107
      %v377 = vpop.permute.xlu0 %376
      %378 = vrot.lane.b32.xlu0 %v325, 107
      %v379 = vpop.permute.xlu0 %378
      %380 = vrot.lane.b32.xlu0 %v330, 107
      %v381 = vpop.permute.xlu0 %380
      %382 = vrot.lane.b32.xlu0 %v334, 107
      %v383 = vpop.permute.xlu0 %382
      %384 = vrot.lane.b32.xlu0 %v336, 107
      %v385 = vpop.permute.xlu0 %384
      %386 = vrot.lane.b32.xlu0 %v340, 107
      %v387 = vpop.permute.xlu0 %386
      %388 = vrot.lane.b32.xlu0 %v342, 107
      %v389 = vpop.permute.xlu0 %388
      %390 = vrot.lane.b32.xlu0 %v346, 107
      %v391 = vpop.permute.xlu0 %390
      %392 = vrot.lane.b32.xlu0 %v348, 107
      %v393 = vpop.permute.xlu0 %392
      %394 = vrot.lane.b32.xlu0 %v352, 107
      %v395 = vpop.permute.xlu0 %394
      %396 = vrot.lane.b32.xlu0 %v354, 107
      %v397 = vpop.permute.xlu0 %396
      %398 = vrot.lane.b32.xlu0 %v358, 107
      %v399 = vpop.permute.xlu0 %398
      %400 = vrot.lane.b32.xlu0 %v360, 107
      %v401 = vpop.permute.xlu0 %400
      %402 = vrot.lane.b32.xlu0 %v364, 107
      %v403 = vpop.permute.xlu0 %402
      %404 = vrot.lane.b32.xlu0 %v323, 107
      %v405 = vpop.permute.xlu0 %404
      %406 = vrot.lane.b32.xlu0 %v328, 107
      %v407 = vpop.permute.xlu0 %406
      %408 = vrot.lane.b32.xlu0 %v369, 107
      %v409 = vpop.permute.xlu0 %408
      %410 = vrot.lane.b32.xlu0 %v368, 107
      %v411 = vpop.permute.xlu0 %410
      %v412 = vsel %vm264, %v371, %v373
      %v413 = vsel %vm264, %v375, %v377
      %v414 = vsel %vm264, %v381, %v383
      %v415 = vsel %vm264, %v385, %v387
      %v416 = vsel %vm264, %v389, %v391
      %v417 = vsel %vm264, %v393, %v395
      %v418 = vsel %vm264, %v397, %v399
      %v419 = vsel %vm264, %v401, %v403
      %v420 = vsel %vm264, %v405, %v407
      %v421 = vsel %vm264, %v409, %v411
      %v433 = vld [vmem:[%s1] sm:$0x77]
      %v434 = vld [vmem:[%s1 + $0x8] sm:$0x77]
      %v435 = vld [vmem:[%s2] sm:$0x3f]
      %437 = vset.pattern.permute.xlu0 0
      %438 = vperm.xlu0 %437, %v435
      %v439 = vpop.permute.xlu0 %438
      %v443 = vunpack.c.l.b16 %v433
      %v444 = vunpack.c.h.b16 %v433
      %v445 = vunpack.c.l.b16 %v434
      %v446 = vunpack.c.h.b16 %v434
      %v447 = vpack.c.b16 %v443, %v443
      %v448 = vpack.c.b16 %v444, %v444
      %v449 = vpack.c.b16 %v445, %v445
      %v450 = vpack.c.b16 %v446, %v446
      %vm454 = vcmask 392192
      %v456 = vsel %vm454, %v450, 0
      %458 = vmatpush.bf16.msra.mxu0 %v265
      %459 = vmatpush.bf16.msra.mxu0 %v258
      %460 = vmatpush.bf16.msra.mxu0 %v251
      %461 = vmatpush.bf16.msra.mxu0 %v244
      %462 = vmatpush.bf16.msra.mxu0 %v237
      %463 = vmatpush.bf16.msra.mxu0 %v230
      %464 = vmatpush.bf16.msra.mxu0 %v223
      %465 = vmatpush.bf16.msra.mxu0 %v213
      %466 = vmatmul.bf16.gmra.mxu0 %v447
      %v467 = vpop.f32.mrf.mxu0
      %v468 = vadd.f32 %v439, %v467
      %v469 = vpop.f32.mrf.mxu0
      %470 = vdwg.mxu0
      %471 = vmatpush.bf16.msra.mxu0 %v317
      %472 = vmatpush.bf16.msra.mxu0 %v311
      %473 = vmatpush.bf16.msra.mxu0 %v305
      %474 = vmatpush.bf16.msra.mxu0 %v299
      %475 = vmatpush.bf16.msra.mxu0 %v293
      %476 = vmatpush.bf16.msra.mxu0 %v287
      %477 = vmatpush.bf16.msra.mxu0 %v278
      %478 = vmatpush.bf16.msra.mxu0 %v272
      %479 = vmatmul.bf16.gmra.mxu0 %v448
      %v480 = vpop.f32.mrf.mxu0
      %v481 = vadd.f32 %v468, %v480
      %v482 = vpop.f32.mrf.mxu0
      %483 = vdwg.mxu0
      %484 = vmatpush.bf16.msra.mxu0 %v418
      %485 = vmatpush.bf16.msra.mxu0 %v417
      %486 = vmatpush.bf16.msra.mxu0 %v416
      %487 = vmatpush.bf16.msra.mxu0 %v415
      %488 = vmatpush.bf16.msra.mxu0 %v414
      %489 = vmatpush.bf16.msra.mxu0 %v379
      %490 = vmatpush.bf16.msra.mxu0 %v413
      %491 = vmatpush.bf16.msra.mxu0 %v412
      %492 = vmatmul.bf16.gmra.mxu0 %v449
      %v493 = vpop.f32.mrf.mxu0
      %v494 = vadd.f32 %v481, %v493
      %v495 = vpop.f32.mrf.mxu0
      %496 = vdwg.mxu0
      %497 = vmatpush.bf16.msra.mxu0 0
      %498 = vmatpush.bf16.msra.mxu0 0
      %499 = vmatpush.bf16.msra.mxu0 0
      %500 = vmatpush.bf16.msra.mxu0 0
      %501 = vmatpush.bf16.msra.mxu0 0
      %502 = vmatpush.bf16.msra.mxu0 %v421
      %503 = vmatpush.bf16.msra.mxu0 %v420
      %504 = vmatpush.bf16.msra.mxu0 %v419
      %505 = vmatmul.bf16.gmra.mxu0 %v456
      %v506 = vpop.f32.mrf.mxu0
      %v507 = vadd.f32 %v494, %v506
      %v508 = vpop.f32.mrf.mxu0
      %509 = vdwg.mxu0
      %510 = vst [vmem:[%s190] sm:$0x3f] %v507
      %p511 = scmp.lt.s32.totalorder %s18, 1
      %s512 = scalar_select %p511, %s18, 1
      %p513 = scmp.lt.s32.totalorder %s19, 7
      %s514 = scalar_select %p513, %s19, 7
      %s515 = smul.addr %s512, 8
      %s516 = sadd.s32 %s514, %s515
      %s517 = smul.addr %s516, 8
      %s518 = scalar_lea.vmem %s3, %s517
      // Predicated region
      $region33: #{dense_motion_forward.14} parent=31 // pred_check
        %p519 = pneg %p114
      $region34: #{dense_motion_forward.14} parent=31 // pred_check_branch
        %521 = sbr.rel (%p519) target = $region36
      $region35: #{dense_motion_forward.14} parent=31 // pred_region
        _
      $region36: #{dense_motion_forward.14} parent=31 // pred_fallthru
        _
    $region32: #{dense_motion_forward.14} parent=5 // pred_fallthru
      _
    %p522 = scmp.le.s32.totalorder 2, %s9
    // Predicated region
    $region37: #{dense_motion_forward.14} parent=5 // pred_check
      %p523 = pneg %p522
    $region38: #{dense_motion_forward.14} parent=5 // pred_check_branch
      %525 = sbr.rel (%p523) target = $region40
    $region39: #{dense_motion_forward.14} parent=5 // pred_region
      %s526 = ssub.s32 %s9, 2
      // Predicated region
      $region41: #{dense_motion_forward.14} parent=39 // pred_check
        %p527 = pneg %p120
      $region42: #{dense_motion_forward.14} parent=39 // pred_check_branch
        %529 = sbr.rel (%p527) target = $region44
      $region43: #{dense_motion_forward.14} parent=39 // pred_region
        %p530 = scmp.lt.s32.totalorder %s20, 1
        %s531 = scalar_select %p530, %s20, 1
        %p532 = scmp.lt.s32.totalorder %s21, 7
        %s533 = scalar_select %p532, %s21, 7
        %s534 = smul.addr %s531, 8
        %s535 = sadd.s32 %s533, %s534
        %s536 = smul.addr %s535, 8
        %s537 = scalar_lea.vmem %s3, %s536
      $region44: #{dense_motion_forward.14} parent=39 // pred_fallthru
        _
    $region40: #{dense_motion_forward.14} parent=5 // pred_fallthru
      _
  $region6: #{dense_motion_forward.14} parent=0 // loop_footer
    %s13 = sadd.s32 1, %s9
  $region7: #{dense_motion_forward.14} parent=0 // loop_footer_branch
    %8 = sbr.rel target = $region3
  $region8: #{dense_motion_forward.14} parent=0 // loop_exit
    _

// kernel: dense_motion_forward.15
$region0: #{dense_motion_forward.15}
  #allocation0 [shape = 'u32[]', space=smem, size = 0x4, offset = 0x4, fixed_abs, tag = 'smem constant byte address 0x4 - core index']
  #allocation1 [shape = 'u32[72,128]{1,0:T(1,128)}', space=vmem, size = 0x9000, scoped, tag = 'internal scratch']
  %s0 = inlined_call_operand.vmem [shape: f32[30], index: 0, kind: input, shape index: {}]
  %s1 = inlined_call_operand.vmem [shape: f32[30], index: 1, kind: input, shape index: {}]
  %s2 = inlined_call_operand.vmem [shape: f32[8,3,128], index: 2, kind: input, shape index: {}]
  %s3 = inlined_call_operand.vmem [shape: f32[2,8,6,128], index: 3, kind: input, shape index: {}]
  %s4 = inlined_call_operand.vmem [shape: f32[2,8,6,128], index: 4, kind: output, shape index: {0}]
  %s5 = inlined_call_operand.vmem [shape: f32[2,8,3,128], index: 5, kind: output, shape index: {1}]
  %6 = xla_tuple %s4, %s5
  %s7 = sld [smem:[#allocation0]]
  $region65: #{dense_motion_forward.15} parent=0
    _
  %s9 = ssub.s32 1, %s7
  %s10 = scalar_select 0, %s9, %s7
  $region1: #{dense_motion_forward.15} parent=0
    #allocation2 [shape = 'u8[512]{0}', space=smem, size = 0x200, scoped, tag = 'input window, operand 0, single buffered']
    #allocation3 [shape = 's32[2]{0}', space=sflag, size = 0x8, scoped, tag = 'scoped memory for dense_motion_forward.15']
    #allocation4 [shape = 'u8[512]{0}', space=smem, size = 0x200, scoped, tag = 'input window, operand 1, single buffered']
    #allocation5 [shape = 's32[1]{0}', space=sflag, size = 0x4, scoped, tag = 'scoped memory for dense_motion_forward.15']
    %11 = vsyncpa [#allocation3], 0
    %12 = vsyncpa [#allocation5], 0
    loop: start=0, step=1, limit=18
    $region2: #{dense_motion_forward.15} parent=1 // loop_pre_header
      _
    $region3: #{dense_motion_forward.15} parent=1 // loop_header
      %s14 = sphi 0, %s18
      %p15 = scmp.ge.s32.totalorder %s14, 18
      %s21 = sphi 0, %s33
      %s22 = sphi 0, %s29
      %s23 = sphi 0, %s21
      %s24 = sphi 0, %s22
      %s25 = sphi 0, %s23
      %s26 = sphi 0, %s24
      %s34 = sphi 0, %s34
      %s36 = sphi 0, %s34
      %s37 = sphi 0, %s36
      %s51 = sphi 0, %s37
      %s55 = sphi 0, %s55
      %s57 = sphi 0, %s55
      %s58 = sphi 0, %s57
      %s72 = sphi 0, %s58
      %s78 = sphi 0, %s80
      %s81 = sphi 0, %s78
      %s82 = sphi 0, %s81
      %s98 = sphi 0, %s82
      %s106 = sphi 0, %s108
      %s109 = sphi 0, %s106
      %s110 = sphi 0, %s109
      %s126 = sphi 0, %s110
      %s134 = sphi 0, %s136
      %s137 = sphi 0, %s134
      %s138 = sphi 0, %s137
      %s154 = sphi 0, %s138
      %s162 = sphi 0, %s164
      %s165 = sphi 0, %s162
      %s166 = sphi 0, %s165
      %s182 = sphi 0, %s166
    $region4: #{dense_motion_forward.15} parent=1 // loop_header_branch
      %17 = sbr.rel (%p15) target = $region8
    $region5: #{dense_motion_forward.15} parent=1 // loop_body
      %s19 = ssub.s32 %s14, 1
      %s20 = ssub.s32 %s14, 2
      %s27 = sadd.s32 1, %s22
      %p28 = scmp.ge.s32.totalorder %s27, 8
      %s29 = scalar_select %p28, 0, %s27
      %s30 = sadd.s32 1, %s21
      %s31 = scalar_select %p28, %s30, %s21
      %p32 = scmp.ge.s32.totalorder %s31, 2
      %s33 = scalar_select %p32, 0, %s31
      %s35 = sadd.s32 %s34, 1
      %p38 = scmp.eq.s32.totalorder %s14, 15
      %p39 = scmp.ne.s32.totalorder %s34, %s36
      %p40 = scmp.eq.s32.totalorder %s14, 0
      %p41 = por %p39, %p40
      %p42 = scmp.ne.s32.totalorder %s34, %s36
      %p43 = scmp.eq.s32.totalorder %s19, 15
      %p44 = por %p42, %p43
      %p45 = scmp.ne.s32.totalorder %s36, %s37
      %p46 = scmp.eq.s32.totalorder %s19, 0
      %p47 = por %p45, %p46
      %p48 = scmp.ne.s32.totalorder %s36, %s37
      %p49 = scmp.eq.s32.totalorder %s20, 15
      %p50 = por %p48, %p49
      %p52 = scmp.ne.s32.totalorder %s37, %s51
      %p53 = scmp.eq.s32.totalorder %s20, 0
      %p54 = por %p52, %p53
      %s56 = sadd.s32 %s55, 1
      %p59 = scmp.eq.s32.totalorder %s14, 15
      %p60 = scmp.ne.s32.totalorder %s55, %s57
      %p61 = scmp.eq.s32.totalorder %s14, 0
      %p62 = por %p60, %p61
      %p63 = scmp.ne.s32.totalorder %s55, %s57
      %p64 = scmp.eq.s32.totalorder %s19, 15
      %p65 = por %p63, %p64
      %p66 = scmp.ne.s32.totalorder %s57, %s58
      %p67 = scmp.eq.s32.totalorder %s19, 0
      %p68 = por %p66, %p67
      %p69 = scmp.ne.s32.totalorder %s57, %s58
      %p70 = scmp.eq.s32.totalorder %s20, 15
      %p71 = por %p69, %p70
      %p73 = scmp.ne.s32.totalorder %s58, %s72
      %p74 = scmp.eq.s32.totalorder %s20, 0
      %p75 = por %p73, %p74
      %s76 = ssub.s32 %s22, %s29
      %p77 = scmp.eq.s32.totalorder %s76, 0
      %s79 = sadd.s32 %s78, 1
      %s80 = scalar_select %p77, %s78, %s79
      %p83 = pneg %p77
      %p84 = scmp.eq.s32.totalorder %s14, 15
      %p85 = por %p83, %p84
      %p86 = scmp.ne.s32.totalorder %s78, %s81
      %p87 = scmp.eq.s32.totalorder %s14, 0
      %p88 = por %p86, %p87
      %p89 = scmp.ne.s32.totalorder %s78, %s81
      %p90 = scmp.eq.s32.totalorder %s19, 15
      %p91 = por %p89, %p90
      %p92 = scmp.ne.s32.totalorder %s81, %s82
      %p93 = scmp.eq.s32.totalorder %s19, 0
      %p94 = por %p92, %p93
      %p95 = scmp.ne.s32.totalorder %s81, %s82
      %p96 = scmp.eq.s32.totalorder %s20, 15
      %p97 = por %p95, %p96
      %p99 = scmp.ne.s32.totalorder %s82, %s98
      %p100 = scmp.eq.s32.totalorder %s20, 0
      %p101 = por %p99, %p100
      %s102 = ssub.s32 %s21, %s33
      %s103 = ssub.s32 %s22, %s29
      %s104 = sor.u32 %s102, %s103
      %p105 = scmp.eq.s32.totalorder %s104, 0
      %s107 = sadd.s32 %s106, 1
      %s108 = scalar_select %p105, %s106, %s107
      %p111 = pneg %p105
      %p112 = scmp.eq.s32.totalorder %s14, 15
      %p113 = por %p111, %p112
      %p114 = scmp.ne.s32.totalorder %s106, %s109
      %p115 = scmp.eq.s32.totalorder %s14, 0
      %p116 = por %p114, %p115
      %p117 = scmp.ne.s32.totalorder %s106, %s109
      %p118 = scmp.eq.s32.totalorder %s19, 15
      %p119 = por %p117, %p118
      %p120 = scmp.ne.s32.totalorder %s109, %s110
      %p121 = scmp.eq.s32.totalorder %s19, 0
      %p122 = por %p120, %p121
      %p123 = scmp.ne.s32.totalorder %s109, %s110
      %p124 = scmp.eq.s32.totalorder %s20, 15
      %p125 = por %p123, %p124
      %p127 = scmp.ne.s32.totalorder %s110, %s126
      %p128 = scmp.eq.s32.totalorder %s20, 0
      %p129 = por %p127, %p128
      %s130 = ssub.s32 %s21, %s33
      %s131 = ssub.s32 %s22, %s29
      %s132 = sor.u32 %s130, %s131
      %p133 = scmp.eq.s32.totalorder %s132, 0
      %s135 = sadd.s32 %s134, 1
      %s136 = scalar_select %p133, %s134, %s135
      %p139 = pneg %p133
      %p140 = scmp.eq.s32.totalorder %s14, 15
      %p141 = por %p139, %p140
      %p142 = scmp.ne.s32.totalorder %s134, %s137
      %p143 = scmp.eq.s32.totalorder %s14, 0
      %p144 = por %p142, %p143
      %p145 = scmp.ne.s32.totalorder %s134, %s137
      %p146 = scmp.eq.s32.totalorder %s19, 15
      %p147 = por %p145, %p146
      %p148 = scmp.ne.s32.totalorder %s137, %s138
      %p149 = scmp.eq.s32.totalorder %s19, 0
      %p150 = por %p148, %p149
      %p151 = scmp.ne.s32.totalorder %s137, %s138
      %p152 = scmp.eq.s32.totalorder %s20, 15
      %p153 = por %p151, %p152
      %p155 = scmp.ne.s32.totalorder %s138, %s154
      %p156 = scmp.eq.s32.totalorder %s20, 0
      %p157 = por %p155, %p156
      %s158 = ssub.s32 %s21, %s33
      %s159 = ssub.s32 %s22, %s29
      %s160 = sor.u32 %s158, %s159
      %p161 = scmp.eq.s32.totalorder %s160, 0
      %s163 = sadd.s32 %s162, 1
      %s164 = scalar_select %p161, %s162, %s163
      %p167 = pneg %p161
      %p168 = scmp.eq.s32.totalorder %s14, 15
      %p169 = por %p167, %p168
      %p170 = scmp.ne.s32.totalorder %s162, %s165
      %p171 = scmp.eq.s32.totalorder %s14, 0
      %p172 = por %p170, %p171
      %p173 = scmp.ne.s32.totalorder %s162, %s165
      %p174 = scmp.eq.s32.totalorder %s19, 15
      %p175 = por %p173, %p174
      %p176 = scmp.ne.s32.totalorder %s165, %s166
      %p177 = scmp.eq.s32.totalorder %s19, 0
      %p178 = por %p176, %p177
      %p179 = scmp.ne.s32.totalorder %s165, %s166
      %p180 = scmp.eq.s32.totalorder %s20, 15
      %p181 = por %p179, %p180
      %p183 = scmp.ne.s32.totalorder %s166, %s182
      %p184 = scmp.eq.s32.totalorder %s20, 0
      %p185 = por %p183, %p184
      %p186 = scmp.le.s32.totalorder 1, %s14
      %p187 = scmp.lt.s32.totalorder %s14, 17
      %p188 = pnand %p186, %p187
      %p189 = pneg %p188
      // Predicated region
      $region9: #{dense_motion_forward.15} parent=5 // pred_check
        _
      $region10: #{dense_motion_forward.15} parent=5 // pred_check_branch
        %191 = sbr.rel (%p188) target = $region12
      $region11: #{dense_motion_forward.15} parent=5 // pred_region
        %s192 = ssub.s32 %s14, 1
        // Predicated region
        $region13: #{dense_motion_forward.15} parent=11 // pred_check
          %p193 = pneg %p47
        $region14: #{dense_motion_forward.15} parent=11 // pred_check_branch
          %195 = sbr.rel (%p193) target = $region16
        $region15: #{dense_motion_forward.15} parent=11 // pred_region
          %197 = vsyncadd [#allocation3], 0
          %s199 = sshll.u32 %s0, 4
          %s200 = int_to_ptr.vmem [resolvable:$true] %s199
          %202 = dma.vmem_to_smem %s200, 16, [#allocation2], [#allocation3]
        $region16: #{dense_motion_forward.15} parent=11 // pred_fallthru
          _
        // Predicated region
        $region17: #{dense_motion_forward.15} parent=11 // pred_check
          %p203 = pneg %p68
        $region18: #{dense_motion_forward.15} parent=11 // pred_check_branch
          %205 = sbr.rel (%p203) target = $region20
        $region19: #{dense_motion_forward.15} parent=11 // pred_region
          %207 = vsyncadd [#allocation5], 0
          %s209 = sshll.u32 %s1, 4
          %s210 = int_to_ptr.vmem [resolvable:$true] %s209
          %212 = dma.vmem_to_smem %s210, 16, [#allocation4], [#allocation5]
        $region20: #{dense_motion_forward.15} parent=11 // pred_fallthru
          _
      $region12: #{dense_motion_forward.15} parent=5 // pred_fallthru
        _
      %p213 = scmp.lt.s32.totalorder %s14, 16
      // Predicated region
      $region21: #{dense_motion_forward.15} parent=5 // pred_check
        %p214 = pneg %p213
      $region22: #{dense_motion_forward.15} parent=5 // pred_check_branch
        %216 = sbr.rel (%p214) target = $region24
      $region23: #{dense_motion_forward.15} parent=5 // pred_region
        // Predicated region
        $region25: #{dense_motion_forward.15} parent=23 // pred_check
          %p217 = pneg %p88
        $region26: #{dense_motion_forward.15} parent=23 // pred_check_branch
          %219 = sbr.rel (%p217) target = $region28
        $region27: #{dense_motion_forward.15} parent=23 // pred_region
          %p220 = scmp.lt.s32.totalorder %s22, 7
          %s221 = scalar_select %p220, %s22, 7
          %s222 = smul.addr %s221, 4
          %s223 = scalar_lea.vmem %s2, %s222
        $region28: #{dense_motion_forward.15} parent=23 // pred_fallthru
          _
        // Predicated region
        $region29: #{dense_motion_forward.15} parent=23 // pred_check
          %p224 = pneg %p116
        $region30: #{dense_motion_forward.15} parent=23 // pred_check_branch
          %226 = sbr.rel (%p224) target = $region32
        $region31: #{dense_motion_forward.15} parent=23 // pred_region
          %p227 = scmp.lt.s32.totalorder %s21, 1
          %s228 = scalar_select %p227, %s21, 1
          %p229 = scmp.lt.s32.totalorder %s22, 7
          %s230 = scalar_select %p229, %s22, 7
          %s231 = smul.addr %s228, 8
          %s232 = sadd.s32 %s230, %s231
          %s233 = smul.addr %s232, 8
          %s234 = scalar_lea.vmem %s3, %s233
        $region32: #{dense_motion_forward.15} parent=23 // pred_fallthru
          _
      $region24: #{dense_motion_forward.15} parent=5 // pred_fallthru
        _
      %p235 = scmp.le.s32.totalorder 1, %s14
      %p236 = scmp.lt.s32.totalorder %s14, 17
      %p237 = pnand %p235, %p236
      %p238 = pneg %p237
      // Predicated region
      $region33: #{dense_motion_forward.15} parent=5 // pred_check
        _
      $region34: #{dense_motion_forward.15} parent=5 // pred_check_branch
        %240 = sbr.rel (%p237) target = $region36
      $region35: #{dense_motion_forward.15} parent=5 // pred_region
        %s241 = ssub.s32 %s14, 1
        // Predicated region
        $region37: #{dense_motion_forward.15} parent=35 // pred_check
          %p242 = pneg %p47
        $region38: #{dense_motion_forward.15} parent=35 // pred_check_branch
          %244 = sbr.rel (%p242) target = $region40
        $region39: #{dense_motion_forward.15} parent=35 // pred_region
          %246 = dma.done [#allocation3], 16
        $region40: #{dense_motion_forward.15} parent=35 // pred_fallthru
          _
        // Predicated region
        $region41: #{dense_motion_forward.15} parent=35 // pred_check
          %p247 = pneg %p68
        $region42: #{dense_motion_forward.15} parent=35 // pred_check_branch
          %249 = sbr.rel (%p247) target = $region44
        $region43: #{dense_motion_forward.15} parent=35 // pred_region
          %251 = dma.done [#allocation5], 16
        $region44: #{dense_motion_forward.15} parent=35 // pred_fallthru
          _
        %252 = sfence
        %p253 = pneg %p47
        %p254 = pneg %p44
        %p255 = pneg %p68
        %p256 = pneg %p65
        %p257 = scmp.lt.s32.totalorder %s24, 7
        %s258 = scalar_select %p257, %s24, 7
        %s259 = smul.addr %s258, 4
        %s260 = scalar_lea.vmem %s2, %s259
        %p261 = pneg %p94
        %p262 = pneg %p91
        %p263 = scmp.lt.s32.totalorder %s23, 1
        %s264 = scalar_select %p263, %s23, 1
        %p265 = scmp.lt.s32.totalorder %s24, 7
        %s266 = scalar_select %p265, %s24, 7
        %s267 = smul.addr %s264, 8
        %s268 = sadd.s32 %s266, %s267
        %s269 = smul.addr %s268, 8
        %s270 = scalar_lea.vmem %s3, %s269
        %p271 = pneg %p122
        %p272 = pneg %p119
        %p273 = pneg %p150
        %p274 = pneg %p147
        %p275 = scmp.lt.s32.totalorder %s23, 1
        %s276 = scalar_select %p275, %s23, 1
        %p277 = scmp.lt.s32.totalorder %s24, 7
        %s278 = scalar_select %p277, %s24, 7
        %s279 = smul.addr %s276, 8
        %s280 = sadd.s32 %s278, %s279
        %s281 = smul.addr %s280, 8
        %s282 = scalar_lea.vmem %s4, %s281
        %p283 = pneg %p178
        %p284 = pneg %p175
        %p285 = scmp.lt.s32.totalorder %s23, 1
        %s286 = scalar_select %p285, %s23, 1
        %p287 = scmp.lt.s32.totalorder %s24, 7
        %s288 = scalar_select %p287, %s24, 7
        %s289 = smul.addr %s286, 8
        %s290 = sadd.s32 %s288, %s289
        %s291 = smul.addr %s290, 4
        %s292 = scalar_lea.vmem %s5, %s291
        %p293 = scmp.lt.s32.totalorder %s24, 7
        %s294 = scalar_select %p293, %s24, 7
        %s295 = smul.addr %s294, 4
        %s296 = scalar_lea.vmem %s2, %s295
        %p297 = scmp.lt.s32.totalorder %s23, 1
        %s298 = scalar_select %p297, %s23, 1
        %p299 = scmp.lt.s32.totalorder %s24, 7
        %s300 = scalar_select %p299, %s24, 7
        %s301 = smul.addr %s298, 8
        %s302 = sadd.s32 %s300, %s301
        %s303 = smul.addr %s302, 8
        %s304 = scalar_lea.vmem %s3, %s303
        %p305 = scmp.lt.s32.totalorder %s23, 1
        %s306 = scalar_select %p305, %s23, 1
        %p307 = scmp.lt.s32.totalorder %s24, 7
        %s308 = scalar_select %p307, %s24, 7
        %s309 = smul.addr %s306, 8
        %s310 = sadd.s32 %s308, %s309
        %s311 = smul.addr %s310, 8
        %s312 = scalar_lea.vmem %s4, %s311
        %p313 = scmp.lt.s32.totalorder %s23, 1
        %s314 = scalar_select %p313, %s23, 1
        %p315 = scmp.lt.s32.totalorder %s24, 7
        %s316 = scalar_select %p315, %s24, 7
        %s317 = smul.addr %s314, 8
        %s318 = sadd.s32 %s316, %s317
        %s319 = smul.addr %s318, 4
        %s320 = scalar_lea.vmem %s5, %s319
        %s321 = smul.u32 %s23, 15
        %v322 = vld [vmem:[%s304] sm:$0x1]
        %v323 = vld [vmem:[%s304 + $0x1] sm:$0x1]
        %v324 = vld [vmem:[%s304 + $0x2] sm:$0x1]
        %v325 = vld [vmem:[%s304 + $0x3] sm:$0x1]
        %v326 = vld [vmem:[%s304 + $0x4] sm:$0x1]
        %v327 = vld [vmem:[%s304 + $0x5] sm:$0x1]
        %v328 = vmax.f32 %v322, %v323
        %v329 = vmax.f32 %v328, %v324
        %v330 = vmax.f32 %v329, %v325
        %v331 = vmax.f32 %v330, %v326
        %v332 = vmax.f32 %v331, %v327
        %v333 = vsub.f32 %v322, %v332
        %v334 = vmul.f32 %v333, 1.442695
        %v335 = vpow.pop %v334
        %v336 = vsub.f32 %v323, %v332
        %v337 = vmul.f32 %v336, 1.442695
        %v338 = vpow.pop %v337
        %v339 = vsub.f32 %v324, %v332
        %v340 = vmul.f32 %v339, 1.442695
        %v341 = vpow.pop %v340
        %v342 = vsub.f32 %v325, %v332
        %v343 = vmul.f32 %v342, 1.442695
        %v344 = vpow.pop %v343
        %v345 = vsub.f32 %v326, %v332
        %v346 = vmul.f32 %v345, 1.442695
        %v347 = vpow.pop %v346
        %v348 = vsub.f32 %v327, %v332
        %v349 = vmul.f32 %v348, 1.442695
        %v350 = vpow.pop %v349
        %v351 = vadd.f32 %v335, %v338
        %v352 = vadd.f32 %v351, %v341
        %v353 = vadd.f32 %v352, %v344
        %v354 = vadd.f32 %v353, %v347
        %v355 = vadd.f32 %v354, %v350
        %v356 = vrcp.pop %v355
        %v357 = vmul.f32 %v355, %v356
        %v358 = vsub.f32 1.0, %v357
        %v359 = vmul.f32 %v356, %v358
        %v360 = vadd.f32 %v356, %v359
        %vm361 = vweird.f32 %v355
        %vm362 = vweird.f32 %v356
        %vm363 = vmor %vm361, %vm362
        %v364 = vsel %vm363, %v356, %v360
        %v365 = vand.u32 2147483647, %v355
        %vm366 = vcmp.eq.f32.partialorder %v365, 8.507059e+37
        %v367 = vand.u32 %v355, 2147483648
        %v368 = vor.u32 1.1754944e-38, %v367
        %v369 = vsel %vm366, %v368, %v364
        %v370 = vmul.f32 1.0, %v369
        %v371 = vmul.f32 %v335, %v370
        %v372 = vmul.f32 %v338, %v370
        %v373 = vmul.f32 %v341, %v370
        %v374 = vmul.f32 %v344, %v370
        %v375 = vmul.f32 %v347, %v370
        %v376 = vmul.f32 %v350, %v370
        %377 = vst [vmem:[%s312] sm:$0x1] %v371
        %378 = vst [vmem:[%s312 + $0x1] sm:$0x1] %v372
        %379 = vst [vmem:[%s312 + $0x2] sm:$0x1] %v373
        %380 = vst [vmem:[%s312 + $0x3] sm:$0x1] %v374
        %381 = vst [vmem:[%s312 + $0x4] sm:$0x1] %v375
        %382 = vst [vmem:[%s312 + $0x5] sm:$0x1] %v376
        %v383 = vld [vmem:[%s296] sm:$0x1]
        %v384 = vmul.f32 %v371, %v383
        %s385 = sld [smem:[#allocation4 + %s321]]
        %s386 = sld [smem:[#allocation2 + %s321]]
        %s387 = ssub.f32 %s385, %s386
        %v388 = vstv %s387
        %v389 = vadd.f32 %v383, %v388
        %v390 = vmul.f32 %v372, %v389
        %v391 = vadd.f32 %v384, %v390
        %s392 = sadd.s32 %s321, 3
        %s393 = sld [smem:[#allocation4 + %s392]]
        %s394 = sld [smem:[#allocation2 + %s392]]
        %s395 = ssub.f32 %s393, %s394
        %v396 = vstv %s395
        %v397 = vadd.f32 %v383, %v396
        %v398 = vmul.f32 %v373, %v397
        %v399 = vadd.f32 %v391, %v398
        %s400 = sadd.s32 %s321, 6
        %s401 = sld [smem:[#allocation4 + %s400]]
        %s402 = sld [smem:[#allocation2 + %s400]]
        %s403 = ssub.f32 %s401, %s402
        %v404 = vstv %s403
        %v405 = vadd.f32 %v383, %v404
        %v406 = vmul.f32 %v374, %v405
        %v407 = vadd.f32 %v399, %v406
        %s408 = sadd.s32 %s321, 9
        %s409 = sld [smem:[#allocation4 + %s408]]
        %s410 = sld [smem:[#allocation2 + %s408]]
        %s411 = ssub.f32 %s409, %s410
        %v412 = vstv %s411
        %v413 = vadd.f32 %v383, %v412
        %v414 = vmul.f32 %v375, %v413
        %v415 = vadd.f32 %v407, %v414
        %s416 = sadd.s32 %s321, 12
        %s417 = sld [smem:[#allocation4 + %s416]]
        %s418 = sld [smem:[#allocation2 + %s416]]
        %s419 = ssub.f32 %s417, %s418
        %v420 = vstv %s419
        %v421 = vadd.f32 %v383, %v420
        %v422 = vmul.f32 %v376, %v421
        %v423 = vadd.f32 %v415, %v422
        %424 = vst [vmem:[%s320] sm:$0x1] %v423
        %v425 = vld [vmem:[%s296 + $0x1] sm:$0x1]
        %v426 = vmul.f32 %v371, %v425
        %s427 = sadd.s32 %s321, 1
        %s428 = sld [smem:[#allocation4 + %s427]]
        %s429 = sld [smem:[#allocation2 + %s427]]
        %s430 = ssub.f32 %s428, %s429
        %v431 = vstv %s430
        %v432 = vadd.f32 %v425, %v431
        %v433 = vmul.f32 %v372, %v432
        %v434 = vadd.f32 %v426, %v433
        %s435 = sadd.s32 %s321, 4
        %s436 = sld [smem:[#allocation4 + %s435]]
        %s437 = sld [smem:[#allocation2 + %s435]]
        %s438 = ssub.f32 %s436, %s437
        %v439 = vstv %s438
        %v440 = vadd.f32 %v425, %v439
        %v441 = vmul.f32 %v373, %v440
        %v442 = vadd.f32 %v434, %v441
        %s443 = sadd.s32 %s321, 7
        %s444 = sld [smem:[#allocation4 + %s443]]
        %s445 = sld [smem:[#allocation2 + %s443]]
        %s446 = ssub.f32 %s444, %s445
        %v447 = vstv %s446
        %v448 = vadd.f32 %v425, %v447
        %v449 = vmul.f32 %v374, %v448
        %v450 = vadd.f32 %v442, %v449
        %s451 = sadd.s32 %s321, 10
        %s452 = sld [smem:[#allocation4 + %s451]]
        %s453 = sld [smem:[#allocation2 + %s451]]
        %s454 = ssub.f32 %s452, %s453
        %v455 = vstv %s454
        %v456 = vadd.f32 %v425, %v455
        %v457 = vmul.f32 %v375, %v456
        %v458 = vadd.f32 %v450, %v457
        %s459 = sadd.s32 %s321, 13
        %s460 = sld [smem:[#allocation4 + %s459]]
        %s461 = sld [smem:[#allocation2 + %s459]]
        %s462 = ssub.f32 %s460, %s461
        %v463 = vstv %s462
        %v464 = vadd.f32 %v425, %v463
        %v465 = vmul.f32 %v376, %v464
        %v466 = vadd.f32 %v458, %v465
        %467 = vst [vmem:[%s320 + $0x1] sm:$0x1] %v466
        %v468 = vld [vmem:[%s296 + $0x2] sm:$0x1]
        %v469 = vmul.f32 %v371, %v468
        %s470 = sadd.s32 %s321, 2
        %s471 = sld [smem:[#allocation4 + %s470]]
        %s472 = sld [smem:[#allocation2 + %s470]]
        %s473 = ssub.f32 %s471, %s472
        %v474 = vstv %s473
        %v475 = vadd.f32 %v468, %v474
        %v476 = vmul.f32 %v372, %v475
        %v477 = vadd.f32 %v469, %v476
        %s478 = sadd.s32 %s321, 5
        %s479 = sld [smem:[#allocation4 + %s478]]
        %s480 = sld [smem:[#allocation2 + %s478]]
        %s481 = ssub.f32 %s479, %s480
        %v482 = vstv %s481
        %v483 = vadd.f32 %v468, %v482
        %v484 = vmul.f32 %v373, %v483
        %v485 = vadd.f32 %v477, %v484
        %s486 = sadd.s32 %s321, 8
        %s487 = sld [smem:[#allocation4 + %s486]]
        %s488 = sld [smem:[#allocation2 + %s486]]
        %s489 = ssub.f32 %s487, %s488
        %v490 = vstv %s489
        %v491 = vadd.f32 %v468, %v490
        %v492 = vmul.f32 %v374, %v491
        %v493 = vadd.f32 %v485, %v492
        %s494 = sadd.s32 %s321, 11
        %s495 = sld [smem:[#allocation4 + %s494]]
        %s496 = sld [smem:[#allocation2 + %s494]]
        %s497 = ssub.f32 %s495, %s496
        %v498 = vstv %s497
        %v499 = vadd.f32 %v468, %v498
        %v500 = vmul.f32 %v375, %v499
        %v501 = vadd.f32 %v493, %v500
        %s502 = sadd.s32 %s321, 14
        %s503 = sld [smem:[#allocation4 + %s502]]
        %s504 = sld [smem:[#allocation2 + %s502]]
        %s505 = ssub.f32 %s503, %s504
        %v506 = vstv %s505
        %v507 = vadd.f32 %v468, %v506
        %v508 = vmul.f32 %v376, %v507
        %v509 = vadd.f32 %v501, %v508
        %510 = vst [vmem:[%s320 + $0x2] sm:$0x1] %v509
        %p511 = scmp.lt.s32.totalorder %s23, 1
        %s512 = scalar_select %p511, %s23, 1
        %p513 = scmp.lt.s32.totalorder %s24, 7
        %s514 = scalar_select %p513, %s24, 7
        %s515 = smul.addr %s512, 8
        %s516 = sadd.s32 %s514, %s515
        %s517 = smul.addr %s516, 8
        %s518 = scalar_lea.vmem %s4, %s517
        %p519 = scmp.lt.s32.totalorder %s23, 1
        %s520 = scalar_select %p519, %s23, 1
        %p521 = scmp.lt.s32.totalorder %s24, 7
        %s522 = scalar_select %p521, %s24, 7
        %s523 = smul.addr %s520, 8
        %s524 = sadd.s32 %s522, %s523
        %s525 = smul.addr %s524, 4
        %s526 = scalar_lea.vmem %s5, %s525
        // Predicated region
        $region45: #{dense_motion_forward.15} parent=35 // pred_check
          %p527 = pneg %p147
        $region46: #{dense_motion_forward.15} parent=35 // pred_check_branch
          %529 = sbr.rel (%p527) target = $region48
        $region47: #{dense_motion_forward.15} parent=35 // pred_region
          _
        $region48: #{dense_motion_forward.15} parent=35 // pred_fallthru
          _
        // Predicated region
        $region49: #{dense_motion_forward.15} parent=35 // pred_check
          %p530 = pneg %p175
        $region50: #{dense_motion_forward.15} parent=35 // pred_check_branch
          %532 = sbr.rel (%p530) target = $region52
        $region51: #{dense_motion_forward.15} parent=35 // pred_region
          _
        $region52: #{dense_motion_forward.15} parent=35 // pred_fallthru
          _
      $region36: #{dense_motion_forward.15} parent=5 // pred_fallthru
        _
      %p533 = scmp.le.s32.totalorder 2, %s14
      // Predicated region
      $region53: #{dense_motion_forward.15} parent=5 // pred_check
        %p534 = pneg %p533
      $region54: #{dense_motion_forward.15} parent=5 // pred_check_branch
        %536 = sbr.rel (%p534) target = $region56
      $region55: #{dense_motion_forward.15} parent=5 // pred_region
        %s537 = ssub.s32 %s14, 2
        // Predicated region
        $region57: #{dense_motion_forward.15} parent=55 // pred_check
          %p538 = pneg %p153
        $region58: #{dense_motion_forward.15} parent=55 // pred_check_branch
          %540 = sbr.rel (%p538) target = $region60
        $region59: #{dense_motion_forward.15} parent=55 // pred_region
          %p541 = scmp.lt.s32.totalorder %s25, 1
          %s542 = scalar_select %p541, %s25, 1
          %p543 = scmp.lt.s32.totalorder %s26, 7
          %s544 = scalar_select %p543, %s26, 7
          %s545 = smul.addr %s542, 8
          %s546 = sadd.s32 %s544, %s545
          %s547 = smul.addr %s546, 8
          %s548 = scalar_lea.vmem %s4, %s547
        $region60: #{dense_motion_forward.15} parent=55 // pred_fallthru
          _
        // Predicated region
        $region61: #{dense_motion_forward.15} parent=55 // pred_check
          %p549 = pneg %p181
        $region62: #{dense_motion_forward.15} parent=55 // pred_check_branch
          %551 = sbr.rel (%p549) target = $region64
        $region63: #{dense_motion_forward.15} parent=55 // pred_region
          %p552 = scmp.lt.s32.totalorder %s25, 1
          %s553 = scalar_select %p552, %s25, 1
          %p554 = scmp.lt.s32.totalorder %s26, 7
          %s555 = scalar_select %p554, %s26, 7
          %s556 = smul.addr %s553, 8
          %s557 = sadd.s32 %s555, %s556
          %s558 = smul.addr %s557, 4
          %s559 = scalar_lea.vmem %s5, %s558
        $region64: #{dense_motion_forward.15} parent=55 // pred_fallthru
          _
      $region56: #{dense_motion_forward.15} parent=5 // pred_fallthru
        _
    $region6: #{dense_motion_forward.15} parent=1 // loop_footer
      %s18 = sadd.s32 1, %s14
    $region7: #{dense_motion_forward.15} parent=1 // loop_footer_branch
      %13 = sbr.rel target = $region3
    $region8: #{dense_motion_forward.15} parent=1 // loop_exit
      _
    %560 = vsyncpa [#allocation3], 1
    %s561 = scalar_lea.sflag [#allocation3], 1
    %562 = vsyncpa %s561, 1
    %563 = vsyncpa [#allocation5], 1

</llo_original>
